<compile_context>
chip_gen: v6e
topology: v6e:2x2x1
jax: 0.10.0
libtpu: 0.0.40
codegen_flags: <defaults>
</compile_context>

<pallas_src>
import functools

import jax
import jax.numpy as jnp
from jax.experimental import pallas as pl
from jax.experimental.pallas import tpu as pltpu


def _maxpool3d_kernel(x_ref, o_ref, *, kernel, stride, out_spatial):
    kh, kw, kd = kernel
    sh, sw, sd = stride
    hY, wY, dY = out_spatial
    _, _, H, W, D = x_ref.shape

    f32 = jnp.float32
    hp = jax.lax.Precision.HIGHEST

    # Exact 0/1 selection matrices, built in VMEM (no HBM traffic):
    #   sel_d[k]: (D, dY), 1 at (od*sd + k, od)  -> picks input lane  od*sd + k
    #   sel_w[i]: (wY, W), 1 at (ox, ox*sw + i)  -> picks input sublane ox*sw + i
    d_in = jax.lax.broadcasted_iota(jnp.int32, (D, dY), 0)
    d_out = jax.lax.broadcasted_iota(jnp.int32, (D, dY), 1)
    sel_d = [(d_in == d_out * sd + k).astype(f32) for k in range(kd)]
    w_out = jax.lax.broadcasted_iota(jnp.int32, (wY, W), 0)
    w_in = jax.lax.broadcasted_iota(jnp.int32, (wY, W), 1)
    sel_w = [(w_in == w_out * sw + i).astype(f32) for i in range(kw)]

    for oy in range(hY):
        # Max over the kh taps along H: static row loads, elementwise max (VPU).
        r = x_ref[0, 0, oy * sh]                       # (W, D), input dtype
        for j in range(1, kh):
            r = jnp.maximum(r, x_ref[0, 0, oy * sh + j])
        r = r.astype(f32)

        # Max over the kd taps along D (lane axis) via exact selection matmuls.
        v = jnp.dot(r, sel_d[0], precision=hp, preferred_element_type=f32)
        for k in range(1, kd):
            v = jnp.maximum(
                v, jnp.dot(r, sel_d[k], precision=hp, preferred_element_type=f32))
        # v: (W, dY)

        # Max over the kw taps along W (sublane axis), same trick from the left.
        y = jnp.dot(sel_w[0], v, precision=hp, preferred_element_type=f32)
        for i in range(1, kw):
            y = jnp.maximum(
                y, jnp.dot(sel_w[i], v, precision=hp, preferred_element_type=f32))
        # y: (wY, dY)

        o_ref[0, 0, oy] = y.astype(o_ref.dtype)


def _round_up(v, m):
    return (v + m - 1) // m * m


def max_pooling3d(x, kernel, stride):
    """Forward of MyMaxPooling3d: x (B, C, H, W, D) -> (B, C, hY, wY, dY)."""
    kh, kw, kd = kernel
    sh, sw, sd = stride
    B, C, H, W, D = x.shape
    hY = (H - kh) // sh + 1
    wY = (W - kw) // sw + 1
    dY = (D - kd) // sd + 1

    kern = functools.partial(
        _maxpool3d_kernel,
        kernel=(kh, kw, kd),
        stride=(sh, sw, sd),
        out_spatial=(hY, wY, dY),
    )

    # VMEM budget: double-buffered input block + output block (+ slack),
    # accounting for (8, 128) layout padding of the minor dims.
    itemsize = jnp.dtype(x.dtype).itemsize
    in_block_bytes = H * _round_up(W, 8) * _round_up(D, 128) * itemsize
    out_block_bytes = hY * _round_up(wY, 8) * _round_up(dY, 128) * itemsize
    vmem_limit = int(min(100 * 2**20,
                         max(32 * 2**20, 4 * (in_block_bytes + out_block_bytes))))
    # TODO(synk): for very large H*W*D volumes, additionally tile along H
    # (receptive-field sized blocks) so a single (H, W, D) slab never exceeds VMEM.

    return pl.pallas_call(
        kern,
        out_shape=jax.ShapeDtypeStruct((B, C, hY, wY, dY), x.dtype),
        grid=(B, C),
        in_specs=[pl.BlockSpec((1, 1, H, W, D), lambda b, c: (b, c, 0, 0, 0))],
        out_specs=pl.BlockSpec((1, 1, hY, wY, dY), lambda b, c: (b, c, 0, 0, 0)),
        compiler_params=pltpu.CompilerParams(
            dimension_semantics=("parallel", "parallel"),
            vmem_limit_bytes=vmem_limit,
        ),
    )(x)


def _reference_maxpool3d(x, kernel, stride):
    """Pure-JAX reference (reduce_window) for correctness checking."""
    kh, kw, kd = kernel
    sh, sw, sd = stride
    return jax.lax.reduce_window(
        x, -jnp.inf, jax.lax.max,
        window_dimensions=(1, 1, kh, kw, kd),
        window_strides=(1, 1, sh, sw, sd),
        padding="VALID",
    )


if __name__ == "__main__":
    key = jax.random.PRNGKey(0)

    # Case 1: canonical non-overlapping pooling (same config as the torch test).
    x1 = jax.random.normal(key, (2, 4, 8, 8, 8), dtype=jnp.float32)
    y1 = jax.block_until_ready(max_pooling3d(x1, (2, 2, 2), (2, 2, 2)))
    r1 = _reference_maxpool3d(x1, (2, 2, 2), (2, 2, 2))
    assert y1.shape == (2, 4, 4, 4, 4), y1.shape
    assert jnp.allclose(y1, r1), "mismatch vs reference (non-overlapping)"

    # Case 2: overlapping windows, odd sizes (stride < kernel, K = 18 taps).
    x2 = jax.random.normal(jax.random.fold_in(key, 1), (2, 3, 7, 8, 9),
                           dtype=jnp.float32)
    y2 = jax.block_until_ready(max_pooling3d(x2, (3, 2, 3), (1, 2, 2)))
    r2 = _reference_maxpool3d(x2, (3, 2, 3), (1, 2, 2))
    assert y2.shape == (2, 3, 5, 4, 4), y2.shape
    assert jnp.allclose(y2, r2), "mismatch vs reference (overlapping)"

    print("KERNEL_OK")
</pallas_src>

<mosaic_0001>
module attributes {stable_mosaic.version = 11 : i64} {
  func.func @_maxpool3d_kernel(%arg0: i32, %arg1: i32, %arg2: memref<1x1x8x8x8xf32, #tpu.memory_space<vmem>>, %arg3: memref<1x1x4x4x4xf32, #tpu.memory_space<vmem>>) attributes {dimension_semantics = [#tpu.dimension_semantics<parallel>, #tpu.dimension_semantics<parallel>], iteration_bounds = array<i64: 2, 4>, scalar_prefetch = 0 : i64, scratch_operands = 0 : i64, tpu.core_type = #tpu.core_type<tc>, window_params = [{transform_indices = @transform_0, window_bounds = array<i64: 1, 1, 8, 8, 8>}, {transform_indices = @transform_1, window_bounds = array<i64: 1, 1, 4, 4, 4>}]} {
    %0 = tpu.iota {dimensions = array<i32: 0>} : vector<8x4xi32>
    %1 = tpu.iota {dimensions = array<i32: 1>} : vector<8x4xi32>
    %c2_i32 = arith.constant 2 : i32
    %2 = vector.broadcast %c2_i32 : i32 to vector<8x4xi32>
    %3 = arith.muli %1, %2 : vector<8x4xi32>
    %c0_i32 = arith.constant 0 : i32
    %4 = vector.broadcast %c0_i32 : i32 to vector<8x4xi32>
    %5 = arith.addi %3, %4 : vector<8x4xi32>
    %6 = arith.cmpi eq, %0, %5 : vector<8x4xi32>
    %7 = arith.extui %6 : vector<8x4xi1> to vector<8x4xi32>
    %8 = arith.sitofp %7 : vector<8x4xi32> to vector<8x4xf32>
    %c2_i32_0 = arith.constant 2 : i32
    %9 = vector.broadcast %c2_i32_0 : i32 to vector<8x4xi32>
    %10 = arith.muli %1, %9 : vector<8x4xi32>
    %c1_i32 = arith.constant 1 : i32
    %11 = vector.broadcast %c1_i32 : i32 to vector<8x4xi32>
    %12 = arith.addi %10, %11 : vector<8x4xi32>
    %13 = arith.cmpi eq, %0, %12 : vector<8x4xi32>
    %14 = arith.extui %13 : vector<8x4xi1> to vector<8x4xi32>
    %15 = arith.sitofp %14 : vector<8x4xi32> to vector<8x4xf32>
    %16 = tpu.iota {dimensions = array<i32: 0>} : vector<4x8xi32>
    %17 = tpu.iota {dimensions = array<i32: 1>} : vector<4x8xi32>
    %c2_i32_1 = arith.constant 2 : i32
    %18 = vector.broadcast %c2_i32_1 : i32 to vector<4x8xi32>
    %19 = arith.muli %16, %18 : vector<4x8xi32>
    %c0_i32_2 = arith.constant 0 : i32
    %20 = vector.broadcast %c0_i32_2 : i32 to vector<4x8xi32>
    %21 = arith.addi %19, %20 : vector<4x8xi32>
    %22 = arith.cmpi eq, %17, %21 : vector<4x8xi32>
    %23 = arith.extui %22 : vector<4x8xi1> to vector<4x8xi32>
    %24 = arith.sitofp %23 : vector<4x8xi32> to vector<4x8xf32>
    %c2_i32_3 = arith.constant 2 : i32
    %25 = vector.broadcast %c2_i32_3 : i32 to vector<4x8xi32>
    %26 = arith.muli %16, %25 : vector<4x8xi32>
    %c1_i32_4 = arith.constant 1 : i32
    %27 = vector.broadcast %c1_i32_4 : i32 to vector<4x8xi32>
    %28 = arith.addi %26, %27 : vector<4x8xi32>
    %29 = arith.cmpi eq, %17, %28 : vector<4x8xi32>
    %30 = arith.extui %29 : vector<4x8xi1> to vector<4x8xi32>
    %31 = arith.sitofp %30 : vector<4x8xi32> to vector<4x8xf32>
    %c0 = arith.constant 0 : index
    %c0_5 = arith.constant 0 : index
    %c0_6 = arith.constant 0 : index
    %c0_7 = arith.constant 0 : index
    %c0_8 = arith.constant 0 : index
    %32 = vector.load %arg2[%c0, %c0_5, %c0_6, %c0_7, %c0_8] : memref<1x1x8x8x8xf32, #tpu.memory_space<vmem>>, vector<1x1x1x8x8xf32>
    %33 = vector.shape_cast %32 : vector<1x1x1x8x8xf32> to vector<8x8xf32>
    %c0_9 = arith.constant 0 : index
    %c0_10 = arith.constant 0 : index
    %c1 = arith.constant 1 : index
    %c0_11 = arith.constant 0 : index
    %c0_12 = arith.constant 0 : index
    %34 = vector.load %arg2[%c0_9, %c0_10, %c1, %c0_11, %c0_12] : memref<1x1x8x8x8xf32, #tpu.memory_space<vmem>>, vector<1x1x1x8x8xf32>
    %35 = vector.shape_cast %34 : vector<1x1x1x8x8xf32> to vector<8x8xf32>
    %36 = arith.maximumf %33, %35 : vector<8x8xf32>
    %cst = arith.constant dense<0.000000e+00> : vector<8x4xf32>
    %37 = tpu.matmul %36, %8, %cst {dimension_numbers = #tpu.dot_dimension_numbers<[1], [0], [0], [1], [0, 0, 1, 1], [], []>, precision = #tpu.contract_precision<fp32>} : vector<8x8xf32>, vector<8x4xf32>, vector<8x4xf32> -> vector<8x4xf32>
    %cst_13 = arith.constant dense<0.000000e+00> : vector<8x4xf32>
    %38 = tpu.matmul %36, %15, %cst_13 {dimension_numbers = #tpu.dot_dimension_numbers<[1], [0], [0], [1], [0, 0, 1, 1], [], []>, precision = #tpu.contract_precision<fp32>} : vector<8x8xf32>, vector<8x4xf32>, vector<8x4xf32> -> vector<8x4xf32>
    %39 = arith.maximumf %37, %38 : vector<8x4xf32>
    %cst_14 = arith.constant dense<0.000000e+00> : vector<4x4xf32>
    %40 = tpu.matmul %24, %39, %cst_14 {dimension_numbers = #tpu.dot_dimension_numbers<[1], [0], [0], [1], [0, 0, 1, 1], [], []>, precision = #tpu.contract_precision<fp32>} : vector<4x8xf32>, vector<8x4xf32>, vector<4x4xf32> -> vector<4x4xf32>
    %cst_15 = arith.constant dense<0.000000e+00> : vector<4x4xf32>
    %41 = tpu.matmul %31, %39, %cst_15 {dimension_numbers = #tpu.dot_dimension_numbers<[1], [0], [0], [1], [0, 0, 1, 1], [], []>, precision = #tpu.contract_precision<fp32>} : vector<4x8xf32>, vector<8x4xf32>, vector<4x4xf32> -> vector<4x4xf32>
    %42 = arith.maximumf %40, %41 : vector<4x4xf32>
    %c0_16 = arith.constant 0 : index
    %c0_17 = arith.constant 0 : index
    %c0_18 = arith.constant 0 : index
    %c0_19 = arith.constant 0 : index
    %c0_20 = arith.constant 0 : index
    %43 = vector.load %arg3[%c0_16, %c0_17, %c0_18, %c0_19, %c0_20] : memref<1x1x4x4x4xf32, #tpu.memory_space<vmem>>, vector<1x1x1x4x4xf32>
    %44 = vector.shape_cast %43 : vector<1x1x1x4x4xf32> to vector<4x4xf32>
    %45 = vector.shape_cast %42 : vector<4x4xf32> to vector<1x1x1x4x4xf32>
    tpu.vector_store %arg3[%c0_16, %c0_17, %c0_18, %c0_19, %c0_20], %45 {strides = array<i32>} : memref<1x1x4x4x4xf32, #tpu.memory_space<vmem>>, vector<1x1x1x4x4xf32>,
    %c0_21 = arith.constant 0 : index
    %c0_22 = arith.constant 0 : index
    %c2 = arith.constant 2 : index
    %c0_23 = arith.constant 0 : index
    %c0_24 = arith.constant 0 : index
    %46 = vector.load %arg2[%c0_21, %c0_22, %c2, %c0_23, %c0_24] : memref<1x1x8x8x8xf32, #tpu.memory_space<vmem>>, vector<1x1x1x8x8xf32>
    %47 = vector.shape_cast %46 : vector<1x1x1x8x8xf32> to vector<8x8xf32>
    %c0_25 = arith.constant 0 : index
    %c0_26 = arith.constant 0 : index
    %c3 = arith.constant 3 : index
    %c0_27 = arith.constant 0 : index
    %c0_28 = arith.constant 0 : index
    %48 = vector.load %arg2[%c0_25, %c0_26, %c3, %c0_27, %c0_28] : memref<1x1x8x8x8xf32, #tpu.memory_space<vmem>>, vector<1x1x1x8x8xf32>
    %49 = vector.shape_cast %48 : vector<1x1x1x8x8xf32> to vector<8x8xf32>
    %50 = arith.maximumf %47, %49 : vector<8x8xf32>
    %cst_29 = arith.constant dense<0.000000e+00> : vector<8x4xf32>
    %51 = tpu.matmul %50, %8, %cst_29 {dimension_numbers = #tpu.dot_dimension_numbers<[1], [0], [0], [1], [0, 0, 1, 1], [], []>, precision = #tpu.contract_precision<fp32>} : vector<8x8xf32>, vector<8x4xf32>, vector<8x4xf32> -> vector<8x4xf32>
    %cst_30 = arith.constant dense<0.000000e+00> : vector<8x4xf32>
    %52 = tpu.matmul %50, %15, %cst_30 {dimension_numbers = #tpu.dot_dimension_numbers<[1], [0], [0], [1], [0, 0, 1, 1], [], []>, precision = #tpu.contract_precision<fp32>} : vector<8x8xf32>, vector<8x4xf32>, vector<8x4xf32> -> vector<8x4xf32>
    %53 = arith.maximumf %51, %52 : vector<8x4xf32>
    %cst_31 = arith.constant dense<0.000000e+00> : vector<4x4xf32>
    %54 = tpu.matmul %24, %53, %cst_31 {dimension_numbers = #tpu.dot_dimension_numbers<[1], [0], [0], [1], [0, 0, 1, 1], [], []>, precision = #tpu.contract_precision<fp32>} : vector<4x8xf32>, vector<8x4xf32>, vector<4x4xf32> -> vector<4x4xf32>
    %cst_32 = arith.constant dense<0.000000e+00> : vector<4x4xf32>
    %55 = tpu.matmul %31, %53, %cst_32 {dimension_numbers = #tpu.dot_dimension_numbers<[1], [0], [0], [1], [0, 0, 1, 1], [], []>, precision = #tpu.contract_precision<fp32>} : vector<4x8xf32>, vector<8x4xf32>, vector<4x4xf32> -> vector<4x4xf32>
    %56 = arith.maximumf %54, %55 : vector<4x4xf32>
    %c0_33 = arith.constant 0 : index
    %c0_34 = arith.constant 0 : index
    %c1_35 = arith.constant 1 : index
    %c0_36 = arith.constant 0 : index
    %c0_37 = arith.constant 0 : index
    %57 = vector.load %arg3[%c0_33, %c0_34, %c1_35, %c0_36, %c0_37] : memref<1x1x4x4x4xf32, #tpu.memory_space<vmem>>, vector<1x1x1x4x4xf32>
    %58 = vector.shape_cast %57 : vector<1x1x1x4x4xf32> to vector<4x4xf32>
    %59 = vector.shape_cast %56 : vector<4x4xf32> to vector<1x1x1x4x4xf32>
    tpu.vector_store %arg3[%c0_33, %c0_34, %c1_35, %c0_36, %c0_37], %59 {strides = array<i32>} : memref<1x1x4x4x4xf32, #tpu.memory_space<vmem>>, vector<1x1x1x4x4xf32>,
    %c0_38 = arith.constant 0 : index
    %c0_39 = arith.constant 0 : index
    %c4 = arith.constant 4 : index
    %c0_40 = arith.constant 0 : index
    %c0_41 = arith.constant 0 : index
    %60 = vector.load %arg2[%c0_38, %c0_39, %c4, %c0_40, %c0_41] : memref<1x1x8x8x8xf32, #tpu.memory_space<vmem>>, vector<1x1x1x8x8xf32>
    %61 = vector.shape_cast %60 : vector<1x1x1x8x8xf32> to vector<8x8xf32>
    %c0_42 = arith.constant 0 : index
    %c0_43 = arith.constant 0 : index
    %c5 = arith.constant 5 : index
    %c0_44 = arith.constant 0 : index
    %c0_45 = arith.constant 0 : index
    %62 = vector.load %arg2[%c0_42, %c0_43, %c5, %c0_44, %c0_45] : memref<1x1x8x8x8xf32, #tpu.memory_space<vmem>>, vector<1x1x1x8x8xf32>
    %63 = vector.shape_cast %62 : vector<1x1x1x8x8xf32> to vector<8x8xf32>
    %64 = arith.maximumf %61, %63 : vector<8x8xf32>
    %cst_46 = arith.constant dense<0.000000e+00> : vector<8x4xf32>
    %65 = tpu.matmul %64, %8, %cst_46 {dimension_numbers = #tpu.dot_dimension_numbers<[1], [0], [0], [1], [0, 0, 1, 1], [], []>, precision = #tpu.contract_precision<fp32>} : vector<8x8xf32>, vector<8x4xf32>, vector<8x4xf32> -> vector<8x4xf32>
    %cst_47 = arith.constant dense<0.000000e+00> : vector<8x4xf32>
    %66 = tpu.matmul %64, %15, %cst_47 {dimension_numbers = #tpu.dot_dimension_numbers<[1], [0], [0], [1], [0, 0, 1, 1], [], []>, precision = #tpu.contract_precision<fp32>} : vector<8x8xf32>, vector<8x4xf32>, vector<8x4xf32> -> vector<8x4xf32>
    %67 = arith.maximumf %65, %66 : vector<8x4xf32>
    %cst_48 = arith.constant dense<0.000000e+00> : vector<4x4xf32>
    %68 = tpu.matmul %24, %67, %cst_48 {dimension_numbers = #tpu.dot_dimension_numbers<[1], [0], [0], [1], [0, 0, 1, 1], [], []>, precision = #tpu.contract_precision<fp32>} : vector<4x8xf32>, vector<8x4xf32>, vector<4x4xf32> -> vector<4x4xf32>
    %cst_49 = arith.constant dense<0.000000e+00> : vector<4x4xf32>
    %69 = tpu.matmul %31, %67, %cst_49 {dimension_numbers = #tpu.dot_dimension_numbers<[1], [0], [0], [1], [0, 0, 1, 1], [], []>, precision = #tpu.contract_precision<fp32>} : vector<4x8xf32>, vector<8x4xf32>, vector<4x4xf32> -> vector<4x4xf32>
    %70 = arith.maximumf %68, %69 : vector<4x4xf32>
    %c0_50 = arith.constant 0 : index
    %c0_51 = arith.constant 0 : index
    %c2_52 = arith.constant 2 : index
    %c0_53 = arith.constant 0 : index
    %c0_54 = arith.constant 0 : index
    %71 = vector.load %arg3[%c0_50, %c0_51, %c2_52, %c0_53, %c0_54] : memref<1x1x4x4x4xf32, #tpu.memory_space<vmem>>, vector<1x1x1x4x4xf32>
    %72 = vector.shape_cast %71 : vector<1x1x1x4x4xf32> to vector<4x4xf32>
    %73 = vector.shape_cast %70 : vector<4x4xf32> to vector<1x1x1x4x4xf32>
    tpu.vector_store %arg3[%c0_50, %c0_51, %c2_52, %c0_53, %c0_54], %73 {strides = array<i32>} : memref<1x1x4x4x4xf32, #tpu.memory_space<vmem>>, vector<1x1x1x4x4xf32>,
    %c0_55 = arith.constant 0 : index
    %c0_56 = arith.constant 0 : index
    %c6 = arith.constant 6 : index
    %c0_57 = arith.constant 0 : index
    %c0_58 = arith.constant 0 : index
    %74 = vector.load %arg2[%c0_55, %c0_56, %c6, %c0_57, %c0_58] : memref<1x1x8x8x8xf32, #tpu.memory_space<vmem>>, vector<1x1x1x8x8xf32>
    %75 = vector.shape_cast %74 : vector<1x1x1x8x8xf32> to vector<8x8xf32>
    %c0_59 = arith.constant 0 : index
    %c0_60 = arith.constant 0 : index
    %c7 = arith.constant 7 : index
    %c0_61 = arith.constant 0 : index
    %c0_62 = arith.constant 0 : index
    %76 = vector.load %arg2[%c0_59, %c0_60, %c7, %c0_61, %c0_62] : memref<1x1x8x8x8xf32, #tpu.memory_space<vmem>>, vector<1x1x1x8x8xf32>
    %77 = vector.shape_cast %76 : vector<1x1x1x8x8xf32> to vector<8x8xf32>
    %78 = arith.maximumf %75, %77 : vector<8x8xf32>
    %cst_63 = arith.constant dense<0.000000e+00> : vector<8x4xf32>
    %79 = tpu.matmul %78, %8, %cst_63 {dimension_numbers = #tpu.dot_dimension_numbers<[1], [0], [0], [1], [0, 0, 1, 1], [], []>, precision = #tpu.contract_precision<fp32>} : vector<8x8xf32>, vector<8x4xf32>, vector<8x4xf32> -> vector<8x4xf32>
    %cst_64 = arith.constant dense<0.000000e+00> : vector<8x4xf32>
    %80 = tpu.matmul %78, %15, %cst_64 {dimension_numbers = #tpu.dot_dimension_numbers<[1], [0], [0], [1], [0, 0, 1, 1], [], []>, precision = #tpu.contract_precision<fp32>} : vector<8x8xf32>, vector<8x4xf32>, vector<8x4xf32> -> vector<8x4xf32>
    %81 = arith.maximumf %79, %80 : vector<8x4xf32>
    %cst_65 = arith.constant dense<0.000000e+00> : vector<4x4xf32>
    %82 = tpu.matmul %24, %81, %cst_65 {dimension_numbers = #tpu.dot_dimension_numbers<[1], [0], [0], [1], [0, 0, 1, 1], [], []>, precision = #tpu.contract_precision<fp32>} : vector<4x8xf32>, vector<8x4xf32>, vector<4x4xf32> -> vector<4x4xf32>
    %cst_66 = arith.constant dense<0.000000e+00> : vector<4x4xf32>
    %83 = tpu.matmul %31, %81, %cst_66 {dimension_numbers = #tpu.dot_dimension_numbers<[1], [0], [0], [1], [0, 0, 1, 1], [], []>, precision = #tpu.contract_precision<fp32>} : vector<4x8xf32>, vector<8x4xf32>, vector<4x4xf32> -> vector<4x4xf32>
    %84 = arith.maximumf %82, %83 : vector<4x4xf32>
    %c0_67 = arith.constant 0 : index
    %c0_68 = arith.constant 0 : index
    %c3_69 = arith.constant 3 : index
    %c0_70 = arith.constant 0 : index
    %c0_71 = arith.constant 0 : index
    %85 = vector.load %arg3[%c0_67, %c0_68, %c3_69, %c0_70, %c0_71] : memref<1x1x4x4x4xf32, #tpu.memory_space<vmem>>, vector<1x1x1x4x4xf32>
    %86 = vector.shape_cast %85 : vector<1x1x1x4x4xf32> to vector<4x4xf32>
    %87 = vector.shape_cast %84 : vector<4x4xf32> to vector<1x1x1x4x4xf32>
    tpu.vector_store %arg3[%c0_67, %c0_68, %c3_69, %c0_70, %c0_71], %87 {strides = array<i32>} : memref<1x1x4x4x4xf32, #tpu.memory_space<vmem>>, vector<1x1x1x4x4xf32>,
    return
  }
  func.func @transform_0(%arg0: i32, %arg1: i32) -> (i32, i32, i32, i32, i32) {
    %c0_i32 = arith.constant 0 : i32
    %c0_i32_0 = arith.constant 0 : i32
    %c0_i32_1 = arith.constant 0 : i32
    %c0_i32_2 = arith.constant 0 : i32
    return %arg0, %arg1, %c0_i32, %c0_i32_0, %c0_i32_1 : i32, i32, i32, i32, i32
  }
  func.func @transform_1(%arg0: i32, %arg1: i32) -> (i32, i32, i32, i32, i32) {
    %c0_i32 = arith.constant 0 : i32
    %c0_i32_0 = arith.constant 0 : i32
    %c0_i32_1 = arith.constant 0 : i32
    %c0_i32_2 = arith.constant 0 : i32
    return %arg0, %arg1, %c0_i32, %c0_i32_0, %c0_i32_1 : i32, i32, i32, i32, i32
  }
}

</mosaic_0001>

<llo_original>
// kernel: tpu_custom_call.1
$region0: #{tpu_custom_call.1}
  #allocation0 [shape = 'u32[]', space=smem, size = 0x4, offset = 0x4, fixed_abs, tag = 'smem constant byte address 0x4 - core index']
  #allocation1 [shape = 'u32[144,128]{1,0:T(1,128)}', space=vmem, size = 0x12000, scoped, tag = 'internal scratch']
  %s0 = inlined_call_operand.hbm [shape: f32[2,4,8,8,8], index: 0, kind: input, shape index: {}]
  %s1 = inlined_call_operand.hbm [shape: f32[2,4,4,4,4], index: 1, kind: output, shape index: {}]
  %s2 = sld [smem:[#allocation0]]
  $region41: #{tpu_custom_call.1} parent=0
    _
  %s4 = ssub.s32 1, %s2
  %s5 = scalar_select 0, %s4, %s2
  $region1: #{tpu_custom_call.1} parent=0
    #allocation2 [shape = 'u8[65536]{0}', space=vmem, size = 0x10000, scoped, tag = 'input window, operand 0']
    #allocation3 [shape = 's32[2]{0}', space=sflag, size = 0x8, scoped, tag = 'scoped memory for tpu_custom_call.1']
    #allocation4 [shape = 's32[2]{0}', space=sflag, size = 0x8, scoped, tag = 'scoped memory for tpu_custom_call.1']
    #allocation5 [shape = 'u8[16384]{0}', space=vmem, size = 0x4000, scoped, tag = 'output window, operand 0']
    %6 = vsyncpa [#allocation3], 0
    %s7 = scalar_lea.sflag [#allocation3], 1
    %8 = vsyncpa %s7, 0
    %9 = vsyncpa [#allocation4], 0
    %s10 = scalar_lea.sflag [#allocation4], 1
    %11 = vsyncpa %s10, 0
    loop: start=0, step=1, limit=10
    $region2: #{tpu_custom_call.1} parent=1 // loop_pre_header
      _
    $region3: #{tpu_custom_call.1} parent=1 // loop_header
      %s13 = sphi 0, %s17
      %p14 = scmp.ge.s32.totalorder %s13, 10
      %s20 = sphi 0, %s32
      %s21 = sphi 0, %s28
      %s22 = sphi 0, %s20
      %s23 = sphi 0, %s21
      %s24 = sphi 0, %s22
      %s25 = sphi 0, %s23
      %s37 = sphi 0, %s39
      %s40 = sphi 0, %s37
      %s41 = sphi 0, %s40
      %s57 = sphi 0, %s41
      %s65 = sphi 0, %s67
      %s68 = sphi 0, %s65
      %s69 = sphi 0, %s68
      %s85 = sphi 0, %s69
    $region4: #{tpu_custom_call.1} parent=1 // loop_header_branch
      %16 = sbr.rel (%p14) target = $region8
    $region5: #{tpu_custom_call.1} parent=1 // loop_body
      %s18 = ssub.s32 %s13, 1
      %s19 = ssub.s32 %s13, 2
      %s26 = sadd.s32 1, %s21
      %p27 = scmp.ge.s32.totalorder %s26, 4
      %s28 = scalar_select %p27, 0, %s26
      %s29 = sadd.s32 1, %s20
      %s30 = scalar_select %p27, %s29, %s20
      %p31 = scmp.ge.s32.totalorder %s30, 2
      %s32 = scalar_select %p31, 0, %s30
      %s33 = ssub.s32 %s20, %s32
      %s34 = ssub.s32 %s21, %s28
      %s35 = sor.u32 %s33, %s34
      %p36 = scmp.eq.s32.totalorder %s35, 0
      %s38 = sadd.s32 %s37, 1
      %s39 = scalar_select %p36, %s37, %s38
      %p42 = pneg %p36
      %p43 = scmp.eq.s32.totalorder %s13, 7
      %p44 = por %p42, %p43
      %p45 = scmp.ne.s32.totalorder %s37, %s40
      %p46 = scmp.eq.s32.totalorder %s13, 0
      %p47 = por %p45, %p46
      %p48 = scmp.ne.s32.totalorder %s37, %s40
      %p49 = scmp.eq.s32.totalorder %s18, 7
      %p50 = por %p48, %p49
      %p51 = scmp.ne.s32.totalorder %s40, %s41
      %p52 = scmp.eq.s32.totalorder %s18, 0
      %p53 = por %p51, %p52
      %p54 = scmp.ne.s32.totalorder %s40, %s41
      %p55 = scmp.eq.s32.totalorder %s19, 7
      %p56 = por %p54, %p55
      %p58 = scmp.ne.s32.totalorder %s41, %s57
      %p59 = scmp.eq.s32.totalorder %s19, 0
      %p60 = por %p58, %p59
      %s61 = ssub.s32 %s20, %s32
      %s62 = ssub.s32 %s21, %s28
      %s63 = sor.u32 %s61, %s62
      %p64 = scmp.eq.s32.totalorder %s63, 0
      %s66 = sadd.s32 %s65, 1
      %s67 = scalar_select %p64, %s65, %s66
      %p70 = pneg %p64
      %p71 = scmp.eq.s32.totalorder %s13, 7
      %p72 = por %p70, %p71
      %p73 = scmp.ne.s32.totalorder %s65, %s68
      %p74 = scmp.eq.s32.totalorder %s13, 0
      %p75 = por %p73, %p74
      %p76 = scmp.ne.s32.totalorder %s65, %s68
      %p77 = scmp.eq.s32.totalorder %s18, 7
      %p78 = por %p76, %p77
      %p79 = scmp.ne.s32.totalorder %s68, %s69
      %p80 = scmp.eq.s32.totalorder %s18, 0
      %p81 = por %p79, %p80
      %p82 = scmp.ne.s32.totalorder %s68, %s69
      %p83 = scmp.eq.s32.totalorder %s19, 7
      %p84 = por %p82, %p83
      %p86 = scmp.ne.s32.totalorder %s69, %s85
      %p87 = scmp.eq.s32.totalorder %s19, 0
      %p88 = por %p86, %p87
      %p89 = scmp.le.s32.totalorder 1, %s13
      %p90 = scmp.lt.s32.totalorder %s13, 9
      %p91 = pnand %p89, %p90
      %p92 = pneg %p91
      // Predicated region
      $region9: #{tpu_custom_call.1} parent=5 // pred_check
        _
      $region10: #{tpu_custom_call.1} parent=5 // pred_check_branch
        %94 = sbr.rel (%p91) target = $region12
      $region11: #{tpu_custom_call.1} parent=5 // pred_region
        %s95 = ssub.s32 %s13, 1
      $region12: #{tpu_custom_call.1} parent=5 // pred_fallthru
        _
      %p96 = scmp.lt.s32.totalorder %s13, 8
      // Predicated region
      $region13: #{tpu_custom_call.1} parent=5 // pred_check
        %p97 = pneg %p96
      $region14: #{tpu_custom_call.1} parent=5 // pred_check_branch
        %99 = sbr.rel (%p97) target = $region16
      $region15: #{tpu_custom_call.1} parent=5 // pred_region
        // Predicated region
        $region17: #{tpu_custom_call.1} parent=15 // pred_check
          %p100 = pneg %p47
        $region18: #{tpu_custom_call.1} parent=15 // pred_check_branch
          %102 = sbr.rel (%p100) target = $region20
        $region19: #{tpu_custom_call.1} parent=15 // pred_region
          %s103 = sand.u32 %s37, 1
          %s104 = scalar_lea.sflag [#allocation3], %s103
          %s105 = sand.u32 %s37, 1
          %s106 = smul.addr %s105, 64
          %s107 = scalar_lea.vmem [#allocation2], %s106
          %s109 = ssub.s32 1024, 1024
          %110 = vsyncadd %s104, %s109
          %s111 = smul.addr %s21, 8
          %s112 = smul.addr %s20, 32
          %s113 = sadd.s32 %s111, %s112
          %s114 = smul.addr %s113, 128
          %s115 = scalar_lea.hbm %s0, %s114
          %s116 = sshll.u32 %s107, 4
          %s117 = int_to_ptr.vmem [resolvable:$true] %s116
          %122 = dma.hbm_to_vmem [thread:$0]  %s115, 1024, %s117, %s104, 128, 128, 8
        $region20: #{tpu_custom_call.1} parent=15 // pred_fallthru
          _
      $region16: #{tpu_custom_call.1} parent=5 // pred_fallthru
        _
      %p123 = scmp.le.s32.totalorder 1, %s13
      %p124 = scmp.lt.s32.totalorder %s13, 9
      %p125 = pnand %p123, %p124
      %p126 = pneg %p125
      // Predicated region
      $region21: #{tpu_custom_call.1} parent=5 // pred_check
        _
      $region22: #{tpu_custom_call.1} parent=5 // pred_check_branch
        %128 = sbr.rel (%p125) target = $region24
      $region23: #{tpu_custom_call.1} parent=5 // pred_region
        %s129 = ssub.s32 %s13, 1
        %s130 = sand.u32 %s40, 1
        %s131 = scalar_lea.sflag [#allocation3], %s130
        %s132 = sand.u32 %s40, 1
        %s133 = smul.addr %s132, 64
        %s134 = scalar_lea.vmem [#allocation2], %s133
        // Predicated region
        $region25: #{tpu_custom_call.1} parent=23 // pred_check
          %p135 = pneg %p53
        $region26: #{tpu_custom_call.1} parent=23 // pred_check_branch
          %137 = sbr.rel (%p135) target = $region28
        $region27: #{tpu_custom_call.1} parent=23 // pred_region
          %138 = dma.done %s131, 1024
        $region28: #{tpu_custom_call.1} parent=23 // pred_fallthru
          _
        %s139 = sand.u32 %s40, 1
        %s140 = scalar_lea.sflag [#allocation3], %s139
        %s141 = sand.u32 %s40, 1
        %s142 = smul.addr %s141, 64
        %s143 = scalar_lea.vmem [#allocation2], %s142
        %p144 = pneg %p53
        %p145 = pneg %p50
        %p146 = pneg %p81
        %p147 = pneg %p78
        %s148 = sand.u32 %s68, 1
        %s149 = scalar_lea.sflag [#allocation4], %s148
        %s150 = sand.u32 %s68, 1
        %s151 = smul.addr %s150, 16
        %s152 = scalar_lea.vmem [#allocation5], %s151
        %v153 = vlaneseq
        %v154 = vshrl.u32 %v153, 7
        %v155 = vlaneseq
        %v156 = vand.u32 %v155, 127
        %v157 = vmul.u32 %v156, 2
        %vm158 = vcmp.eq.s32.totalorder %v154, %v157
        %v159 = vsel %vm158, 1, 0
        %v160 = vcvt.s32.f32 %v159
        %v161 = vadd.s32 %v157, 1
        %vm162 = vcmp.eq.s32.totalorder %v154, %v161
        %v163 = vsel %vm162, 1, 0
        %v164 = vcvt.s32.f32 %v163
        %v165 = vmul.u32 %v154, 2
        %vm166 = vcmp.eq.s32.totalorder %v156, %v165
        %v167 = vsel %vm166, 1, 0
        %v168 = vcvt.s32.f32 %v167
        %v169 = vadd.s32 %v165, 1
        %vm170 = vcmp.eq.s32.totalorder %v156, %v169
        %v171 = vsel %vm170, 1, 0
        %v172 = vcvt.s32.f32 %v171
        %v173 = vld [vmem:[%s134] sm:$0xff]
        %s174 = scalar_lea.vmem %s134, 8 [#allocation2]
        %v175 = vld [vmem:[%s174] sm:$0xff]
        %v176 = vmax.f32 %v173, %v175
        %vm177 = vcmask 64512
        %v179 = vsel %vm177, %v176, 0
        %181 = vmatprep.subr.mxu0 0.0
        %182 = vmatpush1.msra.mxu0 0.0
        %183 = vmatprep.subr.mxu0 0.0
        %184 = vmatpush1.msra.mxu0 0.0
        %185 = vmatprep.subr.mxu0 0.0
        %186 = vmatpush1.msra.mxu0 0.0
        %187 = vmatprep.subr.mxu0 0.0
        %188 = vmatpush1.msra.mxu0 0.0
        %189 = vmatprep.subr.mxu0 0.0
        %190 = vmatpush1.msra.mxu0 0.0
        %191 = vmatprep.subr.mxu0 0.0
        %192 = vmatpush1.msra.mxu0 0.0
        %193 = vmatprep.subr.mxu0 0.0
        %194 = vmatpush1.msra.mxu0 0.0
        %195 = vmatprep.subr.mxu0 0.0
        %196 = vmatpush1.msra.mxu0 0.0
        %197 = vmatprep.subr.mxu0 0.0
        %198 = vmatpush1.msra.mxu0 0.0
        %199 = vmatprep.subr.mxu0 0.0
        %200 = vmatpush1.msra.mxu0 0.0
        %201 = vmatprep.subr.mxu0 0.0
        %202 = vmatpush1.msra.mxu0 0.0
        %203 = vmatprep.subr.mxu0 0.0
        %204 = vmatpush1.msra.mxu0 0.0
        %205 = vmatprep.subr.mxu0 0.0
        %206 = vmatpush1.msra.mxu0 0.0
        %207 = vmatprep.subr.mxu0 0.0
        %208 = vmatpush1.msra.mxu0 0.0
        %209 = vmatprep.subr.mxu0 0.0
        %210 = vmatpush1.msra.mxu0 0.0
        %211 = vmatprep.subr.mxu0 0.0
        %v212 = vand.u32 %v160, 4294901760
        %213 = vmatpush1.msra.mxu0 %v212
        %214 = vmatprep.subr.mxu0 0.0
        %215 = vmatpush2.msra.mxu0 0.0
        %216 = vmatprep.subr.mxu0 0.0
        %217 = vmatpush2.msra.mxu0 0.0
        %218 = vmatprep.subr.mxu0 0.0
        %219 = vmatpush2.msra.mxu0 0.0
        %220 = vmatprep.subr.mxu0 0.0
        %221 = vmatpush2.msra.mxu0 0.0
        %222 = vmatprep.subr.mxu0 0.0
        %223 = vmatpush2.msra.mxu0 0.0
        %224 = vmatprep.subr.mxu0 0.0
        %225 = vmatpush2.msra.mxu0 0.0
        %226 = vmatprep.subr.mxu0 0.0
        %227 = vmatpush2.msra.mxu0 0.0
        %228 = vmatprep.subr.mxu0 0.0
        %229 = vmatpush2.msra.mxu0 0.0
        %230 = vmatprep.subr.mxu0 0.0
        %231 = vmatpush2.msra.mxu0 0.0
        %232 = vmatprep.subr.mxu0 0.0
        %233 = vmatpush2.msra.mxu0 0.0
        %234 = vmatprep.subr.mxu0 0.0
        %235 = vmatpush2.msra.mxu0 0.0
        %236 = vmatprep.subr.mxu0 0.0
        %237 = vmatpush2.msra.mxu0 0.0
        %238 = vmatprep.subr.mxu0 0.0
        %239 = vmatpush2.msra.mxu0 0.0
        %240 = vmatprep.subr.mxu0 0.0
        %241 = vmatpush2.msra.mxu0 0.0
        %242 = vmatprep.subr.mxu0 0.0
        %243 = vmatpush2.msra.mxu0 0.0
        %244 = vmatprep.subr.mxu0 0.0
        %245 = vmatpush2.msra.mxu0 0.0
        %246 = vmatprep.mubr.f32.mxu0 0.0
        %v247 = vand.u32 %v179, 4294901760
        %v248 = vsub.f32 %v179, %v247
        %v249 = vand.u32 %v248, 4294901760
        %v250 = vsub.f32 %v248, %v249
        %v251 = vand.u32 %v250, 4294901760
        %252 = vmatmul.mubr.f32.gmra.mxu0 %v251
        %v253 = vpop.f32.mrf.mxu0
        %v254 = vadd.f32 0.0, %v253
        %v255 = vpop.f32.mrf.mxu0
        %256 = vdwg.mxu0
        %257 = vmatprep.subr.mxu0 0.0
        %258 = vmatpush1.msra.mxu0 0.0
        %259 = vmatprep.subr.mxu0 0.0
        %260 = vmatpush1.msra.mxu0 0.0
        %261 = vmatprep.subr.mxu0 0.0
        %262 = vmatpush1.msra.mxu0 0.0
        %263 = vmatprep.subr.mxu0 0.0
        %264 = vmatpush1.msra.mxu0 0.0
        %265 = vmatprep.subr.mxu0 0.0
        %266 = vmatpush1.msra.mxu0 0.0
        %267 = vmatprep.subr.mxu0 0.0
        %268 = vmatpush1.msra.mxu0 0.0
        %269 = vmatprep.subr.mxu0 0.0
        %270 = vmatpush1.msra.mxu0 0.0
        %271 = vmatprep.subr.mxu0 0.0
        %272 = vmatpush1.msra.mxu0 0.0
        %273 = vmatprep.subr.mxu0 0.0
        %274 = vmatpush1.msra.mxu0 0.0
        %275 = vmatprep.subr.mxu0 0.0
        %276 = vmatpush1.msra.mxu0 0.0
        %277 = vmatprep.subr.mxu0 0.0
        %278 = vmatpush1.msra.mxu0 0.0
        %279 = vmatprep.subr.mxu0 0.0
        %280 = vmatpush1.msra.mxu0 0.0
        %281 = vmatprep.subr.mxu0 0.0
        %282 = vmatpush1.msra.mxu0 0.0
        %283 = vmatprep.subr.mxu0 0.0
        %284 = vmatpush1.msra.mxu0 0.0
        %285 = vmatprep.subr.mxu0 0.0
        %286 = vmatpush1.msra.mxu0 0.0
        %287 = vmatprep.subr.mxu0 0.0
        %v288 = vand.u32 %v160, 4294901760
        %v289 = vsub.f32 %v160, %v288
        %v290 = vand.u32 %v289, 4294901760
        %v291 = vsub.f32 %v289, %v290
        %v292 = vand.u32 %v291, 4294901760
        %293 = vmatpush1.msra.mxu0 %v292
        %294 = vmatprep.subr.mxu0 0.0
        %295 = vmatpush2.msra.mxu0 0.0
        %296 = vmatprep.subr.mxu0 0.0
        %297 = vmatpush2.msra.mxu0 0.0
        %298 = vmatprep.subr.mxu0 0.0
        %299 = vmatpush2.msra.mxu0 0.0
        %300 = vmatprep.subr.mxu0 0.0
        %301 = vmatpush2.msra.mxu0 0.0
        %302 = vmatprep.subr.mxu0 0.0
        %303 = vmatpush2.msra.mxu0 0.0
        %304 = vmatprep.subr.mxu0 0.0
        %305 = vmatpush2.msra.mxu0 0.0
        %306 = vmatprep.subr.mxu0 0.0
        %307 = vmatpush2.msra.mxu0 0.0
        %308 = vmatprep.subr.mxu0 0.0
        %309 = vmatpush2.msra.mxu0 0.0
        %310 = vmatprep.subr.mxu0 0.0
        %311 = vmatpush2.msra.mxu0 0.0
        %312 = vmatprep.subr.mxu0 0.0
        %313 = vmatpush2.msra.mxu0 0.0
        %314 = vmatprep.subr.mxu0 0.0
        %315 = vmatpush2.msra.mxu0 0.0
        %316 = vmatprep.subr.mxu0 0.0
        %317 = vmatpush2.msra.mxu0 0.0
        %318 = vmatprep.subr.mxu0 0.0
        %319 = vmatpush2.msra.mxu0 0.0
        %320 = vmatprep.subr.mxu0 0.0
        %321 = vmatpush2.msra.mxu0 0.0
        %322 = vmatprep.subr.mxu0 0.0
        %323 = vmatpush2.msra.mxu0 0.0
        %324 = vmatprep.subr.mxu0 0.0
        %325 = vmatpush2.msra.mxu0 0.0
        %326 = vmatprep.mubr.f32.mxu0 0.0
        %v327 = vand.u32 %v179, 4294901760
        %328 = vmatmul.mubr.f32.gmra.mxu0 %v327
        %v329 = vpop.f32.mrf.mxu0
        %v330 = vadd.f32 %v254, %v329
        %v331 = vpop.f32.mrf.mxu0
        %332 = vdwg.mxu0
        %333 = vmatprep.subr.mxu0 0.0
        %334 = vmatpush1.msra.mxu0 0.0
        %335 = vmatprep.subr.mxu0 0.0
        %336 = vmatpush1.msra.mxu0 0.0
        %337 = vmatprep.subr.mxu0 0.0
        %338 = vmatpush1.msra.mxu0 0.0
        %339 = vmatprep.subr.mxu0 0.0
        %340 = vmatpush1.msra.mxu0 0.0
        %341 = vmatprep.subr.mxu0 0.0
        %342 = vmatpush1.msra.mxu0 0.0
        %343 = vmatprep.subr.mxu0 0.0
        %344 = vmatpush1.msra.mxu0 0.0
        %345 = vmatprep.subr.mxu0 0.0
        %346 = vmatpush1.msra.mxu0 0.0
        %347 = vmatprep.subr.mxu0 0.0
        %348 = vmatpush1.msra.mxu0 0.0
        %349 = vmatprep.subr.mxu0 0.0
        %350 = vmatpush1.msra.mxu0 0.0
        %351 = vmatprep.subr.mxu0 0.0
        %352 = vmatpush1.msra.mxu0 0.0
        %353 = vmatprep.subr.mxu0 0.0
        %354 = vmatpush1.msra.mxu0 0.0
        %355 = vmatprep.subr.mxu0 0.0
        %356 = vmatpush1.msra.mxu0 0.0
        %357 = vmatprep.subr.mxu0 0.0
        %358 = vmatpush1.msra.mxu0 0.0
        %359 = vmatprep.subr.mxu0 0.0
        %360 = vmatpush1.msra.mxu0 0.0
        %361 = vmatprep.subr.mxu0 0.0
        %362 = vmatpush1.msra.mxu0 0.0
        %363 = vmatprep.subr.mxu0 0.0
        %v364 = vand.u32 %v160, 4294901760
        %v365 = vsub.f32 %v160, %v364
        %366 = vmatpush1.msra.mxu0 %v365
        %367 = vmatprep.subr.mxu0 0.0
        %368 = vmatpush2.msra.mxu0 0.0
        %369 = vmatprep.subr.mxu0 0.0
        %370 = vmatpush2.msra.mxu0 0.0
        %371 = vmatprep.subr.mxu0 0.0
        %372 = vmatpush2.msra.mxu0 0.0
        %373 = vmatprep.subr.mxu0 0.0
        %374 = vmatpush2.msra.mxu0 0.0
        %375 = vmatprep.subr.mxu0 0.0
        %376 = vmatpush2.msra.mxu0 0.0
        %377 = vmatprep.subr.mxu0 0.0
        %378 = vmatpush2.msra.mxu0 0.0
        %379 = vmatprep.subr.mxu0 0.0
        %380 = vmatpush2.msra.mxu0 0.0
        %381 = vmatprep.subr.mxu0 0.0
        %382 = vmatpush2.msra.mxu0 0.0
        %383 = vmatprep.subr.mxu0 0.0
        %384 = vmatpush2.msra.mxu0 0.0
        %385 = vmatprep.subr.mxu0 0.0
        %386 = vmatpush2.msra.mxu0 0.0
        %387 = vmatprep.subr.mxu0 0.0
        %388 = vmatpush2.msra.mxu0 0.0
        %389 = vmatprep.subr.mxu0 0.0
        %390 = vmatpush2.msra.mxu0 0.0
        %391 = vmatprep.subr.mxu0 0.0
        %392 = vmatpush2.msra.mxu0 0.0
        %393 = vmatprep.subr.mxu0 0.0
        %394 = vmatpush2.msra.mxu0 0.0
        %395 = vmatprep.subr.mxu0 0.0
        %396 = vmatpush2.msra.mxu0 0.0
        %397 = vmatprep.subr.mxu0 0.0
        %398 = vmatpush2.msra.mxu0 0.0
        %399 = vmatprep.mubr.f32.mxu0 0.0
        %v400 = vand.u32 %v179, 4294901760
        %v401 = vsub.f32 %v179, %v400
        %402 = vmatmul.mubr.f32.gmra.mxu0 %v401
        %v403 = vpop.f32.mrf.mxu0
        %v404 = vadd.f32 %v330, %v403
        %v405 = vpop.f32.mrf.mxu0
        %406 = vdwg.mxu0
        %407 = vmatprep.subr.mxu0 0.0
        %408 = vmatpush1.msra.mxu0 0.0
        %409 = vmatprep.subr.mxu0 0.0
        %410 = vmatpush1.msra.mxu0 0.0
        %411 = vmatprep.subr.mxu0 0.0
        %412 = vmatpush1.msra.mxu0 0.0
        %413 = vmatprep.subr.mxu0 0.0
        %414 = vmatpush1.msra.mxu0 0.0
        %415 = vmatprep.subr.mxu0 0.0
        %416 = vmatpush1.msra.mxu0 0.0
        %417 = vmatprep.subr.mxu0 0.0
        %418 = vmatpush1.msra.mxu0 0.0
        %419 = vmatprep.subr.mxu0 0.0
        %420 = vmatpush1.msra.mxu0 0.0
        %421 = vmatprep.subr.mxu0 0.0
        %422 = vmatpush1.msra.mxu0 0.0
        %423 = vmatprep.subr.mxu0 0.0
        %424 = vmatpush1.msra.mxu0 0.0
        %425 = vmatprep.subr.mxu0 0.0
        %426 = vmatpush1.msra.mxu0 0.0
        %427 = vmatprep.subr.mxu0 0.0
        %428 = vmatpush1.msra.mxu0 0.0
        %429 = vmatprep.subr.mxu0 0.0
        %430 = vmatpush1.msra.mxu0 0.0
        %431 = vmatprep.subr.mxu0 0.0
        %432 = vmatpush1.msra.mxu0 0.0
        %433 = vmatprep.subr.mxu0 0.0
        %434 = vmatpush1.msra.mxu0 0.0
        %435 = vmatprep.subr.mxu0 0.0
        %436 = vmatpush1.msra.mxu0 0.0
        %437 = vmatprep.subr.mxu0 0.0
        %v438 = vand.u32 %v160, 4294901760
        %439 = vmatpush1.msra.mxu0 %v438
        %440 = vmatprep.subr.mxu0 0.0
        %441 = vmatpush2.msra.mxu0 0.0
        %442 = vmatprep.subr.mxu0 0.0
        %443 = vmatpush2.msra.mxu0 0.0
        %444 = vmatprep.subr.mxu0 0.0
        %445 = vmatpush2.msra.mxu0 0.0
        %446 = vmatprep.subr.mxu0 0.0
        %447 = vmatpush2.msra.mxu0 0.0
        %448 = vmatprep.subr.mxu0 0.0
        %449 = vmatpush2.msra.mxu0 0.0
        %450 = vmatprep.subr.mxu0 0.0
        %451 = vmatpush2.msra.mxu0 0.0
        %452 = vmatprep.subr.mxu0 0.0
        %453 = vmatpush2.msra.mxu0 0.0
        %454 = vmatprep.subr.mxu0 0.0
        %455 = vmatpush2.msra.mxu0 0.0
        %456 = vmatprep.subr.mxu0 0.0
        %457 = vmatpush2.msra.mxu0 0.0
        %458 = vmatprep.subr.mxu0 0.0
        %459 = vmatpush2.msra.mxu0 0.0
        %460 = vmatprep.subr.mxu0 0.0
        %461 = vmatpush2.msra.mxu0 0.0
        %462 = vmatprep.subr.mxu0 0.0
        %463 = vmatpush2.msra.mxu0 0.0
        %464 = vmatprep.subr.mxu0 0.0
        %465 = vmatpush2.msra.mxu0 0.0
        %466 = vmatprep.subr.mxu0 0.0
        %467 = vmatpush2.msra.mxu0 0.0
        %468 = vmatprep.subr.mxu0 0.0
        %469 = vmatpush2.msra.mxu0 0.0
        %470 = vmatprep.subr.mxu0 0.0
        %471 = vmatpush2.msra.mxu0 0.0
        %472 = vmatprep.mubr.f32.mxu0 0.0
        %v473 = vand.u32 %v179, 4294901760
        %v474 = vsub.f32 %v179, %v473
        %v475 = vand.u32 %v474, 4294901760
        %476 = vmatmul.mubr.f32.gmra.mxu0 %v475
        %v477 = vpop.f32.mrf.mxu0
        %v478 = vadd.f32 %v404, %v477
        %v479 = vpop.f32.mrf.mxu0
        %480 = vdwg.mxu0
        %481 = vmatprep.subr.mxu0 0.0
        %482 = vmatpush1.msra.mxu0 0.0
        %483 = vmatprep.subr.mxu0 0.0
        %484 = vmatpush1.msra.mxu0 0.0
        %485 = vmatprep.subr.mxu0 0.0
        %486 = vmatpush1.msra.mxu0 0.0
        %487 = vmatprep.subr.mxu0 0.0
        %488 = vmatpush1.msra.mxu0 0.0
        %489 = vmatprep.subr.mxu0 0.0
        %490 = vmatpush1.msra.mxu0 0.0
        %491 = vmatprep.subr.mxu0 0.0
        %492 = vmatpush1.msra.mxu0 0.0
        %493 = vmatprep.subr.mxu0 0.0
        %494 = vmatpush1.msra.mxu0 0.0
        %495 = vmatprep.subr.mxu0 0.0
        %496 = vmatpush1.msra.mxu0 0.0
        %497 = vmatprep.subr.mxu0 0.0
        %498 = vmatpush1.msra.mxu0 0.0
        %499 = vmatprep.subr.mxu0 0.0
        %500 = vmatpush1.msra.mxu0 0.0
        %501 = vmatprep.subr.mxu0 0.0
        %502 = vmatpush1.msra.mxu0 0.0
        %503 = vmatprep.subr.mxu0 0.0
        %504 = vmatpush1.msra.mxu0 0.0
        %505 = vmatprep.subr.mxu0 0.0
        %506 = vmatpush1.msra.mxu0 0.0
        %507 = vmatprep.subr.mxu0 0.0
        %508 = vmatpush1.msra.mxu0 0.0
        %509 = vmatprep.subr.mxu0 0.0
        %510 = vmatpush1.msra.mxu0 0.0
        %511 = vmatprep.subr.mxu0 0.0
        %v512 = vand.u32 %v160, 4294901760
        %v513 = vsub.f32 %v160, %v512
        %v514 = vand.u32 %v513, 4294901760
        %515 = vmatpush1.msra.mxu0 %v514
        %516 = vmatprep.subr.mxu0 0.0
        %517 = vmatpush2.msra.mxu0 0.0
        %518 = vmatprep.subr.mxu0 0.0
        %519 = vmatpush2.msra.mxu0 0.0
        %520 = vmatprep.subr.mxu0 0.0
        %521 = vmatpush2.msra.mxu0 0.0
        %522 = vmatprep.subr.mxu0 0.0
        %523 = vmatpush2.msra.mxu0 0.0
        %524 = vmatprep.subr.mxu0 0.0
        %525 = vmatpush2.msra.mxu0 0.0
        %526 = vmatprep.subr.mxu0 0.0
        %527 = vmatpush2.msra.mxu0 0.0
        %528 = vmatprep.subr.mxu0 0.0
        %529 = vmatpush2.msra.mxu0 0.0
        %530 = vmatprep.subr.mxu0 0.0
        %531 = vmatpush2.msra.mxu0 0.0
        %532 = vmatprep.subr.mxu0 0.0
        %533 = vmatpush2.msra.mxu0 0.0
        %534 = vmatprep.subr.mxu0 0.0
        %535 = vmatpush2.msra.mxu0 0.0
        %536 = vmatprep.subr.mxu0 0.0
        %537 = vmatpush2.msra.mxu0 0.0
        %538 = vmatprep.subr.mxu0 0.0
        %539 = vmatpush2.msra.mxu0 0.0
        %540 = vmatprep.subr.mxu0 0.0
        %541 = vmatpush2.msra.mxu0 0.0
        %542 = vmatprep.subr.mxu0 0.0
        %543 = vmatpush2.msra.mxu0 0.0
        %544 = vmatprep.subr.mxu0 0.0
        %545 = vmatpush2.msra.mxu0 0.0
        %546 = vmatprep.subr.mxu0 0.0
        %547 = vmatpush2.msra.mxu0 0.0
        %548 = vmatprep.mubr.f32.mxu0 0.0
        %v549 = vand.u32 %v179, 4294901760
        %550 = vmatmul.mubr.f32.gmra.mxu0 %v549
        %v551 = vpop.f32.mrf.mxu0
        %v552 = vadd.f32 %v478, %v551
        %v553 = vpop.f32.mrf.mxu0
        %554 = vdwg.mxu0
        %555 = vmatprep.subr.mxu0 0.0
        %556 = vmatpush1.msra.mxu0 0.0
        %557 = vmatprep.subr.mxu0 0.0
        %558 = vmatpush1.msra.mxu0 0.0
        %559 = vmatprep.subr.mxu0 0.0
        %560 = vmatpush1.msra.mxu0 0.0
        %561 = vmatprep.subr.mxu0 0.0
        %562 = vmatpush1.msra.mxu0 0.0
        %563 = vmatprep.subr.mxu0 0.0
        %564 = vmatpush1.msra.mxu0 0.0
        %565 = vmatprep.subr.mxu0 0.0
        %566 = vmatpush1.msra.mxu0 0.0
        %567 = vmatprep.subr.mxu0 0.0
        %568 = vmatpush1.msra.mxu0 0.0
        %569 = vmatprep.subr.mxu0 0.0
        %570 = vmatpush1.msra.mxu0 0.0
        %571 = vmatprep.subr.mxu0 0.0
        %572 = vmatpush1.msra.mxu0 0.0
        %573 = vmatprep.subr.mxu0 0.0
        %574 = vmatpush1.msra.mxu0 0.0
        %575 = vmatprep.subr.mxu0 0.0
        %576 = vmatpush1.msra.mxu0 0.0
        %577 = vmatprep.subr.mxu0 0.0
        %578 = vmatpush1.msra.mxu0 0.0
        %579 = vmatprep.subr.mxu0 0.0
        %580 = vmatpush1.msra.mxu0 0.0
        %581 = vmatprep.subr.mxu0 0.0
        %582 = vmatpush1.msra.mxu0 0.0
        %583 = vmatprep.subr.mxu0 0.0
        %584 = vmatpush1.msra.mxu0 0.0
        %585 = vmatprep.subr.mxu0 0.0
        %v586 = vand.u32 %v160, 4294901760
        %587 = vmatpush1.msra.mxu0 %v586
        %588 = vmatprep.subr.mxu0 0.0
        %589 = vmatpush2.msra.mxu0 0.0
        %590 = vmatprep.subr.mxu0 0.0
        %591 = vmatpush2.msra.mxu0 0.0
        %592 = vmatprep.subr.mxu0 0.0
        %593 = vmatpush2.msra.mxu0 0.0
        %594 = vmatprep.subr.mxu0 0.0
        %595 = vmatpush2.msra.mxu0 0.0
        %596 = vmatprep.subr.mxu0 0.0
        %597 = vmatpush2.msra.mxu0 0.0
        %598 = vmatprep.subr.mxu0 0.0
        %599 = vmatpush2.msra.mxu0 0.0
        %600 = vmatprep.subr.mxu0 0.0
        %601 = vmatpush2.msra.mxu0 0.0
        %602 = vmatprep.subr.mxu0 0.0
        %603 = vmatpush2.msra.mxu0 0.0
        %604 = vmatprep.subr.mxu0 0.0
        %605 = vmatpush2.msra.mxu0 0.0
        %606 = vmatprep.subr.mxu0 0.0
        %607 = vmatpush2.msra.mxu0 0.0
        %608 = vmatprep.subr.mxu0 0.0
        %609 = vmatpush2.msra.mxu0 0.0
        %610 = vmatprep.subr.mxu0 0.0
        %611 = vmatpush2.msra.mxu0 0.0
        %612 = vmatprep.subr.mxu0 0.0
        %613 = vmatpush2.msra.mxu0 0.0
        %614 = vmatprep.subr.mxu0 0.0
        %615 = vmatpush2.msra.mxu0 0.0
        %616 = vmatprep.subr.mxu0 0.0
        %617 = vmatpush2.msra.mxu0 0.0
        %618 = vmatprep.subr.mxu0 0.0
        %619 = vmatpush2.msra.mxu0 0.0
        %620 = vmatprep.mubr.f32.mxu0 0.0
        %v621 = vand.u32 %v179, 4294901760
        %622 = vmatmul.mubr.f32.gmra.mxu0 %v621
        %v623 = vpop.f32.mrf.mxu0
        %v624 = vadd.f32 %v552, %v623
        %v625 = vpop.f32.mrf.mxu0
        %626 = vdwg.mxu0
        %627 = vmatprep.subr.mxu0 0.0
        %628 = vmatpush1.msra.mxu0 0.0
        %629 = vmatprep.subr.mxu0 0.0
        %630 = vmatpush1.msra.mxu0 0.0
        %631 = vmatprep.subr.mxu0 0.0
        %632 = vmatpush1.msra.mxu0 0.0
        %633 = vmatprep.subr.mxu0 0.0
        %634 = vmatpush1.msra.mxu0 0.0
        %635 = vmatprep.subr.mxu0 0.0
        %636 = vmatpush1.msra.mxu0 0.0
        %637 = vmatprep.subr.mxu0 0.0
        %638 = vmatpush1.msra.mxu0 0.0
        %639 = vmatprep.subr.mxu0 0.0
        %640 = vmatpush1.msra.mxu0 0.0
        %641 = vmatprep.subr.mxu0 0.0
        %642 = vmatpush1.msra.mxu0 0.0
        %643 = vmatprep.subr.mxu0 0.0
        %644 = vmatpush1.msra.mxu0 0.0
        %645 = vmatprep.subr.mxu0 0.0
        %646 = vmatpush1.msra.mxu0 0.0
        %647 = vmatprep.subr.mxu0 0.0
        %648 = vmatpush1.msra.mxu0 0.0
        %649 = vmatprep.subr.mxu0 0.0
        %650 = vmatpush1.msra.mxu0 0.0
        %651 = vmatprep.subr.mxu0 0.0
        %652 = vmatpush1.msra.mxu0 0.0
        %653 = vmatprep.subr.mxu0 0.0
        %654 = vmatpush1.msra.mxu0 0.0
        %655 = vmatprep.subr.mxu0 0.0
        %656 = vmatpush1.msra.mxu0 0.0
        %657 = vmatprep.subr.mxu0 0.0
        %v658 = vand.u32 %v164, 4294901760
        %659 = vmatpush1.msra.mxu0 %v658
        %660 = vmatprep.subr.mxu0 0.0
        %661 = vmatpush2.msra.mxu0 0.0
        %662 = vmatprep.subr.mxu0 0.0
        %663 = vmatpush2.msra.mxu0 0.0
        %664 = vmatprep.subr.mxu0 0.0
        %665 = vmatpush2.msra.mxu0 0.0
        %666 = vmatprep.subr.mxu0 0.0
        %667 = vmatpush2.msra.mxu0 0.0
        %668 = vmatprep.subr.mxu0 0.0
        %669 = vmatpush2.msra.mxu0 0.0
        %670 = vmatprep.subr.mxu0 0.0
        %671 = vmatpush2.msra.mxu0 0.0
        %672 = vmatprep.subr.mxu0 0.0
        %673 = vmatpush2.msra.mxu0 0.0
        %674 = vmatprep.subr.mxu0 0.0
        %675 = vmatpush2.msra.mxu0 0.0
        %676 = vmatprep.subr.mxu0 0.0
        %677 = vmatpush2.msra.mxu0 0.0
        %678 = vmatprep.subr.mxu0 0.0
        %679 = vmatpush2.msra.mxu0 0.0
        %680 = vmatprep.subr.mxu0 0.0
        %681 = vmatpush2.msra.mxu0 0.0
        %682 = vmatprep.subr.mxu0 0.0
        %683 = vmatpush2.msra.mxu0 0.0
        %684 = vmatprep.subr.mxu0 0.0
        %685 = vmatpush2.msra.mxu0 0.0
        %686 = vmatprep.subr.mxu0 0.0
        %687 = vmatpush2.msra.mxu0 0.0
        %688 = vmatprep.subr.mxu0 0.0
        %689 = vmatpush2.msra.mxu0 0.0
        %690 = vmatprep.subr.mxu0 0.0
        %691 = vmatpush2.msra.mxu0 0.0
        %692 = vmatprep.mubr.f32.mxu0 0.0
        %v693 = vand.u32 %v179, 4294901760
        %v694 = vsub.f32 %v179, %v693
        %v695 = vand.u32 %v694, 4294901760
        %v696 = vsub.f32 %v694, %v695
        %v697 = vand.u32 %v696, 4294901760
        %698 = vmatmul.mubr.f32.gmra.mxu0 %v697
        %v699 = vpop.f32.mrf.mxu0
        %v700 = vadd.f32 0.0, %v699
        %v701 = vpop.f32.mrf.mxu0
        %702 = vdwg.mxu0
        %703 = vmatprep.subr.mxu0 0.0
        %704 = vmatpush1.msra.mxu0 0.0
        %705 = vmatprep.subr.mxu0 0.0
        %706 = vmatpush1.msra.mxu0 0.0
        %707 = vmatprep.subr.mxu0 0.0
        %708 = vmatpush1.msra.mxu0 0.0
        %709 = vmatprep.subr.mxu0 0.0
        %710 = vmatpush1.msra.mxu0 0.0
        %711 = vmatprep.subr.mxu0 0.0
        %712 = vmatpush1.msra.mxu0 0.0
        %713 = vmatprep.subr.mxu0 0.0
        %714 = vmatpush1.msra.mxu0 0.0
        %715 = vmatprep.subr.mxu0 0.0
        %716 = vmatpush1.msra.mxu0 0.0
        %717 = vmatprep.subr.mxu0 0.0
        %718 = vmatpush1.msra.mxu0 0.0
        %719 = vmatprep.subr.mxu0 0.0
        %720 = vmatpush1.msra.mxu0 0.0
        %721 = vmatprep.subr.mxu0 0.0
        %722 = vmatpush1.msra.mxu0 0.0
        %723 = vmatprep.subr.mxu0 0.0
        %724 = vmatpush1.msra.mxu0 0.0
        %725 = vmatprep.subr.mxu0 0.0
        %726 = vmatpush1.msra.mxu0 0.0
        %727 = vmatprep.subr.mxu0 0.0
        %728 = vmatpush1.msra.mxu0 0.0
        %729 = vmatprep.subr.mxu0 0.0
        %730 = vmatpush1.msra.mxu0 0.0
        %731 = vmatprep.subr.mxu0 0.0
        %732 = vmatpush1.msra.mxu0 0.0
        %733 = vmatprep.subr.mxu0 0.0
        %v734 = vand.u32 %v164, 4294901760
        %v735 = vsub.f32 %v164, %v734
        %v736 = vand.u32 %v735, 4294901760
        %v737 = vsub.f32 %v735, %v736
        %v738 = vand.u32 %v737, 4294901760
        %739 = vmatpush1.msra.mxu0 %v738
        %740 = vmatprep.subr.mxu0 0.0
        %741 = vmatpush2.msra.mxu0 0.0
        %742 = vmatprep.subr.mxu0 0.0
        %743 = vmatpush2.msra.mxu0 0.0
        %744 = vmatprep.subr.mxu0 0.0
        %745 = vmatpush2.msra.mxu0 0.0
        %746 = vmatprep.subr.mxu0 0.0
        %747 = vmatpush2.msra.mxu0 0.0
        %748 = vmatprep.subr.mxu0 0.0
        %749 = vmatpush2.msra.mxu0 0.0
        %750 = vmatprep.subr.mxu0 0.0
        %751 = vmatpush2.msra.mxu0 0.0
        %752 = vmatprep.subr.mxu0 0.0
        %753 = vmatpush2.msra.mxu0 0.0
        %754 = vmatprep.subr.mxu0 0.0
        %755 = vmatpush2.msra.mxu0 0.0
        %756 = vmatprep.subr.mxu0 0.0
        %757 = vmatpush2.msra.mxu0 0.0
        %758 = vmatprep.subr.mxu0 0.0
        %759 = vmatpush2.msra.mxu0 0.0
        %760 = vmatprep.subr.mxu0 0.0
        %761 = vmatpush2.msra.mxu0 0.0
        %762 = vmatprep.subr.mxu0 0.0
        %763 = vmatpush2.msra.mxu0 0.0
        %764 = vmatprep.subr.mxu0 0.0
        %765 = vmatpush2.msra.mxu0 0.0
        %766 = vmatprep.subr.mxu0 0.0
        %767 = vmatpush2.msra.mxu0 0.0
        %768 = vmatprep.subr.mxu0 0.0
        %769 = vmatpush2.msra.mxu0 0.0
        %770 = vmatprep.subr.mxu0 0.0
        %771 = vmatpush2.msra.mxu0 0.0
        %772 = vmatprep.mubr.f32.mxu0 0.0
        %v773 = vand.u32 %v179, 4294901760
        %774 = vmatmul.mubr.f32.gmra.mxu0 %v773
        %v775 = vpop.f32.mrf.mxu0
        %v776 = vadd.f32 %v700, %v775
        %v777 = vpop.f32.mrf.mxu0
        %778 = vdwg.mxu0
        %779 = vmatprep.subr.mxu0 0.0
        %780 = vmatpush1.msra.mxu0 0.0
        %781 = vmatprep.subr.mxu0 0.0
        %782 = vmatpush1.msra.mxu0 0.0
        %783 = vmatprep.subr.mxu0 0.0
        %784 = vmatpush1.msra.mxu0 0.0
        %785 = vmatprep.subr.mxu0 0.0
        %786 = vmatpush1.msra.mxu0 0.0
        %787 = vmatprep.subr.mxu0 0.0
        %788 = vmatpush1.msra.mxu0 0.0
        %789 = vmatprep.subr.mxu0 0.0
        %790 = vmatpush1.msra.mxu0 0.0
        %791 = vmatprep.subr.mxu0 0.0
        %792 = vmatpush1.msra.mxu0 0.0
        %793 = vmatprep.subr.mxu0 0.0
        %794 = vmatpush1.msra.mxu0 0.0
        %795 = vmatprep.subr.mxu0 0.0
        %796 = vmatpush1.msra.mxu0 0.0
        %797 = vmatprep.subr.mxu0 0.0
        %798 = vmatpush1.msra.mxu0 0.0
        %799 = vmatprep.subr.mxu0 0.0
        %800 = vmatpush1.msra.mxu0 0.0
        %801 = vmatprep.subr.mxu0 0.0
        %802 = vmatpush1.msra.mxu0 0.0
        %803 = vmatprep.subr.mxu0 0.0
        %804 = vmatpush1.msra.mxu0 0.0
        %805 = vmatprep.subr.mxu0 0.0
        %806 = vmatpush1.msra.mxu0 0.0
        %807 = vmatprep.subr.mxu0 0.0
        %808 = vmatpush1.msra.mxu0 0.0
        %809 = vmatprep.subr.mxu0 0.0
        %v810 = vand.u32 %v164, 4294901760
        %v811 = vsub.f32 %v164, %v810
        %812 = vmatpush1.msra.mxu0 %v811
        %813 = vmatprep.subr.mxu0 0.0
        %814 = vmatpush2.msra.mxu0 0.0
        %815 = vmatprep.subr.mxu0 0.0
        %816 = vmatpush2.msra.mxu0 0.0
        %817 = vmatprep.subr.mxu0 0.0
        %818 = vmatpush2.msra.mxu0 0.0
        %819 = vmatprep.subr.mxu0 0.0
        %820 = vmatpush2.msra.mxu0 0.0
        %821 = vmatprep.subr.mxu0 0.0
        %822 = vmatpush2.msra.mxu0 0.0
        %823 = vmatprep.subr.mxu0 0.0
        %824 = vmatpush2.msra.mxu0 0.0
        %825 = vmatprep.subr.mxu0 0.0
        %826 = vmatpush2.msra.mxu0 0.0
        %827 = vmatprep.subr.mxu0 0.0
        %828 = vmatpush2.msra.mxu0 0.0
        %829 = vmatprep.subr.mxu0 0.0
        %830 = vmatpush2.msra.mxu0 0.0
        %831 = vmatprep.subr.mxu0 0.0
        %832 = vmatpush2.msra.mxu0 0.0
        %833 = vmatprep.subr.mxu0 0.0
        %834 = vmatpush2.msra.mxu0 0.0
        %835 = vmatprep.subr.mxu0 0.0
        %836 = vmatpush2.msra.mxu0 0.0
        %837 = vmatprep.subr.mxu0 0.0
        %838 = vmatpush2.msra.mxu0 0.0
        %839 = vmatprep.subr.mxu0 0.0
        %840 = vmatpush2.msra.mxu0 0.0
        %841 = vmatprep.subr.mxu0 0.0
        %842 = vmatpush2.msra.mxu0 0.0
        %843 = vmatprep.subr.mxu0 0.0
        %844 = vmatpush2.msra.mxu0 0.0
        %845 = vmatprep.mubr.f32.mxu0 0.0
        %v846 = vand.u32 %v179, 4294901760
        %v847 = vsub.f32 %v179, %v846
        %848 = vmatmul.mubr.f32.gmra.mxu0 %v847
        %v849 = vpop.f32.mrf.mxu0
        %v850 = vadd.f32 %v776, %v849
        %v851 = vpop.f32.mrf.mxu0
        %852 = vdwg.mxu0
        %853 = vmatprep.subr.mxu0 0.0
        %854 = vmatpush1.msra.mxu0 0.0
        %855 = vmatprep.subr.mxu0 0.0
        %856 = vmatpush1.msra.mxu0 0.0
        %857 = vmatprep.subr.mxu0 0.0
        %858 = vmatpush1.msra.mxu0 0.0
        %859 = vmatprep.subr.mxu0 0.0
        %860 = vmatpush1.msra.mxu0 0.0
        %861 = vmatprep.subr.mxu0 0.0
        %862 = vmatpush1.msra.mxu0 0.0
        %863 = vmatprep.subr.mxu0 0.0
        %864 = vmatpush1.msra.mxu0 0.0
        %865 = vmatprep.subr.mxu0 0.0
        %866 = vmatpush1.msra.mxu0 0.0
        %867 = vmatprep.subr.mxu0 0.0
        %868 = vmatpush1.msra.mxu0 0.0
        %869 = vmatprep.subr.mxu0 0.0
        %870 = vmatpush1.msra.mxu0 0.0
        %871 = vmatprep.subr.mxu0 0.0
        %872 = vmatpush1.msra.mxu0 0.0
        %873 = vmatprep.subr.mxu0 0.0
        %874 = vmatpush1.msra.mxu0 0.0
        %875 = vmatprep.subr.mxu0 0.0
        %876 = vmatpush1.msra.mxu0 0.0
        %877 = vmatprep.subr.mxu0 0.0
        %878 = vmatpush1.msra.mxu0 0.0
        %879 = vmatprep.subr.mxu0 0.0
        %880 = vmatpush1.msra.mxu0 0.0
        %881 = vmatprep.subr.mxu0 0.0
        %882 = vmatpush1.msra.mxu0 0.0
        %883 = vmatprep.subr.mxu0 0.0
        %v884 = vand.u32 %v164, 4294901760
        %885 = vmatpush1.msra.mxu0 %v884
        %886 = vmatprep.subr.mxu0 0.0
        %887 = vmatpush2.msra.mxu0 0.0
        %888 = vmatprep.subr.mxu0 0.0
        %889 = vmatpush2.msra.mxu0 0.0
        %890 = vmatprep.subr.mxu0 0.0
        %891 = vmatpush2.msra.mxu0 0.0
        %892 = vmatprep.subr.mxu0 0.0
        %893 = vmatpush2.msra.mxu0 0.0
        %894 = vmatprep.subr.mxu0 0.0
        %895 = vmatpush2.msra.mxu0 0.0
        %896 = vmatprep.subr.mxu0 0.0
        %897 = vmatpush2.msra.mxu0 0.0
        %898 = vmatprep.subr.mxu0 0.0
        %899 = vmatpush2.msra.mxu0 0.0
        %900 = vmatprep.subr.mxu0 0.0
        %901 = vmatpush2.msra.mxu0 0.0
        %902 = vmatprep.subr.mxu0 0.0
        %903 = vmatpush2.msra.mxu0 0.0
        %904 = vmatprep.subr.mxu0 0.0
        %905 = vmatpush2.msra.mxu0 0.0
        %906 = vmatprep.subr.mxu0 0.0
        %907 = vmatpush2.msra.mxu0 0.0
        %908 = vmatprep.subr.mxu0 0.0
        %909 = vmatpush2.msra.mxu0 0.0
        %910 = vmatprep.subr.mxu0 0.0
        %911 = vmatpush2.msra.mxu0 0.0
        %912 = vmatprep.subr.mxu0 0.0
        %913 = vmatpush2.msra.mxu0 0.0
        %914 = vmatprep.subr.mxu0 0.0
        %915 = vmatpush2.msra.mxu0 0.0
        %916 = vmatprep.subr.mxu0 0.0
        %917 = vmatpush2.msra.mxu0 0.0
        %918 = vmatprep.mubr.f32.mxu0 0.0
        %v919 = vand.u32 %v179, 4294901760
        %v920 = vsub.f32 %v179, %v919
        %v921 = vand.u32 %v920, 4294901760
        %922 = vmatmul.mubr.f32.gmra.mxu0 %v921
        %v923 = vpop.f32.mrf.mxu0
        %v924 = vadd.f32 %v850, %v923
        %v925 = vpop.f32.mrf.mxu0
        %926 = vdwg.mxu0
        %927 = vmatprep.subr.mxu0 0.0
        %928 = vmatpush1.msra.mxu0 0.0
        %929 = vmatprep.subr.mxu0 0.0
        %930 = vmatpush1.msra.mxu0 0.0
        %931 = vmatprep.subr.mxu0 0.0
        %932 = vmatpush1.msra.mxu0 0.0
        %933 = vmatprep.subr.mxu0 0.0
        %934 = vmatpush1.msra.mxu0 0.0
        %935 = vmatprep.subr.mxu0 0.0
        %936 = vmatpush1.msra.mxu0 0.0
        %937 = vmatprep.subr.mxu0 0.0
        %938 = vmatpush1.msra.mxu0 0.0
        %939 = vmatprep.subr.mxu0 0.0
        %940 = vmatpush1.msra.mxu0 0.0
        %941 = vmatprep.subr.mxu0 0.0
        %942 = vmatpush1.msra.mxu0 0.0
        %943 = vmatprep.subr.mxu0 0.0
        %944 = vmatpush1.msra.mxu0 0.0
        %945 = vmatprep.subr.mxu0 0.0
        %946 = vmatpush1.msra.mxu0 0.0
        %947 = vmatprep.subr.mxu0 0.0
        %948 = vmatpush1.msra.mxu0 0.0
        %949 = vmatprep.subr.mxu0 0.0
        %950 = vmatpush1.msra.mxu0 0.0
        %951 = vmatprep.subr.mxu0 0.0
        %952 = vmatpush1.msra.mxu0 0.0
        %953 = vmatprep.subr.mxu0 0.0
        %954 = vmatpush1.msra.mxu0 0.0
        %955 = vmatprep.subr.mxu0 0.0
        %956 = vmatpush1.msra.mxu0 0.0
        %957 = vmatprep.subr.mxu0 0.0
        %v958 = vand.u32 %v164, 4294901760
        %v959 = vsub.f32 %v164, %v958
        %v960 = vand.u32 %v959, 4294901760
        %961 = vmatpush1.msra.mxu0 %v960
        %962 = vmatprep.subr.mxu0 0.0
        %963 = vmatpush2.msra.mxu0 0.0
        %964 = vmatprep.subr.mxu0 0.0
        %965 = vmatpush2.msra.mxu0 0.0
        %966 = vmatprep.subr.mxu0 0.0
        %967 = vmatpush2.msra.mxu0 0.0
        %968 = vmatprep.subr.mxu0 0.0
        %969 = vmatpush2.msra.mxu0 0.0
        %970 = vmatprep.subr.mxu0 0.0
        %971 = vmatpush2.msra.mxu0 0.0
        %972 = vmatprep.subr.mxu0 0.0
        %973 = vmatpush2.msra.mxu0 0.0
        %974 = vmatprep.subr.mxu0 0.0
        %975 = vmatpush2.msra.mxu0 0.0
        %976 = vmatprep.subr.mxu0 0.0
        %977 = vmatpush2.msra.mxu0 0.0
        %978 = vmatprep.subr.mxu0 0.0
        %979 = vmatpush2.msra.mxu0 0.0
        %980 = vmatprep.subr.mxu0 0.0
        %981 = vmatpush2.msra.mxu0 0.0
        %982 = vmatprep.subr.mxu0 0.0
        %983 = vmatpush2.msra.mxu0 0.0
        %984 = vmatprep.subr.mxu0 0.0
        %985 = vmatpush2.msra.mxu0 0.0
        %986 = vmatprep.subr.mxu0 0.0
        %987 = vmatpush2.msra.mxu0 0.0
        %988 = vmatprep.subr.mxu0 0.0
        %989 = vmatpush2.msra.mxu0 0.0
        %990 = vmatprep.subr.mxu0 0.0
        %991 = vmatpush2.msra.mxu0 0.0
        %992 = vmatprep.subr.mxu0 0.0
        %993 = vmatpush2.msra.mxu0 0.0
        %994 = vmatprep.mubr.f32.mxu0 0.0
        %v995 = vand.u32 %v179, 4294901760
        %996 = vmatmul.mubr.f32.gmra.mxu0 %v995
        %v997 = vpop.f32.mrf.mxu0
        %v998 = vadd.f32 %v924, %v997
        %v999 = vpop.f32.mrf.mxu0
        %1000 = vdwg.mxu0
        %1001 = vmatprep.subr.mxu0 0.0
        %1002 = vmatpush1.msra.mxu0 0.0
        %1003 = vmatprep.subr.mxu0 0.0
        %1004 = vmatpush1.msra.mxu0 0.0
        %1005 = vmatprep.subr.mxu0 0.0
        %1006 = vmatpush1.msra.mxu0 0.0
        %1007 = vmatprep.subr.mxu0 0.0
        %1008 = vmatpush1.msra.mxu0 0.0
        %1009 = vmatprep.subr.mxu0 0.0
        %1010 = vmatpush1.msra.mxu0 0.0
        %1011 = vmatprep.subr.mxu0 0.0
        %1012 = vmatpush1.msra.mxu0 0.0
        %1013 = vmatprep.subr.mxu0 0.0
        %1014 = vmatpush1.msra.mxu0 0.0
        %1015 = vmatprep.subr.mxu0 0.0
        %1016 = vmatpush1.msra.mxu0 0.0
        %1017 = vmatprep.subr.mxu0 0.0
        %1018 = vmatpush1.msra.mxu0 0.0
        %1019 = vmatprep.subr.mxu0 0.0
        %1020 = vmatpush1.msra.mxu0 0.0
        %1021 = vmatprep.subr.mxu0 0.0
        %1022 = vmatpush1.msra.mxu0 0.0
        %1023 = vmatprep.subr.mxu0 0.0
        %1024 = vmatpush1.msra.mxu0 0.0
        %1025 = vmatprep.subr.mxu0 0.0
        %1026 = vmatpush1.msra.mxu0 0.0
        %1027 = vmatprep.subr.mxu0 0.0
        %1028 = vmatpush1.msra.mxu0 0.0
        %1029 = vmatprep.subr.mxu0 0.0
        %1030 = vmatpush1.msra.mxu0 0.0
        %1031 = vmatprep.subr.mxu0 0.0
        %v1032 = vand.u32 %v164, 4294901760
        %1033 = vmatpush1.msra.mxu0 %v1032
        %1034 = vmatprep.subr.mxu0 0.0
        %1035 = vmatpush2.msra.mxu0 0.0
        %1036 = vmatprep.subr.mxu0 0.0
        %1037 = vmatpush2.msra.mxu0 0.0
        %1038 = vmatprep.subr.mxu0 0.0
        %1039 = vmatpush2.msra.mxu0 0.0
        %1040 = vmatprep.subr.mxu0 0.0
        %1041 = vmatpush2.msra.mxu0 0.0
        %1042 = vmatprep.subr.mxu0 0.0
        %1043 = vmatpush2.msra.mxu0 0.0
        %1044 = vmatprep.subr.mxu0 0.0
        %1045 = vmatpush2.msra.mxu0 0.0
        %1046 = vmatprep.subr.mxu0 0.0
        %1047 = vmatpush2.msra.mxu0 0.0
        %1048 = vmatprep.subr.mxu0 0.0
        %1049 = vmatpush2.msra.mxu0 0.0
        %1050 = vmatprep.subr.mxu0 0.0
        %1051 = vmatpush2.msra.mxu0 0.0
        %1052 = vmatprep.subr.mxu0 0.0
        %1053 = vmatpush2.msra.mxu0 0.0
        %1054 = vmatprep.subr.mxu0 0.0
        %1055 = vmatpush2.msra.mxu0 0.0
        %1056 = vmatprep.subr.mxu0 0.0
        %1057 = vmatpush2.msra.mxu0 0.0
        %1058 = vmatprep.subr.mxu0 0.0
        %1059 = vmatpush2.msra.mxu0 0.0
        %1060 = vmatprep.subr.mxu0 0.0
        %1061 = vmatpush2.msra.mxu0 0.0
        %1062 = vmatprep.subr.mxu0 0.0
        %1063 = vmatpush2.msra.mxu0 0.0
        %1064 = vmatprep.subr.mxu0 0.0
        %1065 = vmatpush2.msra.mxu0 0.0
        %1066 = vmatprep.mubr.f32.mxu0 0.0
        %v1067 = vand.u32 %v179, 4294901760
        %1068 = vmatmul.mubr.f32.gmra.mxu0 %v1067
        %v1069 = vpop.f32.mrf.mxu0
        %v1070 = vadd.f32 %v998, %v1069
        %v1071 = vpop.f32.mrf.mxu0
        %1072 = vdwg.mxu0
        %v1073 = vmax.f32 %v624, %v1070
        %v1075 = vsel %vm177, %v168, 0
        %1077 = vmatprep.subr.mxu0 0.0
        %1078 = vmatpush1.msra.mxu0 0.0
        %1079 = vmatprep.subr.mxu0 0.0
        %1080 = vmatpush1.msra.mxu0 0.0
        %1081 = vmatprep.subr.mxu0 0.0
        %1082 = vmatpush1.msra.mxu0 0.0
        %1083 = vmatprep.subr.mxu0 0.0
        %1084 = vmatpush1.msra.mxu0 0.0
        %1085 = vmatprep.subr.mxu0 0.0
        %1086 = vmatpush1.msra.mxu0 0.0
        %1087 = vmatprep.subr.mxu0 0.0
        %1088 = vmatpush1.msra.mxu0 0.0
        %1089 = vmatprep.subr.mxu0 0.0
        %1090 = vmatpush1.msra.mxu0 0.0
        %1091 = vmatprep.subr.mxu0 0.0
        %1092 = vmatpush1.msra.mxu0 0.0
        %1093 = vmatprep.subr.mxu0 0.0
        %1094 = vmatpush1.msra.mxu0 0.0
        %1095 = vmatprep.subr.mxu0 0.0
        %1096 = vmatpush1.msra.mxu0 0.0
        %1097 = vmatprep.subr.mxu0 0.0
        %1098 = vmatpush1.msra.mxu0 0.0
        %1099 = vmatprep.subr.mxu0 0.0
        %1100 = vmatpush1.msra.mxu0 0.0
        %1101 = vmatprep.subr.mxu0 0.0
        %1102 = vmatpush1.msra.mxu0 0.0
        %1103 = vmatprep.subr.mxu0 0.0
        %1104 = vmatpush1.msra.mxu0 0.0
        %1105 = vmatprep.subr.mxu0 0.0
        %1106 = vmatpush1.msra.mxu0 0.0
        %1107 = vmatprep.subr.mxu0 0.0
        %v1108 = vand.u32 %v1073, 4294901760
        %1109 = vmatpush1.msra.mxu0 %v1108
        %1110 = vmatprep.subr.mxu0 0.0
        %1111 = vmatpush2.msra.mxu0 0.0
        %1112 = vmatprep.subr.mxu0 0.0
        %1113 = vmatpush2.msra.mxu0 0.0
        %1114 = vmatprep.subr.mxu0 0.0
        %1115 = vmatpush2.msra.mxu0 0.0
        %1116 = vmatprep.subr.mxu0 0.0
        %1117 = vmatpush2.msra.mxu0 0.0
        %1118 = vmatprep.subr.mxu0 0.0
        %1119 = vmatpush2.msra.mxu0 0.0
        %1120 = vmatprep.subr.mxu0 0.0
        %1121 = vmatpush2.msra.mxu0 0.0
        %1122 = vmatprep.subr.mxu0 0.0
        %1123 = vmatpush2.msra.mxu0 0.0
        %1124 = vmatprep.subr.mxu0 0.0
        %1125 = vmatpush2.msra.mxu0 0.0
        %1126 = vmatprep.subr.mxu0 0.0
        %1127 = vmatpush2.msra.mxu0 0.0
        %1128 = vmatprep.subr.mxu0 0.0
        %1129 = vmatpush2.msra.mxu0 0.0
        %1130 = vmatprep.subr.mxu0 0.0
        %1131 = vmatpush2.msra.mxu0 0.0
        %1132 = vmatprep.subr.mxu0 0.0
        %1133 = vmatpush2.msra.mxu0 0.0
        %1134 = vmatprep.subr.mxu0 0.0
        %1135 = vmatpush2.msra.mxu0 0.0
        %1136 = vmatprep.subr.mxu0 0.0
        %1137 = vmatpush2.msra.mxu0 0.0
        %1138 = vmatprep.subr.mxu0 0.0
        %1139 = vmatpush2.msra.mxu0 0.0
        %1140 = vmatprep.subr.mxu0 0.0
        %1141 = vmatpush2.msra.mxu0 0.0
        %1142 = vmatprep.mubr.f32.mxu0 0.0
        %v1143 = vand.u32 %v1075, 4294901760
        %v1144 = vsub.f32 %v1075, %v1143
        %v1145 = vand.u32 %v1144, 4294901760
        %v1146 = vsub.f32 %v1144, %v1145
        %v1147 = vand.u32 %v1146, 4294901760
        %1148 = vmatmul.mubr.f32.gmra.mxu0 %v1147
        %v1149 = vpop.f32.mrf.mxu0
        %v1150 = vadd.f32 0.0, %v1149
        %v1151 = vpop.f32.mrf.mxu0
        %1152 = vdwg.mxu0
        %1153 = vmatprep.subr.mxu0 0.0
        %1154 = vmatpush1.msra.mxu0 0.0
        %1155 = vmatprep.subr.mxu0 0.0
        %1156 = vmatpush1.msra.mxu0 0.0
        %1157 = vmatprep.subr.mxu0 0.0
        %1158 = vmatpush1.msra.mxu0 0.0
        %1159 = vmatprep.subr.mxu0 0.0
        %1160 = vmatpush1.msra.mxu0 0.0
        %1161 = vmatprep.subr.mxu0 0.0
        %1162 = vmatpush1.msra.mxu0 0.0
        %1163 = vmatprep.subr.mxu0 0.0
        %1164 = vmatpush1.msra.mxu0 0.0
        %1165 = vmatprep.subr.mxu0 0.0
        %1166 = vmatpush1.msra.mxu0 0.0
        %1167 = vmatprep.subr.mxu0 0.0
        %1168 = vmatpush1.msra.mxu0 0.0
        %1169 = vmatprep.subr.mxu0 0.0
        %1170 = vmatpush1.msra.mxu0 0.0
        %1171 = vmatprep.subr.mxu0 0.0
        %1172 = vmatpush1.msra.mxu0 0.0
        %1173 = vmatprep.subr.mxu0 0.0
        %1174 = vmatpush1.msra.mxu0 0.0
        %1175 = vmatprep.subr.mxu0 0.0
        %1176 = vmatpush1.msra.mxu0 0.0
        %1177 = vmatprep.subr.mxu0 0.0
        %1178 = vmatpush1.msra.mxu0 0.0
        %1179 = vmatprep.subr.mxu0 0.0
        %1180 = vmatpush1.msra.mxu0 0.0
        %1181 = vmatprep.subr.mxu0 0.0
        %1182 = vmatpush1.msra.mxu0 0.0
        %1183 = vmatprep.subr.mxu0 0.0
        %v1184 = vand.u32 %v1073, 4294901760
        %v1185 = vsub.f32 %v1073, %v1184
        %v1186 = vand.u32 %v1185, 4294901760
        %v1187 = vsub.f32 %v1185, %v1186
        %v1188 = vand.u32 %v1187, 4294901760
        %1189 = vmatpush1.msra.mxu0 %v1188
        %1190 = vmatprep.subr.mxu0 0.0
        %1191 = vmatpush2.msra.mxu0 0.0
        %1192 = vmatprep.subr.mxu0 0.0
        %1193 = vmatpush2.msra.mxu0 0.0
        %1194 = vmatprep.subr.mxu0 0.0
        %1195 = vmatpush2.msra.mxu0 0.0
        %1196 = vmatprep.subr.mxu0 0.0
        %1197 = vmatpush2.msra.mxu0 0.0
        %1198 = vmatprep.subr.mxu0 0.0
        %1199 = vmatpush2.msra.mxu0 0.0
        %1200 = vmatprep.subr.mxu0 0.0
        %1201 = vmatpush2.msra.mxu0 0.0
        %1202 = vmatprep.subr.mxu0 0.0
        %1203 = vmatpush2.msra.mxu0 0.0
        %1204 = vmatprep.subr.mxu0 0.0
        %1205 = vmatpush2.msra.mxu0 0.0
        %1206 = vmatprep.subr.mxu0 0.0
        %1207 = vmatpush2.msra.mxu0 0.0
        %1208 = vmatprep.subr.mxu0 0.0
        %1209 = vmatpush2.msra.mxu0 0.0
        %1210 = vmatprep.subr.mxu0 0.0
        %1211 = vmatpush2.msra.mxu0 0.0
        %1212 = vmatprep.subr.mxu0 0.0
        %1213 = vmatpush2.msra.mxu0 0.0
        %1214 = vmatprep.subr.mxu0 0.0
        %1215 = vmatpush2.msra.mxu0 0.0
        %1216 = vmatprep.subr.mxu0 0.0
        %1217 = vmatpush2.msra.mxu0 0.0
        %1218 = vmatprep.subr.mxu0 0.0
        %1219 = vmatpush2.msra.mxu0 0.0
        %1220 = vmatprep.subr.mxu0 0.0
        %1221 = vmatpush2.msra.mxu0 0.0
        %1222 = vmatprep.mubr.f32.mxu0 0.0
        %v1223 = vand.u32 %v1075, 4294901760
        %1224 = vmatmul.mubr.f32.gmra.mxu0 %v1223
        %v1225 = vpop.f32.mrf.mxu0
        %v1226 = vadd.f32 %v1150, %v1225
        %v1227 = vpop.f32.mrf.mxu0
        %1228 = vdwg.mxu0
        %1229 = vmatprep.subr.mxu0 0.0
        %1230 = vmatpush1.msra.mxu0 0.0
        %1231 = vmatprep.subr.mxu0 0.0
        %1232 = vmatpush1.msra.mxu0 0.0
        %1233 = vmatprep.subr.mxu0 0.0
        %1234 = vmatpush1.msra.mxu0 0.0
        %1235 = vmatprep.subr.mxu0 0.0
        %1236 = vmatpush1.msra.mxu0 0.0
        %1237 = vmatprep.subr.mxu0 0.0
        %1238 = vmatpush1.msra.mxu0 0.0
        %1239 = vmatprep.subr.mxu0 0.0
        %1240 = vmatpush1.msra.mxu0 0.0
        %1241 = vmatprep.subr.mxu0 0.0
        %1242 = vmatpush1.msra.mxu0 0.0
        %1243 = vmatprep.subr.mxu0 0.0
        %1244 = vmatpush1.msra.mxu0 0.0
        %1245 = vmatprep.subr.mxu0 0.0
        %1246 = vmatpush1.msra.mxu0 0.0
        %1247 = vmatprep.subr.mxu0 0.0
        %1248 = vmatpush1.msra.mxu0 0.0
        %1249 = vmatprep.subr.mxu0 0.0
        %1250 = vmatpush1.msra.mxu0 0.0
        %1251 = vmatprep.subr.mxu0 0.0
        %1252 = vmatpush1.msra.mxu0 0.0
        %1253 = vmatprep.subr.mxu0 0.0
        %1254 = vmatpush1.msra.mxu0 0.0
        %1255 = vmatprep.subr.mxu0 0.0
        %1256 = vmatpush1.msra.mxu0 0.0
        %1257 = vmatprep.subr.mxu0 0.0
        %1258 = vmatpush1.msra.mxu0 0.0
        %1259 = vmatprep.subr.mxu0 0.0
        %v1260 = vand.u32 %v1073, 4294901760
        %v1261 = vsub.f32 %v1073, %v1260
        %1262 = vmatpush1.msra.mxu0 %v1261
        %1263 = vmatprep.subr.mxu0 0.0
        %1264 = vmatpush2.msra.mxu0 0.0
        %1265 = vmatprep.subr.mxu0 0.0
        %1266 = vmatpush2.msra.mxu0 0.0
        %1267 = vmatprep.subr.mxu0 0.0
        %1268 = vmatpush2.msra.mxu0 0.0
        %1269 = vmatprep.subr.mxu0 0.0
        %1270 = vmatpush2.msra.mxu0 0.0
        %1271 = vmatprep.subr.mxu0 0.0
        %1272 = vmatpush2.msra.mxu0 0.0
        %1273 = vmatprep.subr.mxu0 0.0
        %1274 = vmatpush2.msra.mxu0 0.0
        %1275 = vmatprep.subr.mxu0 0.0
        %1276 = vmatpush2.msra.mxu0 0.0
        %1277 = vmatprep.subr.mxu0 0.0
        %1278 = vmatpush2.msra.mxu0 0.0
        %1279 = vmatprep.subr.mxu0 0.0
        %1280 = vmatpush2.msra.mxu0 0.0
        %1281 = vmatprep.subr.mxu0 0.0
        %1282 = vmatpush2.msra.mxu0 0.0
        %1283 = vmatprep.subr.mxu0 0.0
        %1284 = vmatpush2.msra.mxu0 0.0
        %1285 = vmatprep.subr.mxu0 0.0
        %1286 = vmatpush2.msra.mxu0 0.0
        %1287 = vmatprep.subr.mxu0 0.0
        %1288 = vmatpush2.msra.mxu0 0.0
        %1289 = vmatprep.subr.mxu0 0.0
        %1290 = vmatpush2.msra.mxu0 0.0
        %1291 = vmatprep.subr.mxu0 0.0
        %1292 = vmatpush2.msra.mxu0 0.0
        %1293 = vmatprep.subr.mxu0 0.0
        %1294 = vmatpush2.msra.mxu0 0.0
        %1295 = vmatprep.mubr.f32.mxu0 0.0
        %v1296 = vand.u32 %v1075, 4294901760
        %v1297 = vsub.f32 %v1075, %v1296
        %1298 = vmatmul.mubr.f32.gmra.mxu0 %v1297
        %v1299 = vpop.f32.mrf.mxu0
        %v1300 = vadd.f32 %v1226, %v1299
        %v1301 = vpop.f32.mrf.mxu0
        %1302 = vdwg.mxu0
        %1303 = vmatprep.subr.mxu0 0.0
        %1304 = vmatpush1.msra.mxu0 0.0
        %1305 = vmatprep.subr.mxu0 0.0
        %1306 = vmatpush1.msra.mxu0 0.0
        %1307 = vmatprep.subr.mxu0 0.0
        %1308 = vmatpush1.msra.mxu0 0.0
        %1309 = vmatprep.subr.mxu0 0.0
        %1310 = vmatpush1.msra.mxu0 0.0
        %1311 = vmatprep.subr.mxu0 0.0
        %1312 = vmatpush1.msra.mxu0 0.0
        %1313 = vmatprep.subr.mxu0 0.0
        %1314 = vmatpush1.msra.mxu0 0.0
        %1315 = vmatprep.subr.mxu0 0.0
        %1316 = vmatpush1.msra.mxu0 0.0
        %1317 = vmatprep.subr.mxu0 0.0
        %1318 = vmatpush1.msra.mxu0 0.0
        %1319 = vmatprep.subr.mxu0 0.0
        %1320 = vmatpush1.msra.mxu0 0.0
        %1321 = vmatprep.subr.mxu0 0.0
        %1322 = vmatpush1.msra.mxu0 0.0
        %1323 = vmatprep.subr.mxu0 0.0
        %1324 = vmatpush1.msra.mxu0 0.0
        %1325 = vmatprep.subr.mxu0 0.0
        %1326 = vmatpush1.msra.mxu0 0.0
        %1327 = vmatprep.subr.mxu0 0.0
        %1328 = vmatpush1.msra.mxu0 0.0
        %1329 = vmatprep.subr.mxu0 0.0
        %1330 = vmatpush1.msra.mxu0 0.0
        %1331 = vmatprep.subr.mxu0 0.0
        %1332 = vmatpush1.msra.mxu0 0.0
        %1333 = vmatprep.subr.mxu0 0.0
        %v1334 = vand.u32 %v1073, 4294901760
        %1335 = vmatpush1.msra.mxu0 %v1334
        %1336 = vmatprep.subr.mxu0 0.0
        %1337 = vmatpush2.msra.mxu0 0.0
        %1338 = vmatprep.subr.mxu0 0.0
        %1339 = vmatpush2.msra.mxu0 0.0
        %1340 = vmatprep.subr.mxu0 0.0
        %1341 = vmatpush2.msra.mxu0 0.0
        %1342 = vmatprep.subr.mxu0 0.0
        %1343 = vmatpush2.msra.mxu0 0.0
        %1344 = vmatprep.subr.mxu0 0.0
        %1345 = vmatpush2.msra.mxu0 0.0
        %1346 = vmatprep.subr.mxu0 0.0
        %1347 = vmatpush2.msra.mxu0 0.0
        %1348 = vmatprep.subr.mxu0 0.0
        %1349 = vmatpush2.msra.mxu0 0.0
        %1350 = vmatprep.subr.mxu0 0.0
        %1351 = vmatpush2.msra.mxu0 0.0
        %1352 = vmatprep.subr.mxu0 0.0
        %1353 = vmatpush2.msra.mxu0 0.0
        %1354 = vmatprep.subr.mxu0 0.0
        %1355 = vmatpush2.msra.mxu0 0.0
        %1356 = vmatprep.subr.mxu0 0.0
        %1357 = vmatpush2.msra.mxu0 0.0
        %1358 = vmatprep.subr.mxu0 0.0
        %1359 = vmatpush2.msra.mxu0 0.0
        %1360 = vmatprep.subr.mxu0 0.0
        %1361 = vmatpush2.msra.mxu0 0.0
        %1362 = vmatprep.subr.mxu0 0.0
        %1363 = vmatpush2.msra.mxu0 0.0
        %1364 = vmatprep.subr.mxu0 0.0
        %1365 = vmatpush2.msra.mxu0 0.0
        %1366 = vmatprep.subr.mxu0 0.0
        %1367 = vmatpush2.msra.mxu0 0.0
        %1368 = vmatprep.mubr.f32.mxu0 0.0
        %v1369 = vand.u32 %v1075, 4294901760
        %v1370 = vsub.f32 %v1075, %v1369
        %v1371 = vand.u32 %v1370, 4294901760
        %1372 = vmatmul.mubr.f32.gmra.mxu0 %v1371
        %v1373 = vpop.f32.mrf.mxu0
        %v1374 = vadd.f32 %v1300, %v1373
        %v1375 = vpop.f32.mrf.mxu0
        %1376 = vdwg.mxu0
        %1377 = vmatprep.subr.mxu0 0.0
        %1378 = vmatpush1.msra.mxu0 0.0
        %1379 = vmatprep.subr.mxu0 0.0
        %1380 = vmatpush1.msra.mxu0 0.0
        %1381 = vmatprep.subr.mxu0 0.0
        %1382 = vmatpush1.msra.mxu0 0.0
        %1383 = vmatprep.subr.mxu0 0.0
        %1384 = vmatpush1.msra.mxu0 0.0
        %1385 = vmatprep.subr.mxu0 0.0
        %1386 = vmatpush1.msra.mxu0 0.0
        %1387 = vmatprep.subr.mxu0 0.0
        %1388 = vmatpush1.msra.mxu0 0.0
        %1389 = vmatprep.subr.mxu0 0.0
        %1390 = vmatpush1.msra.mxu0 0.0
        %1391 = vmatprep.subr.mxu0 0.0
        %1392 = vmatpush1.msra.mxu0 0.0
        %1393 = vmatprep.subr.mxu0 0.0
        %1394 = vmatpush1.msra.mxu0 0.0
        %1395 = vmatprep.subr.mxu0 0.0
        %1396 = vmatpush1.msra.mxu0 0.0
        %1397 = vmatprep.subr.mxu0 0.0
        %1398 = vmatpush1.msra.mxu0 0.0
        %1399 = vmatprep.subr.mxu0 0.0
        %1400 = vmatpush1.msra.mxu0 0.0
        %1401 = vmatprep.subr.mxu0 0.0
        %1402 = vmatpush1.msra.mxu0 0.0
        %1403 = vmatprep.subr.mxu0 0.0
        %1404 = vmatpush1.msra.mxu0 0.0
        %1405 = vmatprep.subr.mxu0 0.0
        %1406 = vmatpush1.msra.mxu0 0.0
        %1407 = vmatprep.subr.mxu0 0.0
        %v1408 = vand.u32 %v1073, 4294901760
        %v1409 = vsub.f32 %v1073, %v1408
        %v1410 = vand.u32 %v1409, 4294901760
        %1411 = vmatpush1.msra.mxu0 %v1410
        %1412 = vmatprep.subr.mxu0 0.0
        %1413 = vmatpush2.msra.mxu0 0.0
        %1414 = vmatprep.subr.mxu0 0.0
        %1415 = vmatpush2.msra.mxu0 0.0
        %1416 = vmatprep.subr.mxu0 0.0
        %1417 = vmatpush2.msra.mxu0 0.0
        %1418 = vmatprep.subr.mxu0 0.0
        %1419 = vmatpush2.msra.mxu0 0.0
        %1420 = vmatprep.subr.mxu0 0.0
        %1421 = vmatpush2.msra.mxu0 0.0
        %1422 = vmatprep.subr.mxu0 0.0
        %1423 = vmatpush2.msra.mxu0 0.0
        %1424 = vmatprep.subr.mxu0 0.0
        %1425 = vmatpush2.msra.mxu0 0.0
        %1426 = vmatprep.subr.mxu0 0.0
        %1427 = vmatpush2.msra.mxu0 0.0
        %1428 = vmatprep.subr.mxu0 0.0
        %1429 = vmatpush2.msra.mxu0 0.0
        %1430 = vmatprep.subr.mxu0 0.0
        %1431 = vmatpush2.msra.mxu0 0.0
        %1432 = vmatprep.subr.mxu0 0.0
        %1433 = vmatpush2.msra.mxu0 0.0
        %1434 = vmatprep.subr.mxu0 0.0
        %1435 = vmatpush2.msra.mxu0 0.0
        %1436 = vmatprep.subr.mxu0 0.0
        %1437 = vmatpush2.msra.mxu0 0.0
        %1438 = vmatprep.subr.mxu0 0.0
        %1439 = vmatpush2.msra.mxu0 0.0
        %1440 = vmatprep.subr.mxu0 0.0
        %1441 = vmatpush2.msra.mxu0 0.0
        %1442 = vmatprep.subr.mxu0 0.0
        %1443 = vmatpush2.msra.mxu0 0.0
        %1444 = vmatprep.mubr.f32.mxu0 0.0
        %v1445 = vand.u32 %v1075, 4294901760
        %1446 = vmatmul.mubr.f32.gmra.mxu0 %v1445
        %v1447 = vpop.f32.mrf.mxu0
        %v1448 = vadd.f32 %v1374, %v1447
        %v1449 = vpop.f32.mrf.mxu0
        %1450 = vdwg.mxu0
        %1451 = vmatprep.subr.mxu0 0.0
        %1452 = vmatpush1.msra.mxu0 0.0
        %1453 = vmatprep.subr.mxu0 0.0
        %1454 = vmatpush1.msra.mxu0 0.0
        %1455 = vmatprep.subr.mxu0 0.0
        %1456 = vmatpush1.msra.mxu0 0.0
        %1457 = vmatprep.subr.mxu0 0.0
        %1458 = vmatpush1.msra.mxu0 0.0
        %1459 = vmatprep.subr.mxu0 0.0
        %1460 = vmatpush1.msra.mxu0 0.0
        %1461 = vmatprep.subr.mxu0 0.0
        %1462 = vmatpush1.msra.mxu0 0.0
        %1463 = vmatprep.subr.mxu0 0.0
        %1464 = vmatpush1.msra.mxu0 0.0
        %1465 = vmatprep.subr.mxu0 0.0
        %1466 = vmatpush1.msra.mxu0 0.0
        %1467 = vmatprep.subr.mxu0 0.0
        %1468 = vmatpush1.msra.mxu0 0.0
        %1469 = vmatprep.subr.mxu0 0.0
        %1470 = vmatpush1.msra.mxu0 0.0
        %1471 = vmatprep.subr.mxu0 0.0
        %1472 = vmatpush1.msra.mxu0 0.0
        %1473 = vmatprep.subr.mxu0 0.0
        %1474 = vmatpush1.msra.mxu0 0.0
        %1475 = vmatprep.subr.mxu0 0.0
        %1476 = vmatpush1.msra.mxu0 0.0
        %1477 = vmatprep.subr.mxu0 0.0
        %1478 = vmatpush1.msra.mxu0 0.0
        %1479 = vmatprep.subr.mxu0 0.0
        %1480 = vmatpush1.msra.mxu0 0.0
        %1481 = vmatprep.subr.mxu0 0.0
        %v1482 = vand.u32 %v1073, 4294901760
        %1483 = vmatpush1.msra.mxu0 %v1482
        %1484 = vmatprep.subr.mxu0 0.0
        %1485 = vmatpush2.msra.mxu0 0.0
        %1486 = vmatprep.subr.mxu0 0.0
        %1487 = vmatpush2.msra.mxu0 0.0
        %1488 = vmatprep.subr.mxu0 0.0
        %1489 = vmatpush2.msra.mxu0 0.0
        %1490 = vmatprep.subr.mxu0 0.0
        %1491 = vmatpush2.msra.mxu0 0.0
        %1492 = vmatprep.subr.mxu0 0.0
        %1493 = vmatpush2.msra.mxu0 0.0
        %1494 = vmatprep.subr.mxu0 0.0
        %1495 = vmatpush2.msra.mxu0 0.0
        %1496 = vmatprep.subr.mxu0 0.0
        %1497 = vmatpush2.msra.mxu0 0.0
        %1498 = vmatprep.subr.mxu0 0.0
        %1499 = vmatpush2.msra.mxu0 0.0
        %1500 = vmatprep.subr.mxu0 0.0
        %1501 = vmatpush2.msra.mxu0 0.0
        %1502 = vmatprep.subr.mxu0 0.0
        %1503 = vmatpush2.msra.mxu0 0.0
        %1504 = vmatprep.subr.mxu0 0.0
        %1505 = vmatpush2.msra.mxu0 0.0
        %1506 = vmatprep.subr.mxu0 0.0
        %1507 = vmatpush2.msra.mxu0 0.0
        %1508 = vmatprep.subr.mxu0 0.0
        %1509 = vmatpush2.msra.mxu0 0.0
        %1510 = vmatprep.subr.mxu0 0.0
        %1511 = vmatpush2.msra.mxu0 0.0
        %1512 = vmatprep.subr.mxu0 0.0
        %1513 = vmatpush2.msra.mxu0 0.0
        %1514 = vmatprep.subr.mxu0 0.0
        %1515 = vmatpush2.msra.mxu0 0.0
        %1516 = vmatprep.mubr.f32.mxu0 0.0
        %v1517 = vand.u32 %v1075, 4294901760
        %1518 = vmatmul.mubr.f32.gmra.mxu0 %v1517
        %v1519 = vpop.f32.mrf.mxu0
        %v1520 = vadd.f32 %v1448, %v1519
        %v1521 = vpop.f32.mrf.mxu0
        %1522 = vdwg.mxu0
        %v1524 = vsel %vm177, %v172, 0
        %1526 = vmatprep.subr.mxu0 0.0
        %1527 = vmatpush1.msra.mxu0 0.0
        %1528 = vmatprep.subr.mxu0 0.0
        %1529 = vmatpush1.msra.mxu0 0.0
        %1530 = vmatprep.subr.mxu0 0.0
        %1531 = vmatpush1.msra.mxu0 0.0
        %1532 = vmatprep.subr.mxu0 0.0
        %1533 = vmatpush1.msra.mxu0 0.0
        %1534 = vmatprep.subr.mxu0 0.0
        %1535 = vmatpush1.msra.mxu0 0.0
        %1536 = vmatprep.subr.mxu0 0.0
        %1537 = vmatpush1.msra.mxu0 0.0
        %1538 = vmatprep.subr.mxu0 0.0
        %1539 = vmatpush1.msra.mxu0 0.0
        %1540 = vmatprep.subr.mxu0 0.0
        %1541 = vmatpush1.msra.mxu0 0.0
        %1542 = vmatprep.subr.mxu0 0.0
        %1543 = vmatpush1.msra.mxu0 0.0
        %1544 = vmatprep.subr.mxu0 0.0
        %1545 = vmatpush1.msra.mxu0 0.0
        %1546 = vmatprep.subr.mxu0 0.0
        %1547 = vmatpush1.msra.mxu0 0.0
        %1548 = vmatprep.subr.mxu0 0.0
        %1549 = vmatpush1.msra.mxu0 0.0
        %1550 = vmatprep.subr.mxu0 0.0
        %1551 = vmatpush1.msra.mxu0 0.0
        %1552 = vmatprep.subr.mxu0 0.0
        %1553 = vmatpush1.msra.mxu0 0.0
        %1554 = vmatprep.subr.mxu0 0.0
        %1555 = vmatpush1.msra.mxu0 0.0
        %1556 = vmatprep.subr.mxu0 0.0
        %v1557 = vand.u32 %v1073, 4294901760
        %1558 = vmatpush1.msra.mxu0 %v1557
        %1559 = vmatprep.subr.mxu0 0.0
        %1560 = vmatpush2.msra.mxu0 0.0
        %1561 = vmatprep.subr.mxu0 0.0
        %1562 = vmatpush2.msra.mxu0 0.0
        %1563 = vmatprep.subr.mxu0 0.0
        %1564 = vmatpush2.msra.mxu0 0.0
        %1565 = vmatprep.subr.mxu0 0.0
        %1566 = vmatpush2.msra.mxu0 0.0
        %1567 = vmatprep.subr.mxu0 0.0
        %1568 = vmatpush2.msra.mxu0 0.0
        %1569 = vmatprep.subr.mxu0 0.0
        %1570 = vmatpush2.msra.mxu0 0.0
        %1571 = vmatprep.subr.mxu0 0.0
        %1572 = vmatpush2.msra.mxu0 0.0
        %1573 = vmatprep.subr.mxu0 0.0
        %1574 = vmatpush2.msra.mxu0 0.0
        %1575 = vmatprep.subr.mxu0 0.0
        %1576 = vmatpush2.msra.mxu0 0.0
        %1577 = vmatprep.subr.mxu0 0.0
        %1578 = vmatpush2.msra.mxu0 0.0
        %1579 = vmatprep.subr.mxu0 0.0
        %1580 = vmatpush2.msra.mxu0 0.0
        %1581 = vmatprep.subr.mxu0 0.0
        %1582 = vmatpush2.msra.mxu0 0.0
        %1583 = vmatprep.subr.mxu0 0.0
        %1584 = vmatpush2.msra.mxu0 0.0
        %1585 = vmatprep.subr.mxu0 0.0
        %1586 = vmatpush2.msra.mxu0 0.0
        %1587 = vmatprep.subr.mxu0 0.0
        %1588 = vmatpush2.msra.mxu0 0.0
        %1589 = vmatprep.subr.mxu0 0.0
        %1590 = vmatpush2.msra.mxu0 0.0
        %1591 = vmatprep.mubr.f32.mxu0 0.0
        %v1592 = vand.u32 %v1524, 4294901760
        %v1593 = vsub.f32 %v1524, %v1592
        %v1594 = vand.u32 %v1593, 4294901760
        %v1595 = vsub.f32 %v1593, %v1594
        %v1596 = vand.u32 %v1595, 4294901760
        %1597 = vmatmul.mubr.f32.gmra.mxu0 %v1596
        %v1598 = vpop.f32.mrf.mxu0
        %v1599 = vadd.f32 0.0, %v1598
        %v1600 = vpop.f32.mrf.mxu0
        %1601 = vdwg.mxu0
        %1602 = vmatprep.subr.mxu0 0.0
        %1603 = vmatpush1.msra.mxu0 0.0
        %1604 = vmatprep.subr.mxu0 0.0
        %1605 = vmatpush1.msra.mxu0 0.0
        %1606 = vmatprep.subr.mxu0 0.0
        %1607 = vmatpush1.msra.mxu0 0.0
        %1608 = vmatprep.subr.mxu0 0.0
        %1609 = vmatpush1.msra.mxu0 0.0
        %1610 = vmatprep.subr.mxu0 0.0
        %1611 = vmatpush1.msra.mxu0 0.0
        %1612 = vmatprep.subr.mxu0 0.0
        %1613 = vmatpush1.msra.mxu0 0.0
        %1614 = vmatprep.subr.mxu0 0.0
        %1615 = vmatpush1.msra.mxu0 0.0
        %1616 = vmatprep.subr.mxu0 0.0
        %1617 = vmatpush1.msra.mxu0 0.0
        %1618 = vmatprep.subr.mxu0 0.0
        %1619 = vmatpush1.msra.mxu0 0.0
        %1620 = vmatprep.subr.mxu0 0.0
        %1621 = vmatpush1.msra.mxu0 0.0
        %1622 = vmatprep.subr.mxu0 0.0
        %1623 = vmatpush1.msra.mxu0 0.0
        %1624 = vmatprep.subr.mxu0 0.0
        %1625 = vmatpush1.msra.mxu0 0.0
        %1626 = vmatprep.subr.mxu0 0.0
        %1627 = vmatpush1.msra.mxu0 0.0
        %1628 = vmatprep.subr.mxu0 0.0
        %1629 = vmatpush1.msra.mxu0 0.0
        %1630 = vmatprep.subr.mxu0 0.0
        %1631 = vmatpush1.msra.mxu0 0.0
        %1632 = vmatprep.subr.mxu0 0.0
        %v1633 = vand.u32 %v1073, 4294901760
        %v1634 = vsub.f32 %v1073, %v1633
        %v1635 = vand.u32 %v1634, 4294901760
        %v1636 = vsub.f32 %v1634, %v1635
        %v1637 = vand.u32 %v1636, 4294901760
        %1638 = vmatpush1.msra.mxu0 %v1637
        %1639 = vmatprep.subr.mxu0 0.0
        %1640 = vmatpush2.msra.mxu0 0.0
        %1641 = vmatprep.subr.mxu0 0.0
        %1642 = vmatpush2.msra.mxu0 0.0
        %1643 = vmatprep.subr.mxu0 0.0
        %1644 = vmatpush2.msra.mxu0 0.0
        %1645 = vmatprep.subr.mxu0 0.0
        %1646 = vmatpush2.msra.mxu0 0.0
        %1647 = vmatprep.subr.mxu0 0.0
        %1648 = vmatpush2.msra.mxu0 0.0
        %1649 = vmatprep.subr.mxu0 0.0
        %1650 = vmatpush2.msra.mxu0 0.0
        %1651 = vmatprep.subr.mxu0 0.0
        %1652 = vmatpush2.msra.mxu0 0.0
        %1653 = vmatprep.subr.mxu0 0.0
        %1654 = vmatpush2.msra.mxu0 0.0
        %1655 = vmatprep.subr.mxu0 0.0
        %1656 = vmatpush2.msra.mxu0 0.0
        %1657 = vmatprep.subr.mxu0 0.0
        %1658 = vmatpush2.msra.mxu0 0.0
        %1659 = vmatprep.subr.mxu0 0.0
        %1660 = vmatpush2.msra.mxu0 0.0
        %1661 = vmatprep.subr.mxu0 0.0
        %1662 = vmatpush2.msra.mxu0 0.0
        %1663 = vmatprep.subr.mxu0 0.0
        %1664 = vmatpush2.msra.mxu0 0.0
        %1665 = vmatprep.subr.mxu0 0.0
        %1666 = vmatpush2.msra.mxu0 0.0
        %1667 = vmatprep.subr.mxu0 0.0
        %1668 = vmatpush2.msra.mxu0 0.0
        %1669 = vmatprep.subr.mxu0 0.0
        %1670 = vmatpush2.msra.mxu0 0.0
        %1671 = vmatprep.mubr.f32.mxu0 0.0
        %v1672 = vand.u32 %v1524, 4294901760
        %1673 = vmatmul.mubr.f32.gmra.mxu0 %v1672
        %v1674 = vpop.f32.mrf.mxu0
        %v1675 = vadd.f32 %v1599, %v1674
        %v1676 = vpop.f32.mrf.mxu0
        %1677 = vdwg.mxu0
        %1678 = vmatprep.subr.mxu0 0.0
        %1679 = vmatpush1.msra.mxu0 0.0
        %1680 = vmatprep.subr.mxu0 0.0
        %1681 = vmatpush1.msra.mxu0 0.0
        %1682 = vmatprep.subr.mxu0 0.0
        %1683 = vmatpush1.msra.mxu0 0.0
        %1684 = vmatprep.subr.mxu0 0.0
        %1685 = vmatpush1.msra.mxu0 0.0
        %1686 = vmatprep.subr.mxu0 0.0
        %1687 = vmatpush1.msra.mxu0 0.0
        %1688 = vmatprep.subr.mxu0 0.0
        %1689 = vmatpush1.msra.mxu0 0.0
        %1690 = vmatprep.subr.mxu0 0.0
        %1691 = vmatpush1.msra.mxu0 0.0
        %1692 = vmatprep.subr.mxu0 0.0
        %1693 = vmatpush1.msra.mxu0 0.0
        %1694 = vmatprep.subr.mxu0 0.0
        %1695 = vmatpush1.msra.mxu0 0.0
        %1696 = vmatprep.subr.mxu0 0.0
        %1697 = vmatpush1.msra.mxu0 0.0
        %1698 = vmatprep.subr.mxu0 0.0
        %1699 = vmatpush1.msra.mxu0 0.0
        %1700 = vmatprep.subr.mxu0 0.0
        %1701 = vmatpush1.msra.mxu0 0.0
        %1702 = vmatprep.subr.mxu0 0.0
        %1703 = vmatpush1.msra.mxu0 0.0
        %1704 = vmatprep.subr.mxu0 0.0
        %1705 = vmatpush1.msra.mxu0 0.0
        %1706 = vmatprep.subr.mxu0 0.0
        %1707 = vmatpush1.msra.mxu0 0.0
        %1708 = vmatprep.subr.mxu0 0.0
        %v1709 = vand.u32 %v1073, 4294901760
        %v1710 = vsub.f32 %v1073, %v1709
        %1711 = vmatpush1.msra.mxu0 %v1710
        %1712 = vmatprep.subr.mxu0 0.0
        %1713 = vmatpush2.msra.mxu0 0.0
        %1714 = vmatprep.subr.mxu0 0.0
        %1715 = vmatpush2.msra.mxu0 0.0
        %1716 = vmatprep.subr.mxu0 0.0
        %1717 = vmatpush2.msra.mxu0 0.0
        %1718 = vmatprep.subr.mxu0 0.0
        %1719 = vmatpush2.msra.mxu0 0.0
        %1720 = vmatprep.subr.mxu0 0.0
        %1721 = vmatpush2.msra.mxu0 0.0
        %1722 = vmatprep.subr.mxu0 0.0
        %1723 = vmatpush2.msra.mxu0 0.0
        %1724 = vmatprep.subr.mxu0 0.0
        %1725 = vmatpush2.msra.mxu0 0.0
        %1726 = vmatprep.subr.mxu0 0.0
        %1727 = vmatpush2.msra.mxu0 0.0
        %1728 = vmatprep.subr.mxu0 0.0
        %1729 = vmatpush2.msra.mxu0 0.0
        %1730 = vmatprep.subr.mxu0 0.0
        %1731 = vmatpush2.msra.mxu0 0.0
        %1732 = vmatprep.subr.mxu0 0.0
        %1733 = vmatpush2.msra.mxu0 0.0
        %1734 = vmatprep.subr.mxu0 0.0
        %1735 = vmatpush2.msra.mxu0 0.0
        %1736 = vmatprep.subr.mxu0 0.0
        %1737 = vmatpush2.msra.mxu0 0.0
        %1738 = vmatprep.subr.mxu0 0.0
        %1739 = vmatpush2.msra.mxu0 0.0
        %1740 = vmatprep.subr.mxu0 0.0
        %1741 = vmatpush2.msra.mxu0 0.0
        %1742 = vmatprep.subr.mxu0 0.0
        %1743 = vmatpush2.msra.mxu0 0.0
        %1744 = vmatprep.mubr.f32.mxu0 0.0
        %v1745 = vand.u32 %v1524, 4294901760
        %v1746 = vsub.f32 %v1524, %v1745
        %1747 = vmatmul.mubr.f32.gmra.mxu0 %v1746
        %v1748 = vpop.f32.mrf.mxu0
        %v1749 = vadd.f32 %v1675, %v1748
        %v1750 = vpop.f32.mrf.mxu0
        %1751 = vdwg.mxu0
        %1752 = vmatprep.subr.mxu0 0.0
        %1753 = vmatpush1.msra.mxu0 0.0
        %1754 = vmatprep.subr.mxu0 0.0
        %1755 = vmatpush1.msra.mxu0 0.0
        %1756 = vmatprep.subr.mxu0 0.0
        %1757 = vmatpush1.msra.mxu0 0.0
        %1758 = vmatprep.subr.mxu0 0.0
        %1759 = vmatpush1.msra.mxu0 0.0
        %1760 = vmatprep.subr.mxu0 0.0
        %1761 = vmatpush1.msra.mxu0 0.0
        %1762 = vmatprep.subr.mxu0 0.0
        %1763 = vmatpush1.msra.mxu0 0.0
        %1764 = vmatprep.subr.mxu0 0.0
        %1765 = vmatpush1.msra.mxu0 0.0
        %1766 = vmatprep.subr.mxu0 0.0
        %1767 = vmatpush1.msra.mxu0 0.0
        %1768 = vmatprep.subr.mxu0 0.0
        %1769 = vmatpush1.msra.mxu0 0.0
        %1770 = vmatprep.subr.mxu0 0.0
        %1771 = vmatpush1.msra.mxu0 0.0
        %1772 = vmatprep.subr.mxu0 0.0
        %1773 = vmatpush1.msra.mxu0 0.0
        %1774 = vmatprep.subr.mxu0 0.0
        %1775 = vmatpush1.msra.mxu0 0.0
        %1776 = vmatprep.subr.mxu0 0.0
        %1777 = vmatpush1.msra.mxu0 0.0
        %1778 = vmatprep.subr.mxu0 0.0
        %1779 = vmatpush1.msra.mxu0 0.0
        %1780 = vmatprep.subr.mxu0 0.0
        %1781 = vmatpush1.msra.mxu0 0.0
        %1782 = vmatprep.subr.mxu0 0.0
        %v1783 = vand.u32 %v1073, 4294901760
        %1784 = vmatpush1.msra.mxu0 %v1783
        %1785 = vmatprep.subr.mxu0 0.0
        %1786 = vmatpush2.msra.mxu0 0.0
        %1787 = vmatprep.subr.mxu0 0.0
        %1788 = vmatpush2.msra.mxu0 0.0
        %1789 = vmatprep.subr.mxu0 0.0
        %1790 = vmatpush2.msra.mxu0 0.0
        %1791 = vmatprep.subr.mxu0 0.0
        %1792 = vmatpush2.msra.mxu0 0.0
        %1793 = vmatprep.subr.mxu0 0.0
        %1794 = vmatpush2.msra.mxu0 0.0
        %1795 = vmatprep.subr.mxu0 0.0
        %1796 = vmatpush2.msra.mxu0 0.0
        %1797 = vmatprep.subr.mxu0 0.0
        %1798 = vmatpush2.msra.mxu0 0.0
        %1799 = vmatprep.subr.mxu0 0.0
        %1800 = vmatpush2.msra.mxu0 0.0
        %1801 = vmatprep.subr.mxu0 0.0
        %1802 = vmatpush2.msra.mxu0 0.0
        %1803 = vmatprep.subr.mxu0 0.0
        %1804 = vmatpush2.msra.mxu0 0.0
        %1805 = vmatprep.subr.mxu0 0.0
        %1806 = vmatpush2.msra.mxu0 0.0
        %1807 = vmatprep.subr.mxu0 0.0
        %1808 = vmatpush2.msra.mxu0 0.0
        %1809 = vmatprep.subr.mxu0 0.0
        %1810 = vmatpush2.msra.mxu0 0.0
        %1811 = vmatprep.subr.mxu0 0.0
        %1812 = vmatpush2.msra.mxu0 0.0
        %1813 = vmatprep.subr.mxu0 0.0
        %1814 = vmatpush2.msra.mxu0 0.0
        %1815 = vmatprep.subr.mxu0 0.0
        %1816 = vmatpush2.msra.mxu0 0.0
        %1817 = vmatprep.mubr.f32.mxu0 0.0
        %v1818 = vand.u32 %v1524, 4294901760
        %v1819 = vsub.f32 %v1524, %v1818
        %v1820 = vand.u32 %v1819, 4294901760
        %1821 = vmatmul.mubr.f32.gmra.mxu0 %v1820
        %v1822 = vpop.f32.mrf.mxu0
        %v1823 = vadd.f32 %v1749, %v1822
        %v1824 = vpop.f32.mrf.mxu0
        %1825 = vdwg.mxu0
        %1826 = vmatprep.subr.mxu0 0.0
        %1827 = vmatpush1.msra.mxu0 0.0
        %1828 = vmatprep.subr.mxu0 0.0
        %1829 = vmatpush1.msra.mxu0 0.0
        %1830 = vmatprep.subr.mxu0 0.0
        %1831 = vmatpush1.msra.mxu0 0.0
        %1832 = vmatprep.subr.mxu0 0.0
        %1833 = vmatpush1.msra.mxu0 0.0
        %1834 = vmatprep.subr.mxu0 0.0
        %1835 = vmatpush1.msra.mxu0 0.0
        %1836 = vmatprep.subr.mxu0 0.0
        %1837 = vmatpush1.msra.mxu0 0.0
        %1838 = vmatprep.subr.mxu0 0.0
        %1839 = vmatpush1.msra.mxu0 0.0
        %1840 = vmatprep.subr.mxu0 0.0
        %1841 = vmatpush1.msra.mxu0 0.0
        %1842 = vmatprep.subr.mxu0 0.0
        %1843 = vmatpush1.msra.mxu0 0.0
        %1844 = vmatprep.subr.mxu0 0.0
        %1845 = vmatpush1.msra.mxu0 0.0
        %1846 = vmatprep.subr.mxu0 0.0
        %1847 = vmatpush1.msra.mxu0 0.0
        %1848 = vmatprep.subr.mxu0 0.0
        %1849 = vmatpush1.msra.mxu0 0.0
        %1850 = vmatprep.subr.mxu0 0.0
        %1851 = vmatpush1.msra.mxu0 0.0
        %1852 = vmatprep.subr.mxu0 0.0
        %1853 = vmatpush1.msra.mxu0 0.0
        %1854 = vmatprep.subr.mxu0 0.0
        %1855 = vmatpush1.msra.mxu0 0.0
        %1856 = vmatprep.subr.mxu0 0.0
        %v1857 = vand.u32 %v1073, 4294901760
        %v1858 = vsub.f32 %v1073, %v1857
        %v1859 = vand.u32 %v1858, 4294901760
        %1860 = vmatpush1.msra.mxu0 %v1859
        %1861 = vmatprep.subr.mxu0 0.0
        %1862 = vmatpush2.msra.mxu0 0.0
        %1863 = vmatprep.subr.mxu0 0.0
        %1864 = vmatpush2.msra.mxu0 0.0
        %1865 = vmatprep.subr.mxu0 0.0
        %1866 = vmatpush2.msra.mxu0 0.0
        %1867 = vmatprep.subr.mxu0 0.0
        %1868 = vmatpush2.msra.mxu0 0.0
        %1869 = vmatprep.subr.mxu0 0.0
        %1870 = vmatpush2.msra.mxu0 0.0
        %1871 = vmatprep.subr.mxu0 0.0
        %1872 = vmatpush2.msra.mxu0 0.0
        %1873 = vmatprep.subr.mxu0 0.0
        %1874 = vmatpush2.msra.mxu0 0.0
        %1875 = vmatprep.subr.mxu0 0.0
        %1876 = vmatpush2.msra.mxu0 0.0
        %1877 = vmatprep.subr.mxu0 0.0
        %1878 = vmatpush2.msra.mxu0 0.0
        %1879 = vmatprep.subr.mxu0 0.0
        %1880 = vmatpush2.msra.mxu0 0.0
        %1881 = vmatprep.subr.mxu0 0.0
        %1882 = vmatpush2.msra.mxu0 0.0
        %1883 = vmatprep.subr.mxu0 0.0
        %1884 = vmatpush2.msra.mxu0 0.0
        %1885 = vmatprep.subr.mxu0 0.0
        %1886 = vmatpush2.msra.mxu0 0.0
        %1887 = vmatprep.subr.mxu0 0.0
        %1888 = vmatpush2.msra.mxu0 0.0
        %1889 = vmatprep.subr.mxu0 0.0
        %1890 = vmatpush2.msra.mxu0 0.0
        %1891 = vmatprep.subr.mxu0 0.0
        %1892 = vmatpush2.msra.mxu0 0.0
        %1893 = vmatprep.mubr.f32.mxu0 0.0
        %v1894 = vand.u32 %v1524, 4294901760
        %1895 = vmatmul.mubr.f32.gmra.mxu0 %v1894
        %v1896 = vpop.f32.mrf.mxu0
        %v1897 = vadd.f32 %v1823, %v1896
        %v1898 = vpop.f32.mrf.mxu0
        %1899 = vdwg.mxu0
        %1900 = vmatprep.subr.mxu0 0.0
        %1901 = vmatpush1.msra.mxu0 0.0
        %1902 = vmatprep.subr.mxu0 0.0
        %1903 = vmatpush1.msra.mxu0 0.0
        %1904 = vmatprep.subr.mxu0 0.0
        %1905 = vmatpush1.msra.mxu0 0.0
        %1906 = vmatprep.subr.mxu0 0.0
        %1907 = vmatpush1.msra.mxu0 0.0
        %1908 = vmatprep.subr.mxu0 0.0
        %1909 = vmatpush1.msra.mxu0 0.0
        %1910 = vmatprep.subr.mxu0 0.0
        %1911 = vmatpush1.msra.mxu0 0.0
        %1912 = vmatprep.subr.mxu0 0.0
        %1913 = vmatpush1.msra.mxu0 0.0
        %1914 = vmatprep.subr.mxu0 0.0
        %1915 = vmatpush1.msra.mxu0 0.0
        %1916 = vmatprep.subr.mxu0 0.0
        %1917 = vmatpush1.msra.mxu0 0.0
        %1918 = vmatprep.subr.mxu0 0.0
        %1919 = vmatpush1.msra.mxu0 0.0
        %1920 = vmatprep.subr.mxu0 0.0
        %1921 = vmatpush1.msra.mxu0 0.0
        %1922 = vmatprep.subr.mxu0 0.0
        %1923 = vmatpush1.msra.mxu0 0.0
        %1924 = vmatprep.subr.mxu0 0.0
        %1925 = vmatpush1.msra.mxu0 0.0
        %1926 = vmatprep.subr.mxu0 0.0
        %1927 = vmatpush1.msra.mxu0 0.0
        %1928 = vmatprep.subr.mxu0 0.0
        %1929 = vmatpush1.msra.mxu0 0.0
        %1930 = vmatprep.subr.mxu0 0.0
        %v1931 = vand.u32 %v1073, 4294901760
        %1932 = vmatpush1.msra.mxu0 %v1931
        %1933 = vmatprep.subr.mxu0 0.0
        %1934 = vmatpush2.msra.mxu0 0.0
        %1935 = vmatprep.subr.mxu0 0.0
        %1936 = vmatpush2.msra.mxu0 0.0
        %1937 = vmatprep.subr.mxu0 0.0
        %1938 = vmatpush2.msra.mxu0 0.0
        %1939 = vmatprep.subr.mxu0 0.0
        %1940 = vmatpush2.msra.mxu0 0.0
        %1941 = vmatprep.subr.mxu0 0.0
        %1942 = vmatpush2.msra.mxu0 0.0
        %1943 = vmatprep.subr.mxu0 0.0
        %1944 = vmatpush2.msra.mxu0 0.0
        %1945 = vmatprep.subr.mxu0 0.0
        %1946 = vmatpush2.msra.mxu0 0.0
        %1947 = vmatprep.subr.mxu0 0.0
        %1948 = vmatpush2.msra.mxu0 0.0
        %1949 = vmatprep.subr.mxu0 0.0
        %1950 = vmatpush2.msra.mxu0 0.0
        %1951 = vmatprep.subr.mxu0 0.0
        %1952 = vmatpush2.msra.mxu0 0.0
        %1953 = vmatprep.subr.mxu0 0.0
        %1954 = vmatpush2.msra.mxu0 0.0
        %1955 = vmatprep.subr.mxu0 0.0
        %1956 = vmatpush2.msra.mxu0 0.0
        %1957 = vmatprep.subr.mxu0 0.0
        %1958 = vmatpush2.msra.mxu0 0.0
        %1959 = vmatprep.subr.mxu0 0.0
        %1960 = vmatpush2.msra.mxu0 0.0
        %1961 = vmatprep.subr.mxu0 0.0
        %1962 = vmatpush2.msra.mxu0 0.0
        %1963 = vmatprep.subr.mxu0 0.0
        %1964 = vmatpush2.msra.mxu0 0.0
        %1965 = vmatprep.mubr.f32.mxu0 0.0
        %v1966 = vand.u32 %v1524, 4294901760
        %1967 = vmatmul.mubr.f32.gmra.mxu0 %v1966
        %v1968 = vpop.f32.mrf.mxu0
        %v1969 = vadd.f32 %v1897, %v1968
        %v1970 = vpop.f32.mrf.mxu0
        %1971 = vdwg.mxu0
        %v1972 = vmax.f32 %v1520, %v1969
        %vm1973 = vcmask 27648
        %1974 = vst.msk [vmem:[%s152] sm:$0xf] %vm1973, %v1972
        %s1975 = scalar_lea.vmem %s134, 16 [#allocation2]
        %v1976 = vld [vmem:[%s1975] sm:$0xff]
        %s1977 = scalar_lea.vmem %s134, 24 [#allocation2]
        %v1978 = vld [vmem:[%s1977] sm:$0xff]
        %v1979 = vmax.f32 %v1976, %v1978
        %v1981 = vsel %vm177, %v1979, 0
        %1983 = vmatprep.subr.mxu0 0.0
        %1984 = vmatpush1.msra.mxu0 0.0
        %1985 = vmatprep.subr.mxu0 0.0
        %1986 = vmatpush1.msra.mxu0 0.0
        %1987 = vmatprep.subr.mxu0 0.0
        %1988 = vmatpush1.msra.mxu0 0.0
        %1989 = vmatprep.subr.mxu0 0.0
        %1990 = vmatpush1.msra.mxu0 0.0
        %1991 = vmatprep.subr.mxu0 0.0
        %1992 = vmatpush1.msra.mxu0 0.0
        %1993 = vmatprep.subr.mxu0 0.0
        %1994 = vmatpush1.msra.mxu0 0.0
        %1995 = vmatprep.subr.mxu0 0.0
        %1996 = vmatpush1.msra.mxu0 0.0
        %1997 = vmatprep.subr.mxu0 0.0
        %1998 = vmatpush1.msra.mxu0 0.0
        %1999 = vmatprep.subr.mxu0 0.0
        %2000 = vmatpush1.msra.mxu0 0.0
        %2001 = vmatprep.subr.mxu0 0.0
        %2002 = vmatpush1.msra.mxu0 0.0
        %2003 = vmatprep.subr.mxu0 0.0
        %2004 = vmatpush1.msra.mxu0 0.0
        %2005 = vmatprep.subr.mxu0 0.0
        %2006 = vmatpush1.msra.mxu0 0.0
        %2007 = vmatprep.subr.mxu0 0.0
        %2008 = vmatpush1.msra.mxu0 0.0
        %2009 = vmatprep.subr.mxu0 0.0
        %2010 = vmatpush1.msra.mxu0 0.0
        %2011 = vmatprep.subr.mxu0 0.0
        %2012 = vmatpush1.msra.mxu0 0.0
        %2013 = vmatprep.subr.mxu0 0.0
        %v2014 = vand.u32 %v160, 4294901760
        %2015 = vmatpush1.msra.mxu0 %v2014
        %2016 = vmatprep.subr.mxu0 0.0
        %2017 = vmatpush2.msra.mxu0 0.0
        %2018 = vmatprep.subr.mxu0 0.0
        %2019 = vmatpush2.msra.mxu0 0.0
        %2020 = vmatprep.subr.mxu0 0.0
        %2021 = vmatpush2.msra.mxu0 0.0
        %2022 = vmatprep.subr.mxu0 0.0
        %2023 = vmatpush2.msra.mxu0 0.0
        %2024 = vmatprep.subr.mxu0 0.0
        %2025 = vmatpush2.msra.mxu0 0.0
        %2026 = vmatprep.subr.mxu0 0.0
        %2027 = vmatpush2.msra.mxu0 0.0
        %2028 = vmatprep.subr.mxu0 0.0
        %2029 = vmatpush2.msra.mxu0 0.0
        %2030 = vmatprep.subr.mxu0 0.0
        %2031 = vmatpush2.msra.mxu0 0.0
        %2032 = vmatprep.subr.mxu0 0.0
        %2033 = vmatpush2.msra.mxu0 0.0
        %2034 = vmatprep.subr.mxu0 0.0
        %2035 = vmatpush2.msra.mxu0 0.0
        %2036 = vmatprep.subr.mxu0 0.0
        %2037 = vmatpush2.msra.mxu0 0.0
        %2038 = vmatprep.subr.mxu0 0.0
        %2039 = vmatpush2.msra.mxu0 0.0
        %2040 = vmatprep.subr.mxu0 0.0
        %2041 = vmatpush2.msra.mxu0 0.0
        %2042 = vmatprep.subr.mxu0 0.0
        %2043 = vmatpush2.msra.mxu0 0.0
        %2044 = vmatprep.subr.mxu0 0.0
        %2045 = vmatpush2.msra.mxu0 0.0
        %2046 = vmatprep.subr.mxu0 0.0
        %2047 = vmatpush2.msra.mxu0 0.0
        %2048 = vmatprep.mubr.f32.mxu0 0.0
        %v2049 = vand.u32 %v1981, 4294901760
        %v2050 = vsub.f32 %v1981, %v2049
        %v2051 = vand.u32 %v2050, 4294901760
        %v2052 = vsub.f32 %v2050, %v2051
        %v2053 = vand.u32 %v2052, 4294901760
        %2054 = vmatmul.mubr.f32.gmra.mxu0 %v2053
        %v2055 = vpop.f32.mrf.mxu0
        %v2056 = vadd.f32 0.0, %v2055
        %v2057 = vpop.f32.mrf.mxu0
        %2058 = vdwg.mxu0
        %2059 = vmatprep.subr.mxu0 0.0
        %2060 = vmatpush1.msra.mxu0 0.0
        %2061 = vmatprep.subr.mxu0 0.0
        %2062 = vmatpush1.msra.mxu0 0.0
        %2063 = vmatprep.subr.mxu0 0.0
        %2064 = vmatpush1.msra.mxu0 0.0
        %2065 = vmatprep.subr.mxu0 0.0
        %2066 = vmatpush1.msra.mxu0 0.0
        %2067 = vmatprep.subr.mxu0 0.0
        %2068 = vmatpush1.msra.mxu0 0.0
        %2069 = vmatprep.subr.mxu0 0.0
        %2070 = vmatpush1.msra.mxu0 0.0
        %2071 = vmatprep.subr.mxu0 0.0
        %2072 = vmatpush1.msra.mxu0 0.0
        %2073 = vmatprep.subr.mxu0 0.0
        %2074 = vmatpush1.msra.mxu0 0.0
        %2075 = vmatprep.subr.mxu0 0.0
        %2076 = vmatpush1.msra.mxu0 0.0
        %2077 = vmatprep.subr.mxu0 0.0
        %2078 = vmatpush1.msra.mxu0 0.0
        %2079 = vmatprep.subr.mxu0 0.0
        %2080 = vmatpush1.msra.mxu0 0.0
        %2081 = vmatprep.subr.mxu0 0.0
        %2082 = vmatpush1.msra.mxu0 0.0
        %2083 = vmatprep.subr.mxu0 0.0
        %2084 = vmatpush1.msra.mxu0 0.0
        %2085 = vmatprep.subr.mxu0 0.0
        %2086 = vmatpush1.msra.mxu0 0.0
        %2087 = vmatprep.subr.mxu0 0.0
        %2088 = vmatpush1.msra.mxu0 0.0
        %2089 = vmatprep.subr.mxu0 0.0
        %v2090 = vand.u32 %v160, 4294901760
        %v2091 = vsub.f32 %v160, %v2090
        %v2092 = vand.u32 %v2091, 4294901760
        %v2093 = vsub.f32 %v2091, %v2092
        %v2094 = vand.u32 %v2093, 4294901760
        %2095 = vmatpush1.msra.mxu0 %v2094
        %2096 = vmatprep.subr.mxu0 0.0
        %2097 = vmatpush2.msra.mxu0 0.0
        %2098 = vmatprep.subr.mxu0 0.0
        %2099 = vmatpush2.msra.mxu0 0.0
        %2100 = vmatprep.subr.mxu0 0.0
        %2101 = vmatpush2.msra.mxu0 0.0
        %2102 = vmatprep.subr.mxu0 0.0
        %2103 = vmatpush2.msra.mxu0 0.0
        %2104 = vmatprep.subr.mxu0 0.0
        %2105 = vmatpush2.msra.mxu0 0.0
        %2106 = vmatprep.subr.mxu0 0.0
        %2107 = vmatpush2.msra.mxu0 0.0
        %2108 = vmatprep.subr.mxu0 0.0
        %2109 = vmatpush2.msra.mxu0 0.0
        %2110 = vmatprep.subr.mxu0 0.0
        %2111 = vmatpush2.msra.mxu0 0.0
        %2112 = vmatprep.subr.mxu0 0.0
        %2113 = vmatpush2.msra.mxu0 0.0
        %2114 = vmatprep.subr.mxu0 0.0
        %2115 = vmatpush2.msra.mxu0 0.0
        %2116 = vmatprep.subr.mxu0 0.0
        %2117 = vmatpush2.msra.mxu0 0.0
        %2118 = vmatprep.subr.mxu0 0.0
        %2119 = vmatpush2.msra.mxu0 0.0
        %2120 = vmatprep.subr.mxu0 0.0
        %2121 = vmatpush2.msra.mxu0 0.0
        %2122 = vmatprep.subr.mxu0 0.0
        %2123 = vmatpush2.msra.mxu0 0.0
        %2124 = vmatprep.subr.mxu0 0.0
        %2125 = vmatpush2.msra.mxu0 0.0
        %2126 = vmatprep.subr.mxu0 0.0
        %2127 = vmatpush2.msra.mxu0 0.0
        %2128 = vmatprep.mubr.f32.mxu0 0.0
        %v2129 = vand.u32 %v1981, 4294901760
        %2130 = vmatmul.mubr.f32.gmra.mxu0 %v2129
        %v2131 = vpop.f32.mrf.mxu0
        %v2132 = vadd.f32 %v2056, %v2131
        %v2133 = vpop.f32.mrf.mxu0
        %2134 = vdwg.mxu0
        %2135 = vmatprep.subr.mxu0 0.0
        %2136 = vmatpush1.msra.mxu0 0.0
        %2137 = vmatprep.subr.mxu0 0.0
        %2138 = vmatpush1.msra.mxu0 0.0
        %2139 = vmatprep.subr.mxu0 0.0
        %2140 = vmatpush1.msra.mxu0 0.0
        %2141 = vmatprep.subr.mxu0 0.0
        %2142 = vmatpush1.msra.mxu0 0.0
        %2143 = vmatprep.subr.mxu0 0.0
        %2144 = vmatpush1.msra.mxu0 0.0
        %2145 = vmatprep.subr.mxu0 0.0
        %2146 = vmatpush1.msra.mxu0 0.0
        %2147 = vmatprep.subr.mxu0 0.0
        %2148 = vmatpush1.msra.mxu0 0.0
        %2149 = vmatprep.subr.mxu0 0.0
        %2150 = vmatpush1.msra.mxu0 0.0
        %2151 = vmatprep.subr.mxu0 0.0
        %2152 = vmatpush1.msra.mxu0 0.0
        %2153 = vmatprep.subr.mxu0 0.0
        %2154 = vmatpush1.msra.mxu0 0.0
        %2155 = vmatprep.subr.mxu0 0.0
        %2156 = vmatpush1.msra.mxu0 0.0
        %2157 = vmatprep.subr.mxu0 0.0
        %2158 = vmatpush1.msra.mxu0 0.0
        %2159 = vmatprep.subr.mxu0 0.0
        %2160 = vmatpush1.msra.mxu0 0.0
        %2161 = vmatprep.subr.mxu0 0.0
        %2162 = vmatpush1.msra.mxu0 0.0
        %2163 = vmatprep.subr.mxu0 0.0
        %2164 = vmatpush1.msra.mxu0 0.0
        %2165 = vmatprep.subr.mxu0 0.0
        %v2166 = vand.u32 %v160, 4294901760
        %v2167 = vsub.f32 %v160, %v2166
        %2168 = vmatpush1.msra.mxu0 %v2167
        %2169 = vmatprep.subr.mxu0 0.0
        %2170 = vmatpush2.msra.mxu0 0.0
        %2171 = vmatprep.subr.mxu0 0.0
        %2172 = vmatpush2.msra.mxu0 0.0
        %2173 = vmatprep.subr.mxu0 0.0
        %2174 = vmatpush2.msra.mxu0 0.0
        %2175 = vmatprep.subr.mxu0 0.0
        %2176 = vmatpush2.msra.mxu0 0.0
        %2177 = vmatprep.subr.mxu0 0.0
        %2178 = vmatpush2.msra.mxu0 0.0
        %2179 = vmatprep.subr.mxu0 0.0
        %2180 = vmatpush2.msra.mxu0 0.0
        %2181 = vmatprep.subr.mxu0 0.0
        %2182 = vmatpush2.msra.mxu0 0.0
        %2183 = vmatprep.subr.mxu0 0.0
        %2184 = vmatpush2.msra.mxu0 0.0
        %2185 = vmatprep.subr.mxu0 0.0
        %2186 = vmatpush2.msra.mxu0 0.0
        %2187 = vmatprep.subr.mxu0 0.0
        %2188 = vmatpush2.msra.mxu0 0.0
        %2189 = vmatprep.subr.mxu0 0.0
        %2190 = vmatpush2.msra.mxu0 0.0
        %2191 = vmatprep.subr.mxu0 0.0
        %2192 = vmatpush2.msra.mxu0 0.0
        %2193 = vmatprep.subr.mxu0 0.0
        %2194 = vmatpush2.msra.mxu0 0.0
        %2195 = vmatprep.subr.mxu0 0.0
        %2196 = vmatpush2.msra.mxu0 0.0
        %2197 = vmatprep.subr.mxu0 0.0
        %2198 = vmatpush2.msra.mxu0 0.0
        %2199 = vmatprep.subr.mxu0 0.0
        %2200 = vmatpush2.msra.mxu0 0.0
        %2201 = vmatprep.mubr.f32.mxu0 0.0
        %v2202 = vand.u32 %v1981, 4294901760
        %v2203 = vsub.f32 %v1981, %v2202
        %2204 = vmatmul.mubr.f32.gmra.mxu0 %v2203
        %v2205 = vpop.f32.mrf.mxu0
        %v2206 = vadd.f32 %v2132, %v2205
        %v2207 = vpop.f32.mrf.mxu0
        %2208 = vdwg.mxu0
        %2209 = vmatprep.subr.mxu0 0.0
        %2210 = vmatpush1.msra.mxu0 0.0
        %2211 = vmatprep.subr.mxu0 0.0
        %2212 = vmatpush1.msra.mxu0 0.0
        %2213 = vmatprep.subr.mxu0 0.0
        %2214 = vmatpush1.msra.mxu0 0.0
        %2215 = vmatprep.subr.mxu0 0.0
        %2216 = vmatpush1.msra.mxu0 0.0
        %2217 = vmatprep.subr.mxu0 0.0
        %2218 = vmatpush1.msra.mxu0 0.0
        %2219 = vmatprep.subr.mxu0 0.0
        %2220 = vmatpush1.msra.mxu0 0.0
        %2221 = vmatprep.subr.mxu0 0.0
        %2222 = vmatpush1.msra.mxu0 0.0
        %2223 = vmatprep.subr.mxu0 0.0
        %2224 = vmatpush1.msra.mxu0 0.0
        %2225 = vmatprep.subr.mxu0 0.0
        %2226 = vmatpush1.msra.mxu0 0.0
        %2227 = vmatprep.subr.mxu0 0.0
        %2228 = vmatpush1.msra.mxu0 0.0
        %2229 = vmatprep.subr.mxu0 0.0
        %2230 = vmatpush1.msra.mxu0 0.0
        %2231 = vmatprep.subr.mxu0 0.0
        %2232 = vmatpush1.msra.mxu0 0.0
        %2233 = vmatprep.subr.mxu0 0.0
        %2234 = vmatpush1.msra.mxu0 0.0
        %2235 = vmatprep.subr.mxu0 0.0
        %2236 = vmatpush1.msra.mxu0 0.0
        %2237 = vmatprep.subr.mxu0 0.0
        %2238 = vmatpush1.msra.mxu0 0.0
        %2239 = vmatprep.subr.mxu0 0.0
        %v2240 = vand.u32 %v160, 4294901760
        %2241 = vmatpush1.msra.mxu0 %v2240
        %2242 = vmatprep.subr.mxu0 0.0
        %2243 = vmatpush2.msra.mxu0 0.0
        %2244 = vmatprep.subr.mxu0 0.0
        %2245 = vmatpush2.msra.mxu0 0.0
        %2246 = vmatprep.subr.mxu0 0.0
        %2247 = vmatpush2.msra.mxu0 0.0
        %2248 = vmatprep.subr.mxu0 0.0
        %2249 = vmatpush2.msra.mxu0 0.0
        %2250 = vmatprep.subr.mxu0 0.0
        %2251 = vmatpush2.msra.mxu0 0.0
        %2252 = vmatprep.subr.mxu0 0.0
        %2253 = vmatpush2.msra.mxu0 0.0
        %2254 = vmatprep.subr.mxu0 0.0
        %2255 = vmatpush2.msra.mxu0 0.0
        %2256 = vmatprep.subr.mxu0 0.0
        %2257 = vmatpush2.msra.mxu0 0.0
        %2258 = vmatprep.subr.mxu0 0.0
        %2259 = vmatpush2.msra.mxu0 0.0
        %2260 = vmatprep.subr.mxu0 0.0
        %2261 = vmatpush2.msra.mxu0 0.0
        %2262 = vmatprep.subr.mxu0 0.0
        %2263 = vmatpush2.msra.mxu0 0.0
        %2264 = vmatprep.subr.mxu0 0.0
        %2265 = vmatpush2.msra.mxu0 0.0
        %2266 = vmatprep.subr.mxu0 0.0
        %2267 = vmatpush2.msra.mxu0 0.0
        %2268 = vmatprep.subr.mxu0 0.0
        %2269 = vmatpush2.msra.mxu0 0.0
        %2270 = vmatprep.subr.mxu0 0.0
        %2271 = vmatpush2.msra.mxu0 0.0
        %2272 = vmatprep.subr.mxu0 0.0
        %2273 = vmatpush2.msra.mxu0 0.0
        %2274 = vmatprep.mubr.f32.mxu0 0.0
        %v2275 = vand.u32 %v1981, 4294901760
        %v2276 = vsub.f32 %v1981, %v2275
        %v2277 = vand.u32 %v2276, 4294901760
        %2278 = vmatmul.mubr.f32.gmra.mxu0 %v2277
        %v2279 = vpop.f32.mrf.mxu0
        %v2280 = vadd.f32 %v2206, %v2279
        %v2281 = vpop.f32.mrf.mxu0
        %2282 = vdwg.mxu0
        %2283 = vmatprep.subr.mxu0 0.0
        %2284 = vmatpush1.msra.mxu0 0.0
        %2285 = vmatprep.subr.mxu0 0.0
        %2286 = vmatpush1.msra.mxu0 0.0
        %2287 = vmatprep.subr.mxu0 0.0
        %2288 = vmatpush1.msra.mxu0 0.0
        %2289 = vmatprep.subr.mxu0 0.0
        %2290 = vmatpush1.msra.mxu0 0.0
        %2291 = vmatprep.subr.mxu0 0.0
        %2292 = vmatpush1.msra.mxu0 0.0
        %2293 = vmatprep.subr.mxu0 0.0
        %2294 = vmatpush1.msra.mxu0 0.0
        %2295 = vmatprep.subr.mxu0 0.0
        %2296 = vmatpush1.msra.mxu0 0.0
        %2297 = vmatprep.subr.mxu0 0.0
        %2298 = vmatpush1.msra.mxu0 0.0
        %2299 = vmatprep.subr.mxu0 0.0
        %2300 = vmatpush1.msra.mxu0 0.0
        %2301 = vmatprep.subr.mxu0 0.0
        %2302 = vmatpush1.msra.mxu0 0.0
        %2303 = vmatprep.subr.mxu0 0.0
        %2304 = vmatpush1.msra.mxu0 0.0
        %2305 = vmatprep.subr.mxu0 0.0
        %2306 = vmatpush1.msra.mxu0 0.0
        %2307 = vmatprep.subr.mxu0 0.0
        %2308 = vmatpush1.msra.mxu0 0.0
        %2309 = vmatprep.subr.mxu0 0.0
        %2310 = vmatpush1.msra.mxu0 0.0
        %2311 = vmatprep.subr.mxu0 0.0
        %2312 = vmatpush1.msra.mxu0 0.0
        %2313 = vmatprep.subr.mxu0 0.0
        %v2314 = vand.u32 %v160, 4294901760
        %v2315 = vsub.f32 %v160, %v2314
        %v2316 = vand.u32 %v2315, 4294901760
        %2317 = vmatpush1.msra.mxu0 %v2316
        %2318 = vmatprep.subr.mxu0 0.0
        %2319 = vmatpush2.msra.mxu0 0.0
        %2320 = vmatprep.subr.mxu0 0.0
        %2321 = vmatpush2.msra.mxu0 0.0
        %2322 = vmatprep.subr.mxu0 0.0
        %2323 = vmatpush2.msra.mxu0 0.0
        %2324 = vmatprep.subr.mxu0 0.0
        %2325 = vmatpush2.msra.mxu0 0.0
        %2326 = vmatprep.subr.mxu0 0.0
        %2327 = vmatpush2.msra.mxu0 0.0
        %2328 = vmatprep.subr.mxu0 0.0
        %2329 = vmatpush2.msra.mxu0 0.0
        %2330 = vmatprep.subr.mxu0 0.0
        %2331 = vmatpush2.msra.mxu0 0.0
        %2332 = vmatprep.subr.mxu0 0.0
        %2333 = vmatpush2.msra.mxu0 0.0
        %2334 = vmatprep.subr.mxu0 0.0
        %2335 = vmatpush2.msra.mxu0 0.0
        %2336 = vmatprep.subr.mxu0 0.0
        %2337 = vmatpush2.msra.mxu0 0.0
        %2338 = vmatprep.subr.mxu0 0.0
        %2339 = vmatpush2.msra.mxu0 0.0
        %2340 = vmatprep.subr.mxu0 0.0
        %2341 = vmatpush2.msra.mxu0 0.0
        %2342 = vmatprep.subr.mxu0 0.0
        %2343 = vmatpush2.msra.mxu0 0.0
        %2344 = vmatprep.subr.mxu0 0.0
        %2345 = vmatpush2.msra.mxu0 0.0
        %2346 = vmatprep.subr.mxu0 0.0
        %2347 = vmatpush2.msra.mxu0 0.0
        %2348 = vmatprep.subr.mxu0 0.0
        %2349 = vmatpush2.msra.mxu0 0.0
        %2350 = vmatprep.mubr.f32.mxu0 0.0
        %v2351 = vand.u32 %v1981, 4294901760
        %2352 = vmatmul.mubr.f32.gmra.mxu0 %v2351
        %v2353 = vpop.f32.mrf.mxu0
        %v2354 = vadd.f32 %v2280, %v2353
        %v2355 = vpop.f32.mrf.mxu0
        %2356 = vdwg.mxu0
        %2357 = vmatprep.subr.mxu0 0.0
        %2358 = vmatpush1.msra.mxu0 0.0
        %2359 = vmatprep.subr.mxu0 0.0
        %2360 = vmatpush1.msra.mxu0 0.0
        %2361 = vmatprep.subr.mxu0 0.0
        %2362 = vmatpush1.msra.mxu0 0.0
        %2363 = vmatprep.subr.mxu0 0.0
        %2364 = vmatpush1.msra.mxu0 0.0
        %2365 = vmatprep.subr.mxu0 0.0
        %2366 = vmatpush1.msra.mxu0 0.0
        %2367 = vmatprep.subr.mxu0 0.0
        %2368 = vmatpush1.msra.mxu0 0.0
        %2369 = vmatprep.subr.mxu0 0.0
        %2370 = vmatpush1.msra.mxu0 0.0
        %2371 = vmatprep.subr.mxu0 0.0
        %2372 = vmatpush1.msra.mxu0 0.0
        %2373 = vmatprep.subr.mxu0 0.0
        %2374 = vmatpush1.msra.mxu0 0.0
        %2375 = vmatprep.subr.mxu0 0.0
        %2376 = vmatpush1.msra.mxu0 0.0
        %2377 = vmatprep.subr.mxu0 0.0
        %2378 = vmatpush1.msra.mxu0 0.0
        %2379 = vmatprep.subr.mxu0 0.0
        %2380 = vmatpush1.msra.mxu0 0.0
        %2381 = vmatprep.subr.mxu0 0.0
        %2382 = vmatpush1.msra.mxu0 0.0
        %2383 = vmatprep.subr.mxu0 0.0
        %2384 = vmatpush1.msra.mxu0 0.0
        %2385 = vmatprep.subr.mxu0 0.0
        %2386 = vmatpush1.msra.mxu0 0.0
        %2387 = vmatprep.subr.mxu0 0.0
        %v2388 = vand.u32 %v160, 4294901760
        %2389 = vmatpush1.msra.mxu0 %v2388
        %2390 = vmatprep.subr.mxu0 0.0
        %2391 = vmatpush2.msra.mxu0 0.0
        %2392 = vmatprep.subr.mxu0 0.0
        %2393 = vmatpush2.msra.mxu0 0.0
        %2394 = vmatprep.subr.mxu0 0.0
        %2395 = vmatpush2.msra.mxu0 0.0
        %2396 = vmatprep.subr.mxu0 0.0
        %2397 = vmatpush2.msra.mxu0 0.0
        %2398 = vmatprep.subr.mxu0 0.0
        %2399 = vmatpush2.msra.mxu0 0.0
        %2400 = vmatprep.subr.mxu0 0.0
        %2401 = vmatpush2.msra.mxu0 0.0
        %2402 = vmatprep.subr.mxu0 0.0
        %2403 = vmatpush2.msra.mxu0 0.0
        %2404 = vmatprep.subr.mxu0 0.0
        %2405 = vmatpush2.msra.mxu0 0.0
        %2406 = vmatprep.subr.mxu0 0.0
        %2407 = vmatpush2.msra.mxu0 0.0
        %2408 = vmatprep.subr.mxu0 0.0
        %2409 = vmatpush2.msra.mxu0 0.0
        %2410 = vmatprep.subr.mxu0 0.0
        %2411 = vmatpush2.msra.mxu0 0.0
        %2412 = vmatprep.subr.mxu0 0.0
        %2413 = vmatpush2.msra.mxu0 0.0
        %2414 = vmatprep.subr.mxu0 0.0
        %2415 = vmatpush2.msra.mxu0 0.0
        %2416 = vmatprep.subr.mxu0 0.0
        %2417 = vmatpush2.msra.mxu0 0.0
        %2418 = vmatprep.subr.mxu0 0.0
        %2419 = vmatpush2.msra.mxu0 0.0
        %2420 = vmatprep.subr.mxu0 0.0
        %2421 = vmatpush2.msra.mxu0 0.0
        %2422 = vmatprep.mubr.f32.mxu0 0.0
        %v2423 = vand.u32 %v1981, 4294901760
        %2424 = vmatmul.mubr.f32.gmra.mxu0 %v2423
        %v2425 = vpop.f32.mrf.mxu0
        %v2426 = vadd.f32 %v2354, %v2425
        %v2427 = vpop.f32.mrf.mxu0
        %2428 = vdwg.mxu0
        %2429 = vmatprep.subr.mxu0 0.0
        %2430 = vmatpush1.msra.mxu0 0.0
        %2431 = vmatprep.subr.mxu0 0.0
        %2432 = vmatpush1.msra.mxu0 0.0
        %2433 = vmatprep.subr.mxu0 0.0
        %2434 = vmatpush1.msra.mxu0 0.0
        %2435 = vmatprep.subr.mxu0 0.0
        %2436 = vmatpush1.msra.mxu0 0.0
        %2437 = vmatprep.subr.mxu0 0.0
        %2438 = vmatpush1.msra.mxu0 0.0
        %2439 = vmatprep.subr.mxu0 0.0
        %2440 = vmatpush1.msra.mxu0 0.0
        %2441 = vmatprep.subr.mxu0 0.0
        %2442 = vmatpush1.msra.mxu0 0.0
        %2443 = vmatprep.subr.mxu0 0.0
        %2444 = vmatpush1.msra.mxu0 0.0
        %2445 = vmatprep.subr.mxu0 0.0
        %2446 = vmatpush1.msra.mxu0 0.0
        %2447 = vmatprep.subr.mxu0 0.0
        %2448 = vmatpush1.msra.mxu0 0.0
        %2449 = vmatprep.subr.mxu0 0.0
        %2450 = vmatpush1.msra.mxu0 0.0
        %2451 = vmatprep.subr.mxu0 0.0
        %2452 = vmatpush1.msra.mxu0 0.0
        %2453 = vmatprep.subr.mxu0 0.0
        %2454 = vmatpush1.msra.mxu0 0.0
        %2455 = vmatprep.subr.mxu0 0.0
        %2456 = vmatpush1.msra.mxu0 0.0
        %2457 = vmatprep.subr.mxu0 0.0
        %2458 = vmatpush1.msra.mxu0 0.0
        %2459 = vmatprep.subr.mxu0 0.0
        %v2460 = vand.u32 %v164, 4294901760
        %2461 = vmatpush1.msra.mxu0 %v2460
        %2462 = vmatprep.subr.mxu0 0.0
        %2463 = vmatpush2.msra.mxu0 0.0
        %2464 = vmatprep.subr.mxu0 0.0
        %2465 = vmatpush2.msra.mxu0 0.0
        %2466 = vmatprep.subr.mxu0 0.0
        %2467 = vmatpush2.msra.mxu0 0.0
        %2468 = vmatprep.subr.mxu0 0.0
        %2469 = vmatpush2.msra.mxu0 0.0
        %2470 = vmatprep.subr.mxu0 0.0
        %2471 = vmatpush2.msra.mxu0 0.0
        %2472 = vmatprep.subr.mxu0 0.0
        %2473 = vmatpush2.msra.mxu0 0.0
        %2474 = vmatprep.subr.mxu0 0.0
        %2475 = vmatpush2.msra.mxu0 0.0
        %2476 = vmatprep.subr.mxu0 0.0
        %2477 = vmatpush2.msra.mxu0 0.0
        %2478 = vmatprep.subr.mxu0 0.0
        %2479 = vmatpush2.msra.mxu0 0.0
        %2480 = vmatprep.subr.mxu0 0.0
        %2481 = vmatpush2.msra.mxu0 0.0
        %2482 = vmatprep.subr.mxu0 0.0
        %2483 = vmatpush2.msra.mxu0 0.0
        %2484 = vmatprep.subr.mxu0 0.0
        %2485 = vmatpush2.msra.mxu0 0.0
        %2486 = vmatprep.subr.mxu0 0.0
        %2487 = vmatpush2.msra.mxu0 0.0
        %2488 = vmatprep.subr.mxu0 0.0
        %2489 = vmatpush2.msra.mxu0 0.0
        %2490 = vmatprep.subr.mxu0 0.0
        %2491 = vmatpush2.msra.mxu0 0.0
        %2492 = vmatprep.subr.mxu0 0.0
        %2493 = vmatpush2.msra.mxu0 0.0
        %2494 = vmatprep.mubr.f32.mxu0 0.0
        %v2495 = vand.u32 %v1981, 4294901760
        %v2496 = vsub.f32 %v1981, %v2495
        %v2497 = vand.u32 %v2496, 4294901760
        %v2498 = vsub.f32 %v2496, %v2497
        %v2499 = vand.u32 %v2498, 4294901760
        %2500 = vmatmul.mubr.f32.gmra.mxu0 %v2499
        %v2501 = vpop.f32.mrf.mxu0
        %v2502 = vadd.f32 0.0, %v2501
        %v2503 = vpop.f32.mrf.mxu0
        %2504 = vdwg.mxu0
        %2505 = vmatprep.subr.mxu0 0.0
        %2506 = vmatpush1.msra.mxu0 0.0
        %2507 = vmatprep.subr.mxu0 0.0
        %2508 = vmatpush1.msra.mxu0 0.0
        %2509 = vmatprep.subr.mxu0 0.0
        %2510 = vmatpush1.msra.mxu0 0.0
        %2511 = vmatprep.subr.mxu0 0.0
        %2512 = vmatpush1.msra.mxu0 0.0
        %2513 = vmatprep.subr.mxu0 0.0
        %2514 = vmatpush1.msra.mxu0 0.0
        %2515 = vmatprep.subr.mxu0 0.0
        %2516 = vmatpush1.msra.mxu0 0.0
        %2517 = vmatprep.subr.mxu0 0.0
        %2518 = vmatpush1.msra.mxu0 0.0
        %2519 = vmatprep.subr.mxu0 0.0
        %2520 = vmatpush1.msra.mxu0 0.0
        %2521 = vmatprep.subr.mxu0 0.0
        %2522 = vmatpush1.msra.mxu0 0.0
        %2523 = vmatprep.subr.mxu0 0.0
        %2524 = vmatpush1.msra.mxu0 0.0
        %2525 = vmatprep.subr.mxu0 0.0
        %2526 = vmatpush1.msra.mxu0 0.0
        %2527 = vmatprep.subr.mxu0 0.0
        %2528 = vmatpush1.msra.mxu0 0.0
        %2529 = vmatprep.subr.mxu0 0.0
        %2530 = vmatpush1.msra.mxu0 0.0
        %2531 = vmatprep.subr.mxu0 0.0
        %2532 = vmatpush1.msra.mxu0 0.0
        %2533 = vmatprep.subr.mxu0 0.0
        %2534 = vmatpush1.msra.mxu0 0.0
        %2535 = vmatprep.subr.mxu0 0.0
        %v2536 = vand.u32 %v164, 4294901760
        %v2537 = vsub.f32 %v164, %v2536
        %v2538 = vand.u32 %v2537, 4294901760
        %v2539 = vsub.f32 %v2537, %v2538
        %v2540 = vand.u32 %v2539, 4294901760
        %2541 = vmatpush1.msra.mxu0 %v2540
        %2542 = vmatprep.subr.mxu0 0.0
        %2543 = vmatpush2.msra.mxu0 0.0
        %2544 = vmatprep.subr.mxu0 0.0
        %2545 = vmatpush2.msra.mxu0 0.0
        %2546 = vmatprep.subr.mxu0 0.0
        %2547 = vmatpush2.msra.mxu0 0.0
        %2548 = vmatprep.subr.mxu0 0.0
        %2549 = vmatpush2.msra.mxu0 0.0
        %2550 = vmatprep.subr.mxu0 0.0
        %2551 = vmatpush2.msra.mxu0 0.0
        %2552 = vmatprep.subr.mxu0 0.0
        %2553 = vmatpush2.msra.mxu0 0.0
        %2554 = vmatprep.subr.mxu0 0.0
        %2555 = vmatpush2.msra.mxu0 0.0
        %2556 = vmatprep.subr.mxu0 0.0
        %2557 = vmatpush2.msra.mxu0 0.0
        %2558 = vmatprep.subr.mxu0 0.0
        %2559 = vmatpush2.msra.mxu0 0.0
        %2560 = vmatprep.subr.mxu0 0.0
        %2561 = vmatpush2.msra.mxu0 0.0
        %2562 = vmatprep.subr.mxu0 0.0
        %2563 = vmatpush2.msra.mxu0 0.0
        %2564 = vmatprep.subr.mxu0 0.0
        %2565 = vmatpush2.msra.mxu0 0.0
        %2566 = vmatprep.subr.mxu0 0.0
        %2567 = vmatpush2.msra.mxu0 0.0
        %2568 = vmatprep.subr.mxu0 0.0
        %2569 = vmatpush2.msra.mxu0 0.0
        %2570 = vmatprep.subr.mxu0 0.0
        %2571 = vmatpush2.msra.mxu0 0.0
        %2572 = vmatprep.subr.mxu0 0.0
        %2573 = vmatpush2.msra.mxu0 0.0
        %2574 = vmatprep.mubr.f32.mxu0 0.0
        %v2575 = vand.u32 %v1981, 4294901760
        %2576 = vmatmul.mubr.f32.gmra.mxu0 %v2575
        %v2577 = vpop.f32.mrf.mxu0
        %v2578 = vadd.f32 %v2502, %v2577
        %v2579 = vpop.f32.mrf.mxu0
        %2580 = vdwg.mxu0
        %2581 = vmatprep.subr.mxu0 0.0
        %2582 = vmatpush1.msra.mxu0 0.0
        %2583 = vmatprep.subr.mxu0 0.0
        %2584 = vmatpush1.msra.mxu0 0.0
        %2585 = vmatprep.subr.mxu0 0.0
        %2586 = vmatpush1.msra.mxu0 0.0
        %2587 = vmatprep.subr.mxu0 0.0
        %2588 = vmatpush1.msra.mxu0 0.0
        %2589 = vmatprep.subr.mxu0 0.0
        %2590 = vmatpush1.msra.mxu0 0.0
        %2591 = vmatprep.subr.mxu0 0.0
        %2592 = vmatpush1.msra.mxu0 0.0
        %2593 = vmatprep.subr.mxu0 0.0
        %2594 = vmatpush1.msra.mxu0 0.0
        %2595 = vmatprep.subr.mxu0 0.0
        %2596 = vmatpush1.msra.mxu0 0.0
        %2597 = vmatprep.subr.mxu0 0.0
        %2598 = vmatpush1.msra.mxu0 0.0
        %2599 = vmatprep.subr.mxu0 0.0
        %2600 = vmatpush1.msra.mxu0 0.0
        %2601 = vmatprep.subr.mxu0 0.0
        %2602 = vmatpush1.msra.mxu0 0.0
        %2603 = vmatprep.subr.mxu0 0.0
        %2604 = vmatpush1.msra.mxu0 0.0
        %2605 = vmatprep.subr.mxu0 0.0
        %2606 = vmatpush1.msra.mxu0 0.0
        %2607 = vmatprep.subr.mxu0 0.0
        %2608 = vmatpush1.msra.mxu0 0.0
        %2609 = vmatprep.subr.mxu0 0.0
        %2610 = vmatpush1.msra.mxu0 0.0
        %2611 = vmatprep.subr.mxu0 0.0
        %v2612 = vand.u32 %v164, 4294901760
        %v2613 = vsub.f32 %v164, %v2612
        %2614 = vmatpush1.msra.mxu0 %v2613
        %2615 = vmatprep.subr.mxu0 0.0
        %2616 = vmatpush2.msra.mxu0 0.0
        %2617 = vmatprep.subr.mxu0 0.0
        %2618 = vmatpush2.msra.mxu0 0.0
        %2619 = vmatprep.subr.mxu0 0.0
        %2620 = vmatpush2.msra.mxu0 0.0
        %2621 = vmatprep.subr.mxu0 0.0
        %2622 = vmatpush2.msra.mxu0 0.0
        %2623 = vmatprep.subr.mxu0 0.0
        %2624 = vmatpush2.msra.mxu0 0.0
        %2625 = vmatprep.subr.mxu0 0.0
        %2626 = vmatpush2.msra.mxu0 0.0
        %2627 = vmatprep.subr.mxu0 0.0
        %2628 = vmatpush2.msra.mxu0 0.0
        %2629 = vmatprep.subr.mxu0 0.0
        %2630 = vmatpush2.msra.mxu0 0.0
        %2631 = vmatprep.subr.mxu0 0.0
        %2632 = vmatpush2.msra.mxu0 0.0
        %2633 = vmatprep.subr.mxu0 0.0
        %2634 = vmatpush2.msra.mxu0 0.0
        %2635 = vmatprep.subr.mxu0 0.0
        %2636 = vmatpush2.msra.mxu0 0.0
        %2637 = vmatprep.subr.mxu0 0.0
        %2638 = vmatpush2.msra.mxu0 0.0
        %2639 = vmatprep.subr.mxu0 0.0
        %2640 = vmatpush2.msra.mxu0 0.0
        %2641 = vmatprep.subr.mxu0 0.0
        %2642 = vmatpush2.msra.mxu0 0.0
        %2643 = vmatprep.subr.mxu0 0.0
        %2644 = vmatpush2.msra.mxu0 0.0
        %2645 = vmatprep.subr.mxu0 0.0
        %2646 = vmatpush2.msra.mxu0 0.0
        %2647 = vmatprep.mubr.f32.mxu0 0.0
        %v2648 = vand.u32 %v1981, 4294901760
        %v2649 = vsub.f32 %v1981, %v2648
        %2650 = vmatmul.mubr.f32.gmra.mxu0 %v2649
        %v2651 = vpop.f32.mrf.mxu0
        %v2652 = vadd.f32 %v2578, %v2651
        %v2653 = vpop.f32.mrf.mxu0
        %2654 = vdwg.mxu0
        %2655 = vmatprep.subr.mxu0 0.0
        %2656 = vmatpush1.msra.mxu0 0.0
        %2657 = vmatprep.subr.mxu0 0.0
        %2658 = vmatpush1.msra.mxu0 0.0
        %2659 = vmatprep.subr.mxu0 0.0
        %2660 = vmatpush1.msra.mxu0 0.0
        %2661 = vmatprep.subr.mxu0 0.0
        %2662 = vmatpush1.msra.mxu0 0.0
        %2663 = vmatprep.subr.mxu0 0.0
        %2664 = vmatpush1.msra.mxu0 0.0
        %2665 = vmatprep.subr.mxu0 0.0
        %2666 = vmatpush1.msra.mxu0 0.0
        %2667 = vmatprep.subr.mxu0 0.0
        %2668 = vmatpush1.msra.mxu0 0.0
        %2669 = vmatprep.subr.mxu0 0.0
        %2670 = vmatpush1.msra.mxu0 0.0
        %2671 = vmatprep.subr.mxu0 0.0
        %2672 = vmatpush1.msra.mxu0 0.0
        %2673 = vmatprep.subr.mxu0 0.0
        %2674 = vmatpush1.msra.mxu0 0.0
        %2675 = vmatprep.subr.mxu0 0.0
        %2676 = vmatpush1.msra.mxu0 0.0
        %2677 = vmatprep.subr.mxu0 0.0
        %2678 = vmatpush1.msra.mxu0 0.0
        %2679 = vmatprep.subr.mxu0 0.0
        %2680 = vmatpush1.msra.mxu0 0.0
        %2681 = vmatprep.subr.mxu0 0.0
        %2682 = vmatpush1.msra.mxu0 0.0
        %2683 = vmatprep.subr.mxu0 0.0
        %2684 = vmatpush1.msra.mxu0 0.0
        %2685 = vmatprep.subr.mxu0 0.0
        %v2686 = vand.u32 %v164, 4294901760
        %2687 = vmatpush1.msra.mxu0 %v2686
        %2688 = vmatprep.subr.mxu0 0.0
        %2689 = vmatpush2.msra.mxu0 0.0
        %2690 = vmatprep.subr.mxu0 0.0
        %2691 = vmatpush2.msra.mxu0 0.0
        %2692 = vmatprep.subr.mxu0 0.0
        %2693 = vmatpush2.msra.mxu0 0.0
        %2694 = vmatprep.subr.mxu0 0.0
        %2695 = vmatpush2.msra.mxu0 0.0
        %2696 = vmatprep.subr.mxu0 0.0
        %2697 = vmatpush2.msra.mxu0 0.0
        %2698 = vmatprep.subr.mxu0 0.0
        %2699 = vmatpush2.msra.mxu0 0.0
        %2700 = vmatprep.subr.mxu0 0.0
        %2701 = vmatpush2.msra.mxu0 0.0
        %2702 = vmatprep.subr.mxu0 0.0
        %2703 = vmatpush2.msra.mxu0 0.0
        %2704 = vmatprep.subr.mxu0 0.0
        %2705 = vmatpush2.msra.mxu0 0.0
        %2706 = vmatprep.subr.mxu0 0.0
        %2707 = vmatpush2.msra.mxu0 0.0
        %2708 = vmatprep.subr.mxu0 0.0
        %2709 = vmatpush2.msra.mxu0 0.0
        %2710 = vmatprep.subr.mxu0 0.0
        %2711 = vmatpush2.msra.mxu0 0.0
        %2712 = vmatprep.subr.mxu0 0.0
        %2713 = vmatpush2.msra.mxu0 0.0
        %2714 = vmatprep.subr.mxu0 0.0
        %2715 = vmatpush2.msra.mxu0 0.0
        %2716 = vmatprep.subr.mxu0 0.0
        %2717 = vmatpush2.msra.mxu0 0.0
        %2718 = vmatprep.subr.mxu0 0.0
        %2719 = vmatpush2.msra.mxu0 0.0
        %2720 = vmatprep.mubr.f32.mxu0 0.0
        %v2721 = vand.u32 %v1981, 4294901760
        %v2722 = vsub.f32 %v1981, %v2721
        %v2723 = vand.u32 %v2722, 4294901760
        %2724 = vmatmul.mubr.f32.gmra.mxu0 %v2723
        %v2725 = vpop.f32.mrf.mxu0
        %v2726 = vadd.f32 %v2652, %v2725
        %v2727 = vpop.f32.mrf.mxu0
        %2728 = vdwg.mxu0
        %2729 = vmatprep.subr.mxu0 0.0
        %2730 = vmatpush1.msra.mxu0 0.0
        %2731 = vmatprep.subr.mxu0 0.0
        %2732 = vmatpush1.msra.mxu0 0.0
        %2733 = vmatprep.subr.mxu0 0.0
        %2734 = vmatpush1.msra.mxu0 0.0
        %2735 = vmatprep.subr.mxu0 0.0
        %2736 = vmatpush1.msra.mxu0 0.0
        %2737 = vmatprep.subr.mxu0 0.0
        %2738 = vmatpush1.msra.mxu0 0.0
        %2739 = vmatprep.subr.mxu0 0.0
        %2740 = vmatpush1.msra.mxu0 0.0
        %2741 = vmatprep.subr.mxu0 0.0
        %2742 = vmatpush1.msra.mxu0 0.0
        %2743 = vmatprep.subr.mxu0 0.0
        %2744 = vmatpush1.msra.mxu0 0.0
        %2745 = vmatprep.subr.mxu0 0.0
        %2746 = vmatpush1.msra.mxu0 0.0
        %2747 = vmatprep.subr.mxu0 0.0
        %2748 = vmatpush1.msra.mxu0 0.0
        %2749 = vmatprep.subr.mxu0 0.0
        %2750 = vmatpush1.msra.mxu0 0.0
        %2751 = vmatprep.subr.mxu0 0.0
        %2752 = vmatpush1.msra.mxu0 0.0
        %2753 = vmatprep.subr.mxu0 0.0
        %2754 = vmatpush1.msra.mxu0 0.0
        %2755 = vmatprep.subr.mxu0 0.0
        %2756 = vmatpush1.msra.mxu0 0.0
        %2757 = vmatprep.subr.mxu0 0.0
        %2758 = vmatpush1.msra.mxu0 0.0
        %2759 = vmatprep.subr.mxu0 0.0
        %v2760 = vand.u32 %v164, 4294901760
        %v2761 = vsub.f32 %v164, %v2760
        %v2762 = vand.u32 %v2761, 4294901760
        %2763 = vmatpush1.msra.mxu0 %v2762
        %2764 = vmatprep.subr.mxu0 0.0
        %2765 = vmatpush2.msra.mxu0 0.0
        %2766 = vmatprep.subr.mxu0 0.0
        %2767 = vmatpush2.msra.mxu0 0.0
        %2768 = vmatprep.subr.mxu0 0.0
        %2769 = vmatpush2.msra.mxu0 0.0
        %2770 = vmatprep.subr.mxu0 0.0
        %2771 = vmatpush2.msra.mxu0 0.0
        %2772 = vmatprep.subr.mxu0 0.0
        %2773 = vmatpush2.msra.mxu0 0.0
        %2774 = vmatprep.subr.mxu0 0.0
        %2775 = vmatpush2.msra.mxu0 0.0
        %2776 = vmatprep.subr.mxu0 0.0
        %2777 = vmatpush2.msra.mxu0 0.0
        %2778 = vmatprep.subr.mxu0 0.0
        %2779 = vmatpush2.msra.mxu0 0.0
        %2780 = vmatprep.subr.mxu0 0.0
        %2781 = vmatpush2.msra.mxu0 0.0
        %2782 = vmatprep.subr.mxu0 0.0
        %2783 = vmatpush2.msra.mxu0 0.0
        %2784 = vmatprep.subr.mxu0 0.0
        %2785 = vmatpush2.msra.mxu0 0.0
        %2786 = vmatprep.subr.mxu0 0.0
        %2787 = vmatpush2.msra.mxu0 0.0
        %2788 = vmatprep.subr.mxu0 0.0
        %2789 = vmatpush2.msra.mxu0 0.0
        %2790 = vmatprep.subr.mxu0 0.0
        %2791 = vmatpush2.msra.mxu0 0.0
        %2792 = vmatprep.subr.mxu0 0.0
        %2793 = vmatpush2.msra.mxu0 0.0
        %2794 = vmatprep.subr.mxu0 0.0
        %2795 = vmatpush2.msra.mxu0 0.0
        %2796 = vmatprep.mubr.f32.mxu0 0.0
        %v2797 = vand.u32 %v1981, 4294901760
        %2798 = vmatmul.mubr.f32.gmra.mxu0 %v2797
        %v2799 = vpop.f32.mrf.mxu0
        %v2800 = vadd.f32 %v2726, %v2799
        %v2801 = vpop.f32.mrf.mxu0
        %2802 = vdwg.mxu0
        %2803 = vmatprep.subr.mxu0 0.0
        %2804 = vmatpush1.msra.mxu0 0.0
        %2805 = vmatprep.subr.mxu0 0.0
        %2806 = vmatpush1.msra.mxu0 0.0
        %2807 = vmatprep.subr.mxu0 0.0
        %2808 = vmatpush1.msra.mxu0 0.0
        %2809 = vmatprep.subr.mxu0 0.0
        %2810 = vmatpush1.msra.mxu0 0.0
        %2811 = vmatprep.subr.mxu0 0.0
        %2812 = vmatpush1.msra.mxu0 0.0
        %2813 = vmatprep.subr.mxu0 0.0
        %2814 = vmatpush1.msra.mxu0 0.0
        %2815 = vmatprep.subr.mxu0 0.0
        %2816 = vmatpush1.msra.mxu0 0.0
        %2817 = vmatprep.subr.mxu0 0.0
        %2818 = vmatpush1.msra.mxu0 0.0
        %2819 = vmatprep.subr.mxu0 0.0
        %2820 = vmatpush1.msra.mxu0 0.0
        %2821 = vmatprep.subr.mxu0 0.0
        %2822 = vmatpush1.msra.mxu0 0.0
        %2823 = vmatprep.subr.mxu0 0.0
        %2824 = vmatpush1.msra.mxu0 0.0
        %2825 = vmatprep.subr.mxu0 0.0
        %2826 = vmatpush1.msra.mxu0 0.0
        %2827 = vmatprep.subr.mxu0 0.0
        %2828 = vmatpush1.msra.mxu0 0.0
        %2829 = vmatprep.subr.mxu0 0.0
        %2830 = vmatpush1.msra.mxu0 0.0
        %2831 = vmatprep.subr.mxu0 0.0
        %2832 = vmatpush1.msra.mxu0 0.0
        %2833 = vmatprep.subr.mxu0 0.0
        %v2834 = vand.u32 %v164, 4294901760
        %2835 = vmatpush1.msra.mxu0 %v2834
        %2836 = vmatprep.subr.mxu0 0.0
        %2837 = vmatpush2.msra.mxu0 0.0
        %2838 = vmatprep.subr.mxu0 0.0
        %2839 = vmatpush2.msra.mxu0 0.0
        %2840 = vmatprep.subr.mxu0 0.0
        %2841 = vmatpush2.msra.mxu0 0.0
        %2842 = vmatprep.subr.mxu0 0.0
        %2843 = vmatpush2.msra.mxu0 0.0
        %2844 = vmatprep.subr.mxu0 0.0
        %2845 = vmatpush2.msra.mxu0 0.0
        %2846 = vmatprep.subr.mxu0 0.0
        %2847 = vmatpush2.msra.mxu0 0.0
        %2848 = vmatprep.subr.mxu0 0.0
        %2849 = vmatpush2.msra.mxu0 0.0
        %2850 = vmatprep.subr.mxu0 0.0
        %2851 = vmatpush2.msra.mxu0 0.0
        %2852 = vmatprep.subr.mxu0 0.0
        %2853 = vmatpush2.msra.mxu0 0.0
        %2854 = vmatprep.subr.mxu0 0.0
        %2855 = vmatpush2.msra.mxu0 0.0
        %2856 = vmatprep.subr.mxu0 0.0
        %2857 = vmatpush2.msra.mxu0 0.0
        %2858 = vmatprep.subr.mxu0 0.0
        %2859 = vmatpush2.msra.mxu0 0.0
        %2860 = vmatprep.subr.mxu0 0.0
        %2861 = vmatpush2.msra.mxu0 0.0
        %2862 = vmatprep.subr.mxu0 0.0
        %2863 = vmatpush2.msra.mxu0 0.0
        %2864 = vmatprep.subr.mxu0 0.0
        %2865 = vmatpush2.msra.mxu0 0.0
        %2866 = vmatprep.subr.mxu0 0.0
        %2867 = vmatpush2.msra.mxu0 0.0
        %2868 = vmatprep.mubr.f32.mxu0 0.0
        %v2869 = vand.u32 %v1981, 4294901760
        %2870 = vmatmul.mubr.f32.gmra.mxu0 %v2869
        %v2871 = vpop.f32.mrf.mxu0
        %v2872 = vadd.f32 %v2800, %v2871
        %v2873 = vpop.f32.mrf.mxu0
        %2874 = vdwg.mxu0
        %v2875 = vmax.f32 %v2426, %v2872
        %2876 = vmatprep.subr.mxu0 0.0
        %2877 = vmatpush1.msra.mxu0 0.0
        %2878 = vmatprep.subr.mxu0 0.0
        %2879 = vmatpush1.msra.mxu0 0.0
        %2880 = vmatprep.subr.mxu0 0.0
        %2881 = vmatpush1.msra.mxu0 0.0
        %2882 = vmatprep.subr.mxu0 0.0
        %2883 = vmatpush1.msra.mxu0 0.0
        %2884 = vmatprep.subr.mxu0 0.0
        %2885 = vmatpush1.msra.mxu0 0.0
        %2886 = vmatprep.subr.mxu0 0.0
        %2887 = vmatpush1.msra.mxu0 0.0
        %2888 = vmatprep.subr.mxu0 0.0
        %2889 = vmatpush1.msra.mxu0 0.0
        %2890 = vmatprep.subr.mxu0 0.0
        %2891 = vmatpush1.msra.mxu0 0.0
        %2892 = vmatprep.subr.mxu0 0.0
        %2893 = vmatpush1.msra.mxu0 0.0
        %2894 = vmatprep.subr.mxu0 0.0
        %2895 = vmatpush1.msra.mxu0 0.0
        %2896 = vmatprep.subr.mxu0 0.0
        %2897 = vmatpush1.msra.mxu0 0.0
        %2898 = vmatprep.subr.mxu0 0.0
        %2899 = vmatpush1.msra.mxu0 0.0
        %2900 = vmatprep.subr.mxu0 0.0
        %2901 = vmatpush1.msra.mxu0 0.0
        %2902 = vmatprep.subr.mxu0 0.0
        %2903 = vmatpush1.msra.mxu0 0.0
        %2904 = vmatprep.subr.mxu0 0.0
        %2905 = vmatpush1.msra.mxu0 0.0
        %2906 = vmatprep.subr.mxu0 0.0
        %v2907 = vand.u32 %v2875, 4294901760
        %2908 = vmatpush1.msra.mxu0 %v2907
        %2909 = vmatprep.subr.mxu0 0.0
        %2910 = vmatpush2.msra.mxu0 0.0
        %2911 = vmatprep.subr.mxu0 0.0
        %2912 = vmatpush2.msra.mxu0 0.0
        %2913 = vmatprep.subr.mxu0 0.0
        %2914 = vmatpush2.msra.mxu0 0.0
        %2915 = vmatprep.subr.mxu0 0.0
        %2916 = vmatpush2.msra.mxu0 0.0
        %2917 = vmatprep.subr.mxu0 0.0
        %2918 = vmatpush2.msra.mxu0 0.0
        %2919 = vmatprep.subr.mxu0 0.0
        %2920 = vmatpush2.msra.mxu0 0.0
        %2921 = vmatprep.subr.mxu0 0.0
        %2922 = vmatpush2.msra.mxu0 0.0
        %2923 = vmatprep.subr.mxu0 0.0
        %2924 = vmatpush2.msra.mxu0 0.0
        %2925 = vmatprep.subr.mxu0 0.0
        %2926 = vmatpush2.msra.mxu0 0.0
        %2927 = vmatprep.subr.mxu0 0.0
        %2928 = vmatpush2.msra.mxu0 0.0
        %2929 = vmatprep.subr.mxu0 0.0
        %2930 = vmatpush2.msra.mxu0 0.0
        %2931 = vmatprep.subr.mxu0 0.0
        %2932 = vmatpush2.msra.mxu0 0.0
        %2933 = vmatprep.subr.mxu0 0.0
        %2934 = vmatpush2.msra.mxu0 0.0
        %2935 = vmatprep.subr.mxu0 0.0
        %2936 = vmatpush2.msra.mxu0 0.0
        %2937 = vmatprep.subr.mxu0 0.0
        %2938 = vmatpush2.msra.mxu0 0.0
        %2939 = vmatprep.subr.mxu0 0.0
        %2940 = vmatpush2.msra.mxu0 0.0
        %2941 = vmatprep.mubr.f32.mxu0 0.0
        %v2942 = vand.u32 %v1075, 4294901760
        %v2943 = vsub.f32 %v1075, %v2942
        %v2944 = vand.u32 %v2943, 4294901760
        %v2945 = vsub.f32 %v2943, %v2944
        %v2946 = vand.u32 %v2945, 4294901760
        %2947 = vmatmul.mubr.f32.gmra.mxu0 %v2946
        %v2948 = vpop.f32.mrf.mxu0
        %v2949 = vadd.f32 0.0, %v2948
        %v2950 = vpop.f32.mrf.mxu0
        %2951 = vdwg.mxu0
        %2952 = vmatprep.subr.mxu0 0.0
        %2953 = vmatpush1.msra.mxu0 0.0
        %2954 = vmatprep.subr.mxu0 0.0
        %2955 = vmatpush1.msra.mxu0 0.0
        %2956 = vmatprep.subr.mxu0 0.0
        %2957 = vmatpush1.msra.mxu0 0.0
        %2958 = vmatprep.subr.mxu0 0.0
        %2959 = vmatpush1.msra.mxu0 0.0
        %2960 = vmatprep.subr.mxu0 0.0
        %2961 = vmatpush1.msra.mxu0 0.0
        %2962 = vmatprep.subr.mxu0 0.0
        %2963 = vmatpush1.msra.mxu0 0.0
        %2964 = vmatprep.subr.mxu0 0.0
        %2965 = vmatpush1.msra.mxu0 0.0
        %2966 = vmatprep.subr.mxu0 0.0
        %2967 = vmatpush1.msra.mxu0 0.0
        %2968 = vmatprep.subr.mxu0 0.0
        %2969 = vmatpush1.msra.mxu0 0.0
        %2970 = vmatprep.subr.mxu0 0.0
        %2971 = vmatpush1.msra.mxu0 0.0
        %2972 = vmatprep.subr.mxu0 0.0
        %2973 = vmatpush1.msra.mxu0 0.0
        %2974 = vmatprep.subr.mxu0 0.0
        %2975 = vmatpush1.msra.mxu0 0.0
        %2976 = vmatprep.subr.mxu0 0.0
        %2977 = vmatpush1.msra.mxu0 0.0
        %2978 = vmatprep.subr.mxu0 0.0
        %2979 = vmatpush1.msra.mxu0 0.0
        %2980 = vmatprep.subr.mxu0 0.0
        %2981 = vmatpush1.msra.mxu0 0.0
        %2982 = vmatprep.subr.mxu0 0.0
        %v2983 = vand.u32 %v2875, 4294901760
        %v2984 = vsub.f32 %v2875, %v2983
        %v2985 = vand.u32 %v2984, 4294901760
        %v2986 = vsub.f32 %v2984, %v2985
        %v2987 = vand.u32 %v2986, 4294901760
        %2988 = vmatpush1.msra.mxu0 %v2987
        %2989 = vmatprep.subr.mxu0 0.0
        %2990 = vmatpush2.msra.mxu0 0.0
        %2991 = vmatprep.subr.mxu0 0.0
        %2992 = vmatpush2.msra.mxu0 0.0
        %2993 = vmatprep.subr.mxu0 0.0
        %2994 = vmatpush2.msra.mxu0 0.0
        %2995 = vmatprep.subr.mxu0 0.0
        %2996 = vmatpush2.msra.mxu0 0.0
        %2997 = vmatprep.subr.mxu0 0.0
        %2998 = vmatpush2.msra.mxu0 0.0
        %2999 = vmatprep.subr.mxu0 0.0
        %3000 = vmatpush2.msra.mxu0 0.0
        %3001 = vmatprep.subr.mxu0 0.0
        %3002 = vmatpush2.msra.mxu0 0.0
        %3003 = vmatprep.subr.mxu0 0.0
        %3004 = vmatpush2.msra.mxu0 0.0
        %3005 = vmatprep.subr.mxu0 0.0
        %3006 = vmatpush2.msra.mxu0 0.0
        %3007 = vmatprep.subr.mxu0 0.0
        %3008 = vmatpush2.msra.mxu0 0.0
        %3009 = vmatprep.subr.mxu0 0.0
        %3010 = vmatpush2.msra.mxu0 0.0
        %3011 = vmatprep.subr.mxu0 0.0
        %3012 = vmatpush2.msra.mxu0 0.0
        %3013 = vmatprep.subr.mxu0 0.0
        %3014 = vmatpush2.msra.mxu0 0.0
        %3015 = vmatprep.subr.mxu0 0.0
        %3016 = vmatpush2.msra.mxu0 0.0
        %3017 = vmatprep.subr.mxu0 0.0
        %3018 = vmatpush2.msra.mxu0 0.0
        %3019 = vmatprep.subr.mxu0 0.0
        %3020 = vmatpush2.msra.mxu0 0.0
        %3021 = vmatprep.mubr.f32.mxu0 0.0
        %v3022 = vand.u32 %v1075, 4294901760
        %3023 = vmatmul.mubr.f32.gmra.mxu0 %v3022
        %v3024 = vpop.f32.mrf.mxu0
        %v3025 = vadd.f32 %v2949, %v3024
        %v3026 = vpop.f32.mrf.mxu0
        %3027 = vdwg.mxu0
        %3028 = vmatprep.subr.mxu0 0.0
        %3029 = vmatpush1.msra.mxu0 0.0
        %3030 = vmatprep.subr.mxu0 0.0
        %3031 = vmatpush1.msra.mxu0 0.0
        %3032 = vmatprep.subr.mxu0 0.0
        %3033 = vmatpush1.msra.mxu0 0.0
        %3034 = vmatprep.subr.mxu0 0.0
        %3035 = vmatpush1.msra.mxu0 0.0
        %3036 = vmatprep.subr.mxu0 0.0
        %3037 = vmatpush1.msra.mxu0 0.0
        %3038 = vmatprep.subr.mxu0 0.0
        %3039 = vmatpush1.msra.mxu0 0.0
        %3040 = vmatprep.subr.mxu0 0.0
        %3041 = vmatpush1.msra.mxu0 0.0
        %3042 = vmatprep.subr.mxu0 0.0
        %3043 = vmatpush1.msra.mxu0 0.0
        %3044 = vmatprep.subr.mxu0 0.0
        %3045 = vmatpush1.msra.mxu0 0.0
        %3046 = vmatprep.subr.mxu0 0.0
        %3047 = vmatpush1.msra.mxu0 0.0
        %3048 = vmatprep.subr.mxu0 0.0
        %3049 = vmatpush1.msra.mxu0 0.0
        %3050 = vmatprep.subr.mxu0 0.0
        %3051 = vmatpush1.msra.mxu0 0.0
        %3052 = vmatprep.subr.mxu0 0.0
        %3053 = vmatpush1.msra.mxu0 0.0
        %3054 = vmatprep.subr.mxu0 0.0
        %3055 = vmatpush1.msra.mxu0 0.0
        %3056 = vmatprep.subr.mxu0 0.0
        %3057 = vmatpush1.msra.mxu0 0.0
        %3058 = vmatprep.subr.mxu0 0.0
        %v3059 = vand.u32 %v2875, 4294901760
        %v3060 = vsub.f32 %v2875, %v3059
        %3061 = vmatpush1.msra.mxu0 %v3060
        %3062 = vmatprep.subr.mxu0 0.0
        %3063 = vmatpush2.msra.mxu0 0.0
        %3064 = vmatprep.subr.mxu0 0.0
        %3065 = vmatpush2.msra.mxu0 0.0
        %3066 = vmatprep.subr.mxu0 0.0
        %3067 = vmatpush2.msra.mxu0 0.0
        %3068 = vmatprep.subr.mxu0 0.0
        %3069 = vmatpush2.msra.mxu0 0.0
        %3070 = vmatprep.subr.mxu0 0.0
        %3071 = vmatpush2.msra.mxu0 0.0
        %3072 = vmatprep.subr.mxu0 0.0
        %3073 = vmatpush2.msra.mxu0 0.0
        %3074 = vmatprep.subr.mxu0 0.0
        %3075 = vmatpush2.msra.mxu0 0.0
        %3076 = vmatprep.subr.mxu0 0.0
        %3077 = vmatpush2.msra.mxu0 0.0
        %3078 = vmatprep.subr.mxu0 0.0
        %3079 = vmatpush2.msra.mxu0 0.0
        %3080 = vmatprep.subr.mxu0 0.0
        %3081 = vmatpush2.msra.mxu0 0.0
        %3082 = vmatprep.subr.mxu0 0.0
        %3083 = vmatpush2.msra.mxu0 0.0
        %3084 = vmatprep.subr.mxu0 0.0
        %3085 = vmatpush2.msra.mxu0 0.0
        %3086 = vmatprep.subr.mxu0 0.0
        %3087 = vmatpush2.msra.mxu0 0.0
        %3088 = vmatprep.subr.mxu0 0.0
        %3089 = vmatpush2.msra.mxu0 0.0
        %3090 = vmatprep.subr.mxu0 0.0
        %3091 = vmatpush2.msra.mxu0 0.0
        %3092 = vmatprep.subr.mxu0 0.0
        %3093 = vmatpush2.msra.mxu0 0.0
        %3094 = vmatprep.mubr.f32.mxu0 0.0
        %v3095 = vand.u32 %v1075, 4294901760
        %v3096 = vsub.f32 %v1075, %v3095
        %3097 = vmatmul.mubr.f32.gmra.mxu0 %v3096
        %v3098 = vpop.f32.mrf.mxu0
        %v3099 = vadd.f32 %v3025, %v3098
        %v3100 = vpop.f32.mrf.mxu0
        %3101 = vdwg.mxu0
        %3102 = vmatprep.subr.mxu0 0.0
        %3103 = vmatpush1.msra.mxu0 0.0
        %3104 = vmatprep.subr.mxu0 0.0
        %3105 = vmatpush1.msra.mxu0 0.0
        %3106 = vmatprep.subr.mxu0 0.0
        %3107 = vmatpush1.msra.mxu0 0.0
        %3108 = vmatprep.subr.mxu0 0.0
        %3109 = vmatpush1.msra.mxu0 0.0
        %3110 = vmatprep.subr.mxu0 0.0
        %3111 = vmatpush1.msra.mxu0 0.0
        %3112 = vmatprep.subr.mxu0 0.0
        %3113 = vmatpush1.msra.mxu0 0.0
        %3114 = vmatprep.subr.mxu0 0.0
        %3115 = vmatpush1.msra.mxu0 0.0
        %3116 = vmatprep.subr.mxu0 0.0
        %3117 = vmatpush1.msra.mxu0 0.0
        %3118 = vmatprep.subr.mxu0 0.0
        %3119 = vmatpush1.msra.mxu0 0.0
        %3120 = vmatprep.subr.mxu0 0.0
        %3121 = vmatpush1.msra.mxu0 0.0
        %3122 = vmatprep.subr.mxu0 0.0
        %3123 = vmatpush1.msra.mxu0 0.0
        %3124 = vmatprep.subr.mxu0 0.0
        %3125 = vmatpush1.msra.mxu0 0.0
        %3126 = vmatprep.subr.mxu0 0.0
        %3127 = vmatpush1.msra.mxu0 0.0
        %3128 = vmatprep.subr.mxu0 0.0
        %3129 = vmatpush1.msra.mxu0 0.0
        %3130 = vmatprep.subr.mxu0 0.0
        %3131 = vmatpush1.msra.mxu0 0.0
        %3132 = vmatprep.subr.mxu0 0.0
        %v3133 = vand.u32 %v2875, 4294901760
        %3134 = vmatpush1.msra.mxu0 %v3133
        %3135 = vmatprep.subr.mxu0 0.0
        %3136 = vmatpush2.msra.mxu0 0.0
        %3137 = vmatprep.subr.mxu0 0.0
        %3138 = vmatpush2.msra.mxu0 0.0
        %3139 = vmatprep.subr.mxu0 0.0
        %3140 = vmatpush2.msra.mxu0 0.0
        %3141 = vmatprep.subr.mxu0 0.0
        %3142 = vmatpush2.msra.mxu0 0.0
        %3143 = vmatprep.subr.mxu0 0.0
        %3144 = vmatpush2.msra.mxu0 0.0
        %3145 = vmatprep.subr.mxu0 0.0
        %3146 = vmatpush2.msra.mxu0 0.0
        %3147 = vmatprep.subr.mxu0 0.0
        %3148 = vmatpush2.msra.mxu0 0.0
        %3149 = vmatprep.subr.mxu0 0.0
        %3150 = vmatpush2.msra.mxu0 0.0
        %3151 = vmatprep.subr.mxu0 0.0
        %3152 = vmatpush2.msra.mxu0 0.0
        %3153 = vmatprep.subr.mxu0 0.0
        %3154 = vmatpush2.msra.mxu0 0.0
        %3155 = vmatprep.subr.mxu0 0.0
        %3156 = vmatpush2.msra.mxu0 0.0
        %3157 = vmatprep.subr.mxu0 0.0
        %3158 = vmatpush2.msra.mxu0 0.0
        %3159 = vmatprep.subr.mxu0 0.0
        %3160 = vmatpush2.msra.mxu0 0.0
        %3161 = vmatprep.subr.mxu0 0.0
        %3162 = vmatpush2.msra.mxu0 0.0
        %3163 = vmatprep.subr.mxu0 0.0
        %3164 = vmatpush2.msra.mxu0 0.0
        %3165 = vmatprep.subr.mxu0 0.0
        %3166 = vmatpush2.msra.mxu0 0.0
        %3167 = vmatprep.mubr.f32.mxu0 0.0
        %v3168 = vand.u32 %v1075, 4294901760
        %v3169 = vsub.f32 %v1075, %v3168
        %v3170 = vand.u32 %v3169, 4294901760
        %3171 = vmatmul.mubr.f32.gmra.mxu0 %v3170
        %v3172 = vpop.f32.mrf.mxu0
        %v3173 = vadd.f32 %v3099, %v3172
        %v3174 = vpop.f32.mrf.mxu0
        %3175 = vdwg.mxu0
        %3176 = vmatprep.subr.mxu0 0.0
        %3177 = vmatpush1.msra.mxu0 0.0
        %3178 = vmatprep.subr.mxu0 0.0
        %3179 = vmatpush1.msra.mxu0 0.0
        %3180 = vmatprep.subr.mxu0 0.0
        %3181 = vmatpush1.msra.mxu0 0.0
        %3182 = vmatprep.subr.mxu0 0.0
        %3183 = vmatpush1.msra.mxu0 0.0
        %3184 = vmatprep.subr.mxu0 0.0
        %3185 = vmatpush1.msra.mxu0 0.0
        %3186 = vmatprep.subr.mxu0 0.0
        %3187 = vmatpush1.msra.mxu0 0.0
        %3188 = vmatprep.subr.mxu0 0.0
        %3189 = vmatpush1.msra.mxu0 0.0
        %3190 = vmatprep.subr.mxu0 0.0
        %3191 = vmatpush1.msra.mxu0 0.0
        %3192 = vmatprep.subr.mxu0 0.0
        %3193 = vmatpush1.msra.mxu0 0.0
        %3194 = vmatprep.subr.mxu0 0.0
        %3195 = vmatpush1.msra.mxu0 0.0
        %3196 = vmatprep.subr.mxu0 0.0
        %3197 = vmatpush1.msra.mxu0 0.0
        %3198 = vmatprep.subr.mxu0 0.0
        %3199 = vmatpush1.msra.mxu0 0.0
        %3200 = vmatprep.subr.mxu0 0.0
        %3201 = vmatpush1.msra.mxu0 0.0
        %3202 = vmatprep.subr.mxu0 0.0
        %3203 = vmatpush1.msra.mxu0 0.0
        %3204 = vmatprep.subr.mxu0 0.0
        %3205 = vmatpush1.msra.mxu0 0.0
        %3206 = vmatprep.subr.mxu0 0.0
        %v3207 = vand.u32 %v2875, 4294901760
        %v3208 = vsub.f32 %v2875, %v3207
        %v3209 = vand.u32 %v3208, 4294901760
        %3210 = vmatpush1.msra.mxu0 %v3209
        %3211 = vmatprep.subr.mxu0 0.0
        %3212 = vmatpush2.msra.mxu0 0.0
        %3213 = vmatprep.subr.mxu0 0.0
        %3214 = vmatpush2.msra.mxu0 0.0
        %3215 = vmatprep.subr.mxu0 0.0
        %3216 = vmatpush2.msra.mxu0 0.0
        %3217 = vmatprep.subr.mxu0 0.0
        %3218 = vmatpush2.msra.mxu0 0.0
        %3219 = vmatprep.subr.mxu0 0.0
        %3220 = vmatpush2.msra.mxu0 0.0
        %3221 = vmatprep.subr.mxu0 0.0
        %3222 = vmatpush2.msra.mxu0 0.0
        %3223 = vmatprep.subr.mxu0 0.0
        %3224 = vmatpush2.msra.mxu0 0.0
        %3225 = vmatprep.subr.mxu0 0.0
        %3226 = vmatpush2.msra.mxu0 0.0
        %3227 = vmatprep.subr.mxu0 0.0
        %3228 = vmatpush2.msra.mxu0 0.0
        %3229 = vmatprep.subr.mxu0 0.0
        %3230 = vmatpush2.msra.mxu0 0.0
        %3231 = vmatprep.subr.mxu0 0.0
        %3232 = vmatpush2.msra.mxu0 0.0
        %3233 = vmatprep.subr.mxu0 0.0
        %3234 = vmatpush2.msra.mxu0 0.0
        %3235 = vmatprep.subr.mxu0 0.0
        %3236 = vmatpush2.msra.mxu0 0.0
        %3237 = vmatprep.subr.mxu0 0.0
        %3238 = vmatpush2.msra.mxu0 0.0
        %3239 = vmatprep.subr.mxu0 0.0
        %3240 = vmatpush2.msra.mxu0 0.0
        %3241 = vmatprep.subr.mxu0 0.0
        %3242 = vmatpush2.msra.mxu0 0.0
        %3243 = vmatprep.mubr.f32.mxu0 0.0
        %v3244 = vand.u32 %v1075, 4294901760
        %3245 = vmatmul.mubr.f32.gmra.mxu0 %v3244
        %v3246 = vpop.f32.mrf.mxu0
        %v3247 = vadd.f32 %v3173, %v3246
        %v3248 = vpop.f32.mrf.mxu0
        %3249 = vdwg.mxu0
        %3250 = vmatprep.subr.mxu0 0.0
        %3251 = vmatpush1.msra.mxu0 0.0
        %3252 = vmatprep.subr.mxu0 0.0
        %3253 = vmatpush1.msra.mxu0 0.0
        %3254 = vmatprep.subr.mxu0 0.0
        %3255 = vmatpush1.msra.mxu0 0.0
        %3256 = vmatprep.subr.mxu0 0.0
        %3257 = vmatpush1.msra.mxu0 0.0
        %3258 = vmatprep.subr.mxu0 0.0
        %3259 = vmatpush1.msra.mxu0 0.0
        %3260 = vmatprep.subr.mxu0 0.0
        %3261 = vmatpush1.msra.mxu0 0.0
        %3262 = vmatprep.subr.mxu0 0.0
        %3263 = vmatpush1.msra.mxu0 0.0
        %3264 = vmatprep.subr.mxu0 0.0
        %3265 = vmatpush1.msra.mxu0 0.0
        %3266 = vmatprep.subr.mxu0 0.0
        %3267 = vmatpush1.msra.mxu0 0.0
        %3268 = vmatprep.subr.mxu0 0.0
        %3269 = vmatpush1.msra.mxu0 0.0
        %3270 = vmatprep.subr.mxu0 0.0
        %3271 = vmatpush1.msra.mxu0 0.0
        %3272 = vmatprep.subr.mxu0 0.0
        %3273 = vmatpush1.msra.mxu0 0.0
        %3274 = vmatprep.subr.mxu0 0.0
        %3275 = vmatpush1.msra.mxu0 0.0
        %3276 = vmatprep.subr.mxu0 0.0
        %3277 = vmatpush1.msra.mxu0 0.0
        %3278 = vmatprep.subr.mxu0 0.0
        %3279 = vmatpush1.msra.mxu0 0.0
        %3280 = vmatprep.subr.mxu0 0.0
        %v3281 = vand.u32 %v2875, 4294901760
        %3282 = vmatpush1.msra.mxu0 %v3281
        %3283 = vmatprep.subr.mxu0 0.0
        %3284 = vmatpush2.msra.mxu0 0.0
        %3285 = vmatprep.subr.mxu0 0.0
        %3286 = vmatpush2.msra.mxu0 0.0
        %3287 = vmatprep.subr.mxu0 0.0
        %3288 = vmatpush2.msra.mxu0 0.0
        %3289 = vmatprep.subr.mxu0 0.0
        %3290 = vmatpush2.msra.mxu0 0.0
        %3291 = vmatprep.subr.mxu0 0.0
        %3292 = vmatpush2.msra.mxu0 0.0
        %3293 = vmatprep.subr.mxu0 0.0
        %3294 = vmatpush2.msra.mxu0 0.0
        %3295 = vmatprep.subr.mxu0 0.0
        %3296 = vmatpush2.msra.mxu0 0.0
        %3297 = vmatprep.subr.mxu0 0.0
        %3298 = vmatpush2.msra.mxu0 0.0
        %3299 = vmatprep.subr.mxu0 0.0
        %3300 = vmatpush2.msra.mxu0 0.0
        %3301 = vmatprep.subr.mxu0 0.0
        %3302 = vmatpush2.msra.mxu0 0.0
        %3303 = vmatprep.subr.mxu0 0.0
        %3304 = vmatpush2.msra.mxu0 0.0
        %3305 = vmatprep.subr.mxu0 0.0
        %3306 = vmatpush2.msra.mxu0 0.0
        %3307 = vmatprep.subr.mxu0 0.0
        %3308 = vmatpush2.msra.mxu0 0.0
        %3309 = vmatprep.subr.mxu0 0.0
        %3310 = vmatpush2.msra.mxu0 0.0
        %3311 = vmatprep.subr.mxu0 0.0
        %3312 = vmatpush2.msra.mxu0 0.0
        %3313 = vmatprep.subr.mxu0 0.0
        %3314 = vmatpush2.msra.mxu0 0.0
        %3315 = vmatprep.mubr.f32.mxu0 0.0
        %v3316 = vand.u32 %v1075, 4294901760
        %3317 = vmatmul.mubr.f32.gmra.mxu0 %v3316
        %v3318 = vpop.f32.mrf.mxu0
        %v3319 = vadd.f32 %v3247, %v3318
        %v3320 = vpop.f32.mrf.mxu0
        %3321 = vdwg.mxu0
        %3322 = vmatprep.subr.mxu0 0.0
        %3323 = vmatpush1.msra.mxu0 0.0
        %3324 = vmatprep.subr.mxu0 0.0
        %3325 = vmatpush1.msra.mxu0 0.0
        %3326 = vmatprep.subr.mxu0 0.0
        %3327 = vmatpush1.msra.mxu0 0.0
        %3328 = vmatprep.subr.mxu0 0.0
        %3329 = vmatpush1.msra.mxu0 0.0
        %3330 = vmatprep.subr.mxu0 0.0
        %3331 = vmatpush1.msra.mxu0 0.0
        %3332 = vmatprep.subr.mxu0 0.0
        %3333 = vmatpush1.msra.mxu0 0.0
        %3334 = vmatprep.subr.mxu0 0.0
        %3335 = vmatpush1.msra.mxu0 0.0
        %3336 = vmatprep.subr.mxu0 0.0
        %3337 = vmatpush1.msra.mxu0 0.0
        %3338 = vmatprep.subr.mxu0 0.0
        %3339 = vmatpush1.msra.mxu0 0.0
        %3340 = vmatprep.subr.mxu0 0.0
        %3341 = vmatpush1.msra.mxu0 0.0
        %3342 = vmatprep.subr.mxu0 0.0
        %3343 = vmatpush1.msra.mxu0 0.0
        %3344 = vmatprep.subr.mxu0 0.0
        %3345 = vmatpush1.msra.mxu0 0.0
        %3346 = vmatprep.subr.mxu0 0.0
        %3347 = vmatpush1.msra.mxu0 0.0
        %3348 = vmatprep.subr.mxu0 0.0
        %3349 = vmatpush1.msra.mxu0 0.0
        %3350 = vmatprep.subr.mxu0 0.0
        %3351 = vmatpush1.msra.mxu0 0.0
        %3352 = vmatprep.subr.mxu0 0.0
        %v3353 = vand.u32 %v2875, 4294901760
        %3354 = vmatpush1.msra.mxu0 %v3353
        %3355 = vmatprep.subr.mxu0 0.0
        %3356 = vmatpush2.msra.mxu0 0.0
        %3357 = vmatprep.subr.mxu0 0.0
        %3358 = vmatpush2.msra.mxu0 0.0
        %3359 = vmatprep.subr.mxu0 0.0
        %3360 = vmatpush2.msra.mxu0 0.0
        %3361 = vmatprep.subr.mxu0 0.0
        %3362 = vmatpush2.msra.mxu0 0.0
        %3363 = vmatprep.subr.mxu0 0.0
        %3364 = vmatpush2.msra.mxu0 0.0
        %3365 = vmatprep.subr.mxu0 0.0
        %3366 = vmatpush2.msra.mxu0 0.0
        %3367 = vmatprep.subr.mxu0 0.0
        %3368 = vmatpush2.msra.mxu0 0.0
        %3369 = vmatprep.subr.mxu0 0.0
        %3370 = vmatpush2.msra.mxu0 0.0
        %3371 = vmatprep.subr.mxu0 0.0
        %3372 = vmatpush2.msra.mxu0 0.0
        %3373 = vmatprep.subr.mxu0 0.0
        %3374 = vmatpush2.msra.mxu0 0.0
        %3375 = vmatprep.subr.mxu0 0.0
        %3376 = vmatpush2.msra.mxu0 0.0
        %3377 = vmatprep.subr.mxu0 0.0
        %3378 = vmatpush2.msra.mxu0 0.0
        %3379 = vmatprep.subr.mxu0 0.0
        %3380 = vmatpush2.msra.mxu0 0.0
        %3381 = vmatprep.subr.mxu0 0.0
        %3382 = vmatpush2.msra.mxu0 0.0
        %3383 = vmatprep.subr.mxu0 0.0
        %3384 = vmatpush2.msra.mxu0 0.0
        %3385 = vmatprep.subr.mxu0 0.0
        %3386 = vmatpush2.msra.mxu0 0.0
        %3387 = vmatprep.mubr.f32.mxu0 0.0
        %v3388 = vand.u32 %v1524, 4294901760
        %v3389 = vsub.f32 %v1524, %v3388
        %v3390 = vand.u32 %v3389, 4294901760
        %v3391 = vsub.f32 %v3389, %v3390
        %v3392 = vand.u32 %v3391, 4294901760
        %3393 = vmatmul.mubr.f32.gmra.mxu0 %v3392
        %v3394 = vpop.f32.mrf.mxu0
        %v3395 = vadd.f32 0.0, %v3394
        %v3396 = vpop.f32.mrf.mxu0
        %3397 = vdwg.mxu0
        %3398 = vmatprep.subr.mxu0 0.0
        %3399 = vmatpush1.msra.mxu0 0.0
        %3400 = vmatprep.subr.mxu0 0.0
        %3401 = vmatpush1.msra.mxu0 0.0
        %3402 = vmatprep.subr.mxu0 0.0
        %3403 = vmatpush1.msra.mxu0 0.0
        %3404 = vmatprep.subr.mxu0 0.0
        %3405 = vmatpush1.msra.mxu0 0.0
        %3406 = vmatprep.subr.mxu0 0.0
        %3407 = vmatpush1.msra.mxu0 0.0
        %3408 = vmatprep.subr.mxu0 0.0
        %3409 = vmatpush1.msra.mxu0 0.0
        %3410 = vmatprep.subr.mxu0 0.0
        %3411 = vmatpush1.msra.mxu0 0.0
        %3412 = vmatprep.subr.mxu0 0.0
        %3413 = vmatpush1.msra.mxu0 0.0
        %3414 = vmatprep.subr.mxu0 0.0
        %3415 = vmatpush1.msra.mxu0 0.0
        %3416 = vmatprep.subr.mxu0 0.0
        %3417 = vmatpush1.msra.mxu0 0.0
        %3418 = vmatprep.subr.mxu0 0.0
        %3419 = vmatpush1.msra.mxu0 0.0
        %3420 = vmatprep.subr.mxu0 0.0
        %3421 = vmatpush1.msra.mxu0 0.0
        %3422 = vmatprep.subr.mxu0 0.0
        %3423 = vmatpush1.msra.mxu0 0.0
        %3424 = vmatprep.subr.mxu0 0.0
        %3425 = vmatpush1.msra.mxu0 0.0
        %3426 = vmatprep.subr.mxu0 0.0
        %3427 = vmatpush1.msra.mxu0 0.0
        %3428 = vmatprep.subr.mxu0 0.0
        %v3429 = vand.u32 %v2875, 4294901760
        %v3430 = vsub.f32 %v2875, %v3429
        %v3431 = vand.u32 %v3430, 4294901760
        %v3432 = vsub.f32 %v3430, %v3431
        %v3433 = vand.u32 %v3432, 4294901760
        %3434 = vmatpush1.msra.mxu0 %v3433
        %3435 = vmatprep.subr.mxu0 0.0
        %3436 = vmatpush2.msra.mxu0 0.0
        %3437 = vmatprep.subr.mxu0 0.0
        %3438 = vmatpush2.msra.mxu0 0.0
        %3439 = vmatprep.subr.mxu0 0.0
        %3440 = vmatpush2.msra.mxu0 0.0
        %3441 = vmatprep.subr.mxu0 0.0
        %3442 = vmatpush2.msra.mxu0 0.0
        %3443 = vmatprep.subr.mxu0 0.0
        %3444 = vmatpush2.msra.mxu0 0.0
        %3445 = vmatprep.subr.mxu0 0.0
        %3446 = vmatpush2.msra.mxu0 0.0
        %3447 = vmatprep.subr.mxu0 0.0
        %3448 = vmatpush2.msra.mxu0 0.0
        %3449 = vmatprep.subr.mxu0 0.0
        %3450 = vmatpush2.msra.mxu0 0.0
        %3451 = vmatprep.subr.mxu0 0.0
        %3452 = vmatpush2.msra.mxu0 0.0
        %3453 = vmatprep.subr.mxu0 0.0
        %3454 = vmatpush2.msra.mxu0 0.0
        %3455 = vmatprep.subr.mxu0 0.0
        %3456 = vmatpush2.msra.mxu0 0.0
        %3457 = vmatprep.subr.mxu0 0.0
        %3458 = vmatpush2.msra.mxu0 0.0
        %3459 = vmatprep.subr.mxu0 0.0
        %3460 = vmatpush2.msra.mxu0 0.0
        %3461 = vmatprep.subr.mxu0 0.0
        %3462 = vmatpush2.msra.mxu0 0.0
        %3463 = vmatprep.subr.mxu0 0.0
        %3464 = vmatpush2.msra.mxu0 0.0
        %3465 = vmatprep.subr.mxu0 0.0
        %3466 = vmatpush2.msra.mxu0 0.0
        %3467 = vmatprep.mubr.f32.mxu0 0.0
        %v3468 = vand.u32 %v1524, 4294901760
        %3469 = vmatmul.mubr.f32.gmra.mxu0 %v3468
        %v3470 = vpop.f32.mrf.mxu0
        %v3471 = vadd.f32 %v3395, %v3470
        %v3472 = vpop.f32.mrf.mxu0
        %3473 = vdwg.mxu0
        %3474 = vmatprep.subr.mxu0 0.0
        %3475 = vmatpush1.msra.mxu0 0.0
        %3476 = vmatprep.subr.mxu0 0.0
        %3477 = vmatpush1.msra.mxu0 0.0
        %3478 = vmatprep.subr.mxu0 0.0
        %3479 = vmatpush1.msra.mxu0 0.0
        %3480 = vmatprep.subr.mxu0 0.0
        %3481 = vmatpush1.msra.mxu0 0.0
        %3482 = vmatprep.subr.mxu0 0.0
        %3483 = vmatpush1.msra.mxu0 0.0
        %3484 = vmatprep.subr.mxu0 0.0
        %3485 = vmatpush1.msra.mxu0 0.0
        %3486 = vmatprep.subr.mxu0 0.0
        %3487 = vmatpush1.msra.mxu0 0.0
        %3488 = vmatprep.subr.mxu0 0.0
        %3489 = vmatpush1.msra.mxu0 0.0
        %3490 = vmatprep.subr.mxu0 0.0
        %3491 = vmatpush1.msra.mxu0 0.0
        %3492 = vmatprep.subr.mxu0 0.0
        %3493 = vmatpush1.msra.mxu0 0.0
        %3494 = vmatprep.subr.mxu0 0.0
        %3495 = vmatpush1.msra.mxu0 0.0
        %3496 = vmatprep.subr.mxu0 0.0
        %3497 = vmatpush1.msra.mxu0 0.0
        %3498 = vmatprep.subr.mxu0 0.0
        %3499 = vmatpush1.msra.mxu0 0.0
        %3500 = vmatprep.subr.mxu0 0.0
        %3501 = vmatpush1.msra.mxu0 0.0
        %3502 = vmatprep.subr.mxu0 0.0
        %3503 = vmatpush1.msra.mxu0 0.0
        %3504 = vmatprep.subr.mxu0 0.0
        %v3505 = vand.u32 %v2875, 4294901760
        %v3506 = vsub.f32 %v2875, %v3505
        %3507 = vmatpush1.msra.mxu0 %v3506
        %3508 = vmatprep.subr.mxu0 0.0
        %3509 = vmatpush2.msra.mxu0 0.0
        %3510 = vmatprep.subr.mxu0 0.0
        %3511 = vmatpush2.msra.mxu0 0.0
        %3512 = vmatprep.subr.mxu0 0.0
        %3513 = vmatpush2.msra.mxu0 0.0
        %3514 = vmatprep.subr.mxu0 0.0
        %3515 = vmatpush2.msra.mxu0 0.0
        %3516 = vmatprep.subr.mxu0 0.0
        %3517 = vmatpush2.msra.mxu0 0.0
        %3518 = vmatprep.subr.mxu0 0.0
        %3519 = vmatpush2.msra.mxu0 0.0
        %3520 = vmatprep.subr.mxu0 0.0
        %3521 = vmatpush2.msra.mxu0 0.0
        %3522 = vmatprep.subr.mxu0 0.0
        %3523 = vmatpush2.msra.mxu0 0.0
        %3524 = vmatprep.subr.mxu0 0.0
        %3525 = vmatpush2.msra.mxu0 0.0
        %3526 = vmatprep.subr.mxu0 0.0
        %3527 = vmatpush2.msra.mxu0 0.0
        %3528 = vmatprep.subr.mxu0 0.0
        %3529 = vmatpush2.msra.mxu0 0.0
        %3530 = vmatprep.subr.mxu0 0.0
        %3531 = vmatpush2.msra.mxu0 0.0
        %3532 = vmatprep.subr.mxu0 0.0
        %3533 = vmatpush2.msra.mxu0 0.0
        %3534 = vmatprep.subr.mxu0 0.0
        %3535 = vmatpush2.msra.mxu0 0.0
        %3536 = vmatprep.subr.mxu0 0.0
        %3537 = vmatpush2.msra.mxu0 0.0
        %3538 = vmatprep.subr.mxu0 0.0
        %3539 = vmatpush2.msra.mxu0 0.0
        %3540 = vmatprep.mubr.f32.mxu0 0.0
        %v3541 = vand.u32 %v1524, 4294901760
        %v3542 = vsub.f32 %v1524, %v3541
        %3543 = vmatmul.mubr.f32.gmra.mxu0 %v3542
        %v3544 = vpop.f32.mrf.mxu0
        %v3545 = vadd.f32 %v3471, %v3544
        %v3546 = vpop.f32.mrf.mxu0
        %3547 = vdwg.mxu0
        %3548 = vmatprep.subr.mxu0 0.0
        %3549 = vmatpush1.msra.mxu0 0.0
        %3550 = vmatprep.subr.mxu0 0.0
        %3551 = vmatpush1.msra.mxu0 0.0
        %3552 = vmatprep.subr.mxu0 0.0
        %3553 = vmatpush1.msra.mxu0 0.0
        %3554 = vmatprep.subr.mxu0 0.0
        %3555 = vmatpush1.msra.mxu0 0.0
        %3556 = vmatprep.subr.mxu0 0.0
        %3557 = vmatpush1.msra.mxu0 0.0
        %3558 = vmatprep.subr.mxu0 0.0
        %3559 = vmatpush1.msra.mxu0 0.0
        %3560 = vmatprep.subr.mxu0 0.0
        %3561 = vmatpush1.msra.mxu0 0.0
        %3562 = vmatprep.subr.mxu0 0.0
        %3563 = vmatpush1.msra.mxu0 0.0
        %3564 = vmatprep.subr.mxu0 0.0
        %3565 = vmatpush1.msra.mxu0 0.0
        %3566 = vmatprep.subr.mxu0 0.0
        %3567 = vmatpush1.msra.mxu0 0.0
        %3568 = vmatprep.subr.mxu0 0.0
        %3569 = vmatpush1.msra.mxu0 0.0
        %3570 = vmatprep.subr.mxu0 0.0
        %3571 = vmatpush1.msra.mxu0 0.0
        %3572 = vmatprep.subr.mxu0 0.0
        %3573 = vmatpush1.msra.mxu0 0.0
        %3574 = vmatprep.subr.mxu0 0.0
        %3575 = vmatpush1.msra.mxu0 0.0
        %3576 = vmatprep.subr.mxu0 0.0
        %3577 = vmatpush1.msra.mxu0 0.0
        %3578 = vmatprep.subr.mxu0 0.0
        %v3579 = vand.u32 %v2875, 4294901760
        %3580 = vmatpush1.msra.mxu0 %v3579
        %3581 = vmatprep.subr.mxu0 0.0
        %3582 = vmatpush2.msra.mxu0 0.0
        %3583 = vmatprep.subr.mxu0 0.0
        %3584 = vmatpush2.msra.mxu0 0.0
        %3585 = vmatprep.subr.mxu0 0.0
        %3586 = vmatpush2.msra.mxu0 0.0
        %3587 = vmatprep.subr.mxu0 0.0
        %3588 = vmatpush2.msra.mxu0 0.0
        %3589 = vmatprep.subr.mxu0 0.0
        %3590 = vmatpush2.msra.mxu0 0.0
        %3591 = vmatprep.subr.mxu0 0.0
        %3592 = vmatpush2.msra.mxu0 0.0
        %3593 = vmatprep.subr.mxu0 0.0
        %3594 = vmatpush2.msra.mxu0 0.0
        %3595 = vmatprep.subr.mxu0 0.0
        %3596 = vmatpush2.msra.mxu0 0.0
        %3597 = vmatprep.subr.mxu0 0.0
        %3598 = vmatpush2.msra.mxu0 0.0
        %3599 = vmatprep.subr.mxu0 0.0
        %3600 = vmatpush2.msra.mxu0 0.0
        %3601 = vmatprep.subr.mxu0 0.0
        %3602 = vmatpush2.msra.mxu0 0.0
        %3603 = vmatprep.subr.mxu0 0.0
        %3604 = vmatpush2.msra.mxu0 0.0
        %3605 = vmatprep.subr.mxu0 0.0
        %3606 = vmatpush2.msra.mxu0 0.0
        %3607 = vmatprep.subr.mxu0 0.0
        %3608 = vmatpush2.msra.mxu0 0.0
        %3609 = vmatprep.subr.mxu0 0.0
        %3610 = vmatpush2.msra.mxu0 0.0
        %3611 = vmatprep.subr.mxu0 0.0
        %3612 = vmatpush2.msra.mxu0 0.0
        %3613 = vmatprep.mubr.f32.mxu0 0.0
        %v3614 = vand.u32 %v1524, 4294901760
        %v3615 = vsub.f32 %v1524, %v3614
        %v3616 = vand.u32 %v3615, 4294901760
        %3617 = vmatmul.mubr.f32.gmra.mxu0 %v3616
        %v3618 = vpop.f32.mrf.mxu0
        %v3619 = vadd.f32 %v3545, %v3618
        %v3620 = vpop.f32.mrf.mxu0
        %3621 = vdwg.mxu0
        %3622 = vmatprep.subr.mxu0 0.0
        %3623 = vmatpush1.msra.mxu0 0.0
        %3624 = vmatprep.subr.mxu0 0.0
        %3625 = vmatpush1.msra.mxu0 0.0
        %3626 = vmatprep.subr.mxu0 0.0
        %3627 = vmatpush1.msra.mxu0 0.0
        %3628 = vmatprep.subr.mxu0 0.0
        %3629 = vmatpush1.msra.mxu0 0.0
        %3630 = vmatprep.subr.mxu0 0.0
        %3631 = vmatpush1.msra.mxu0 0.0
        %3632 = vmatprep.subr.mxu0 0.0
        %3633 = vmatpush1.msra.mxu0 0.0
        %3634 = vmatprep.subr.mxu0 0.0
        %3635 = vmatpush1.msra.mxu0 0.0
        %3636 = vmatprep.subr.mxu0 0.0
        %3637 = vmatpush1.msra.mxu0 0.0
        %3638 = vmatprep.subr.mxu0 0.0
        %3639 = vmatpush1.msra.mxu0 0.0
        %3640 = vmatprep.subr.mxu0 0.0
        %3641 = vmatpush1.msra.mxu0 0.0
        %3642 = vmatprep.subr.mxu0 0.0
        %3643 = vmatpush1.msra.mxu0 0.0
        %3644 = vmatprep.subr.mxu0 0.0
        %3645 = vmatpush1.msra.mxu0 0.0
        %3646 = vmatprep.subr.mxu0 0.0
        %3647 = vmatpush1.msra.mxu0 0.0
        %3648 = vmatprep.subr.mxu0 0.0
        %3649 = vmatpush1.msra.mxu0 0.0
        %3650 = vmatprep.subr.mxu0 0.0
        %3651 = vmatpush1.msra.mxu0 0.0
        %3652 = vmatprep.subr.mxu0 0.0
        %v3653 = vand.u32 %v2875, 4294901760
        %v3654 = vsub.f32 %v2875, %v3653
        %v3655 = vand.u32 %v3654, 4294901760
        %3656 = vmatpush1.msra.mxu0 %v3655
        %3657 = vmatprep.subr.mxu0 0.0
        %3658 = vmatpush2.msra.mxu0 0.0
        %3659 = vmatprep.subr.mxu0 0.0
        %3660 = vmatpush2.msra.mxu0 0.0
        %3661 = vmatprep.subr.mxu0 0.0
        %3662 = vmatpush2.msra.mxu0 0.0
        %3663 = vmatprep.subr.mxu0 0.0
        %3664 = vmatpush2.msra.mxu0 0.0
        %3665 = vmatprep.subr.mxu0 0.0
        %3666 = vmatpush2.msra.mxu0 0.0
        %3667 = vmatprep.subr.mxu0 0.0
        %3668 = vmatpush2.msra.mxu0 0.0
        %3669 = vmatprep.subr.mxu0 0.0
        %3670 = vmatpush2.msra.mxu0 0.0
        %3671 = vmatprep.subr.mxu0 0.0
        %3672 = vmatpush2.msra.mxu0 0.0
        %3673 = vmatprep.subr.mxu0 0.0
        %3674 = vmatpush2.msra.mxu0 0.0
        %3675 = vmatprep.subr.mxu0 0.0
        %3676 = vmatpush2.msra.mxu0 0.0
        %3677 = vmatprep.subr.mxu0 0.0
        %3678 = vmatpush2.msra.mxu0 0.0
        %3679 = vmatprep.subr.mxu0 0.0
        %3680 = vmatpush2.msra.mxu0 0.0
        %3681 = vmatprep.subr.mxu0 0.0
        %3682 = vmatpush2.msra.mxu0 0.0
        %3683 = vmatprep.subr.mxu0 0.0
        %3684 = vmatpush2.msra.mxu0 0.0
        %3685 = vmatprep.subr.mxu0 0.0
        %3686 = vmatpush2.msra.mxu0 0.0
        %3687 = vmatprep.subr.mxu0 0.0
        %3688 = vmatpush2.msra.mxu0 0.0
        %3689 = vmatprep.mubr.f32.mxu0 0.0
        %v3690 = vand.u32 %v1524, 4294901760
        %3691 = vmatmul.mubr.f32.gmra.mxu0 %v3690
        %v3692 = vpop.f32.mrf.mxu0
        %v3693 = vadd.f32 %v3619, %v3692
        %v3694 = vpop.f32.mrf.mxu0
        %3695 = vdwg.mxu0
        %3696 = vmatprep.subr.mxu0 0.0
        %3697 = vmatpush1.msra.mxu0 0.0
        %3698 = vmatprep.subr.mxu0 0.0
        %3699 = vmatpush1.msra.mxu0 0.0
        %3700 = vmatprep.subr.mxu0 0.0
        %3701 = vmatpush1.msra.mxu0 0.0
        %3702 = vmatprep.subr.mxu0 0.0
        %3703 = vmatpush1.msra.mxu0 0.0
        %3704 = vmatprep.subr.mxu0 0.0
        %3705 = vmatpush1.msra.mxu0 0.0
        %3706 = vmatprep.subr.mxu0 0.0
        %3707 = vmatpush1.msra.mxu0 0.0
        %3708 = vmatprep.subr.mxu0 0.0
        %3709 = vmatpush1.msra.mxu0 0.0
        %3710 = vmatprep.subr.mxu0 0.0
        %3711 = vmatpush1.msra.mxu0 0.0
        %3712 = vmatprep.subr.mxu0 0.0
        %3713 = vmatpush1.msra.mxu0 0.0
        %3714 = vmatprep.subr.mxu0 0.0
        %3715 = vmatpush1.msra.mxu0 0.0
        %3716 = vmatprep.subr.mxu0 0.0
        %3717 = vmatpush1.msra.mxu0 0.0
        %3718 = vmatprep.subr.mxu0 0.0
        %3719 = vmatpush1.msra.mxu0 0.0
        %3720 = vmatprep.subr.mxu0 0.0
        %3721 = vmatpush1.msra.mxu0 0.0
        %3722 = vmatprep.subr.mxu0 0.0
        %3723 = vmatpush1.msra.mxu0 0.0
        %3724 = vmatprep.subr.mxu0 0.0
        %3725 = vmatpush1.msra.mxu0 0.0
        %3726 = vmatprep.subr.mxu0 0.0
        %v3727 = vand.u32 %v2875, 4294901760
        %3728 = vmatpush1.msra.mxu0 %v3727
        %3729 = vmatprep.subr.mxu0 0.0
        %3730 = vmatpush2.msra.mxu0 0.0
        %3731 = vmatprep.subr.mxu0 0.0
        %3732 = vmatpush2.msra.mxu0 0.0
        %3733 = vmatprep.subr.mxu0 0.0
        %3734 = vmatpush2.msra.mxu0 0.0
        %3735 = vmatprep.subr.mxu0 0.0
        %3736 = vmatpush2.msra.mxu0 0.0
        %3737 = vmatprep.subr.mxu0 0.0
        %3738 = vmatpush2.msra.mxu0 0.0
        %3739 = vmatprep.subr.mxu0 0.0
        %3740 = vmatpush2.msra.mxu0 0.0
        %3741 = vmatprep.subr.mxu0 0.0
        %3742 = vmatpush2.msra.mxu0 0.0
        %3743 = vmatprep.subr.mxu0 0.0
        %3744 = vmatpush2.msra.mxu0 0.0
        %3745 = vmatprep.subr.mxu0 0.0
        %3746 = vmatpush2.msra.mxu0 0.0
        %3747 = vmatprep.subr.mxu0 0.0
        %3748 = vmatpush2.msra.mxu0 0.0
        %3749 = vmatprep.subr.mxu0 0.0
        %3750 = vmatpush2.msra.mxu0 0.0
        %3751 = vmatprep.subr.mxu0 0.0
        %3752 = vmatpush2.msra.mxu0 0.0
        %3753 = vmatprep.subr.mxu0 0.0
        %3754 = vmatpush2.msra.mxu0 0.0
        %3755 = vmatprep.subr.mxu0 0.0
        %3756 = vmatpush2.msra.mxu0 0.0
        %3757 = vmatprep.subr.mxu0 0.0
        %3758 = vmatpush2.msra.mxu0 0.0
        %3759 = vmatprep.subr.mxu0 0.0
        %3760 = vmatpush2.msra.mxu0 0.0
        %3761 = vmatprep.mubr.f32.mxu0 0.0
        %v3762 = vand.u32 %v1524, 4294901760
        %3763 = vmatmul.mubr.f32.gmra.mxu0 %v3762
        %v3764 = vpop.f32.mrf.mxu0
        %v3765 = vadd.f32 %v3693, %v3764
        %v3766 = vpop.f32.mrf.mxu0
        %3767 = vdwg.mxu0
        %v3768 = vmax.f32 %v3319, %v3765
        %s3769 = scalar_lea.vmem %s152, 4 [#allocation5]
        %3770 = vst.msk [vmem:[%s3769] sm:$0xf] %vm1973, %v3768
        %s3771 = scalar_lea.vmem %s134, 32 [#allocation2]
        %v3772 = vld [vmem:[%s3771] sm:$0xff]
        %s3773 = scalar_lea.vmem %s134, 40 [#allocation2]
        %v3774 = vld [vmem:[%s3773] sm:$0xff]
        %v3775 = vmax.f32 %v3772, %v3774
        %v3777 = vsel %vm177, %v3775, 0
        %3779 = vmatprep.subr.mxu0 0.0
        %3780 = vmatpush1.msra.mxu0 0.0
        %3781 = vmatprep.subr.mxu0 0.0
        %3782 = vmatpush1.msra.mxu0 0.0
        %3783 = vmatprep.subr.mxu0 0.0
        %3784 = vmatpush1.msra.mxu0 0.0
        %3785 = vmatprep.subr.mxu0 0.0
        %3786 = vmatpush1.msra.mxu0 0.0
        %3787 = vmatprep.subr.mxu0 0.0
        %3788 = vmatpush1.msra.mxu0 0.0
        %3789 = vmatprep.subr.mxu0 0.0
        %3790 = vmatpush1.msra.mxu0 0.0
        %3791 = vmatprep.subr.mxu0 0.0
        %3792 = vmatpush1.msra.mxu0 0.0
        %3793 = vmatprep.subr.mxu0 0.0
        %3794 = vmatpush1.msra.mxu0 0.0
        %3795 = vmatprep.subr.mxu0 0.0
        %3796 = vmatpush1.msra.mxu0 0.0
        %3797 = vmatprep.subr.mxu0 0.0
        %3798 = vmatpush1.msra.mxu0 0.0
        %3799 = vmatprep.subr.mxu0 0.0
        %3800 = vmatpush1.msra.mxu0 0.0
        %3801 = vmatprep.subr.mxu0 0.0
        %3802 = vmatpush1.msra.mxu0 0.0
        %3803 = vmatprep.subr.mxu0 0.0
        %3804 = vmatpush1.msra.mxu0 0.0
        %3805 = vmatprep.subr.mxu0 0.0
        %3806 = vmatpush1.msra.mxu0 0.0
        %3807 = vmatprep.subr.mxu0 0.0
        %3808 = vmatpush1.msra.mxu0 0.0
        %3809 = vmatprep.subr.mxu0 0.0
        %v3810 = vand.u32 %v160, 4294901760
        %3811 = vmatpush1.msra.mxu0 %v3810
        %3812 = vmatprep.subr.mxu0 0.0
        %3813 = vmatpush2.msra.mxu0 0.0
        %3814 = vmatprep.subr.mxu0 0.0
        %3815 = vmatpush2.msra.mxu0 0.0
        %3816 = vmatprep.subr.mxu0 0.0
        %3817 = vmatpush2.msra.mxu0 0.0
        %3818 = vmatprep.subr.mxu0 0.0
        %3819 = vmatpush2.msra.mxu0 0.0
        %3820 = vmatprep.subr.mxu0 0.0
        %3821 = vmatpush2.msra.mxu0 0.0
        %3822 = vmatprep.subr.mxu0 0.0
        %3823 = vmatpush2.msra.mxu0 0.0
        %3824 = vmatprep.subr.mxu0 0.0
        %3825 = vmatpush2.msra.mxu0 0.0
        %3826 = vmatprep.subr.mxu0 0.0
        %3827 = vmatpush2.msra.mxu0 0.0
        %3828 = vmatprep.subr.mxu0 0.0
        %3829 = vmatpush2.msra.mxu0 0.0
        %3830 = vmatprep.subr.mxu0 0.0
        %3831 = vmatpush2.msra.mxu0 0.0
        %3832 = vmatprep.subr.mxu0 0.0
        %3833 = vmatpush2.msra.mxu0 0.0
        %3834 = vmatprep.subr.mxu0 0.0
        %3835 = vmatpush2.msra.mxu0 0.0
        %3836 = vmatprep.subr.mxu0 0.0
        %3837 = vmatpush2.msra.mxu0 0.0
        %3838 = vmatprep.subr.mxu0 0.0
        %3839 = vmatpush2.msra.mxu0 0.0
        %3840 = vmatprep.subr.mxu0 0.0
        %3841 = vmatpush2.msra.mxu0 0.0
        %3842 = vmatprep.subr.mxu0 0.0
        %3843 = vmatpush2.msra.mxu0 0.0
        %3844 = vmatprep.mubr.f32.mxu0 0.0
        %v3845 = vand.u32 %v3777, 4294901760
        %v3846 = vsub.f32 %v3777, %v3845
        %v3847 = vand.u32 %v3846, 4294901760
        %v3848 = vsub.f32 %v3846, %v3847
        %v3849 = vand.u32 %v3848, 4294901760
        %3850 = vmatmul.mubr.f32.gmra.mxu0 %v3849
        %v3851 = vpop.f32.mrf.mxu0
        %v3852 = vadd.f32 0.0, %v3851
        %v3853 = vpop.f32.mrf.mxu0
        %3854 = vdwg.mxu0
        %3855 = vmatprep.subr.mxu0 0.0
        %3856 = vmatpush1.msra.mxu0 0.0
        %3857 = vmatprep.subr.mxu0 0.0
        %3858 = vmatpush1.msra.mxu0 0.0
        %3859 = vmatprep.subr.mxu0 0.0
        %3860 = vmatpush1.msra.mxu0 0.0
        %3861 = vmatprep.subr.mxu0 0.0
        %3862 = vmatpush1.msra.mxu0 0.0
        %3863 = vmatprep.subr.mxu0 0.0
        %3864 = vmatpush1.msra.mxu0 0.0
        %3865 = vmatprep.subr.mxu0 0.0
        %3866 = vmatpush1.msra.mxu0 0.0
        %3867 = vmatprep.subr.mxu0 0.0
        %3868 = vmatpush1.msra.mxu0 0.0
        %3869 = vmatprep.subr.mxu0 0.0
        %3870 = vmatpush1.msra.mxu0 0.0
        %3871 = vmatprep.subr.mxu0 0.0
        %3872 = vmatpush1.msra.mxu0 0.0
        %3873 = vmatprep.subr.mxu0 0.0
        %3874 = vmatpush1.msra.mxu0 0.0
        %3875 = vmatprep.subr.mxu0 0.0
        %3876 = vmatpush1.msra.mxu0 0.0
        %3877 = vmatprep.subr.mxu0 0.0
        %3878 = vmatpush1.msra.mxu0 0.0
        %3879 = vmatprep.subr.mxu0 0.0
        %3880 = vmatpush1.msra.mxu0 0.0
        %3881 = vmatprep.subr.mxu0 0.0
        %3882 = vmatpush1.msra.mxu0 0.0
        %3883 = vmatprep.subr.mxu0 0.0
        %3884 = vmatpush1.msra.mxu0 0.0
        %3885 = vmatprep.subr.mxu0 0.0
        %v3886 = vand.u32 %v160, 4294901760
        %v3887 = vsub.f32 %v160, %v3886
        %v3888 = vand.u32 %v3887, 4294901760
        %v3889 = vsub.f32 %v3887, %v3888
        %v3890 = vand.u32 %v3889, 4294901760
        %3891 = vmatpush1.msra.mxu0 %v3890
        %3892 = vmatprep.subr.mxu0 0.0
        %3893 = vmatpush2.msra.mxu0 0.0
        %3894 = vmatprep.subr.mxu0 0.0
        %3895 = vmatpush2.msra.mxu0 0.0
        %3896 = vmatprep.subr.mxu0 0.0
        %3897 = vmatpush2.msra.mxu0 0.0
        %3898 = vmatprep.subr.mxu0 0.0
        %3899 = vmatpush2.msra.mxu0 0.0
        %3900 = vmatprep.subr.mxu0 0.0
        %3901 = vmatpush2.msra.mxu0 0.0
        %3902 = vmatprep.subr.mxu0 0.0
        %3903 = vmatpush2.msra.mxu0 0.0
        %3904 = vmatprep.subr.mxu0 0.0
        %3905 = vmatpush2.msra.mxu0 0.0
        %3906 = vmatprep.subr.mxu0 0.0
        %3907 = vmatpush2.msra.mxu0 0.0
        %3908 = vmatprep.subr.mxu0 0.0
        %3909 = vmatpush2.msra.mxu0 0.0
        %3910 = vmatprep.subr.mxu0 0.0
        %3911 = vmatpush2.msra.mxu0 0.0
        %3912 = vmatprep.subr.mxu0 0.0
        %3913 = vmatpush2.msra.mxu0 0.0
        %3914 = vmatprep.subr.mxu0 0.0
        %3915 = vmatpush2.msra.mxu0 0.0
        %3916 = vmatprep.subr.mxu0 0.0
        %3917 = vmatpush2.msra.mxu0 0.0
        %3918 = vmatprep.subr.mxu0 0.0
        %3919 = vmatpush2.msra.mxu0 0.0
        %3920 = vmatprep.subr.mxu0 0.0
        %3921 = vmatpush2.msra.mxu0 0.0
        %3922 = vmatprep.subr.mxu0 0.0
        %3923 = vmatpush2.msra.mxu0 0.0
        %3924 = vmatprep.mubr.f32.mxu0 0.0
        %v3925 = vand.u32 %v3777, 4294901760
        %3926 = vmatmul.mubr.f32.gmra.mxu0 %v3925
        %v3927 = vpop.f32.mrf.mxu0
        %v3928 = vadd.f32 %v3852, %v3927
        %v3929 = vpop.f32.mrf.mxu0
        %3930 = vdwg.mxu0
        %3931 = vmatprep.subr.mxu0 0.0
        %3932 = vmatpush1.msra.mxu0 0.0
        %3933 = vmatprep.subr.mxu0 0.0
        %3934 = vmatpush1.msra.mxu0 0.0
        %3935 = vmatprep.subr.mxu0 0.0
        %3936 = vmatpush1.msra.mxu0 0.0
        %3937 = vmatprep.subr.mxu0 0.0
        %3938 = vmatpush1.msra.mxu0 0.0
        %3939 = vmatprep.subr.mxu0 0.0
        %3940 = vmatpush1.msra.mxu0 0.0
        %3941 = vmatprep.subr.mxu0 0.0
        %3942 = vmatpush1.msra.mxu0 0.0
        %3943 = vmatprep.subr.mxu0 0.0
        %3944 = vmatpush1.msra.mxu0 0.0
        %3945 = vmatprep.subr.mxu0 0.0
        %3946 = vmatpush1.msra.mxu0 0.0
        %3947 = vmatprep.subr.mxu0 0.0
        %3948 = vmatpush1.msra.mxu0 0.0
        %3949 = vmatprep.subr.mxu0 0.0
        %3950 = vmatpush1.msra.mxu0 0.0
        %3951 = vmatprep.subr.mxu0 0.0
        %3952 = vmatpush1.msra.mxu0 0.0
        %3953 = vmatprep.subr.mxu0 0.0
        %3954 = vmatpush1.msra.mxu0 0.0
        %3955 = vmatprep.subr.mxu0 0.0
        %3956 = vmatpush1.msra.mxu0 0.0
        %3957 = vmatprep.subr.mxu0 0.0
        %3958 = vmatpush1.msra.mxu0 0.0
        %3959 = vmatprep.subr.mxu0 0.0
        %3960 = vmatpush1.msra.mxu0 0.0
        %3961 = vmatprep.subr.mxu0 0.0
        %v3962 = vand.u32 %v160, 4294901760
        %v3963 = vsub.f32 %v160, %v3962
        %3964 = vmatpush1.msra.mxu0 %v3963
        %3965 = vmatprep.subr.mxu0 0.0
        %3966 = vmatpush2.msra.mxu0 0.0
        %3967 = vmatprep.subr.mxu0 0.0
        %3968 = vmatpush2.msra.mxu0 0.0
        %3969 = vmatprep.subr.mxu0 0.0
        %3970 = vmatpush2.msra.mxu0 0.0
        %3971 = vmatprep.subr.mxu0 0.0
        %3972 = vmatpush2.msra.mxu0 0.0
        %3973 = vmatprep.subr.mxu0 0.0
        %3974 = vmatpush2.msra.mxu0 0.0
        %3975 = vmatprep.subr.mxu0 0.0
        %3976 = vmatpush2.msra.mxu0 0.0
        %3977 = vmatprep.subr.mxu0 0.0
        %3978 = vmatpush2.msra.mxu0 0.0
        %3979 = vmatprep.subr.mxu0 0.0
        %3980 = vmatpush2.msra.mxu0 0.0
        %3981 = vmatprep.subr.mxu0 0.0
        %3982 = vmatpush2.msra.mxu0 0.0
        %3983 = vmatprep.subr.mxu0 0.0
        %3984 = vmatpush2.msra.mxu0 0.0
        %3985 = vmatprep.subr.mxu0 0.0
        %3986 = vmatpush2.msra.mxu0 0.0
        %3987 = vmatprep.subr.mxu0 0.0
        %3988 = vmatpush2.msra.mxu0 0.0
        %3989 = vmatprep.subr.mxu0 0.0
        %3990 = vmatpush2.msra.mxu0 0.0
        %3991 = vmatprep.subr.mxu0 0.0
        %3992 = vmatpush2.msra.mxu0 0.0
        %3993 = vmatprep.subr.mxu0 0.0
        %3994 = vmatpush2.msra.mxu0 0.0
        %3995 = vmatprep.subr.mxu0 0.0
        %3996 = vmatpush2.msra.mxu0 0.0
        %3997 = vmatprep.mubr.f32.mxu0 0.0
        %v3998 = vand.u32 %v3777, 4294901760
        %v3999 = vsub.f32 %v3777, %v3998
        %4000 = vmatmul.mubr.f32.gmra.mxu0 %v3999
        %v4001 = vpop.f32.mrf.mxu0
        %v4002 = vadd.f32 %v3928, %v4001
        %v4003 = vpop.f32.mrf.mxu0
        %4004 = vdwg.mxu0
        %4005 = vmatprep.subr.mxu0 0.0
        %4006 = vmatpush1.msra.mxu0 0.0
        %4007 = vmatprep.subr.mxu0 0.0
        %4008 = vmatpush1.msra.mxu0 0.0
        %4009 = vmatprep.subr.mxu0 0.0
        %4010 = vmatpush1.msra.mxu0 0.0
        %4011 = vmatprep.subr.mxu0 0.0
        %4012 = vmatpush1.msra.mxu0 0.0
        %4013 = vmatprep.subr.mxu0 0.0
        %4014 = vmatpush1.msra.mxu0 0.0
        %4015 = vmatprep.subr.mxu0 0.0
        %4016 = vmatpush1.msra.mxu0 0.0
        %4017 = vmatprep.subr.mxu0 0.0
        %4018 = vmatpush1.msra.mxu0 0.0
        %4019 = vmatprep.subr.mxu0 0.0
        %4020 = vmatpush1.msra.mxu0 0.0
        %4021 = vmatprep.subr.mxu0 0.0
        %4022 = vmatpush1.msra.mxu0 0.0
        %4023 = vmatprep.subr.mxu0 0.0
        %4024 = vmatpush1.msra.mxu0 0.0
        %4025 = vmatprep.subr.mxu0 0.0
        %4026 = vmatpush1.msra.mxu0 0.0
        %4027 = vmatprep.subr.mxu0 0.0
        %4028 = vmatpush1.msra.mxu0 0.0
        %4029 = vmatprep.subr.mxu0 0.0
        %4030 = vmatpush1.msra.mxu0 0.0
        %4031 = vmatprep.subr.mxu0 0.0
        %4032 = vmatpush1.msra.mxu0 0.0
        %4033 = vmatprep.subr.mxu0 0.0
        %4034 = vmatpush1.msra.mxu0 0.0
        %4035 = vmatprep.subr.mxu0 0.0
        %v4036 = vand.u32 %v160, 4294901760
        %4037 = vmatpush1.msra.mxu0 %v4036
        %4038 = vmatprep.subr.mxu0 0.0
        %4039 = vmatpush2.msra.mxu0 0.0
        %4040 = vmatprep.subr.mxu0 0.0
        %4041 = vmatpush2.msra.mxu0 0.0
        %4042 = vmatprep.subr.mxu0 0.0
        %4043 = vmatpush2.msra.mxu0 0.0
        %4044 = vmatprep.subr.mxu0 0.0
        %4045 = vmatpush2.msra.mxu0 0.0
        %4046 = vmatprep.subr.mxu0 0.0
        %4047 = vmatpush2.msra.mxu0 0.0
        %4048 = vmatprep.subr.mxu0 0.0
        %4049 = vmatpush2.msra.mxu0 0.0
        %4050 = vmatprep.subr.mxu0 0.0
        %4051 = vmatpush2.msra.mxu0 0.0
        %4052 = vmatprep.subr.mxu0 0.0
        %4053 = vmatpush2.msra.mxu0 0.0
        %4054 = vmatprep.subr.mxu0 0.0
        %4055 = vmatpush2.msra.mxu0 0.0
        %4056 = vmatprep.subr.mxu0 0.0
        %4057 = vmatpush2.msra.mxu0 0.0
        %4058 = vmatprep.subr.mxu0 0.0
        %4059 = vmatpush2.msra.mxu0 0.0
        %4060 = vmatprep.subr.mxu0 0.0
        %4061 = vmatpush2.msra.mxu0 0.0
        %4062 = vmatprep.subr.mxu0 0.0
        %4063 = vmatpush2.msra.mxu0 0.0
        %4064 = vmatprep.subr.mxu0 0.0
        %4065 = vmatpush2.msra.mxu0 0.0
        %4066 = vmatprep.subr.mxu0 0.0
        %4067 = vmatpush2.msra.mxu0 0.0
        %4068 = vmatprep.subr.mxu0 0.0
        %4069 = vmatpush2.msra.mxu0 0.0
        %4070 = vmatprep.mubr.f32.mxu0 0.0
        %v4071 = vand.u32 %v3777, 4294901760
        %v4072 = vsub.f32 %v3777, %v4071
        %v4073 = vand.u32 %v4072, 4294901760
        %4074 = vmatmul.mubr.f32.gmra.mxu0 %v4073
        %v4075 = vpop.f32.mrf.mxu0
        %v4076 = vadd.f32 %v4002, %v4075
        %v4077 = vpop.f32.mrf.mxu0
        %4078 = vdwg.mxu0
        %4079 = vmatprep.subr.mxu0 0.0
        %4080 = vmatpush1.msra.mxu0 0.0
        %4081 = vmatprep.subr.mxu0 0.0
        %4082 = vmatpush1.msra.mxu0 0.0
        %4083 = vmatprep.subr.mxu0 0.0
        %4084 = vmatpush1.msra.mxu0 0.0
        %4085 = vmatprep.subr.mxu0 0.0
        %4086 = vmatpush1.msra.mxu0 0.0
        %4087 = vmatprep.subr.mxu0 0.0
        %4088 = vmatpush1.msra.mxu0 0.0
        %4089 = vmatprep.subr.mxu0 0.0
        %4090 = vmatpush1.msra.mxu0 0.0
        %4091 = vmatprep.subr.mxu0 0.0
        %4092 = vmatpush1.msra.mxu0 0.0
        %4093 = vmatprep.subr.mxu0 0.0
        %4094 = vmatpush1.msra.mxu0 0.0
        %4095 = vmatprep.subr.mxu0 0.0
        %4096 = vmatpush1.msra.mxu0 0.0
        %4097 = vmatprep.subr.mxu0 0.0
        %4098 = vmatpush1.msra.mxu0 0.0
        %4099 = vmatprep.subr.mxu0 0.0
        %4100 = vmatpush1.msra.mxu0 0.0
        %4101 = vmatprep.subr.mxu0 0.0
        %4102 = vmatpush1.msra.mxu0 0.0
        %4103 = vmatprep.subr.mxu0 0.0
        %4104 = vmatpush1.msra.mxu0 0.0
        %4105 = vmatprep.subr.mxu0 0.0
        %4106 = vmatpush1.msra.mxu0 0.0
        %4107 = vmatprep.subr.mxu0 0.0
        %4108 = vmatpush1.msra.mxu0 0.0
        %4109 = vmatprep.subr.mxu0 0.0
        %v4110 = vand.u32 %v160, 4294901760
        %v4111 = vsub.f32 %v160, %v4110
        %v4112 = vand.u32 %v4111, 4294901760
        %4113 = vmatpush1.msra.mxu0 %v4112
        %4114 = vmatprep.subr.mxu0 0.0
        %4115 = vmatpush2.msra.mxu0 0.0
        %4116 = vmatprep.subr.mxu0 0.0
        %4117 = vmatpush2.msra.mxu0 0.0
        %4118 = vmatprep.subr.mxu0 0.0
        %4119 = vmatpush2.msra.mxu0 0.0
        %4120 = vmatprep.subr.mxu0 0.0
        %4121 = vmatpush2.msra.mxu0 0.0
        %4122 = vmatprep.subr.mxu0 0.0
        %4123 = vmatpush2.msra.mxu0 0.0
        %4124 = vmatprep.subr.mxu0 0.0
        %4125 = vmatpush2.msra.mxu0 0.0
        %4126 = vmatprep.subr.mxu0 0.0
        %4127 = vmatpush2.msra.mxu0 0.0
        %4128 = vmatprep.subr.mxu0 0.0
        %4129 = vmatpush2.msra.mxu0 0.0
        %4130 = vmatprep.subr.mxu0 0.0
        %4131 = vmatpush2.msra.mxu0 0.0
        %4132 = vmatprep.subr.mxu0 0.0
        %4133 = vmatpush2.msra.mxu0 0.0
        %4134 = vmatprep.subr.mxu0 0.0
        %4135 = vmatpush2.msra.mxu0 0.0
        %4136 = vmatprep.subr.mxu0 0.0
        %4137 = vmatpush2.msra.mxu0 0.0
        %4138 = vmatprep.subr.mxu0 0.0
        %4139 = vmatpush2.msra.mxu0 0.0
        %4140 = vmatprep.subr.mxu0 0.0
        %4141 = vmatpush2.msra.mxu0 0.0
        %4142 = vmatprep.subr.mxu0 0.0
        %4143 = vmatpush2.msra.mxu0 0.0
        %4144 = vmatprep.subr.mxu0 0.0
        %4145 = vmatpush2.msra.mxu0 0.0
        %4146 = vmatprep.mubr.f32.mxu0 0.0
        %v4147 = vand.u32 %v3777, 4294901760
        %4148 = vmatmul.mubr.f32.gmra.mxu0 %v4147
        %v4149 = vpop.f32.mrf.mxu0
        %v4150 = vadd.f32 %v4076, %v4149
        %v4151 = vpop.f32.mrf.mxu0
        %4152 = vdwg.mxu0
        %4153 = vmatprep.subr.mxu0 0.0
        %4154 = vmatpush1.msra.mxu0 0.0
        %4155 = vmatprep.subr.mxu0 0.0
        %4156 = vmatpush1.msra.mxu0 0.0
        %4157 = vmatprep.subr.mxu0 0.0
        %4158 = vmatpush1.msra.mxu0 0.0
        %4159 = vmatprep.subr.mxu0 0.0
        %4160 = vmatpush1.msra.mxu0 0.0
        %4161 = vmatprep.subr.mxu0 0.0
        %4162 = vmatpush1.msra.mxu0 0.0
        %4163 = vmatprep.subr.mxu0 0.0
        %4164 = vmatpush1.msra.mxu0 0.0
        %4165 = vmatprep.subr.mxu0 0.0
        %4166 = vmatpush1.msra.mxu0 0.0
        %4167 = vmatprep.subr.mxu0 0.0
        %4168 = vmatpush1.msra.mxu0 0.0
        %4169 = vmatprep.subr.mxu0 0.0
        %4170 = vmatpush1.msra.mxu0 0.0
        %4171 = vmatprep.subr.mxu0 0.0
        %4172 = vmatpush1.msra.mxu0 0.0
        %4173 = vmatprep.subr.mxu0 0.0
        %4174 = vmatpush1.msra.mxu0 0.0
        %4175 = vmatprep.subr.mxu0 0.0
        %4176 = vmatpush1.msra.mxu0 0.0
        %4177 = vmatprep.subr.mxu0 0.0
        %4178 = vmatpush1.msra.mxu0 0.0
        %4179 = vmatprep.subr.mxu0 0.0
        %4180 = vmatpush1.msra.mxu0 0.0
        %4181 = vmatprep.subr.mxu0 0.0
        %4182 = vmatpush1.msra.mxu0 0.0
        %4183 = vmatprep.subr.mxu0 0.0
        %v4184 = vand.u32 %v160, 4294901760
        %4185 = vmatpush1.msra.mxu0 %v4184
        %4186 = vmatprep.subr.mxu0 0.0
        %4187 = vmatpush2.msra.mxu0 0.0
        %4188 = vmatprep.subr.mxu0 0.0
        %4189 = vmatpush2.msra.mxu0 0.0
        %4190 = vmatprep.subr.mxu0 0.0
        %4191 = vmatpush2.msra.mxu0 0.0
        %4192 = vmatprep.subr.mxu0 0.0
        %4193 = vmatpush2.msra.mxu0 0.0
        %4194 = vmatprep.subr.mxu0 0.0
        %4195 = vmatpush2.msra.mxu0 0.0
        %4196 = vmatprep.subr.mxu0 0.0
        %4197 = vmatpush2.msra.mxu0 0.0
        %4198 = vmatprep.subr.mxu0 0.0
        %4199 = vmatpush2.msra.mxu0 0.0
        %4200 = vmatprep.subr.mxu0 0.0
        %4201 = vmatpush2.msra.mxu0 0.0
        %4202 = vmatprep.subr.mxu0 0.0
        %4203 = vmatpush2.msra.mxu0 0.0
        %4204 = vmatprep.subr.mxu0 0.0
        %4205 = vmatpush2.msra.mxu0 0.0
        %4206 = vmatprep.subr.mxu0 0.0
        %4207 = vmatpush2.msra.mxu0 0.0
        %4208 = vmatprep.subr.mxu0 0.0
        %4209 = vmatpush2.msra.mxu0 0.0
        %4210 = vmatprep.subr.mxu0 0.0
        %4211 = vmatpush2.msra.mxu0 0.0
        %4212 = vmatprep.subr.mxu0 0.0
        %4213 = vmatpush2.msra.mxu0 0.0
        %4214 = vmatprep.subr.mxu0 0.0
        %4215 = vmatpush2.msra.mxu0 0.0
        %4216 = vmatprep.subr.mxu0 0.0
        %4217 = vmatpush2.msra.mxu0 0.0
        %4218 = vmatprep.mubr.f32.mxu0 0.0
        %v4219 = vand.u32 %v3777, 4294901760
        %4220 = vmatmul.mubr.f32.gmra.mxu0 %v4219
        %v4221 = vpop.f32.mrf.mxu0
        %v4222 = vadd.f32 %v4150, %v4221
        %v4223 = vpop.f32.mrf.mxu0
        %4224 = vdwg.mxu0
        %4225 = vmatprep.subr.mxu0 0.0
        %4226 = vmatpush1.msra.mxu0 0.0
        %4227 = vmatprep.subr.mxu0 0.0
        %4228 = vmatpush1.msra.mxu0 0.0
        %4229 = vmatprep.subr.mxu0 0.0
        %4230 = vmatpush1.msra.mxu0 0.0
        %4231 = vmatprep.subr.mxu0 0.0
        %4232 = vmatpush1.msra.mxu0 0.0
        %4233 = vmatprep.subr.mxu0 0.0
        %4234 = vmatpush1.msra.mxu0 0.0
        %4235 = vmatprep.subr.mxu0 0.0
        %4236 = vmatpush1.msra.mxu0 0.0
        %4237 = vmatprep.subr.mxu0 0.0
        %4238 = vmatpush1.msra.mxu0 0.0
        %4239 = vmatprep.subr.mxu0 0.0
        %4240 = vmatpush1.msra.mxu0 0.0
        %4241 = vmatprep.subr.mxu0 0.0
        %4242 = vmatpush1.msra.mxu0 0.0
        %4243 = vmatprep.subr.mxu0 0.0
        %4244 = vmatpush1.msra.mxu0 0.0
        %4245 = vmatprep.subr.mxu0 0.0
        %4246 = vmatpush1.msra.mxu0 0.0
        %4247 = vmatprep.subr.mxu0 0.0
        %4248 = vmatpush1.msra.mxu0 0.0
        %4249 = vmatprep.subr.mxu0 0.0
        %4250 = vmatpush1.msra.mxu0 0.0
        %4251 = vmatprep.subr.mxu0 0.0
        %4252 = vmatpush1.msra.mxu0 0.0
        %4253 = vmatprep.subr.mxu0 0.0
        %4254 = vmatpush1.msra.mxu0 0.0
        %4255 = vmatprep.subr.mxu0 0.0
        %v4256 = vand.u32 %v164, 4294901760
        %4257 = vmatpush1.msra.mxu0 %v4256
        %4258 = vmatprep.subr.mxu0 0.0
        %4259 = vmatpush2.msra.mxu0 0.0
        %4260 = vmatprep.subr.mxu0 0.0
        %4261 = vmatpush2.msra.mxu0 0.0
        %4262 = vmatprep.subr.mxu0 0.0
        %4263 = vmatpush2.msra.mxu0 0.0
        %4264 = vmatprep.subr.mxu0 0.0
        %4265 = vmatpush2.msra.mxu0 0.0
        %4266 = vmatprep.subr.mxu0 0.0
        %4267 = vmatpush2.msra.mxu0 0.0
        %4268 = vmatprep.subr.mxu0 0.0
        %4269 = vmatpush2.msra.mxu0 0.0
        %4270 = vmatprep.subr.mxu0 0.0
        %4271 = vmatpush2.msra.mxu0 0.0
        %4272 = vmatprep.subr.mxu0 0.0
        %4273 = vmatpush2.msra.mxu0 0.0
        %4274 = vmatprep.subr.mxu0 0.0
        %4275 = vmatpush2.msra.mxu0 0.0
        %4276 = vmatprep.subr.mxu0 0.0
        %4277 = vmatpush2.msra.mxu0 0.0
        %4278 = vmatprep.subr.mxu0 0.0
        %4279 = vmatpush2.msra.mxu0 0.0
        %4280 = vmatprep.subr.mxu0 0.0
        %4281 = vmatpush2.msra.mxu0 0.0
        %4282 = vmatprep.subr.mxu0 0.0
        %4283 = vmatpush2.msra.mxu0 0.0
        %4284 = vmatprep.subr.mxu0 0.0
        %4285 = vmatpush2.msra.mxu0 0.0
        %4286 = vmatprep.subr.mxu0 0.0
        %4287 = vmatpush2.msra.mxu0 0.0
        %4288 = vmatprep.subr.mxu0 0.0
        %4289 = vmatpush2.msra.mxu0 0.0
        %4290 = vmatprep.mubr.f32.mxu0 0.0
        %v4291 = vand.u32 %v3777, 4294901760
        %v4292 = vsub.f32 %v3777, %v4291
        %v4293 = vand.u32 %v4292, 4294901760
        %v4294 = vsub.f32 %v4292, %v4293
        %v4295 = vand.u32 %v4294, 4294901760
        %4296 = vmatmul.mubr.f32.gmra.mxu0 %v4295
        %v4297 = vpop.f32.mrf.mxu0
        %v4298 = vadd.f32 0.0, %v4297
        %v4299 = vpop.f32.mrf.mxu0
        %4300 = vdwg.mxu0
        %4301 = vmatprep.subr.mxu0 0.0
        %4302 = vmatpush1.msra.mxu0 0.0
        %4303 = vmatprep.subr.mxu0 0.0
        %4304 = vmatpush1.msra.mxu0 0.0
        %4305 = vmatprep.subr.mxu0 0.0
        %4306 = vmatpush1.msra.mxu0 0.0
        %4307 = vmatprep.subr.mxu0 0.0
        %4308 = vmatpush1.msra.mxu0 0.0
        %4309 = vmatprep.subr.mxu0 0.0
        %4310 = vmatpush1.msra.mxu0 0.0
        %4311 = vmatprep.subr.mxu0 0.0
        %4312 = vmatpush1.msra.mxu0 0.0
        %4313 = vmatprep.subr.mxu0 0.0
        %4314 = vmatpush1.msra.mxu0 0.0
        %4315 = vmatprep.subr.mxu0 0.0
        %4316 = vmatpush1.msra.mxu0 0.0
        %4317 = vmatprep.subr.mxu0 0.0
        %4318 = vmatpush1.msra.mxu0 0.0
        %4319 = vmatprep.subr.mxu0 0.0
        %4320 = vmatpush1.msra.mxu0 0.0
        %4321 = vmatprep.subr.mxu0 0.0
        %4322 = vmatpush1.msra.mxu0 0.0
        %4323 = vmatprep.subr.mxu0 0.0
        %4324 = vmatpush1.msra.mxu0 0.0
        %4325 = vmatprep.subr.mxu0 0.0
        %4326 = vmatpush1.msra.mxu0 0.0
        %4327 = vmatprep.subr.mxu0 0.0
        %4328 = vmatpush1.msra.mxu0 0.0
        %4329 = vmatprep.subr.mxu0 0.0
        %4330 = vmatpush1.msra.mxu0 0.0
        %4331 = vmatprep.subr.mxu0 0.0
        %v4332 = vand.u32 %v164, 4294901760
        %v4333 = vsub.f32 %v164, %v4332
        %v4334 = vand.u32 %v4333, 4294901760
        %v4335 = vsub.f32 %v4333, %v4334
        %v4336 = vand.u32 %v4335, 4294901760
        %4337 = vmatpush1.msra.mxu0 %v4336
        %4338 = vmatprep.subr.mxu0 0.0
        %4339 = vmatpush2.msra.mxu0 0.0
        %4340 = vmatprep.subr.mxu0 0.0
        %4341 = vmatpush2.msra.mxu0 0.0
        %4342 = vmatprep.subr.mxu0 0.0
        %4343 = vmatpush2.msra.mxu0 0.0
        %4344 = vmatprep.subr.mxu0 0.0
        %4345 = vmatpush2.msra.mxu0 0.0
        %4346 = vmatprep.subr.mxu0 0.0
        %4347 = vmatpush2.msra.mxu0 0.0
        %4348 = vmatprep.subr.mxu0 0.0
        %4349 = vmatpush2.msra.mxu0 0.0
        %4350 = vmatprep.subr.mxu0 0.0
        %4351 = vmatpush2.msra.mxu0 0.0
        %4352 = vmatprep.subr.mxu0 0.0
        %4353 = vmatpush2.msra.mxu0 0.0
        %4354 = vmatprep.subr.mxu0 0.0
        %4355 = vmatpush2.msra.mxu0 0.0
        %4356 = vmatprep.subr.mxu0 0.0
        %4357 = vmatpush2.msra.mxu0 0.0
        %4358 = vmatprep.subr.mxu0 0.0
        %4359 = vmatpush2.msra.mxu0 0.0
        %4360 = vmatprep.subr.mxu0 0.0
        %4361 = vmatpush2.msra.mxu0 0.0
        %4362 = vmatprep.subr.mxu0 0.0
        %4363 = vmatpush2.msra.mxu0 0.0
        %4364 = vmatprep.subr.mxu0 0.0
        %4365 = vmatpush2.msra.mxu0 0.0
        %4366 = vmatprep.subr.mxu0 0.0
        %4367 = vmatpush2.msra.mxu0 0.0
        %4368 = vmatprep.subr.mxu0 0.0
        %4369 = vmatpush2.msra.mxu0 0.0
        %4370 = vmatprep.mubr.f32.mxu0 0.0
        %v4371 = vand.u32 %v3777, 4294901760
        %4372 = vmatmul.mubr.f32.gmra.mxu0 %v4371
        %v4373 = vpop.f32.mrf.mxu0
        %v4374 = vadd.f32 %v4298, %v4373
        %v4375 = vpop.f32.mrf.mxu0
        %4376 = vdwg.mxu0
        %4377 = vmatprep.subr.mxu0 0.0
        %4378 = vmatpush1.msra.mxu0 0.0
        %4379 = vmatprep.subr.mxu0 0.0
        %4380 = vmatpush1.msra.mxu0 0.0
        %4381 = vmatprep.subr.mxu0 0.0
        %4382 = vmatpush1.msra.mxu0 0.0
        %4383 = vmatprep.subr.mxu0 0.0
        %4384 = vmatpush1.msra.mxu0 0.0
        %4385 = vmatprep.subr.mxu0 0.0
        %4386 = vmatpush1.msra.mxu0 0.0
        %4387 = vmatprep.subr.mxu0 0.0
        %4388 = vmatpush1.msra.mxu0 0.0
        %4389 = vmatprep.subr.mxu0 0.0
        %4390 = vmatpush1.msra.mxu0 0.0
        %4391 = vmatprep.subr.mxu0 0.0
        %4392 = vmatpush1.msra.mxu0 0.0
        %4393 = vmatprep.subr.mxu0 0.0
        %4394 = vmatpush1.msra.mxu0 0.0
        %4395 = vmatprep.subr.mxu0 0.0
        %4396 = vmatpush1.msra.mxu0 0.0
        %4397 = vmatprep.subr.mxu0 0.0
        %4398 = vmatpush1.msra.mxu0 0.0
        %4399 = vmatprep.subr.mxu0 0.0
        %4400 = vmatpush1.msra.mxu0 0.0
        %4401 = vmatprep.subr.mxu0 0.0
        %4402 = vmatpush1.msra.mxu0 0.0
        %4403 = vmatprep.subr.mxu0 0.0
        %4404 = vmatpush1.msra.mxu0 0.0
        %4405 = vmatprep.subr.mxu0 0.0
        %4406 = vmatpush1.msra.mxu0 0.0
        %4407 = vmatprep.subr.mxu0 0.0
        %v4408 = vand.u32 %v164, 4294901760
        %v4409 = vsub.f32 %v164, %v4408
        %4410 = vmatpush1.msra.mxu0 %v4409
        %4411 = vmatprep.subr.mxu0 0.0
        %4412 = vmatpush2.msra.mxu0 0.0
        %4413 = vmatprep.subr.mxu0 0.0
        %4414 = vmatpush2.msra.mxu0 0.0
        %4415 = vmatprep.subr.mxu0 0.0
        %4416 = vmatpush2.msra.mxu0 0.0
        %4417 = vmatprep.subr.mxu0 0.0
        %4418 = vmatpush2.msra.mxu0 0.0
        %4419 = vmatprep.subr.mxu0 0.0
        %4420 = vmatpush2.msra.mxu0 0.0
        %4421 = vmatprep.subr.mxu0 0.0
        %4422 = vmatpush2.msra.mxu0 0.0
        %4423 = vmatprep.subr.mxu0 0.0
        %4424 = vmatpush2.msra.mxu0 0.0
        %4425 = vmatprep.subr.mxu0 0.0
        %4426 = vmatpush2.msra.mxu0 0.0
        %4427 = vmatprep.subr.mxu0 0.0
        %4428 = vmatpush2.msra.mxu0 0.0
        %4429 = vmatprep.subr.mxu0 0.0
        %4430 = vmatpush2.msra.mxu0 0.0
        %4431 = vmatprep.subr.mxu0 0.0
        %4432 = vmatpush2.msra.mxu0 0.0
        %4433 = vmatprep.subr.mxu0 0.0
        %4434 = vmatpush2.msra.mxu0 0.0
        %4435 = vmatprep.subr.mxu0 0.0
        %4436 = vmatpush2.msra.mxu0 0.0
        %4437 = vmatprep.subr.mxu0 0.0
        %4438 = vmatpush2.msra.mxu0 0.0
        %4439 = vmatprep.subr.mxu0 0.0
        %4440 = vmatpush2.msra.mxu0 0.0
        %4441 = vmatprep.subr.mxu0 0.0
        %4442 = vmatpush2.msra.mxu0 0.0
        %4443 = vmatprep.mubr.f32.mxu0 0.0
        %v4444 = vand.u32 %v3777, 4294901760
        %v4445 = vsub.f32 %v3777, %v4444
        %4446 = vmatmul.mubr.f32.gmra.mxu0 %v4445
        %v4447 = vpop.f32.mrf.mxu0
        %v4448 = vadd.f32 %v4374, %v4447
        %v4449 = vpop.f32.mrf.mxu0
        %4450 = vdwg.mxu0
        %4451 = vmatprep.subr.mxu0 0.0
        %4452 = vmatpush1.msra.mxu0 0.0
        %4453 = vmatprep.subr.mxu0 0.0
        %4454 = vmatpush1.msra.mxu0 0.0
        %4455 = vmatprep.subr.mxu0 0.0
        %4456 = vmatpush1.msra.mxu0 0.0
        %4457 = vmatprep.subr.mxu0 0.0
        %4458 = vmatpush1.msra.mxu0 0.0
        %4459 = vmatprep.subr.mxu0 0.0
        %4460 = vmatpush1.msra.mxu0 0.0
        %4461 = vmatprep.subr.mxu0 0.0
        %4462 = vmatpush1.msra.mxu0 0.0
        %4463 = vmatprep.subr.mxu0 0.0
        %4464 = vmatpush1.msra.mxu0 0.0
        %4465 = vmatprep.subr.mxu0 0.0
        %4466 = vmatpush1.msra.mxu0 0.0
        %4467 = vmatprep.subr.mxu0 0.0
        %4468 = vmatpush1.msra.mxu0 0.0
        %4469 = vmatprep.subr.mxu0 0.0
        %4470 = vmatpush1.msra.mxu0 0.0
        %4471 = vmatprep.subr.mxu0 0.0
        %4472 = vmatpush1.msra.mxu0 0.0
        %4473 = vmatprep.subr.mxu0 0.0
        %4474 = vmatpush1.msra.mxu0 0.0
        %4475 = vmatprep.subr.mxu0 0.0
        %4476 = vmatpush1.msra.mxu0 0.0
        %4477 = vmatprep.subr.mxu0 0.0
        %4478 = vmatpush1.msra.mxu0 0.0
        %4479 = vmatprep.subr.mxu0 0.0
        %4480 = vmatpush1.msra.mxu0 0.0
        %4481 = vmatprep.subr.mxu0 0.0
        %v4482 = vand.u32 %v164, 4294901760
        %4483 = vmatpush1.msra.mxu0 %v4482
        %4484 = vmatprep.subr.mxu0 0.0
        %4485 = vmatpush2.msra.mxu0 0.0
        %4486 = vmatprep.subr.mxu0 0.0
        %4487 = vmatpush2.msra.mxu0 0.0
        %4488 = vmatprep.subr.mxu0 0.0
        %4489 = vmatpush2.msra.mxu0 0.0
        %4490 = vmatprep.subr.mxu0 0.0
        %4491 = vmatpush2.msra.mxu0 0.0
        %4492 = vmatprep.subr.mxu0 0.0
        %4493 = vmatpush2.msra.mxu0 0.0
        %4494 = vmatprep.subr.mxu0 0.0
        %4495 = vmatpush2.msra.mxu0 0.0
        %4496 = vmatprep.subr.mxu0 0.0
        %4497 = vmatpush2.msra.mxu0 0.0
        %4498 = vmatprep.subr.mxu0 0.0
        %4499 = vmatpush2.msra.mxu0 0.0
        %4500 = vmatprep.subr.mxu0 0.0
        %4501 = vmatpush2.msra.mxu0 0.0
        %4502 = vmatprep.subr.mxu0 0.0
        %4503 = vmatpush2.msra.mxu0 0.0
        %4504 = vmatprep.subr.mxu0 0.0
        %4505 = vmatpush2.msra.mxu0 0.0
        %4506 = vmatprep.subr.mxu0 0.0
        %4507 = vmatpush2.msra.mxu0 0.0
        %4508 = vmatprep.subr.mxu0 0.0
        %4509 = vmatpush2.msra.mxu0 0.0
        %4510 = vmatprep.subr.mxu0 0.0
        %4511 = vmatpush2.msra.mxu0 0.0
        %4512 = vmatprep.subr.mxu0 0.0
        %4513 = vmatpush2.msra.mxu0 0.0
        %4514 = vmatprep.subr.mxu0 0.0
        %4515 = vmatpush2.msra.mxu0 0.0
        %4516 = vmatprep.mubr.f32.mxu0 0.0
        %v4517 = vand.u32 %v3777, 4294901760
        %v4518 = vsub.f32 %v3777, %v4517
        %v4519 = vand.u32 %v4518, 4294901760
        %4520 = vmatmul.mubr.f32.gmra.mxu0 %v4519
        %v4521 = vpop.f32.mrf.mxu0
        %v4522 = vadd.f32 %v4448, %v4521
        %v4523 = vpop.f32.mrf.mxu0
        %4524 = vdwg.mxu0
        %4525 = vmatprep.subr.mxu0 0.0
        %4526 = vmatpush1.msra.mxu0 0.0
        %4527 = vmatprep.subr.mxu0 0.0
        %4528 = vmatpush1.msra.mxu0 0.0
        %4529 = vmatprep.subr.mxu0 0.0
        %4530 = vmatpush1.msra.mxu0 0.0
        %4531 = vmatprep.subr.mxu0 0.0
        %4532 = vmatpush1.msra.mxu0 0.0
        %4533 = vmatprep.subr.mxu0 0.0
        %4534 = vmatpush1.msra.mxu0 0.0
        %4535 = vmatprep.subr.mxu0 0.0
        %4536 = vmatpush1.msra.mxu0 0.0
        %4537 = vmatprep.subr.mxu0 0.0
        %4538 = vmatpush1.msra.mxu0 0.0
        %4539 = vmatprep.subr.mxu0 0.0
        %4540 = vmatpush1.msra.mxu0 0.0
        %4541 = vmatprep.subr.mxu0 0.0
        %4542 = vmatpush1.msra.mxu0 0.0
        %4543 = vmatprep.subr.mxu0 0.0
        %4544 = vmatpush1.msra.mxu0 0.0
        %4545 = vmatprep.subr.mxu0 0.0
        %4546 = vmatpush1.msra.mxu0 0.0
        %4547 = vmatprep.subr.mxu0 0.0
        %4548 = vmatpush1.msra.mxu0 0.0
        %4549 = vmatprep.subr.mxu0 0.0
        %4550 = vmatpush1.msra.mxu0 0.0
        %4551 = vmatprep.subr.mxu0 0.0
        %4552 = vmatpush1.msra.mxu0 0.0
        %4553 = vmatprep.subr.mxu0 0.0
        %4554 = vmatpush1.msra.mxu0 0.0
        %4555 = vmatprep.subr.mxu0 0.0
        %v4556 = vand.u32 %v164, 4294901760
        %v4557 = vsub.f32 %v164, %v4556
        %v4558 = vand.u32 %v4557, 4294901760
        %4559 = vmatpush1.msra.mxu0 %v4558
        %4560 = vmatprep.subr.mxu0 0.0
        %4561 = vmatpush2.msra.mxu0 0.0
        %4562 = vmatprep.subr.mxu0 0.0
        %4563 = vmatpush2.msra.mxu0 0.0
        %4564 = vmatprep.subr.mxu0 0.0
        %4565 = vmatpush2.msra.mxu0 0.0
        %4566 = vmatprep.subr.mxu0 0.0
        %4567 = vmatpush2.msra.mxu0 0.0
        %4568 = vmatprep.subr.mxu0 0.0
        %4569 = vmatpush2.msra.mxu0 0.0
        %4570 = vmatprep.subr.mxu0 0.0
        %4571 = vmatpush2.msra.mxu0 0.0
        %4572 = vmatprep.subr.mxu0 0.0
        %4573 = vmatpush2.msra.mxu0 0.0
        %4574 = vmatprep.subr.mxu0 0.0
        %4575 = vmatpush2.msra.mxu0 0.0
        %4576 = vmatprep.subr.mxu0 0.0
        %4577 = vmatpush2.msra.mxu0 0.0
        %4578 = vmatprep.subr.mxu0 0.0
        %4579 = vmatpush2.msra.mxu0 0.0
        %4580 = vmatprep.subr.mxu0 0.0
        %4581 = vmatpush2.msra.mxu0 0.0
        %4582 = vmatprep.subr.mxu0 0.0
        %4583 = vmatpush2.msra.mxu0 0.0
        %4584 = vmatprep.subr.mxu0 0.0
        %4585 = vmatpush2.msra.mxu0 0.0
        %4586 = vmatprep.subr.mxu0 0.0
        %4587 = vmatpush2.msra.mxu0 0.0
        %4588 = vmatprep.subr.mxu0 0.0
        %4589 = vmatpush2.msra.mxu0 0.0
        %4590 = vmatprep.subr.mxu0 0.0
        %4591 = vmatpush2.msra.mxu0 0.0
        %4592 = vmatprep.mubr.f32.mxu0 0.0
        %v4593 = vand.u32 %v3777, 4294901760
        %4594 = vmatmul.mubr.f32.gmra.mxu0 %v4593
        %v4595 = vpop.f32.mrf.mxu0
        %v4596 = vadd.f32 %v4522, %v4595
        %v4597 = vpop.f32.mrf.mxu0
        %4598 = vdwg.mxu0
        %4599 = vmatprep.subr.mxu0 0.0
        %4600 = vmatpush1.msra.mxu0 0.0
        %4601 = vmatprep.subr.mxu0 0.0
        %4602 = vmatpush1.msra.mxu0 0.0
        %4603 = vmatprep.subr.mxu0 0.0
        %4604 = vmatpush1.msra.mxu0 0.0
        %4605 = vmatprep.subr.mxu0 0.0
        %4606 = vmatpush1.msra.mxu0 0.0
        %4607 = vmatprep.subr.mxu0 0.0
        %4608 = vmatpush1.msra.mxu0 0.0
        %4609 = vmatprep.subr.mxu0 0.0
        %4610 = vmatpush1.msra.mxu0 0.0
        %4611 = vmatprep.subr.mxu0 0.0
        %4612 = vmatpush1.msra.mxu0 0.0
        %4613 = vmatprep.subr.mxu0 0.0
        %4614 = vmatpush1.msra.mxu0 0.0
        %4615 = vmatprep.subr.mxu0 0.0
        %4616 = vmatpush1.msra.mxu0 0.0
        %4617 = vmatprep.subr.mxu0 0.0
        %4618 = vmatpush1.msra.mxu0 0.0
        %4619 = vmatprep.subr.mxu0 0.0
        %4620 = vmatpush1.msra.mxu0 0.0
        %4621 = vmatprep.subr.mxu0 0.0
        %4622 = vmatpush1.msra.mxu0 0.0
        %4623 = vmatprep.subr.mxu0 0.0
        %4624 = vmatpush1.msra.mxu0 0.0
        %4625 = vmatprep.subr.mxu0 0.0
        %4626 = vmatpush1.msra.mxu0 0.0
        %4627 = vmatprep.subr.mxu0 0.0
        %4628 = vmatpush1.msra.mxu0 0.0
        %4629 = vmatprep.subr.mxu0 0.0
        %v4630 = vand.u32 %v164, 4294901760
        %4631 = vmatpush1.msra.mxu0 %v4630
        %4632 = vmatprep.subr.mxu0 0.0
        %4633 = vmatpush2.msra.mxu0 0.0
        %4634 = vmatprep.subr.mxu0 0.0
        %4635 = vmatpush2.msra.mxu0 0.0
        %4636 = vmatprep.subr.mxu0 0.0
        %4637 = vmatpush2.msra.mxu0 0.0
        %4638 = vmatprep.subr.mxu0 0.0
        %4639 = vmatpush2.msra.mxu0 0.0
        %4640 = vmatprep.subr.mxu0 0.0
        %4641 = vmatpush2.msra.mxu0 0.0
        %4642 = vmatprep.subr.mxu0 0.0
        %4643 = vmatpush2.msra.mxu0 0.0
        %4644 = vmatprep.subr.mxu0 0.0
        %4645 = vmatpush2.msra.mxu0 0.0
        %4646 = vmatprep.subr.mxu0 0.0
        %4647 = vmatpush2.msra.mxu0 0.0
        %4648 = vmatprep.subr.mxu0 0.0
        %4649 = vmatpush2.msra.mxu0 0.0
        %4650 = vmatprep.subr.mxu0 0.0
        %4651 = vmatpush2.msra.mxu0 0.0
        %4652 = vmatprep.subr.mxu0 0.0
        %4653 = vmatpush2.msra.mxu0 0.0
        %4654 = vmatprep.subr.mxu0 0.0
        %4655 = vmatpush2.msra.mxu0 0.0
        %4656 = vmatprep.subr.mxu0 0.0
        %4657 = vmatpush2.msra.mxu0 0.0
        %4658 = vmatprep.subr.mxu0 0.0
        %4659 = vmatpush2.msra.mxu0 0.0
        %4660 = vmatprep.subr.mxu0 0.0
        %4661 = vmatpush2.msra.mxu0 0.0
        %4662 = vmatprep.subr.mxu0 0.0
        %4663 = vmatpush2.msra.mxu0 0.0
        %4664 = vmatprep.mubr.f32.mxu0 0.0
        %v4665 = vand.u32 %v3777, 4294901760
        %4666 = vmatmul.mubr.f32.gmra.mxu0 %v4665
        %v4667 = vpop.f32.mrf.mxu0
        %v4668 = vadd.f32 %v4596, %v4667
        %v4669 = vpop.f32.mrf.mxu0
        %4670 = vdwg.mxu0
        %v4671 = vmax.f32 %v4222, %v4668
        %4672 = vmatprep.subr.mxu0 0.0
        %4673 = vmatpush1.msra.mxu0 0.0
        %4674 = vmatprep.subr.mxu0 0.0
        %4675 = vmatpush1.msra.mxu0 0.0
        %4676 = vmatprep.subr.mxu0 0.0
        %4677 = vmatpush1.msra.mxu0 0.0
        %4678 = vmatprep.subr.mxu0 0.0
        %4679 = vmatpush1.msra.mxu0 0.0
        %4680 = vmatprep.subr.mxu0 0.0
        %4681 = vmatpush1.msra.mxu0 0.0
        %4682 = vmatprep.subr.mxu0 0.0
        %4683 = vmatpush1.msra.mxu0 0.0
        %4684 = vmatprep.subr.mxu0 0.0
        %4685 = vmatpush1.msra.mxu0 0.0
        %4686 = vmatprep.subr.mxu0 0.0
        %4687 = vmatpush1.msra.mxu0 0.0
        %4688 = vmatprep.subr.mxu0 0.0
        %4689 = vmatpush1.msra.mxu0 0.0
        %4690 = vmatprep.subr.mxu0 0.0
        %4691 = vmatpush1.msra.mxu0 0.0
        %4692 = vmatprep.subr.mxu0 0.0
        %4693 = vmatpush1.msra.mxu0 0.0
        %4694 = vmatprep.subr.mxu0 0.0
        %4695 = vmatpush1.msra.mxu0 0.0
        %4696 = vmatprep.subr.mxu0 0.0
        %4697 = vmatpush1.msra.mxu0 0.0
        %4698 = vmatprep.subr.mxu0 0.0
        %4699 = vmatpush1.msra.mxu0 0.0
        %4700 = vmatprep.subr.mxu0 0.0
        %4701 = vmatpush1.msra.mxu0 0.0
        %4702 = vmatprep.subr.mxu0 0.0
        %v4703 = vand.u32 %v4671, 4294901760
        %4704 = vmatpush1.msra.mxu0 %v4703
        %4705 = vmatprep.subr.mxu0 0.0
        %4706 = vmatpush2.msra.mxu0 0.0
        %4707 = vmatprep.subr.mxu0 0.0
        %4708 = vmatpush2.msra.mxu0 0.0
        %4709 = vmatprep.subr.mxu0 0.0
        %4710 = vmatpush2.msra.mxu0 0.0
        %4711 = vmatprep.subr.mxu0 0.0
        %4712 = vmatpush2.msra.mxu0 0.0
        %4713 = vmatprep.subr.mxu0 0.0
        %4714 = vmatpush2.msra.mxu0 0.0
        %4715 = vmatprep.subr.mxu0 0.0
        %4716 = vmatpush2.msra.mxu0 0.0
        %4717 = vmatprep.subr.mxu0 0.0
        %4718 = vmatpush2.msra.mxu0 0.0
        %4719 = vmatprep.subr.mxu0 0.0
        %4720 = vmatpush2.msra.mxu0 0.0
        %4721 = vmatprep.subr.mxu0 0.0
        %4722 = vmatpush2.msra.mxu0 0.0
        %4723 = vmatprep.subr.mxu0 0.0
        %4724 = vmatpush2.msra.mxu0 0.0
        %4725 = vmatprep.subr.mxu0 0.0
        %4726 = vmatpush2.msra.mxu0 0.0
        %4727 = vmatprep.subr.mxu0 0.0
        %4728 = vmatpush2.msra.mxu0 0.0
        %4729 = vmatprep.subr.mxu0 0.0
        %4730 = vmatpush2.msra.mxu0 0.0
        %4731 = vmatprep.subr.mxu0 0.0
        %4732 = vmatpush2.msra.mxu0 0.0
        %4733 = vmatprep.subr.mxu0 0.0
        %4734 = vmatpush2.msra.mxu0 0.0
        %4735 = vmatprep.subr.mxu0 0.0
        %4736 = vmatpush2.msra.mxu0 0.0
        %4737 = vmatprep.mubr.f32.mxu0 0.0
        %v4738 = vand.u32 %v1075, 4294901760
        %v4739 = vsub.f32 %v1075, %v4738
        %v4740 = vand.u32 %v4739, 4294901760
        %v4741 = vsub.f32 %v4739, %v4740
        %v4742 = vand.u32 %v4741, 4294901760
        %4743 = vmatmul.mubr.f32.gmra.mxu0 %v4742
        %v4744 = vpop.f32.mrf.mxu0
        %v4745 = vadd.f32 0.0, %v4744
        %v4746 = vpop.f32.mrf.mxu0
        %4747 = vdwg.mxu0
        %4748 = vmatprep.subr.mxu0 0.0
        %4749 = vmatpush1.msra.mxu0 0.0
        %4750 = vmatprep.subr.mxu0 0.0
        %4751 = vmatpush1.msra.mxu0 0.0
        %4752 = vmatprep.subr.mxu0 0.0
        %4753 = vmatpush1.msra.mxu0 0.0
        %4754 = vmatprep.subr.mxu0 0.0
        %4755 = vmatpush1.msra.mxu0 0.0
        %4756 = vmatprep.subr.mxu0 0.0
        %4757 = vmatpush1.msra.mxu0 0.0
        %4758 = vmatprep.subr.mxu0 0.0
        %4759 = vmatpush1.msra.mxu0 0.0
        %4760 = vmatprep.subr.mxu0 0.0
        %4761 = vmatpush1.msra.mxu0 0.0
        %4762 = vmatprep.subr.mxu0 0.0
        %4763 = vmatpush1.msra.mxu0 0.0
        %4764 = vmatprep.subr.mxu0 0.0
        %4765 = vmatpush1.msra.mxu0 0.0
        %4766 = vmatprep.subr.mxu0 0.0
        %4767 = vmatpush1.msra.mxu0 0.0
        %4768 = vmatprep.subr.mxu0 0.0
        %4769 = vmatpush1.msra.mxu0 0.0
        %4770 = vmatprep.subr.mxu0 0.0
        %4771 = vmatpush1.msra.mxu0 0.0
        %4772 = vmatprep.subr.mxu0 0.0
        %4773 = vmatpush1.msra.mxu0 0.0
        %4774 = vmatprep.subr.mxu0 0.0
        %4775 = vmatpush1.msra.mxu0 0.0
        %4776 = vmatprep.subr.mxu0 0.0
        %4777 = vmatpush1.msra.mxu0 0.0
        %4778 = vmatprep.subr.mxu0 0.0
        %v4779 = vand.u32 %v4671, 4294901760
        %v4780 = vsub.f32 %v4671, %v4779
        %v4781 = vand.u32 %v4780, 4294901760
        %v4782 = vsub.f32 %v4780, %v4781
        %v4783 = vand.u32 %v4782, 4294901760
        %4784 = vmatpush1.msra.mxu0 %v4783
        %4785 = vmatprep.subr.mxu0 0.0
        %4786 = vmatpush2.msra.mxu0 0.0
        %4787 = vmatprep.subr.mxu0 0.0
        %4788 = vmatpush2.msra.mxu0 0.0
        %4789 = vmatprep.subr.mxu0 0.0
        %4790 = vmatpush2.msra.mxu0 0.0
        %4791 = vmatprep.subr.mxu0 0.0
        %4792 = vmatpush2.msra.mxu0 0.0
        %4793 = vmatprep.subr.mxu0 0.0
        %4794 = vmatpush2.msra.mxu0 0.0
        %4795 = vmatprep.subr.mxu0 0.0
        %4796 = vmatpush2.msra.mxu0 0.0
        %4797 = vmatprep.subr.mxu0 0.0
        %4798 = vmatpush2.msra.mxu0 0.0
        %4799 = vmatprep.subr.mxu0 0.0
        %4800 = vmatpush2.msra.mxu0 0.0
        %4801 = vmatprep.subr.mxu0 0.0
        %4802 = vmatpush2.msra.mxu0 0.0
        %4803 = vmatprep.subr.mxu0 0.0
        %4804 = vmatpush2.msra.mxu0 0.0
        %4805 = vmatprep.subr.mxu0 0.0
        %4806 = vmatpush2.msra.mxu0 0.0
        %4807 = vmatprep.subr.mxu0 0.0
        %4808 = vmatpush2.msra.mxu0 0.0
        %4809 = vmatprep.subr.mxu0 0.0
        %4810 = vmatpush2.msra.mxu0 0.0
        %4811 = vmatprep.subr.mxu0 0.0
        %4812 = vmatpush2.msra.mxu0 0.0
        %4813 = vmatprep.subr.mxu0 0.0
        %4814 = vmatpush2.msra.mxu0 0.0
        %4815 = vmatprep.subr.mxu0 0.0
        %4816 = vmatpush2.msra.mxu0 0.0
        %4817 = vmatprep.mubr.f32.mxu0 0.0
        %v4818 = vand.u32 %v1075, 4294901760
        %4819 = vmatmul.mubr.f32.gmra.mxu0 %v4818
        %v4820 = vpop.f32.mrf.mxu0
        %v4821 = vadd.f32 %v4745, %v4820
        %v4822 = vpop.f32.mrf.mxu0
        %4823 = vdwg.mxu0
        %4824 = vmatprep.subr.mxu0 0.0
        %4825 = vmatpush1.msra.mxu0 0.0
        %4826 = vmatprep.subr.mxu0 0.0
        %4827 = vmatpush1.msra.mxu0 0.0
        %4828 = vmatprep.subr.mxu0 0.0
        %4829 = vmatpush1.msra.mxu0 0.0
        %4830 = vmatprep.subr.mxu0 0.0
        %4831 = vmatpush1.msra.mxu0 0.0
        %4832 = vmatprep.subr.mxu0 0.0
        %4833 = vmatpush1.msra.mxu0 0.0
        %4834 = vmatprep.subr.mxu0 0.0
        %4835 = vmatpush1.msra.mxu0 0.0
        %4836 = vmatprep.subr.mxu0 0.0
        %4837 = vmatpush1.msra.mxu0 0.0
        %4838 = vmatprep.subr.mxu0 0.0
        %4839 = vmatpush1.msra.mxu0 0.0
        %4840 = vmatprep.subr.mxu0 0.0
        %4841 = vmatpush1.msra.mxu0 0.0
        %4842 = vmatprep.subr.mxu0 0.0
        %4843 = vmatpush1.msra.mxu0 0.0
        %4844 = vmatprep.subr.mxu0 0.0
        %4845 = vmatpush1.msra.mxu0 0.0
        %4846 = vmatprep.subr.mxu0 0.0
        %4847 = vmatpush1.msra.mxu0 0.0
        %4848 = vmatprep.subr.mxu0 0.0
        %4849 = vmatpush1.msra.mxu0 0.0
        %4850 = vmatprep.subr.mxu0 0.0
        %4851 = vmatpush1.msra.mxu0 0.0
        %4852 = vmatprep.subr.mxu0 0.0
        %4853 = vmatpush1.msra.mxu0 0.0
        %4854 = vmatprep.subr.mxu0 0.0
        %v4855 = vand.u32 %v4671, 4294901760
        %v4856 = vsub.f32 %v4671, %v4855
        %4857 = vmatpush1.msra.mxu0 %v4856
        %4858 = vmatprep.subr.mxu0 0.0
        %4859 = vmatpush2.msra.mxu0 0.0
        %4860 = vmatprep.subr.mxu0 0.0
        %4861 = vmatpush2.msra.mxu0 0.0
        %4862 = vmatprep.subr.mxu0 0.0
        %4863 = vmatpush2.msra.mxu0 0.0
        %4864 = vmatprep.subr.mxu0 0.0
        %4865 = vmatpush2.msra.mxu0 0.0
        %4866 = vmatprep.subr.mxu0 0.0
        %4867 = vmatpush2.msra.mxu0 0.0
        %4868 = vmatprep.subr.mxu0 0.0
        %4869 = vmatpush2.msra.mxu0 0.0
        %4870 = vmatprep.subr.mxu0 0.0
        %4871 = vmatpush2.msra.mxu0 0.0
        %4872 = vmatprep.subr.mxu0 0.0
        %4873 = vmatpush2.msra.mxu0 0.0
        %4874 = vmatprep.subr.mxu0 0.0
        %4875 = vmatpush2.msra.mxu0 0.0
        %4876 = vmatprep.subr.mxu0 0.0
        %4877 = vmatpush2.msra.mxu0 0.0
        %4878 = vmatprep.subr.mxu0 0.0
        %4879 = vmatpush2.msra.mxu0 0.0
        %4880 = vmatprep.subr.mxu0 0.0
        %4881 = vmatpush2.msra.mxu0 0.0
        %4882 = vmatprep.subr.mxu0 0.0
        %4883 = vmatpush2.msra.mxu0 0.0
        %4884 = vmatprep.subr.mxu0 0.0
        %4885 = vmatpush2.msra.mxu0 0.0
        %4886 = vmatprep.subr.mxu0 0.0
        %4887 = vmatpush2.msra.mxu0 0.0
        %4888 = vmatprep.subr.mxu0 0.0
        %4889 = vmatpush2.msra.mxu0 0.0
        %4890 = vmatprep.mubr.f32.mxu0 0.0
        %v4891 = vand.u32 %v1075, 4294901760
        %v4892 = vsub.f32 %v1075, %v4891
        %4893 = vmatmul.mubr.f32.gmra.mxu0 %v4892
        %v4894 = vpop.f32.mrf.mxu0
        %v4895 = vadd.f32 %v4821, %v4894
        %v4896 = vpop.f32.mrf.mxu0
        %4897 = vdwg.mxu0
        %4898 = vmatprep.subr.mxu0 0.0
        %4899 = vmatpush1.msra.mxu0 0.0
        %4900 = vmatprep.subr.mxu0 0.0
        %4901 = vmatpush1.msra.mxu0 0.0
        %4902 = vmatprep.subr.mxu0 0.0
        %4903 = vmatpush1.msra.mxu0 0.0
        %4904 = vmatprep.subr.mxu0 0.0
        %4905 = vmatpush1.msra.mxu0 0.0
        %4906 = vmatprep.subr.mxu0 0.0
        %4907 = vmatpush1.msra.mxu0 0.0
        %4908 = vmatprep.subr.mxu0 0.0
        %4909 = vmatpush1.msra.mxu0 0.0
        %4910 = vmatprep.subr.mxu0 0.0
        %4911 = vmatpush1.msra.mxu0 0.0
        %4912 = vmatprep.subr.mxu0 0.0
        %4913 = vmatpush1.msra.mxu0 0.0
        %4914 = vmatprep.subr.mxu0 0.0
        %4915 = vmatpush1.msra.mxu0 0.0
        %4916 = vmatprep.subr.mxu0 0.0
        %4917 = vmatpush1.msra.mxu0 0.0
        %4918 = vmatprep.subr.mxu0 0.0
        %4919 = vmatpush1.msra.mxu0 0.0
        %4920 = vmatprep.subr.mxu0 0.0
        %4921 = vmatpush1.msra.mxu0 0.0
        %4922 = vmatprep.subr.mxu0 0.0
        %4923 = vmatpush1.msra.mxu0 0.0
        %4924 = vmatprep.subr.mxu0 0.0
        %4925 = vmatpush1.msra.mxu0 0.0
        %4926 = vmatprep.subr.mxu0 0.0
        %4927 = vmatpush1.msra.mxu0 0.0
        %4928 = vmatprep.subr.mxu0 0.0
        %v4929 = vand.u32 %v4671, 4294901760
        %4930 = vmatpush1.msra.mxu0 %v4929
        %4931 = vmatprep.subr.mxu0 0.0
        %4932 = vmatpush2.msra.mxu0 0.0
        %4933 = vmatprep.subr.mxu0 0.0
        %4934 = vmatpush2.msra.mxu0 0.0
        %4935 = vmatprep.subr.mxu0 0.0
        %4936 = vmatpush2.msra.mxu0 0.0
        %4937 = vmatprep.subr.mxu0 0.0
        %4938 = vmatpush2.msra.mxu0 0.0
        %4939 = vmatprep.subr.mxu0 0.0
        %4940 = vmatpush2.msra.mxu0 0.0
        %4941 = vmatprep.subr.mxu0 0.0
        %4942 = vmatpush2.msra.mxu0 0.0
        %4943 = vmatprep.subr.mxu0 0.0
        %4944 = vmatpush2.msra.mxu0 0.0
        %4945 = vmatprep.subr.mxu0 0.0
        %4946 = vmatpush2.msra.mxu0 0.0
        %4947 = vmatprep.subr.mxu0 0.0
        %4948 = vmatpush2.msra.mxu0 0.0
        %4949 = vmatprep.subr.mxu0 0.0
        %4950 = vmatpush2.msra.mxu0 0.0
        %4951 = vmatprep.subr.mxu0 0.0
        %4952 = vmatpush2.msra.mxu0 0.0
        %4953 = vmatprep.subr.mxu0 0.0
        %4954 = vmatpush2.msra.mxu0 0.0
        %4955 = vmatprep.subr.mxu0 0.0
        %4956 = vmatpush2.msra.mxu0 0.0
        %4957 = vmatprep.subr.mxu0 0.0
        %4958 = vmatpush2.msra.mxu0 0.0
        %4959 = vmatprep.subr.mxu0 0.0
        %4960 = vmatpush2.msra.mxu0 0.0
        %4961 = vmatprep.subr.mxu0 0.0
        %4962 = vmatpush2.msra.mxu0 0.0
        %4963 = vmatprep.mubr.f32.mxu0 0.0
        %v4964 = vand.u32 %v1075, 4294901760
        %v4965 = vsub.f32 %v1075, %v4964
        %v4966 = vand.u32 %v4965, 4294901760
        %4967 = vmatmul.mubr.f32.gmra.mxu0 %v4966
        %v4968 = vpop.f32.mrf.mxu0
        %v4969 = vadd.f32 %v4895, %v4968
        %v4970 = vpop.f32.mrf.mxu0
        %4971 = vdwg.mxu0
        %4972 = vmatprep.subr.mxu0 0.0
        %4973 = vmatpush1.msra.mxu0 0.0
        %4974 = vmatprep.subr.mxu0 0.0
        %4975 = vmatpush1.msra.mxu0 0.0
        %4976 = vmatprep.subr.mxu0 0.0
        %4977 = vmatpush1.msra.mxu0 0.0
        %4978 = vmatprep.subr.mxu0 0.0
        %4979 = vmatpush1.msra.mxu0 0.0
        %4980 = vmatprep.subr.mxu0 0.0
        %4981 = vmatpush1.msra.mxu0 0.0
        %4982 = vmatprep.subr.mxu0 0.0
        %4983 = vmatpush1.msra.mxu0 0.0
        %4984 = vmatprep.subr.mxu0 0.0
        %4985 = vmatpush1.msra.mxu0 0.0
        %4986 = vmatprep.subr.mxu0 0.0
        %4987 = vmatpush1.msra.mxu0 0.0
        %4988 = vmatprep.subr.mxu0 0.0
        %4989 = vmatpush1.msra.mxu0 0.0
        %4990 = vmatprep.subr.mxu0 0.0
        %4991 = vmatpush1.msra.mxu0 0.0
        %4992 = vmatprep.subr.mxu0 0.0
        %4993 = vmatpush1.msra.mxu0 0.0
        %4994 = vmatprep.subr.mxu0 0.0
        %4995 = vmatpush1.msra.mxu0 0.0
        %4996 = vmatprep.subr.mxu0 0.0
        %4997 = vmatpush1.msra.mxu0 0.0
        %4998 = vmatprep.subr.mxu0 0.0
        %4999 = vmatpush1.msra.mxu0 0.0
        %5000 = vmatprep.subr.mxu0 0.0
        %5001 = vmatpush1.msra.mxu0 0.0
        %5002 = vmatprep.subr.mxu0 0.0
        %v5003 = vand.u32 %v4671, 4294901760
        %v5004 = vsub.f32 %v4671, %v5003
        %v5005 = vand.u32 %v5004, 4294901760
        %5006 = vmatpush1.msra.mxu0 %v5005
        %5007 = vmatprep.subr.mxu0 0.0
        %5008 = vmatpush2.msra.mxu0 0.0
        %5009 = vmatprep.subr.mxu0 0.0
        %5010 = vmatpush2.msra.mxu0 0.0
        %5011 = vmatprep.subr.mxu0 0.0
        %5012 = vmatpush2.msra.mxu0 0.0
        %5013 = vmatprep.subr.mxu0 0.0
        %5014 = vmatpush2.msra.mxu0 0.0
        %5015 = vmatprep.subr.mxu0 0.0
        %5016 = vmatpush2.msra.mxu0 0.0
        %5017 = vmatprep.subr.mxu0 0.0
        %5018 = vmatpush2.msra.mxu0 0.0
        %5019 = vmatprep.subr.mxu0 0.0
        %5020 = vmatpush2.msra.mxu0 0.0
        %5021 = vmatprep.subr.mxu0 0.0
        %5022 = vmatpush2.msra.mxu0 0.0
        %5023 = vmatprep.subr.mxu0 0.0
        %5024 = vmatpush2.msra.mxu0 0.0
        %5025 = vmatprep.subr.mxu0 0.0
        %5026 = vmatpush2.msra.mxu0 0.0
        %5027 = vmatprep.subr.mxu0 0.0
        %5028 = vmatpush2.msra.mxu0 0.0
        %5029 = vmatprep.subr.mxu0 0.0
        %5030 = vmatpush2.msra.mxu0 0.0
        %5031 = vmatprep.subr.mxu0 0.0
        %5032 = vmatpush2.msra.mxu0 0.0
        %5033 = vmatprep.subr.mxu0 0.0
        %5034 = vmatpush2.msra.mxu0 0.0
        %5035 = vmatprep.subr.mxu0 0.0
        %5036 = vmatpush2.msra.mxu0 0.0
        %5037 = vmatprep.subr.mxu0 0.0
        %5038 = vmatpush2.msra.mxu0 0.0
        %5039 = vmatprep.mubr.f32.mxu0 0.0
        %v5040 = vand.u32 %v1075, 4294901760
        %5041 = vmatmul.mubr.f32.gmra.mxu0 %v5040
        %v5042 = vpop.f32.mrf.mxu0
        %v5043 = vadd.f32 %v4969, %v5042
        %v5044 = vpop.f32.mrf.mxu0
        %5045 = vdwg.mxu0
        %5046 = vmatprep.subr.mxu0 0.0
        %5047 = vmatpush1.msra.mxu0 0.0
        %5048 = vmatprep.subr.mxu0 0.0
        %5049 = vmatpush1.msra.mxu0 0.0
        %5050 = vmatprep.subr.mxu0 0.0
        %5051 = vmatpush1.msra.mxu0 0.0
        %5052 = vmatprep.subr.mxu0 0.0
        %5053 = vmatpush1.msra.mxu0 0.0
        %5054 = vmatprep.subr.mxu0 0.0
        %5055 = vmatpush1.msra.mxu0 0.0
        %5056 = vmatprep.subr.mxu0 0.0
        %5057 = vmatpush1.msra.mxu0 0.0
        %5058 = vmatprep.subr.mxu0 0.0
        %5059 = vmatpush1.msra.mxu0 0.0
        %5060 = vmatprep.subr.mxu0 0.0
        %5061 = vmatpush1.msra.mxu0 0.0
        %5062 = vmatprep.subr.mxu0 0.0
        %5063 = vmatpush1.msra.mxu0 0.0
        %5064 = vmatprep.subr.mxu0 0.0
        %5065 = vmatpush1.msra.mxu0 0.0
        %5066 = vmatprep.subr.mxu0 0.0
        %5067 = vmatpush1.msra.mxu0 0.0
        %5068 = vmatprep.subr.mxu0 0.0
        %5069 = vmatpush1.msra.mxu0 0.0
        %5070 = vmatprep.subr.mxu0 0.0
        %5071 = vmatpush1.msra.mxu0 0.0
        %5072 = vmatprep.subr.mxu0 0.0
        %5073 = vmatpush1.msra.mxu0 0.0
        %5074 = vmatprep.subr.mxu0 0.0
        %5075 = vmatpush1.msra.mxu0 0.0
        %5076 = vmatprep.subr.mxu0 0.0
        %v5077 = vand.u32 %v4671, 4294901760
        %5078 = vmatpush1.msra.mxu0 %v5077
        %5079 = vmatprep.subr.mxu0 0.0
        %5080 = vmatpush2.msra.mxu0 0.0
        %5081 = vmatprep.subr.mxu0 0.0
        %5082 = vmatpush2.msra.mxu0 0.0
        %5083 = vmatprep.subr.mxu0 0.0
        %5084 = vmatpush2.msra.mxu0 0.0
        %5085 = vmatprep.subr.mxu0 0.0
        %5086 = vmatpush2.msra.mxu0 0.0
        %5087 = vmatprep.subr.mxu0 0.0
        %5088 = vmatpush2.msra.mxu0 0.0
        %5089 = vmatprep.subr.mxu0 0.0
        %5090 = vmatpush2.msra.mxu0 0.0
        %5091 = vmatprep.subr.mxu0 0.0
        %5092 = vmatpush2.msra.mxu0 0.0
        %5093 = vmatprep.subr.mxu0 0.0
        %5094 = vmatpush2.msra.mxu0 0.0
        %5095 = vmatprep.subr.mxu0 0.0
        %5096 = vmatpush2.msra.mxu0 0.0
        %5097 = vmatprep.subr.mxu0 0.0
        %5098 = vmatpush2.msra.mxu0 0.0
        %5099 = vmatprep.subr.mxu0 0.0
        %5100 = vmatpush2.msra.mxu0 0.0
        %5101 = vmatprep.subr.mxu0 0.0
        %5102 = vmatpush2.msra.mxu0 0.0
        %5103 = vmatprep.subr.mxu0 0.0
        %5104 = vmatpush2.msra.mxu0 0.0
        %5105 = vmatprep.subr.mxu0 0.0
        %5106 = vmatpush2.msra.mxu0 0.0
        %5107 = vmatprep.subr.mxu0 0.0
        %5108 = vmatpush2.msra.mxu0 0.0
        %5109 = vmatprep.subr.mxu0 0.0
        %5110 = vmatpush2.msra.mxu0 0.0
        %5111 = vmatprep.mubr.f32.mxu0 0.0
        %v5112 = vand.u32 %v1075, 4294901760
        %5113 = vmatmul.mubr.f32.gmra.mxu0 %v5112
        %v5114 = vpop.f32.mrf.mxu0
        %v5115 = vadd.f32 %v5043, %v5114
        %v5116 = vpop.f32.mrf.mxu0
        %5117 = vdwg.mxu0
        %5118 = vmatprep.subr.mxu0 0.0
        %5119 = vmatpush1.msra.mxu0 0.0
        %5120 = vmatprep.subr.mxu0 0.0
        %5121 = vmatpush1.msra.mxu0 0.0
        %5122 = vmatprep.subr.mxu0 0.0
        %5123 = vmatpush1.msra.mxu0 0.0
        %5124 = vmatprep.subr.mxu0 0.0
        %5125 = vmatpush1.msra.mxu0 0.0
        %5126 = vmatprep.subr.mxu0 0.0
        %5127 = vmatpush1.msra.mxu0 0.0
        %5128 = vmatprep.subr.mxu0 0.0
        %5129 = vmatpush1.msra.mxu0 0.0
        %5130 = vmatprep.subr.mxu0 0.0
        %5131 = vmatpush1.msra.mxu0 0.0
        %5132 = vmatprep.subr.mxu0 0.0
        %5133 = vmatpush1.msra.mxu0 0.0
        %5134 = vmatprep.subr.mxu0 0.0
        %5135 = vmatpush1.msra.mxu0 0.0
        %5136 = vmatprep.subr.mxu0 0.0
        %5137 = vmatpush1.msra.mxu0 0.0
        %5138 = vmatprep.subr.mxu0 0.0
        %5139 = vmatpush1.msra.mxu0 0.0
        %5140 = vmatprep.subr.mxu0 0.0
        %5141 = vmatpush1.msra.mxu0 0.0
        %5142 = vmatprep.subr.mxu0 0.0
        %5143 = vmatpush1.msra.mxu0 0.0
        %5144 = vmatprep.subr.mxu0 0.0
        %5145 = vmatpush1.msra.mxu0 0.0
        %5146 = vmatprep.subr.mxu0 0.0
        %5147 = vmatpush1.msra.mxu0 0.0
        %5148 = vmatprep.subr.mxu0 0.0
        %v5149 = vand.u32 %v4671, 4294901760
        %5150 = vmatpush1.msra.mxu0 %v5149
        %5151 = vmatprep.subr.mxu0 0.0
        %5152 = vmatpush2.msra.mxu0 0.0
        %5153 = vmatprep.subr.mxu0 0.0
        %5154 = vmatpush2.msra.mxu0 0.0
        %5155 = vmatprep.subr.mxu0 0.0
        %5156 = vmatpush2.msra.mxu0 0.0
        %5157 = vmatprep.subr.mxu0 0.0
        %5158 = vmatpush2.msra.mxu0 0.0
        %5159 = vmatprep.subr.mxu0 0.0
        %5160 = vmatpush2.msra.mxu0 0.0
        %5161 = vmatprep.subr.mxu0 0.0
        %5162 = vmatpush2.msra.mxu0 0.0
        %5163 = vmatprep.subr.mxu0 0.0
        %5164 = vmatpush2.msra.mxu0 0.0
        %5165 = vmatprep.subr.mxu0 0.0
        %5166 = vmatpush2.msra.mxu0 0.0
        %5167 = vmatprep.subr.mxu0 0.0
        %5168 = vmatpush2.msra.mxu0 0.0
        %5169 = vmatprep.subr.mxu0 0.0
        %5170 = vmatpush2.msra.mxu0 0.0
        %5171 = vmatprep.subr.mxu0 0.0
        %5172 = vmatpush2.msra.mxu0 0.0
        %5173 = vmatprep.subr.mxu0 0.0
        %5174 = vmatpush2.msra.mxu0 0.0
        %5175 = vmatprep.subr.mxu0 0.0
        %5176 = vmatpush2.msra.mxu0 0.0
        %5177 = vmatprep.subr.mxu0 0.0
        %5178 = vmatpush2.msra.mxu0 0.0
        %5179 = vmatprep.subr.mxu0 0.0
        %5180 = vmatpush2.msra.mxu0 0.0
        %5181 = vmatprep.subr.mxu0 0.0
        %5182 = vmatpush2.msra.mxu0 0.0
        %5183 = vmatprep.mubr.f32.mxu0 0.0
        %v5184 = vand.u32 %v1524, 4294901760
        %v5185 = vsub.f32 %v1524, %v5184
        %v5186 = vand.u32 %v5185, 4294901760
        %v5187 = vsub.f32 %v5185, %v5186
        %v5188 = vand.u32 %v5187, 4294901760
        %5189 = vmatmul.mubr.f32.gmra.mxu0 %v5188
        %v5190 = vpop.f32.mrf.mxu0
        %v5191 = vadd.f32 0.0, %v5190
        %v5192 = vpop.f32.mrf.mxu0
        %5193 = vdwg.mxu0
        %5194 = vmatprep.subr.mxu0 0.0
        %5195 = vmatpush1.msra.mxu0 0.0
        %5196 = vmatprep.subr.mxu0 0.0
        %5197 = vmatpush1.msra.mxu0 0.0
        %5198 = vmatprep.subr.mxu0 0.0
        %5199 = vmatpush1.msra.mxu0 0.0
        %5200 = vmatprep.subr.mxu0 0.0
        %5201 = vmatpush1.msra.mxu0 0.0
        %5202 = vmatprep.subr.mxu0 0.0
        %5203 = vmatpush1.msra.mxu0 0.0
        %5204 = vmatprep.subr.mxu0 0.0
        %5205 = vmatpush1.msra.mxu0 0.0
        %5206 = vmatprep.subr.mxu0 0.0
        %5207 = vmatpush1.msra.mxu0 0.0
        %5208 = vmatprep.subr.mxu0 0.0
        %5209 = vmatpush1.msra.mxu0 0.0
        %5210 = vmatprep.subr.mxu0 0.0
        %5211 = vmatpush1.msra.mxu0 0.0
        %5212 = vmatprep.subr.mxu0 0.0
        %5213 = vmatpush1.msra.mxu0 0.0
        %5214 = vmatprep.subr.mxu0 0.0
        %5215 = vmatpush1.msra.mxu0 0.0
        %5216 = vmatprep.subr.mxu0 0.0
        %5217 = vmatpush1.msra.mxu0 0.0
        %5218 = vmatprep.subr.mxu0 0.0
        %5219 = vmatpush1.msra.mxu0 0.0
        %5220 = vmatprep.subr.mxu0 0.0
        %5221 = vmatpush1.msra.mxu0 0.0
        %5222 = vmatprep.subr.mxu0 0.0
        %5223 = vmatpush1.msra.mxu0 0.0
        %5224 = vmatprep.subr.mxu0 0.0
        %v5225 = vand.u32 %v4671, 4294901760
        %v5226 = vsub.f32 %v4671, %v5225
        %v5227 = vand.u32 %v5226, 4294901760
        %v5228 = vsub.f32 %v5226, %v5227
        %v5229 = vand.u32 %v5228, 4294901760
        %5230 = vmatpush1.msra.mxu0 %v5229
        %5231 = vmatprep.subr.mxu0 0.0
        %5232 = vmatpush2.msra.mxu0 0.0
        %5233 = vmatprep.subr.mxu0 0.0
        %5234 = vmatpush2.msra.mxu0 0.0
        %5235 = vmatprep.subr.mxu0 0.0
        %5236 = vmatpush2.msra.mxu0 0.0
        %5237 = vmatprep.subr.mxu0 0.0
        %5238 = vmatpush2.msra.mxu0 0.0
        %5239 = vmatprep.subr.mxu0 0.0
        %5240 = vmatpush2.msra.mxu0 0.0
        %5241 = vmatprep.subr.mxu0 0.0
        %5242 = vmatpush2.msra.mxu0 0.0
        %5243 = vmatprep.subr.mxu0 0.0
        %5244 = vmatpush2.msra.mxu0 0.0
        %5245 = vmatprep.subr.mxu0 0.0
        %5246 = vmatpush2.msra.mxu0 0.0
        %5247 = vmatprep.subr.mxu0 0.0
        %5248 = vmatpush2.msra.mxu0 0.0
        %5249 = vmatprep.subr.mxu0 0.0
        %5250 = vmatpush2.msra.mxu0 0.0
        %5251 = vmatprep.subr.mxu0 0.0
        %5252 = vmatpush2.msra.mxu0 0.0
        %5253 = vmatprep.subr.mxu0 0.0
        %5254 = vmatpush2.msra.mxu0 0.0
        %5255 = vmatprep.subr.mxu0 0.0
        %5256 = vmatpush2.msra.mxu0 0.0
        %5257 = vmatprep.subr.mxu0 0.0
        %5258 = vmatpush2.msra.mxu0 0.0
        %5259 = vmatprep.subr.mxu0 0.0
        %5260 = vmatpush2.msra.mxu0 0.0
        %5261 = vmatprep.subr.mxu0 0.0
        %5262 = vmatpush2.msra.mxu0 0.0
        %5263 = vmatprep.mubr.f32.mxu0 0.0
        %v5264 = vand.u32 %v1524, 4294901760
        %5265 = vmatmul.mubr.f32.gmra.mxu0 %v5264
        %v5266 = vpop.f32.mrf.mxu0
        %v5267 = vadd.f32 %v5191, %v5266
        %v5268 = vpop.f32.mrf.mxu0
        %5269 = vdwg.mxu0
        %5270 = vmatprep.subr.mxu0 0.0
        %5271 = vmatpush1.msra.mxu0 0.0
        %5272 = vmatprep.subr.mxu0 0.0
        %5273 = vmatpush1.msra.mxu0 0.0
        %5274 = vmatprep.subr.mxu0 0.0
        %5275 = vmatpush1.msra.mxu0 0.0
        %5276 = vmatprep.subr.mxu0 0.0
        %5277 = vmatpush1.msra.mxu0 0.0
        %5278 = vmatprep.subr.mxu0 0.0
        %5279 = vmatpush1.msra.mxu0 0.0
        %5280 = vmatprep.subr.mxu0 0.0
        %5281 = vmatpush1.msra.mxu0 0.0
        %5282 = vmatprep.subr.mxu0 0.0
        %5283 = vmatpush1.msra.mxu0 0.0
        %5284 = vmatprep.subr.mxu0 0.0
        %5285 = vmatpush1.msra.mxu0 0.0
        %5286 = vmatprep.subr.mxu0 0.0
        %5287 = vmatpush1.msra.mxu0 0.0
        %5288 = vmatprep.subr.mxu0 0.0
        %5289 = vmatpush1.msra.mxu0 0.0
        %5290 = vmatprep.subr.mxu0 0.0
        %5291 = vmatpush1.msra.mxu0 0.0
        %5292 = vmatprep.subr.mxu0 0.0
        %5293 = vmatpush1.msra.mxu0 0.0
        %5294 = vmatprep.subr.mxu0 0.0
        %5295 = vmatpush1.msra.mxu0 0.0
        %5296 = vmatprep.subr.mxu0 0.0
        %5297 = vmatpush1.msra.mxu0 0.0
        %5298 = vmatprep.subr.mxu0 0.0
        %5299 = vmatpush1.msra.mxu0 0.0
        %5300 = vmatprep.subr.mxu0 0.0
        %v5301 = vand.u32 %v4671, 4294901760
        %v5302 = vsub.f32 %v4671, %v5301
        %5303 = vmatpush1.msra.mxu0 %v5302
        %5304 = vmatprep.subr.mxu0 0.0
        %5305 = vmatpush2.msra.mxu0 0.0
        %5306 = vmatprep.subr.mxu0 0.0
        %5307 = vmatpush2.msra.mxu0 0.0
        %5308 = vmatprep.subr.mxu0 0.0
        %5309 = vmatpush2.msra.mxu0 0.0
        %5310 = vmatprep.subr.mxu0 0.0
        %5311 = vmatpush2.msra.mxu0 0.0
        %5312 = vmatprep.subr.mxu0 0.0
        %5313 = vmatpush2.msra.mxu0 0.0
        %5314 = vmatprep.subr.mxu0 0.0
        %5315 = vmatpush2.msra.mxu0 0.0
        %5316 = vmatprep.subr.mxu0 0.0
        %5317 = vmatpush2.msra.mxu0 0.0
        %5318 = vmatprep.subr.mxu0 0.0
        %5319 = vmatpush2.msra.mxu0 0.0
        %5320 = vmatprep.subr.mxu0 0.0
        %5321 = vmatpush2.msra.mxu0 0.0
        %5322 = vmatprep.subr.mxu0 0.0
        %5323 = vmatpush2.msra.mxu0 0.0
        %5324 = vmatprep.subr.mxu0 0.0
        %5325 = vmatpush2.msra.mxu0 0.0
        %5326 = vmatprep.subr.mxu0 0.0
        %5327 = vmatpush2.msra.mxu0 0.0
        %5328 = vmatprep.subr.mxu0 0.0
        %5329 = vmatpush2.msra.mxu0 0.0
        %5330 = vmatprep.subr.mxu0 0.0
        %5331 = vmatpush2.msra.mxu0 0.0
        %5332 = vmatprep.subr.mxu0 0.0
        %5333 = vmatpush2.msra.mxu0 0.0
        %5334 = vmatprep.subr.mxu0 0.0
        %5335 = vmatpush2.msra.mxu0 0.0
        %5336 = vmatprep.mubr.f32.mxu0 0.0
        %v5337 = vand.u32 %v1524, 4294901760
        %v5338 = vsub.f32 %v1524, %v5337
        %5339 = vmatmul.mubr.f32.gmra.mxu0 %v5338
        %v5340 = vpop.f32.mrf.mxu0
        %v5341 = vadd.f32 %v5267, %v5340
        %v5342 = vpop.f32.mrf.mxu0
        %5343 = vdwg.mxu0
        %5344 = vmatprep.subr.mxu0 0.0
        %5345 = vmatpush1.msra.mxu0 0.0
        %5346 = vmatprep.subr.mxu0 0.0
        %5347 = vmatpush1.msra.mxu0 0.0
        %5348 = vmatprep.subr.mxu0 0.0
        %5349 = vmatpush1.msra.mxu0 0.0
        %5350 = vmatprep.subr.mxu0 0.0
        %5351 = vmatpush1.msra.mxu0 0.0
        %5352 = vmatprep.subr.mxu0 0.0
        %5353 = vmatpush1.msra.mxu0 0.0
        %5354 = vmatprep.subr.mxu0 0.0
        %5355 = vmatpush1.msra.mxu0 0.0
        %5356 = vmatprep.subr.mxu0 0.0
        %5357 = vmatpush1.msra.mxu0 0.0
        %5358 = vmatprep.subr.mxu0 0.0
        %5359 = vmatpush1.msra.mxu0 0.0
        %5360 = vmatprep.subr.mxu0 0.0
        %5361 = vmatpush1.msra.mxu0 0.0
        %5362 = vmatprep.subr.mxu0 0.0
        %5363 = vmatpush1.msra.mxu0 0.0
        %5364 = vmatprep.subr.mxu0 0.0
        %5365 = vmatpush1.msra.mxu0 0.0
        %5366 = vmatprep.subr.mxu0 0.0
        %5367 = vmatpush1.msra.mxu0 0.0
        %5368 = vmatprep.subr.mxu0 0.0
        %5369 = vmatpush1.msra.mxu0 0.0
        %5370 = vmatprep.subr.mxu0 0.0
        %5371 = vmatpush1.msra.mxu0 0.0
        %5372 = vmatprep.subr.mxu0 0.0
        %5373 = vmatpush1.msra.mxu0 0.0
        %5374 = vmatprep.subr.mxu0 0.0
        %v5375 = vand.u32 %v4671, 4294901760
        %5376 = vmatpush1.msra.mxu0 %v5375
        %5377 = vmatprep.subr.mxu0 0.0
        %5378 = vmatpush2.msra.mxu0 0.0
        %5379 = vmatprep.subr.mxu0 0.0
        %5380 = vmatpush2.msra.mxu0 0.0
        %5381 = vmatprep.subr.mxu0 0.0
        %5382 = vmatpush2.msra.mxu0 0.0
        %5383 = vmatprep.subr.mxu0 0.0
        %5384 = vmatpush2.msra.mxu0 0.0
        %5385 = vmatprep.subr.mxu0 0.0
        %5386 = vmatpush2.msra.mxu0 0.0
        %5387 = vmatprep.subr.mxu0 0.0
        %5388 = vmatpush2.msra.mxu0 0.0
        %5389 = vmatprep.subr.mxu0 0.0
        %5390 = vmatpush2.msra.mxu0 0.0
        %5391 = vmatprep.subr.mxu0 0.0
        %5392 = vmatpush2.msra.mxu0 0.0
        %5393 = vmatprep.subr.mxu0 0.0
        %5394 = vmatpush2.msra.mxu0 0.0
        %5395 = vmatprep.subr.mxu0 0.0
        %5396 = vmatpush2.msra.mxu0 0.0
        %5397 = vmatprep.subr.mxu0 0.0
        %5398 = vmatpush2.msra.mxu0 0.0
        %5399 = vmatprep.subr.mxu0 0.0
        %5400 = vmatpush2.msra.mxu0 0.0
        %5401 = vmatprep.subr.mxu0 0.0
        %5402 = vmatpush2.msra.mxu0 0.0
        %5403 = vmatprep.subr.mxu0 0.0
        %5404 = vmatpush2.msra.mxu0 0.0
        %5405 = vmatprep.subr.mxu0 0.0
        %5406 = vmatpush2.msra.mxu0 0.0
        %5407 = vmatprep.subr.mxu0 0.0
        %5408 = vmatpush2.msra.mxu0 0.0
        %5409 = vmatprep.mubr.f32.mxu0 0.0
        %v5410 = vand.u32 %v1524, 4294901760
        %v5411 = vsub.f32 %v1524, %v5410
        %v5412 = vand.u32 %v5411, 4294901760
        %5413 = vmatmul.mubr.f32.gmra.mxu0 %v5412
        %v5414 = vpop.f32.mrf.mxu0
        %v5415 = vadd.f32 %v5341, %v5414
        %v5416 = vpop.f32.mrf.mxu0
        %5417 = vdwg.mxu0
        %5418 = vmatprep.subr.mxu0 0.0
        %5419 = vmatpush1.msra.mxu0 0.0
        %5420 = vmatprep.subr.mxu0 0.0
        %5421 = vmatpush1.msra.mxu0 0.0
        %5422 = vmatprep.subr.mxu0 0.0
        %5423 = vmatpush1.msra.mxu0 0.0
        %5424 = vmatprep.subr.mxu0 0.0
        %5425 = vmatpush1.msra.mxu0 0.0
        %5426 = vmatprep.subr.mxu0 0.0
        %5427 = vmatpush1.msra.mxu0 0.0
        %5428 = vmatprep.subr.mxu0 0.0
        %5429 = vmatpush1.msra.mxu0 0.0
        %5430 = vmatprep.subr.mxu0 0.0
        %5431 = vmatpush1.msra.mxu0 0.0
        %5432 = vmatprep.subr.mxu0 0.0
        %5433 = vmatpush1.msra.mxu0 0.0
        %5434 = vmatprep.subr.mxu0 0.0
        %5435 = vmatpush1.msra.mxu0 0.0
        %5436 = vmatprep.subr.mxu0 0.0
        %5437 = vmatpush1.msra.mxu0 0.0
        %5438 = vmatprep.subr.mxu0 0.0
        %5439 = vmatpush1.msra.mxu0 0.0
        %5440 = vmatprep.subr.mxu0 0.0
        %5441 = vmatpush1.msra.mxu0 0.0
        %5442 = vmatprep.subr.mxu0 0.0
        %5443 = vmatpush1.msra.mxu0 0.0
        %5444 = vmatprep.subr.mxu0 0.0
        %5445 = vmatpush1.msra.mxu0 0.0
        %5446 = vmatprep.subr.mxu0 0.0
        %5447 = vmatpush1.msra.mxu0 0.0
        %5448 = vmatprep.subr.mxu0 0.0
        %v5449 = vand.u32 %v4671, 4294901760
        %v5450 = vsub.f32 %v4671, %v5449
        %v5451 = vand.u32 %v5450, 4294901760
        %5452 = vmatpush1.msra.mxu0 %v5451
        %5453 = vmatprep.subr.mxu0 0.0
        %5454 = vmatpush2.msra.mxu0 0.0
        %5455 = vmatprep.subr.mxu0 0.0
        %5456 = vmatpush2.msra.mxu0 0.0
        %5457 = vmatprep.subr.mxu0 0.0
        %5458 = vmatpush2.msra.mxu0 0.0
        %5459 = vmatprep.subr.mxu0 0.0
        %5460 = vmatpush2.msra.mxu0 0.0
        %5461 = vmatprep.subr.mxu0 0.0
        %5462 = vmatpush2.msra.mxu0 0.0
        %5463 = vmatprep.subr.mxu0 0.0
        %5464 = vmatpush2.msra.mxu0 0.0
        %5465 = vmatprep.subr.mxu0 0.0
        %5466 = vmatpush2.msra.mxu0 0.0
        %5467 = vmatprep.subr.mxu0 0.0
        %5468 = vmatpush2.msra.mxu0 0.0
        %5469 = vmatprep.subr.mxu0 0.0
        %5470 = vmatpush2.msra.mxu0 0.0
        %5471 = vmatprep.subr.mxu0 0.0
        %5472 = vmatpush2.msra.mxu0 0.0
        %5473 = vmatprep.subr.mxu0 0.0
        %5474 = vmatpush2.msra.mxu0 0.0
        %5475 = vmatprep.subr.mxu0 0.0
        %5476 = vmatpush2.msra.mxu0 0.0
        %5477 = vmatprep.subr.mxu0 0.0
        %5478 = vmatpush2.msra.mxu0 0.0
        %5479 = vmatprep.subr.mxu0 0.0
        %5480 = vmatpush2.msra.mxu0 0.0
        %5481 = vmatprep.subr.mxu0 0.0
        %5482 = vmatpush2.msra.mxu0 0.0
        %5483 = vmatprep.subr.mxu0 0.0
        %5484 = vmatpush2.msra.mxu0 0.0
        %5485 = vmatprep.mubr.f32.mxu0 0.0
        %v5486 = vand.u32 %v1524, 4294901760
        %5487 = vmatmul.mubr.f32.gmra.mxu0 %v5486
        %v5488 = vpop.f32.mrf.mxu0
        %v5489 = vadd.f32 %v5415, %v5488
        %v5490 = vpop.f32.mrf.mxu0
        %5491 = vdwg.mxu0
        %5492 = vmatprep.subr.mxu0 0.0
        %5493 = vmatpush1.msra.mxu0 0.0
        %5494 = vmatprep.subr.mxu0 0.0
        %5495 = vmatpush1.msra.mxu0 0.0
        %5496 = vmatprep.subr.mxu0 0.0
        %5497 = vmatpush1.msra.mxu0 0.0
        %5498 = vmatprep.subr.mxu0 0.0
        %5499 = vmatpush1.msra.mxu0 0.0
        %5500 = vmatprep.subr.mxu0 0.0
        %5501 = vmatpush1.msra.mxu0 0.0
        %5502 = vmatprep.subr.mxu0 0.0
        %5503 = vmatpush1.msra.mxu0 0.0
        %5504 = vmatprep.subr.mxu0 0.0
        %5505 = vmatpush1.msra.mxu0 0.0
        %5506 = vmatprep.subr.mxu0 0.0
        %5507 = vmatpush1.msra.mxu0 0.0
        %5508 = vmatprep.subr.mxu0 0.0
        %5509 = vmatpush1.msra.mxu0 0.0
        %5510 = vmatprep.subr.mxu0 0.0
        %5511 = vmatpush1.msra.mxu0 0.0
        %5512 = vmatprep.subr.mxu0 0.0
        %5513 = vmatpush1.msra.mxu0 0.0
        %5514 = vmatprep.subr.mxu0 0.0
        %5515 = vmatpush1.msra.mxu0 0.0
        %5516 = vmatprep.subr.mxu0 0.0
        %5517 = vmatpush1.msra.mxu0 0.0
        %5518 = vmatprep.subr.mxu0 0.0
        %5519 = vmatpush1.msra.mxu0 0.0
        %5520 = vmatprep.subr.mxu0 0.0
        %5521 = vmatpush1.msra.mxu0 0.0
        %5522 = vmatprep.subr.mxu0 0.0
        %v5523 = vand.u32 %v4671, 4294901760
        %5524 = vmatpush1.msra.mxu0 %v5523
        %5525 = vmatprep.subr.mxu0 0.0
        %5526 = vmatpush2.msra.mxu0 0.0
        %5527 = vmatprep.subr.mxu0 0.0
        %5528 = vmatpush2.msra.mxu0 0.0
        %5529 = vmatprep.subr.mxu0 0.0
        %5530 = vmatpush2.msra.mxu0 0.0
        %5531 = vmatprep.subr.mxu0 0.0
        %5532 = vmatpush2.msra.mxu0 0.0
        %5533 = vmatprep.subr.mxu0 0.0
        %5534 = vmatpush2.msra.mxu0 0.0
        %5535 = vmatprep.subr.mxu0 0.0
        %5536 = vmatpush2.msra.mxu0 0.0
        %5537 = vmatprep.subr.mxu0 0.0
        %5538 = vmatpush2.msra.mxu0 0.0
        %5539 = vmatprep.subr.mxu0 0.0
        %5540 = vmatpush2.msra.mxu0 0.0
        %5541 = vmatprep.subr.mxu0 0.0
        %5542 = vmatpush2.msra.mxu0 0.0
        %5543 = vmatprep.subr.mxu0 0.0
        %5544 = vmatpush2.msra.mxu0 0.0
        %5545 = vmatprep.subr.mxu0 0.0
        %5546 = vmatpush2.msra.mxu0 0.0
        %5547 = vmatprep.subr.mxu0 0.0
        %5548 = vmatpush2.msra.mxu0 0.0
        %5549 = vmatprep.subr.mxu0 0.0
        %5550 = vmatpush2.msra.mxu0 0.0
        %5551 = vmatprep.subr.mxu0 0.0
        %5552 = vmatpush2.msra.mxu0 0.0
        %5553 = vmatprep.subr.mxu0 0.0
        %5554 = vmatpush2.msra.mxu0 0.0
        %5555 = vmatprep.subr.mxu0 0.0
        %5556 = vmatpush2.msra.mxu0 0.0
        %5557 = vmatprep.mubr.f32.mxu0 0.0
        %v5558 = vand.u32 %v1524, 4294901760
        %5559 = vmatmul.mubr.f32.gmra.mxu0 %v5558
        %v5560 = vpop.f32.mrf.mxu0
        %v5561 = vadd.f32 %v5489, %v5560
        %v5562 = vpop.f32.mrf.mxu0
        %5563 = vdwg.mxu0
        %v5564 = vmax.f32 %v5115, %v5561
        %s5565 = scalar_lea.vmem %s152, 8 [#allocation5]
        %5566 = vst.msk [vmem:[%s5565] sm:$0xf] %vm1973, %v5564
        %s5567 = scalar_lea.vmem %s134, 48 [#allocation2]
        %v5568 = vld [vmem:[%s5567] sm:$0xff]
        %s5569 = scalar_lea.vmem %s134, 56 [#allocation2]
        %v5570 = vld [vmem:[%s5569] sm:$0xff]
        %v5571 = vmax.f32 %v5568, %v5570
        %v5573 = vsel %vm177, %v5571, 0
        %5575 = vmatprep.subr.mxu0 0.0
        %5576 = vmatpush1.msra.mxu0 0.0
        %5577 = vmatprep.subr.mxu0 0.0
        %5578 = vmatpush1.msra.mxu0 0.0
        %5579 = vmatprep.subr.mxu0 0.0
        %5580 = vmatpush1.msra.mxu0 0.0
        %5581 = vmatprep.subr.mxu0 0.0
        %5582 = vmatpush1.msra.mxu0 0.0
        %5583 = vmatprep.subr.mxu0 0.0
        %5584 = vmatpush1.msra.mxu0 0.0
        %5585 = vmatprep.subr.mxu0 0.0
        %5586 = vmatpush1.msra.mxu0 0.0
        %5587 = vmatprep.subr.mxu0 0.0
        %5588 = vmatpush1.msra.mxu0 0.0
        %5589 = vmatprep.subr.mxu0 0.0
        %5590 = vmatpush1.msra.mxu0 0.0
        %5591 = vmatprep.subr.mxu0 0.0
        %5592 = vmatpush1.msra.mxu0 0.0
        %5593 = vmatprep.subr.mxu0 0.0
        %5594 = vmatpush1.msra.mxu0 0.0
        %5595 = vmatprep.subr.mxu0 0.0
        %5596 = vmatpush1.msra.mxu0 0.0
        %5597 = vmatprep.subr.mxu0 0.0
        %5598 = vmatpush1.msra.mxu0 0.0
        %5599 = vmatprep.subr.mxu0 0.0
        %5600 = vmatpush1.msra.mxu0 0.0
        %5601 = vmatprep.subr.mxu0 0.0
        %5602 = vmatpush1.msra.mxu0 0.0
        %5603 = vmatprep.subr.mxu0 0.0
        %5604 = vmatpush1.msra.mxu0 0.0
        %5605 = vmatprep.subr.mxu0 0.0
        %v5606 = vand.u32 %v160, 4294901760
        %5607 = vmatpush1.msra.mxu0 %v5606
        %5608 = vmatprep.subr.mxu0 0.0
        %5609 = vmatpush2.msra.mxu0 0.0
        %5610 = vmatprep.subr.mxu0 0.0
        %5611 = vmatpush2.msra.mxu0 0.0
        %5612 = vmatprep.subr.mxu0 0.0
        %5613 = vmatpush2.msra.mxu0 0.0
        %5614 = vmatprep.subr.mxu0 0.0
        %5615 = vmatpush2.msra.mxu0 0.0
        %5616 = vmatprep.subr.mxu0 0.0
        %5617 = vmatpush2.msra.mxu0 0.0
        %5618 = vmatprep.subr.mxu0 0.0
        %5619 = vmatpush2.msra.mxu0 0.0
        %5620 = vmatprep.subr.mxu0 0.0
        %5621 = vmatpush2.msra.mxu0 0.0
        %5622 = vmatprep.subr.mxu0 0.0
        %5623 = vmatpush2.msra.mxu0 0.0
        %5624 = vmatprep.subr.mxu0 0.0
        %5625 = vmatpush2.msra.mxu0 0.0
        %5626 = vmatprep.subr.mxu0 0.0
        %5627 = vmatpush2.msra.mxu0 0.0
        %5628 = vmatprep.subr.mxu0 0.0
        %5629 = vmatpush2.msra.mxu0 0.0
        %5630 = vmatprep.subr.mxu0 0.0
        %5631 = vmatpush2.msra.mxu0 0.0
        %5632 = vmatprep.subr.mxu0 0.0
        %5633 = vmatpush2.msra.mxu0 0.0
        %5634 = vmatprep.subr.mxu0 0.0
        %5635 = vmatpush2.msra.mxu0 0.0
        %5636 = vmatprep.subr.mxu0 0.0
        %5637 = vmatpush2.msra.mxu0 0.0
        %5638 = vmatprep.subr.mxu0 0.0
        %5639 = vmatpush2.msra.mxu0 0.0
        %5640 = vmatprep.mubr.f32.mxu0 0.0
        %v5641 = vand.u32 %v5573, 4294901760
        %v5642 = vsub.f32 %v5573, %v5641
        %v5643 = vand.u32 %v5642, 4294901760
        %v5644 = vsub.f32 %v5642, %v5643
        %v5645 = vand.u32 %v5644, 4294901760
        %5646 = vmatmul.mubr.f32.gmra.mxu0 %v5645
        %v5647 = vpop.f32.mrf.mxu0
        %v5648 = vadd.f32 0.0, %v5647
        %v5649 = vpop.f32.mrf.mxu0
        %5650 = vdwg.mxu0
        %5651 = vmatprep.subr.mxu0 0.0
        %5652 = vmatpush1.msra.mxu0 0.0
        %5653 = vmatprep.subr.mxu0 0.0
        %5654 = vmatpush1.msra.mxu0 0.0
        %5655 = vmatprep.subr.mxu0 0.0
        %5656 = vmatpush1.msra.mxu0 0.0
        %5657 = vmatprep.subr.mxu0 0.0
        %5658 = vmatpush1.msra.mxu0 0.0
        %5659 = vmatprep.subr.mxu0 0.0
        %5660 = vmatpush1.msra.mxu0 0.0
        %5661 = vmatprep.subr.mxu0 0.0
        %5662 = vmatpush1.msra.mxu0 0.0
        %5663 = vmatprep.subr.mxu0 0.0
        %5664 = vmatpush1.msra.mxu0 0.0
        %5665 = vmatprep.subr.mxu0 0.0
        %5666 = vmatpush1.msra.mxu0 0.0
        %5667 = vmatprep.subr.mxu0 0.0
        %5668 = vmatpush1.msra.mxu0 0.0
        %5669 = vmatprep.subr.mxu0 0.0
        %5670 = vmatpush1.msra.mxu0 0.0
        %5671 = vmatprep.subr.mxu0 0.0
        %5672 = vmatpush1.msra.mxu0 0.0
        %5673 = vmatprep.subr.mxu0 0.0
        %5674 = vmatpush1.msra.mxu0 0.0
        %5675 = vmatprep.subr.mxu0 0.0
        %5676 = vmatpush1.msra.mxu0 0.0
        %5677 = vmatprep.subr.mxu0 0.0
        %5678 = vmatpush1.msra.mxu0 0.0
        %5679 = vmatprep.subr.mxu0 0.0
        %5680 = vmatpush1.msra.mxu0 0.0
        %5681 = vmatprep.subr.mxu0 0.0
        %v5682 = vand.u32 %v160, 4294901760
        %v5683 = vsub.f32 %v160, %v5682
        %v5684 = vand.u32 %v5683, 4294901760
        %v5685 = vsub.f32 %v5683, %v5684
        %v5686 = vand.u32 %v5685, 4294901760
        %5687 = vmatpush1.msra.mxu0 %v5686
        %5688 = vmatprep.subr.mxu0 0.0
        %5689 = vmatpush2.msra.mxu0 0.0
        %5690 = vmatprep.subr.mxu0 0.0
        %5691 = vmatpush2.msra.mxu0 0.0
        %5692 = vmatprep.subr.mxu0 0.0
        %5693 = vmatpush2.msra.mxu0 0.0
        %5694 = vmatprep.subr.mxu0 0.0
        %5695 = vmatpush2.msra.mxu0 0.0
        %5696 = vmatprep.subr.mxu0 0.0
        %5697 = vmatpush2.msra.mxu0 0.0
        %5698 = vmatprep.subr.mxu0 0.0
        %5699 = vmatpush2.msra.mxu0 0.0
        %5700 = vmatprep.subr.mxu0 0.0
        %5701 = vmatpush2.msra.mxu0 0.0
        %5702 = vmatprep.subr.mxu0 0.0
        %5703 = vmatpush2.msra.mxu0 0.0
        %5704 = vmatprep.subr.mxu0 0.0
        %5705 = vmatpush2.msra.mxu0 0.0
        %5706 = vmatprep.subr.mxu0 0.0
        %5707 = vmatpush2.msra.mxu0 0.0
        %5708 = vmatprep.subr.mxu0 0.0
        %5709 = vmatpush2.msra.mxu0 0.0
        %5710 = vmatprep.subr.mxu0 0.0
        %5711 = vmatpush2.msra.mxu0 0.0
        %5712 = vmatprep.subr.mxu0 0.0
        %5713 = vmatpush2.msra.mxu0 0.0
        %5714 = vmatprep.subr.mxu0 0.0
        %5715 = vmatpush2.msra.mxu0 0.0
        %5716 = vmatprep.subr.mxu0 0.0
        %5717 = vmatpush2.msra.mxu0 0.0
        %5718 = vmatprep.subr.mxu0 0.0
        %5719 = vmatpush2.msra.mxu0 0.0
        %5720 = vmatprep.mubr.f32.mxu0 0.0
        %v5721 = vand.u32 %v5573, 4294901760
        %5722 = vmatmul.mubr.f32.gmra.mxu0 %v5721
        %v5723 = vpop.f32.mrf.mxu0
        %v5724 = vadd.f32 %v5648, %v5723
        %v5725 = vpop.f32.mrf.mxu0
        %5726 = vdwg.mxu0
        %5727 = vmatprep.subr.mxu0 0.0
        %5728 = vmatpush1.msra.mxu0 0.0
        %5729 = vmatprep.subr.mxu0 0.0
        %5730 = vmatpush1.msra.mxu0 0.0
        %5731 = vmatprep.subr.mxu0 0.0
        %5732 = vmatpush1.msra.mxu0 0.0
        %5733 = vmatprep.subr.mxu0 0.0
        %5734 = vmatpush1.msra.mxu0 0.0
        %5735 = vmatprep.subr.mxu0 0.0
        %5736 = vmatpush1.msra.mxu0 0.0
        %5737 = vmatprep.subr.mxu0 0.0
        %5738 = vmatpush1.msra.mxu0 0.0
        %5739 = vmatprep.subr.mxu0 0.0
        %5740 = vmatpush1.msra.mxu0 0.0
        %5741 = vmatprep.subr.mxu0 0.0
        %5742 = vmatpush1.msra.mxu0 0.0
        %5743 = vmatprep.subr.mxu0 0.0
        %5744 = vmatpush1.msra.mxu0 0.0
        %5745 = vmatprep.subr.mxu0 0.0
        %5746 = vmatpush1.msra.mxu0 0.0
        %5747 = vmatprep.subr.mxu0 0.0
        %5748 = vmatpush1.msra.mxu0 0.0
        %5749 = vmatprep.subr.mxu0 0.0
        %5750 = vmatpush1.msra.mxu0 0.0
        %5751 = vmatprep.subr.mxu0 0.0
        %5752 = vmatpush1.msra.mxu0 0.0
        %5753 = vmatprep.subr.mxu0 0.0
        %5754 = vmatpush1.msra.mxu0 0.0
        %5755 = vmatprep.subr.mxu0 0.0
        %5756 = vmatpush1.msra.mxu0 0.0
        %5757 = vmatprep.subr.mxu0 0.0
        %v5758 = vand.u32 %v160, 4294901760
        %v5759 = vsub.f32 %v160, %v5758
        %5760 = vmatpush1.msra.mxu0 %v5759
        %5761 = vmatprep.subr.mxu0 0.0
        %5762 = vmatpush2.msra.mxu0 0.0
        %5763 = vmatprep.subr.mxu0 0.0
        %5764 = vmatpush2.msra.mxu0 0.0
        %5765 = vmatprep.subr.mxu0 0.0
        %5766 = vmatpush2.msra.mxu0 0.0
        %5767 = vmatprep.subr.mxu0 0.0
        %5768 = vmatpush2.msra.mxu0 0.0
        %5769 = vmatprep.subr.mxu0 0.0
        %5770 = vmatpush2.msra.mxu0 0.0
        %5771 = vmatprep.subr.mxu0 0.0
        %5772 = vmatpush2.msra.mxu0 0.0
        %5773 = vmatprep.subr.mxu0 0.0
        %5774 = vmatpush2.msra.mxu0 0.0
        %5775 = vmatprep.subr.mxu0 0.0
        %5776 = vmatpush2.msra.mxu0 0.0
        %5777 = vmatprep.subr.mxu0 0.0
        %5778 = vmatpush2.msra.mxu0 0.0
        %5779 = vmatprep.subr.mxu0 0.0
        %5780 = vmatpush2.msra.mxu0 0.0
        %5781 = vmatprep.subr.mxu0 0.0
        %5782 = vmatpush2.msra.mxu0 0.0
        %5783 = vmatprep.subr.mxu0 0.0
        %5784 = vmatpush2.msra.mxu0 0.0
        %5785 = vmatprep.subr.mxu0 0.0
        %5786 = vmatpush2.msra.mxu0 0.0
        %5787 = vmatprep.subr.mxu0 0.0
        %5788 = vmatpush2.msra.mxu0 0.0
        %5789 = vmatprep.subr.mxu0 0.0
        %5790 = vmatpush2.msra.mxu0 0.0
        %5791 = vmatprep.subr.mxu0 0.0
        %5792 = vmatpush2.msra.mxu0 0.0
        %5793 = vmatprep.mubr.f32.mxu0 0.0
        %v5794 = vand.u32 %v5573, 4294901760
        %v5795 = vsub.f32 %v5573, %v5794
        %5796 = vmatmul.mubr.f32.gmra.mxu0 %v5795
        %v5797 = vpop.f32.mrf.mxu0
        %v5798 = vadd.f32 %v5724, %v5797
        %v5799 = vpop.f32.mrf.mxu0
        %5800 = vdwg.mxu0
        %5801 = vmatprep.subr.mxu0 0.0
        %5802 = vmatpush1.msra.mxu0 0.0
        %5803 = vmatprep.subr.mxu0 0.0
        %5804 = vmatpush1.msra.mxu0 0.0
        %5805 = vmatprep.subr.mxu0 0.0
        %5806 = vmatpush1.msra.mxu0 0.0
        %5807 = vmatprep.subr.mxu0 0.0
        %5808 = vmatpush1.msra.mxu0 0.0
        %5809 = vmatprep.subr.mxu0 0.0
        %5810 = vmatpush1.msra.mxu0 0.0
        %5811 = vmatprep.subr.mxu0 0.0
        %5812 = vmatpush1.msra.mxu0 0.0
        %5813 = vmatprep.subr.mxu0 0.0
        %5814 = vmatpush1.msra.mxu0 0.0
        %5815 = vmatprep.subr.mxu0 0.0
        %5816 = vmatpush1.msra.mxu0 0.0
        %5817 = vmatprep.subr.mxu0 0.0
        %5818 = vmatpush1.msra.mxu0 0.0
        %5819 = vmatprep.subr.mxu0 0.0
        %5820 = vmatpush1.msra.mxu0 0.0
        %5821 = vmatprep.subr.mxu0 0.0
        %5822 = vmatpush1.msra.mxu0 0.0
        %5823 = vmatprep.subr.mxu0 0.0
        %5824 = vmatpush1.msra.mxu0 0.0
        %5825 = vmatprep.subr.mxu0 0.0
        %5826 = vmatpush1.msra.mxu0 0.0
        %5827 = vmatprep.subr.mxu0 0.0
        %5828 = vmatpush1.msra.mxu0 0.0
        %5829 = vmatprep.subr.mxu0 0.0
        %5830 = vmatpush1.msra.mxu0 0.0
        %5831 = vmatprep.subr.mxu0 0.0
        %v5832 = vand.u32 %v160, 4294901760
        %5833 = vmatpush1.msra.mxu0 %v5832
        %5834 = vmatprep.subr.mxu0 0.0
        %5835 = vmatpush2.msra.mxu0 0.0
        %5836 = vmatprep.subr.mxu0 0.0
        %5837 = vmatpush2.msra.mxu0 0.0
        %5838 = vmatprep.subr.mxu0 0.0
        %5839 = vmatpush2.msra.mxu0 0.0
        %5840 = vmatprep.subr.mxu0 0.0
        %5841 = vmatpush2.msra.mxu0 0.0
        %5842 = vmatprep.subr.mxu0 0.0
        %5843 = vmatpush2.msra.mxu0 0.0
        %5844 = vmatprep.subr.mxu0 0.0
        %5845 = vmatpush2.msra.mxu0 0.0
        %5846 = vmatprep.subr.mxu0 0.0
        %5847 = vmatpush2.msra.mxu0 0.0
        %5848 = vmatprep.subr.mxu0 0.0
        %5849 = vmatpush2.msra.mxu0 0.0
        %5850 = vmatprep.subr.mxu0 0.0
        %5851 = vmatpush2.msra.mxu0 0.0
        %5852 = vmatprep.subr.mxu0 0.0
        %5853 = vmatpush2.msra.mxu0 0.0
        %5854 = vmatprep.subr.mxu0 0.0
        %5855 = vmatpush2.msra.mxu0 0.0
        %5856 = vmatprep.subr.mxu0 0.0
        %5857 = vmatpush2.msra.mxu0 0.0
        %5858 = vmatprep.subr.mxu0 0.0
        %5859 = vmatpush2.msra.mxu0 0.0
        %5860 = vmatprep.subr.mxu0 0.0
        %5861 = vmatpush2.msra.mxu0 0.0
        %5862 = vmatprep.subr.mxu0 0.0
        %5863 = vmatpush2.msra.mxu0 0.0
        %5864 = vmatprep.subr.mxu0 0.0
        %5865 = vmatpush2.msra.mxu0 0.0
        %5866 = vmatprep.mubr.f32.mxu0 0.0
        %v5867 = vand.u32 %v5573, 4294901760
        %v5868 = vsub.f32 %v5573, %v5867
        %v5869 = vand.u32 %v5868, 4294901760
        %5870 = vmatmul.mubr.f32.gmra.mxu0 %v5869
        %v5871 = vpop.f32.mrf.mxu0
        %v5872 = vadd.f32 %v5798, %v5871
        %v5873 = vpop.f32.mrf.mxu0
        %5874 = vdwg.mxu0
        %5875 = vmatprep.subr.mxu0 0.0
        %5876 = vmatpush1.msra.mxu0 0.0
        %5877 = vmatprep.subr.mxu0 0.0
        %5878 = vmatpush1.msra.mxu0 0.0
        %5879 = vmatprep.subr.mxu0 0.0
        %5880 = vmatpush1.msra.mxu0 0.0
        %5881 = vmatprep.subr.mxu0 0.0
        %5882 = vmatpush1.msra.mxu0 0.0
        %5883 = vmatprep.subr.mxu0 0.0
        %5884 = vmatpush1.msra.mxu0 0.0
        %5885 = vmatprep.subr.mxu0 0.0
        %5886 = vmatpush1.msra.mxu0 0.0
        %5887 = vmatprep.subr.mxu0 0.0
        %5888 = vmatpush1.msra.mxu0 0.0
        %5889 = vmatprep.subr.mxu0 0.0
        %5890 = vmatpush1.msra.mxu0 0.0
        %5891 = vmatprep.subr.mxu0 0.0
        %5892 = vmatpush1.msra.mxu0 0.0
        %5893 = vmatprep.subr.mxu0 0.0
        %5894 = vmatpush1.msra.mxu0 0.0
        %5895 = vmatprep.subr.mxu0 0.0
        %5896 = vmatpush1.msra.mxu0 0.0
        %5897 = vmatprep.subr.mxu0 0.0
        %5898 = vmatpush1.msra.mxu0 0.0
        %5899 = vmatprep.subr.mxu0 0.0
        %5900 = vmatpush1.msra.mxu0 0.0
        %5901 = vmatprep.subr.mxu0 0.0
        %5902 = vmatpush1.msra.mxu0 0.0
        %5903 = vmatprep.subr.mxu0 0.0
        %5904 = vmatpush1.msra.mxu0 0.0
        %5905 = vmatprep.subr.mxu0 0.0
        %v5906 = vand.u32 %v160, 4294901760
        %v5907 = vsub.f32 %v160, %v5906
        %v5908 = vand.u32 %v5907, 4294901760
        %5909 = vmatpush1.msra.mxu0 %v5908
        %5910 = vmatprep.subr.mxu0 0.0
        %5911 = vmatpush2.msra.mxu0 0.0
        %5912 = vmatprep.subr.mxu0 0.0
        %5913 = vmatpush2.msra.mxu0 0.0
        %5914 = vmatprep.subr.mxu0 0.0
        %5915 = vmatpush2.msra.mxu0 0.0
        %5916 = vmatprep.subr.mxu0 0.0
        %5917 = vmatpush2.msra.mxu0 0.0
        %5918 = vmatprep.subr.mxu0 0.0
        %5919 = vmatpush2.msra.mxu0 0.0
        %5920 = vmatprep.subr.mxu0 0.0
        %5921 = vmatpush2.msra.mxu0 0.0
        %5922 = vmatprep.subr.mxu0 0.0
        %5923 = vmatpush2.msra.mxu0 0.0
        %5924 = vmatprep.subr.mxu0 0.0
        %5925 = vmatpush2.msra.mxu0 0.0
        %5926 = vmatprep.subr.mxu0 0.0
        %5927 = vmatpush2.msra.mxu0 0.0
        %5928 = vmatprep.subr.mxu0 0.0
        %5929 = vmatpush2.msra.mxu0 0.0
        %5930 = vmatprep.subr.mxu0 0.0
        %5931 = vmatpush2.msra.mxu0 0.0
        %5932 = vmatprep.subr.mxu0 0.0
        %5933 = vmatpush2.msra.mxu0 0.0
        %5934 = vmatprep.subr.mxu0 0.0
        %5935 = vmatpush2.msra.mxu0 0.0
        %5936 = vmatprep.subr.mxu0 0.0
        %5937 = vmatpush2.msra.mxu0 0.0
        %5938 = vmatprep.subr.mxu0 0.0
        %5939 = vmatpush2.msra.mxu0 0.0
        %5940 = vmatprep.subr.mxu0 0.0
        %5941 = vmatpush2.msra.mxu0 0.0
        %5942 = vmatprep.mubr.f32.mxu0 0.0
        %v5943 = vand.u32 %v5573, 4294901760
        %5944 = vmatmul.mubr.f32.gmra.mxu0 %v5943
        %v5945 = vpop.f32.mrf.mxu0
        %v5946 = vadd.f32 %v5872, %v5945
        %v5947 = vpop.f32.mrf.mxu0
        %5948 = vdwg.mxu0
        %5949 = vmatprep.subr.mxu0 0.0
        %5950 = vmatpush1.msra.mxu0 0.0
        %5951 = vmatprep.subr.mxu0 0.0
        %5952 = vmatpush1.msra.mxu0 0.0
        %5953 = vmatprep.subr.mxu0 0.0
        %5954 = vmatpush1.msra.mxu0 0.0
        %5955 = vmatprep.subr.mxu0 0.0
        %5956 = vmatpush1.msra.mxu0 0.0
        %5957 = vmatprep.subr.mxu0 0.0
        %5958 = vmatpush1.msra.mxu0 0.0
        %5959 = vmatprep.subr.mxu0 0.0
        %5960 = vmatpush1.msra.mxu0 0.0
        %5961 = vmatprep.subr.mxu0 0.0
        %5962 = vmatpush1.msra.mxu0 0.0
        %5963 = vmatprep.subr.mxu0 0.0
        %5964 = vmatpush1.msra.mxu0 0.0
        %5965 = vmatprep.subr.mxu0 0.0
        %5966 = vmatpush1.msra.mxu0 0.0
        %5967 = vmatprep.subr.mxu0 0.0
        %5968 = vmatpush1.msra.mxu0 0.0
        %5969 = vmatprep.subr.mxu0 0.0
        %5970 = vmatpush1.msra.mxu0 0.0
        %5971 = vmatprep.subr.mxu0 0.0
        %5972 = vmatpush1.msra.mxu0 0.0
        %5973 = vmatprep.subr.mxu0 0.0
        %5974 = vmatpush1.msra.mxu0 0.0
        %5975 = vmatprep.subr.mxu0 0.0
        %5976 = vmatpush1.msra.mxu0 0.0
        %5977 = vmatprep.subr.mxu0 0.0
        %5978 = vmatpush1.msra.mxu0 0.0
        %5979 = vmatprep.subr.mxu0 0.0
        %v5980 = vand.u32 %v160, 4294901760
        %5981 = vmatpush1.msra.mxu0 %v5980
        %5982 = vmatprep.subr.mxu0 0.0
        %5983 = vmatpush2.msra.mxu0 0.0
        %5984 = vmatprep.subr.mxu0 0.0
        %5985 = vmatpush2.msra.mxu0 0.0
        %5986 = vmatprep.subr.mxu0 0.0
        %5987 = vmatpush2.msra.mxu0 0.0
        %5988 = vmatprep.subr.mxu0 0.0
        %5989 = vmatpush2.msra.mxu0 0.0
        %5990 = vmatprep.subr.mxu0 0.0
        %5991 = vmatpush2.msra.mxu0 0.0
        %5992 = vmatprep.subr.mxu0 0.0
        %5993 = vmatpush2.msra.mxu0 0.0
        %5994 = vmatprep.subr.mxu0 0.0
        %5995 = vmatpush2.msra.mxu0 0.0
        %5996 = vmatprep.subr.mxu0 0.0
        %5997 = vmatpush2.msra.mxu0 0.0
        %5998 = vmatprep.subr.mxu0 0.0
        %5999 = vmatpush2.msra.mxu0 0.0
        %6000 = vmatprep.subr.mxu0 0.0
        %6001 = vmatpush2.msra.mxu0 0.0
        %6002 = vmatprep.subr.mxu0 0.0
        %6003 = vmatpush2.msra.mxu0 0.0
        %6004 = vmatprep.subr.mxu0 0.0
        %6005 = vmatpush2.msra.mxu0 0.0
        %6006 = vmatprep.subr.mxu0 0.0
        %6007 = vmatpush2.msra.mxu0 0.0
        %6008 = vmatprep.subr.mxu0 0.0
        %6009 = vmatpush2.msra.mxu0 0.0
        %6010 = vmatprep.subr.mxu0 0.0
        %6011 = vmatpush2.msra.mxu0 0.0
        %6012 = vmatprep.subr.mxu0 0.0
        %6013 = vmatpush2.msra.mxu0 0.0
        %6014 = vmatprep.mubr.f32.mxu0 0.0
        %v6015 = vand.u32 %v5573, 4294901760
        %6016 = vmatmul.mubr.f32.gmra.mxu0 %v6015
        %v6017 = vpop.f32.mrf.mxu0
        %v6018 = vadd.f32 %v5946, %v6017
        %v6019 = vpop.f32.mrf.mxu0
        %6020 = vdwg.mxu0
        %6021 = vmatprep.subr.mxu0 0.0
        %6022 = vmatpush1.msra.mxu0 0.0
        %6023 = vmatprep.subr.mxu0 0.0
        %6024 = vmatpush1.msra.mxu0 0.0
        %6025 = vmatprep.subr.mxu0 0.0
        %6026 = vmatpush1.msra.mxu0 0.0
        %6027 = vmatprep.subr.mxu0 0.0
        %6028 = vmatpush1.msra.mxu0 0.0
        %6029 = vmatprep.subr.mxu0 0.0
        %6030 = vmatpush1.msra.mxu0 0.0
        %6031 = vmatprep.subr.mxu0 0.0
        %6032 = vmatpush1.msra.mxu0 0.0
        %6033 = vmatprep.subr.mxu0 0.0
        %6034 = vmatpush1.msra.mxu0 0.0
        %6035 = vmatprep.subr.mxu0 0.0
        %6036 = vmatpush1.msra.mxu0 0.0
        %6037 = vmatprep.subr.mxu0 0.0
        %6038 = vmatpush1.msra.mxu0 0.0
        %6039 = vmatprep.subr.mxu0 0.0
        %6040 = vmatpush1.msra.mxu0 0.0
        %6041 = vmatprep.subr.mxu0 0.0
        %6042 = vmatpush1.msra.mxu0 0.0
        %6043 = vmatprep.subr.mxu0 0.0
        %6044 = vmatpush1.msra.mxu0 0.0
        %6045 = vmatprep.subr.mxu0 0.0
        %6046 = vmatpush1.msra.mxu0 0.0
        %6047 = vmatprep.subr.mxu0 0.0
        %6048 = vmatpush1.msra.mxu0 0.0
        %6049 = vmatprep.subr.mxu0 0.0
        %6050 = vmatpush1.msra.mxu0 0.0
        %6051 = vmatprep.subr.mxu0 0.0
        %v6052 = vand.u32 %v164, 4294901760
        %6053 = vmatpush1.msra.mxu0 %v6052
        %6054 = vmatprep.subr.mxu0 0.0
        %6055 = vmatpush2.msra.mxu0 0.0
        %6056 = vmatprep.subr.mxu0 0.0
        %6057 = vmatpush2.msra.mxu0 0.0
        %6058 = vmatprep.subr.mxu0 0.0
        %6059 = vmatpush2.msra.mxu0 0.0
        %6060 = vmatprep.subr.mxu0 0.0
        %6061 = vmatpush2.msra.mxu0 0.0
        %6062 = vmatprep.subr.mxu0 0.0
        %6063 = vmatpush2.msra.mxu0 0.0
        %6064 = vmatprep.subr.mxu0 0.0
        %6065 = vmatpush2.msra.mxu0 0.0
        %6066 = vmatprep.subr.mxu0 0.0
        %6067 = vmatpush2.msra.mxu0 0.0
        %6068 = vmatprep.subr.mxu0 0.0
        %6069 = vmatpush2.msra.mxu0 0.0
        %6070 = vmatprep.subr.mxu0 0.0
        %6071 = vmatpush2.msra.mxu0 0.0
        %6072 = vmatprep.subr.mxu0 0.0
        %6073 = vmatpush2.msra.mxu0 0.0
        %6074 = vmatprep.subr.mxu0 0.0
        %6075 = vmatpush2.msra.mxu0 0.0
        %6076 = vmatprep.subr.mxu0 0.0
        %6077 = vmatpush2.msra.mxu0 0.0
        %6078 = vmatprep.subr.mxu0 0.0
        %6079 = vmatpush2.msra.mxu0 0.0
        %6080 = vmatprep.subr.mxu0 0.0
        %6081 = vmatpush2.msra.mxu0 0.0
        %6082 = vmatprep.subr.mxu0 0.0
        %6083 = vmatpush2.msra.mxu0 0.0
        %6084 = vmatprep.subr.mxu0 0.0
        %6085 = vmatpush2.msra.mxu0 0.0
        %6086 = vmatprep.mubr.f32.mxu0 0.0
        %v6087 = vand.u32 %v5573, 4294901760
        %v6088 = vsub.f32 %v5573, %v6087
        %v6089 = vand.u32 %v6088, 4294901760
        %v6090 = vsub.f32 %v6088, %v6089
        %v6091 = vand.u32 %v6090, 4294901760
        %6092 = vmatmul.mubr.f32.gmra.mxu0 %v6091
        %v6093 = vpop.f32.mrf.mxu0
        %v6094 = vadd.f32 0.0, %v6093
        %v6095 = vpop.f32.mrf.mxu0
        %6096 = vdwg.mxu0
        %6097 = vmatprep.subr.mxu0 0.0
        %6098 = vmatpush1.msra.mxu0 0.0
        %6099 = vmatprep.subr.mxu0 0.0
        %6100 = vmatpush1.msra.mxu0 0.0
        %6101 = vmatprep.subr.mxu0 0.0
        %6102 = vmatpush1.msra.mxu0 0.0
        %6103 = vmatprep.subr.mxu0 0.0
        %6104 = vmatpush1.msra.mxu0 0.0
        %6105 = vmatprep.subr.mxu0 0.0
        %6106 = vmatpush1.msra.mxu0 0.0
        %6107 = vmatprep.subr.mxu0 0.0
        %6108 = vmatpush1.msra.mxu0 0.0
        %6109 = vmatprep.subr.mxu0 0.0
        %6110 = vmatpush1.msra.mxu0 0.0
        %6111 = vmatprep.subr.mxu0 0.0
        %6112 = vmatpush1.msra.mxu0 0.0
        %6113 = vmatprep.subr.mxu0 0.0
        %6114 = vmatpush1.msra.mxu0 0.0
        %6115 = vmatprep.subr.mxu0 0.0
        %6116 = vmatpush1.msra.mxu0 0.0
        %6117 = vmatprep.subr.mxu0 0.0
        %6118 = vmatpush1.msra.mxu0 0.0
        %6119 = vmatprep.subr.mxu0 0.0
        %6120 = vmatpush1.msra.mxu0 0.0
        %6121 = vmatprep.subr.mxu0 0.0
        %6122 = vmatpush1.msra.mxu0 0.0
        %6123 = vmatprep.subr.mxu0 0.0
        %6124 = vmatpush1.msra.mxu0 0.0
        %6125 = vmatprep.subr.mxu0 0.0
        %6126 = vmatpush1.msra.mxu0 0.0
        %6127 = vmatprep.subr.mxu0 0.0
        %v6128 = vand.u32 %v164, 4294901760
        %v6129 = vsub.f32 %v164, %v6128
        %v6130 = vand.u32 %v6129, 4294901760
        %v6131 = vsub.f32 %v6129, %v6130
        %v6132 = vand.u32 %v6131, 4294901760
        %6133 = vmatpush1.msra.mxu0 %v6132
        %6134 = vmatprep.subr.mxu0 0.0
        %6135 = vmatpush2.msra.mxu0 0.0
        %6136 = vmatprep.subr.mxu0 0.0
        %6137 = vmatpush2.msra.mxu0 0.0
        %6138 = vmatprep.subr.mxu0 0.0
        %6139 = vmatpush2.msra.mxu0 0.0
        %6140 = vmatprep.subr.mxu0 0.0
        %6141 = vmatpush2.msra.mxu0 0.0
        %6142 = vmatprep.subr.mxu0 0.0
        %6143 = vmatpush2.msra.mxu0 0.0
        %6144 = vmatprep.subr.mxu0 0.0
        %6145 = vmatpush2.msra.mxu0 0.0
        %6146 = vmatprep.subr.mxu0 0.0
        %6147 = vmatpush2.msra.mxu0 0.0
        %6148 = vmatprep.subr.mxu0 0.0
        %6149 = vmatpush2.msra.mxu0 0.0
        %6150 = vmatprep.subr.mxu0 0.0
        %6151 = vmatpush2.msra.mxu0 0.0
        %6152 = vmatprep.subr.mxu0 0.0
        %6153 = vmatpush2.msra.mxu0 0.0
        %6154 = vmatprep.subr.mxu0 0.0
        %6155 = vmatpush2.msra.mxu0 0.0
        %6156 = vmatprep.subr.mxu0 0.0
        %6157 = vmatpush2.msra.mxu0 0.0
        %6158 = vmatprep.subr.mxu0 0.0
        %6159 = vmatpush2.msra.mxu0 0.0
        %6160 = vmatprep.subr.mxu0 0.0
        %6161 = vmatpush2.msra.mxu0 0.0
        %6162 = vmatprep.subr.mxu0 0.0
        %6163 = vmatpush2.msra.mxu0 0.0
        %6164 = vmatprep.subr.mxu0 0.0
        %6165 = vmatpush2.msra.mxu0 0.0
        %6166 = vmatprep.mubr.f32.mxu0 0.0
        %v6167 = vand.u32 %v5573, 4294901760
        %6168 = vmatmul.mubr.f32.gmra.mxu0 %v6167
        %v6169 = vpop.f32.mrf.mxu0
        %v6170 = vadd.f32 %v6094, %v6169
        %v6171 = vpop.f32.mrf.mxu0
        %6172 = vdwg.mxu0
        %6173 = vmatprep.subr.mxu0 0.0
        %6174 = vmatpush1.msra.mxu0 0.0
        %6175 = vmatprep.subr.mxu0 0.0
        %6176 = vmatpush1.msra.mxu0 0.0
        %6177 = vmatprep.subr.mxu0 0.0
        %6178 = vmatpush1.msra.mxu0 0.0
        %6179 = vmatprep.subr.mxu0 0.0
        %6180 = vmatpush1.msra.mxu0 0.0
        %6181 = vmatprep.subr.mxu0 0.0
        %6182 = vmatpush1.msra.mxu0 0.0
        %6183 = vmatprep.subr.mxu0 0.0
        %6184 = vmatpush1.msra.mxu0 0.0
        %6185 = vmatprep.subr.mxu0 0.0
        %6186 = vmatpush1.msra.mxu0 0.0
        %6187 = vmatprep.subr.mxu0 0.0
        %6188 = vmatpush1.msra.mxu0 0.0
        %6189 = vmatprep.subr.mxu0 0.0
        %6190 = vmatpush1.msra.mxu0 0.0
        %6191 = vmatprep.subr.mxu0 0.0
        %6192 = vmatpush1.msra.mxu0 0.0
        %6193 = vmatprep.subr.mxu0 0.0
        %6194 = vmatpush1.msra.mxu0 0.0
        %6195 = vmatprep.subr.mxu0 0.0
        %6196 = vmatpush1.msra.mxu0 0.0
        %6197 = vmatprep.subr.mxu0 0.0
        %6198 = vmatpush1.msra.mxu0 0.0
        %6199 = vmatprep.subr.mxu0 0.0
        %6200 = vmatpush1.msra.mxu0 0.0
        %6201 = vmatprep.subr.mxu0 0.0
        %6202 = vmatpush1.msra.mxu0 0.0
        %6203 = vmatprep.subr.mxu0 0.0
        %v6204 = vand.u32 %v164, 4294901760
        %v6205 = vsub.f32 %v164, %v6204
        %6206 = vmatpush1.msra.mxu0 %v6205
        %6207 = vmatprep.subr.mxu0 0.0
        %6208 = vmatpush2.msra.mxu0 0.0
        %6209 = vmatprep.subr.mxu0 0.0
        %6210 = vmatpush2.msra.mxu0 0.0
        %6211 = vmatprep.subr.mxu0 0.0
        %6212 = vmatpush2.msra.mxu0 0.0
        %6213 = vmatprep.subr.mxu0 0.0
        %6214 = vmatpush2.msra.mxu0 0.0
        %6215 = vmatprep.subr.mxu0 0.0
        %6216 = vmatpush2.msra.mxu0 0.0
        %6217 = vmatprep.subr.mxu0 0.0
        %6218 = vmatpush2.msra.mxu0 0.0
        %6219 = vmatprep.subr.mxu0 0.0
        %6220 = vmatpush2.msra.mxu0 0.0
        %6221 = vmatprep.subr.mxu0 0.0
        %6222 = vmatpush2.msra.mxu0 0.0
        %6223 = vmatprep.subr.mxu0 0.0
        %6224 = vmatpush2.msra.mxu0 0.0
        %6225 = vmatprep.subr.mxu0 0.0
        %6226 = vmatpush2.msra.mxu0 0.0
        %6227 = vmatprep.subr.mxu0 0.0
        %6228 = vmatpush2.msra.mxu0 0.0
        %6229 = vmatprep.subr.mxu0 0.0
        %6230 = vmatpush2.msra.mxu0 0.0
        %6231 = vmatprep.subr.mxu0 0.0
        %6232 = vmatpush2.msra.mxu0 0.0
        %6233 = vmatprep.subr.mxu0 0.0
        %6234 = vmatpush2.msra.mxu0 0.0
        %6235 = vmatprep.subr.mxu0 0.0
        %6236 = vmatpush2.msra.mxu0 0.0
        %6237 = vmatprep.subr.mxu0 0.0
        %6238 = vmatpush2.msra.mxu0 0.0
        %6239 = vmatprep.mubr.f32.mxu0 0.0
        %v6240 = vand.u32 %v5573, 4294901760
        %v6241 = vsub.f32 %v5573, %v6240
        %6242 = vmatmul.mubr.f32.gmra.mxu0 %v6241
        %v6243 = vpop.f32.mrf.mxu0
        %v6244 = vadd.f32 %v6170, %v6243
        %v6245 = vpop.f32.mrf.mxu0
        %6246 = vdwg.mxu0
        %6247 = vmatprep.subr.mxu0 0.0
        %6248 = vmatpush1.msra.mxu0 0.0
        %6249 = vmatprep.subr.mxu0 0.0
        %6250 = vmatpush1.msra.mxu0 0.0
        %6251 = vmatprep.subr.mxu0 0.0
        %6252 = vmatpush1.msra.mxu0 0.0
        %6253 = vmatprep.subr.mxu0 0.0
        %6254 = vmatpush1.msra.mxu0 0.0
        %6255 = vmatprep.subr.mxu0 0.0
        %6256 = vmatpush1.msra.mxu0 0.0
        %6257 = vmatprep.subr.mxu0 0.0
        %6258 = vmatpush1.msra.mxu0 0.0
        %6259 = vmatprep.subr.mxu0 0.0
        %6260 = vmatpush1.msra.mxu0 0.0
        %6261 = vmatprep.subr.mxu0 0.0
        %6262 = vmatpush1.msra.mxu0 0.0
        %6263 = vmatprep.subr.mxu0 0.0
        %6264 = vmatpush1.msra.mxu0 0.0
        %6265 = vmatprep.subr.mxu0 0.0
        %6266 = vmatpush1.msra.mxu0 0.0
        %6267 = vmatprep.subr.mxu0 0.0
        %6268 = vmatpush1.msra.mxu0 0.0
        %6269 = vmatprep.subr.mxu0 0.0
        %6270 = vmatpush1.msra.mxu0 0.0
        %6271 = vmatprep.subr.mxu0 0.0
        %6272 = vmatpush1.msra.mxu0 0.0
        %6273 = vmatprep.subr.mxu0 0.0
        %6274 = vmatpush1.msra.mxu0 0.0
        %6275 = vmatprep.subr.mxu0 0.0
        %6276 = vmatpush1.msra.mxu0 0.0
        %6277 = vmatprep.subr.mxu0 0.0
        %v6278 = vand.u32 %v164, 4294901760
        %6279 = vmatpush1.msra.mxu0 %v6278
        %6280 = vmatprep.subr.mxu0 0.0
        %6281 = vmatpush2.msra.mxu0 0.0
        %6282 = vmatprep.subr.mxu0 0.0
        %6283 = vmatpush2.msra.mxu0 0.0
        %6284 = vmatprep.subr.mxu0 0.0
        %6285 = vmatpush2.msra.mxu0 0.0
        %6286 = vmatprep.subr.mxu0 0.0
        %6287 = vmatpush2.msra.mxu0 0.0
        %6288 = vmatprep.subr.mxu0 0.0
        %6289 = vmatpush2.msra.mxu0 0.0
        %6290 = vmatprep.subr.mxu0 0.0
        %6291 = vmatpush2.msra.mxu0 0.0
        %6292 = vmatprep.subr.mxu0 0.0
        %6293 = vmatpush2.msra.mxu0 0.0
        %6294 = vmatprep.subr.mxu0 0.0
        %6295 = vmatpush2.msra.mxu0 0.0
        %6296 = vmatprep.subr.mxu0 0.0
        %6297 = vmatpush2.msra.mxu0 0.0
        %6298 = vmatprep.subr.mxu0 0.0
        %6299 = vmatpush2.msra.mxu0 0.0
        %6300 = vmatprep.subr.mxu0 0.0
        %6301 = vmatpush2.msra.mxu0 0.0
        %6302 = vmatprep.subr.mxu0 0.0
        %6303 = vmatpush2.msra.mxu0 0.0
        %6304 = vmatprep.subr.mxu0 0.0
        %6305 = vmatpush2.msra.mxu0 0.0
        %6306 = vmatprep.subr.mxu0 0.0
        %6307 = vmatpush2.msra.mxu0 0.0
        %6308 = vmatprep.subr.mxu0 0.0
        %6309 = vmatpush2.msra.mxu0 0.0
        %6310 = vmatprep.subr.mxu0 0.0
        %6311 = vmatpush2.msra.mxu0 0.0
        %6312 = vmatprep.mubr.f32.mxu0 0.0
        %v6313 = vand.u32 %v5573, 4294901760
        %v6314 = vsub.f32 %v5573, %v6313
        %v6315 = vand.u32 %v6314, 4294901760
        %6316 = vmatmul.mubr.f32.gmra.mxu0 %v6315
        %v6317 = vpop.f32.mrf.mxu0
        %v6318 = vadd.f32 %v6244, %v6317
        %v6319 = vpop.f32.mrf.mxu0
        %6320 = vdwg.mxu0
        %6321 = vmatprep.subr.mxu0 0.0
        %6322 = vmatpush1.msra.mxu0 0.0
        %6323 = vmatprep.subr.mxu0 0.0
        %6324 = vmatpush1.msra.mxu0 0.0
        %6325 = vmatprep.subr.mxu0 0.0
        %6326 = vmatpush1.msra.mxu0 0.0
        %6327 = vmatprep.subr.mxu0 0.0
        %6328 = vmatpush1.msra.mxu0 0.0
        %6329 = vmatprep.subr.mxu0 0.0
        %6330 = vmatpush1.msra.mxu0 0.0
        %6331 = vmatprep.subr.mxu0 0.0
        %6332 = vmatpush1.msra.mxu0 0.0
        %6333 = vmatprep.subr.mxu0 0.0
        %6334 = vmatpush1.msra.mxu0 0.0
        %6335 = vmatprep.subr.mxu0 0.0
        %6336 = vmatpush1.msra.mxu0 0.0
        %6337 = vmatprep.subr.mxu0 0.0
        %6338 = vmatpush1.msra.mxu0 0.0
        %6339 = vmatprep.subr.mxu0 0.0
        %6340 = vmatpush1.msra.mxu0 0.0
        %6341 = vmatprep.subr.mxu0 0.0
        %6342 = vmatpush1.msra.mxu0 0.0
        %6343 = vmatprep.subr.mxu0 0.0
        %6344 = vmatpush1.msra.mxu0 0.0
        %6345 = vmatprep.subr.mxu0 0.0
        %6346 = vmatpush1.msra.mxu0 0.0
        %6347 = vmatprep.subr.mxu0 0.0
        %6348 = vmatpush1.msra.mxu0 0.0
        %6349 = vmatprep.subr.mxu0 0.0
        %6350 = vmatpush1.msra.mxu0 0.0
        %6351 = vmatprep.subr.mxu0 0.0
        %v6352 = vand.u32 %v164, 4294901760
        %v6353 = vsub.f32 %v164, %v6352
        %v6354 = vand.u32 %v6353, 4294901760
        %6355 = vmatpush1.msra.mxu0 %v6354
        %6356 = vmatprep.subr.mxu0 0.0
        %6357 = vmatpush2.msra.mxu0 0.0
        %6358 = vmatprep.subr.mxu0 0.0
        %6359 = vmatpush2.msra.mxu0 0.0
        %6360 = vmatprep.subr.mxu0 0.0
        %6361 = vmatpush2.msra.mxu0 0.0
        %6362 = vmatprep.subr.mxu0 0.0
        %6363 = vmatpush2.msra.mxu0 0.0
        %6364 = vmatprep.subr.mxu0 0.0
        %6365 = vmatpush2.msra.mxu0 0.0
        %6366 = vmatprep.subr.mxu0 0.0
        %6367 = vmatpush2.msra.mxu0 0.0
        %6368 = vmatprep.subr.mxu0 0.0
        %6369 = vmatpush2.msra.mxu0 0.0
        %6370 = vmatprep.subr.mxu0 0.0
        %6371 = vmatpush2.msra.mxu0 0.0
        %6372 = vmatprep.subr.mxu0 0.0
        %6373 = vmatpush2.msra.mxu0 0.0
        %6374 = vmatprep.subr.mxu0 0.0
        %6375 = vmatpush2.msra.mxu0 0.0
        %6376 = vmatprep.subr.mxu0 0.0
        %6377 = vmatpush2.msra.mxu0 0.0
        %6378 = vmatprep.subr.mxu0 0.0
        %6379 = vmatpush2.msra.mxu0 0.0
        %6380 = vmatprep.subr.mxu0 0.0
        %6381 = vmatpush2.msra.mxu0 0.0
        %6382 = vmatprep.subr.mxu0 0.0
        %6383 = vmatpush2.msra.mxu0 0.0
        %6384 = vmatprep.subr.mxu0 0.0
        %6385 = vmatpush2.msra.mxu0 0.0
        %6386 = vmatprep.subr.mxu0 0.0
        %6387 = vmatpush2.msra.mxu0 0.0
        %6388 = vmatprep.mubr.f32.mxu0 0.0
        %v6389 = vand.u32 %v5573, 4294901760
        %6390 = vmatmul.mubr.f32.gmra.mxu0 %v6389
        %v6391 = vpop.f32.mrf.mxu0
        %v6392 = vadd.f32 %v6318, %v6391
        %v6393 = vpop.f32.mrf.mxu0
        %6394 = vdwg.mxu0
        %6395 = vmatprep.subr.mxu0 0.0
        %6396 = vmatpush1.msra.mxu0 0.0
        %6397 = vmatprep.subr.mxu0 0.0
        %6398 = vmatpush1.msra.mxu0 0.0
        %6399 = vmatprep.subr.mxu0 0.0
        %6400 = vmatpush1.msra.mxu0 0.0
        %6401 = vmatprep.subr.mxu0 0.0
        %6402 = vmatpush1.msra.mxu0 0.0
        %6403 = vmatprep.subr.mxu0 0.0
        %6404 = vmatpush1.msra.mxu0 0.0
        %6405 = vmatprep.subr.mxu0 0.0
        %6406 = vmatpush1.msra.mxu0 0.0
        %6407 = vmatprep.subr.mxu0 0.0
        %6408 = vmatpush1.msra.mxu0 0.0
        %6409 = vmatprep.subr.mxu0 0.0
        %6410 = vmatpush1.msra.mxu0 0.0
        %6411 = vmatprep.subr.mxu0 0.0
        %6412 = vmatpush1.msra.mxu0 0.0
        %6413 = vmatprep.subr.mxu0 0.0
        %6414 = vmatpush1.msra.mxu0 0.0
        %6415 = vmatprep.subr.mxu0 0.0
        %6416 = vmatpush1.msra.mxu0 0.0
        %6417 = vmatprep.subr.mxu0 0.0
        %6418 = vmatpush1.msra.mxu0 0.0
        %6419 = vmatprep.subr.mxu0 0.0
        %6420 = vmatpush1.msra.mxu0 0.0
        %6421 = vmatprep.subr.mxu0 0.0
        %6422 = vmatpush1.msra.mxu0 0.0
        %6423 = vmatprep.subr.mxu0 0.0
        %6424 = vmatpush1.msra.mxu0 0.0
        %6425 = vmatprep.subr.mxu0 0.0
        %v6426 = vand.u32 %v164, 4294901760
        %6427 = vmatpush1.msra.mxu0 %v6426
        %6428 = vmatprep.subr.mxu0 0.0
        %6429 = vmatpush2.msra.mxu0 0.0
        %6430 = vmatprep.subr.mxu0 0.0
        %6431 = vmatpush2.msra.mxu0 0.0
        %6432 = vmatprep.subr.mxu0 0.0
        %6433 = vmatpush2.msra.mxu0 0.0
        %6434 = vmatprep.subr.mxu0 0.0
        %6435 = vmatpush2.msra.mxu0 0.0
        %6436 = vmatprep.subr.mxu0 0.0
        %6437 = vmatpush2.msra.mxu0 0.0
        %6438 = vmatprep.subr.mxu0 0.0
        %6439 = vmatpush2.msra.mxu0 0.0
        %6440 = vmatprep.subr.mxu0 0.0
        %6441 = vmatpush2.msra.mxu0 0.0
        %6442 = vmatprep.subr.mxu0 0.0
        %6443 = vmatpush2.msra.mxu0 0.0
        %6444 = vmatprep.subr.mxu0 0.0
        %6445 = vmatpush2.msra.mxu0 0.0
        %6446 = vmatprep.subr.mxu0 0.0
        %6447 = vmatpush2.msra.mxu0 0.0
        %6448 = vmatprep.subr.mxu0 0.0
        %6449 = vmatpush2.msra.mxu0 0.0
        %6450 = vmatprep.subr.mxu0 0.0
        %6451 = vmatpush2.msra.mxu0 0.0
        %6452 = vmatprep.subr.mxu0 0.0
        %6453 = vmatpush2.msra.mxu0 0.0
        %6454 = vmatprep.subr.mxu0 0.0
        %6455 = vmatpush2.msra.mxu0 0.0
        %6456 = vmatprep.subr.mxu0 0.0
        %6457 = vmatpush2.msra.mxu0 0.0
        %6458 = vmatprep.subr.mxu0 0.0
        %6459 = vmatpush2.msra.mxu0 0.0
        %6460 = vmatprep.mubr.f32.mxu0 0.0
        %v6461 = vand.u32 %v5573, 4294901760
        %6462 = vmatmul.mubr.f32.gmra.mxu0 %v6461
        %v6463 = vpop.f32.mrf.mxu0
        %v6464 = vadd.f32 %v6392, %v6463
        %v6465 = vpop.f32.mrf.mxu0
        %6466 = vdwg.mxu0
        %v6467 = vmax.f32 %v6018, %v6464
        %6468 = vmatprep.subr.mxu0 0.0
        %6469 = vmatpush1.msra.mxu0 0.0
        %6470 = vmatprep.subr.mxu0 0.0
        %6471 = vmatpush1.msra.mxu0 0.0
        %6472 = vmatprep.subr.mxu0 0.0
        %6473 = vmatpush1.msra.mxu0 0.0
        %6474 = vmatprep.subr.mxu0 0.0
        %6475 = vmatpush1.msra.mxu0 0.0
        %6476 = vmatprep.subr.mxu0 0.0
        %6477 = vmatpush1.msra.mxu0 0.0
        %6478 = vmatprep.subr.mxu0 0.0
        %6479 = vmatpush1.msra.mxu0 0.0
        %6480 = vmatprep.subr.mxu0 0.0
        %6481 = vmatpush1.msra.mxu0 0.0
        %6482 = vmatprep.subr.mxu0 0.0
        %6483 = vmatpush1.msra.mxu0 0.0
        %6484 = vmatprep.subr.mxu0 0.0
        %6485 = vmatpush1.msra.mxu0 0.0
        %6486 = vmatprep.subr.mxu0 0.0
        %6487 = vmatpush1.msra.mxu0 0.0
        %6488 = vmatprep.subr.mxu0 0.0
        %6489 = vmatpush1.msra.mxu0 0.0
        %6490 = vmatprep.subr.mxu0 0.0
        %6491 = vmatpush1.msra.mxu0 0.0
        %6492 = vmatprep.subr.mxu0 0.0
        %6493 = vmatpush1.msra.mxu0 0.0
        %6494 = vmatprep.subr.mxu0 0.0
        %6495 = vmatpush1.msra.mxu0 0.0
        %6496 = vmatprep.subr.mxu0 0.0
        %6497 = vmatpush1.msra.mxu0 0.0
        %6498 = vmatprep.subr.mxu0 0.0
        %v6499 = vand.u32 %v6467, 4294901760
        %6500 = vmatpush1.msra.mxu0 %v6499
        %6501 = vmatprep.subr.mxu0 0.0
        %6502 = vmatpush2.msra.mxu0 0.0
        %6503 = vmatprep.subr.mxu0 0.0
        %6504 = vmatpush2.msra.mxu0 0.0
        %6505 = vmatprep.subr.mxu0 0.0
        %6506 = vmatpush2.msra.mxu0 0.0
        %6507 = vmatprep.subr.mxu0 0.0
        %6508 = vmatpush2.msra.mxu0 0.0
        %6509 = vmatprep.subr.mxu0 0.0
        %6510 = vmatpush2.msra.mxu0 0.0
        %6511 = vmatprep.subr.mxu0 0.0
        %6512 = vmatpush2.msra.mxu0 0.0
        %6513 = vmatprep.subr.mxu0 0.0
        %6514 = vmatpush2.msra.mxu0 0.0
        %6515 = vmatprep.subr.mxu0 0.0
        %6516 = vmatpush2.msra.mxu0 0.0
        %6517 = vmatprep.subr.mxu0 0.0
        %6518 = vmatpush2.msra.mxu0 0.0
        %6519 = vmatprep.subr.mxu0 0.0
        %6520 = vmatpush2.msra.mxu0 0.0
        %6521 = vmatprep.subr.mxu0 0.0
        %6522 = vmatpush2.msra.mxu0 0.0
        %6523 = vmatprep.subr.mxu0 0.0
        %6524 = vmatpush2.msra.mxu0 0.0
        %6525 = vmatprep.subr.mxu0 0.0
        %6526 = vmatpush2.msra.mxu0 0.0
        %6527 = vmatprep.subr.mxu0 0.0
        %6528 = vmatpush2.msra.mxu0 0.0
        %6529 = vmatprep.subr.mxu0 0.0
        %6530 = vmatpush2.msra.mxu0 0.0
        %6531 = vmatprep.subr.mxu0 0.0
        %6532 = vmatpush2.msra.mxu0 0.0
        %6533 = vmatprep.mubr.f32.mxu0 0.0
        %v6534 = vand.u32 %v1075, 4294901760
        %v6535 = vsub.f32 %v1075, %v6534
        %v6536 = vand.u32 %v6535, 4294901760
        %v6537 = vsub.f32 %v6535, %v6536
        %v6538 = vand.u32 %v6537, 4294901760
        %6539 = vmatmul.mubr.f32.gmra.mxu0 %v6538
        %v6540 = vpop.f32.mrf.mxu0
        %v6541 = vadd.f32 0.0, %v6540
        %v6542 = vpop.f32.mrf.mxu0
        %6543 = vdwg.mxu0
        %6544 = vmatprep.subr.mxu0 0.0
        %6545 = vmatpush1.msra.mxu0 0.0
        %6546 = vmatprep.subr.mxu0 0.0
        %6547 = vmatpush1.msra.mxu0 0.0
        %6548 = vmatprep.subr.mxu0 0.0
        %6549 = vmatpush1.msra.mxu0 0.0
        %6550 = vmatprep.subr.mxu0 0.0
        %6551 = vmatpush1.msra.mxu0 0.0
        %6552 = vmatprep.subr.mxu0 0.0
        %6553 = vmatpush1.msra.mxu0 0.0
        %6554 = vmatprep.subr.mxu0 0.0
        %6555 = vmatpush1.msra.mxu0 0.0
        %6556 = vmatprep.subr.mxu0 0.0
        %6557 = vmatpush1.msra.mxu0 0.0
        %6558 = vmatprep.subr.mxu0 0.0
        %6559 = vmatpush1.msra.mxu0 0.0
        %6560 = vmatprep.subr.mxu0 0.0
        %6561 = vmatpush1.msra.mxu0 0.0
        %6562 = vmatprep.subr.mxu0 0.0
        %6563 = vmatpush1.msra.mxu0 0.0
        %6564 = vmatprep.subr.mxu0 0.0
        %6565 = vmatpush1.msra.mxu0 0.0
        %6566 = vmatprep.subr.mxu0 0.0
        %6567 = vmatpush1.msra.mxu0 0.0
        %6568 = vmatprep.subr.mxu0 0.0
        %6569 = vmatpush1.msra.mxu0 0.0
        %6570 = vmatprep.subr.mxu0 0.0
        %6571 = vmatpush1.msra.mxu0 0.0
        %6572 = vmatprep.subr.mxu0 0.0
        %6573 = vmatpush1.msra.mxu0 0.0
        %6574 = vmatprep.subr.mxu0 0.0
        %v6575 = vand.u32 %v6467, 4294901760
        %v6576 = vsub.f32 %v6467, %v6575
        %v6577 = vand.u32 %v6576, 4294901760
        %v6578 = vsub.f32 %v6576, %v6577
        %v6579 = vand.u32 %v6578, 4294901760
        %6580 = vmatpush1.msra.mxu0 %v6579
        %6581 = vmatprep.subr.mxu0 0.0
        %6582 = vmatpush2.msra.mxu0 0.0
        %6583 = vmatprep.subr.mxu0 0.0
        %6584 = vmatpush2.msra.mxu0 0.0
        %6585 = vmatprep.subr.mxu0 0.0
        %6586 = vmatpush2.msra.mxu0 0.0
        %6587 = vmatprep.subr.mxu0 0.0
        %6588 = vmatpush2.msra.mxu0 0.0
        %6589 = vmatprep.subr.mxu0 0.0
        %6590 = vmatpush2.msra.mxu0 0.0
        %6591 = vmatprep.subr.mxu0 0.0
        %6592 = vmatpush2.msra.mxu0 0.0
        %6593 = vmatprep.subr.mxu0 0.0
        %6594 = vmatpush2.msra.mxu0 0.0
        %6595 = vmatprep.subr.mxu0 0.0
        %6596 = vmatpush2.msra.mxu0 0.0
        %6597 = vmatprep.subr.mxu0 0.0
        %6598 = vmatpush2.msra.mxu0 0.0
        %6599 = vmatprep.subr.mxu0 0.0
        %6600 = vmatpush2.msra.mxu0 0.0
        %6601 = vmatprep.subr.mxu0 0.0
        %6602 = vmatpush2.msra.mxu0 0.0
        %6603 = vmatprep.subr.mxu0 0.0
        %6604 = vmatpush2.msra.mxu0 0.0
        %6605 = vmatprep.subr.mxu0 0.0
        %6606 = vmatpush2.msra.mxu0 0.0
        %6607 = vmatprep.subr.mxu0 0.0
        %6608 = vmatpush2.msra.mxu0 0.0
        %6609 = vmatprep.subr.mxu0 0.0
        %6610 = vmatpush2.msra.mxu0 0.0
        %6611 = vmatprep.subr.mxu0 0.0
        %6612 = vmatpush2.msra.mxu0 0.0
        %6613 = vmatprep.mubr.f32.mxu0 0.0
        %v6614 = vand.u32 %v1075, 4294901760
        %6615 = vmatmul.mubr.f32.gmra.mxu0 %v6614
        %v6616 = vpop.f32.mrf.mxu0
        %v6617 = vadd.f32 %v6541, %v6616
        %v6618 = vpop.f32.mrf.mxu0
        %6619 = vdwg.mxu0
        %6620 = vmatprep.subr.mxu0 0.0
        %6621 = vmatpush1.msra.mxu0 0.0
        %6622 = vmatprep.subr.mxu0 0.0
        %6623 = vmatpush1.msra.mxu0 0.0
        %6624 = vmatprep.subr.mxu0 0.0
        %6625 = vmatpush1.msra.mxu0 0.0
        %6626 = vmatprep.subr.mxu0 0.0
        %6627 = vmatpush1.msra.mxu0 0.0
        %6628 = vmatprep.subr.mxu0 0.0
        %6629 = vmatpush1.msra.mxu0 0.0
        %6630 = vmatprep.subr.mxu0 0.0
        %6631 = vmatpush1.msra.mxu0 0.0
        %6632 = vmatprep.subr.mxu0 0.0
        %6633 = vmatpush1.msra.mxu0 0.0
        %6634 = vmatprep.subr.mxu0 0.0
        %6635 = vmatpush1.msra.mxu0 0.0
        %6636 = vmatprep.subr.mxu0 0.0
        %6637 = vmatpush1.msra.mxu0 0.0
        %6638 = vmatprep.subr.mxu0 0.0
        %6639 = vmatpush1.msra.mxu0 0.0
        %6640 = vmatprep.subr.mxu0 0.0
        %6641 = vmatpush1.msra.mxu0 0.0
        %6642 = vmatprep.subr.mxu0 0.0
        %6643 = vmatpush1.msra.mxu0 0.0
        %6644 = vmatprep.subr.mxu0 0.0
        %6645 = vmatpush1.msra.mxu0 0.0
        %6646 = vmatprep.subr.mxu0 0.0
        %6647 = vmatpush1.msra.mxu0 0.0
        %6648 = vmatprep.subr.mxu0 0.0
        %6649 = vmatpush1.msra.mxu0 0.0
        %6650 = vmatprep.subr.mxu0 0.0
        %v6651 = vand.u32 %v6467, 4294901760
        %v6652 = vsub.f32 %v6467, %v6651
        %6653 = vmatpush1.msra.mxu0 %v6652
        %6654 = vmatprep.subr.mxu0 0.0
        %6655 = vmatpush2.msra.mxu0 0.0
        %6656 = vmatprep.subr.mxu0 0.0
        %6657 = vmatpush2.msra.mxu0 0.0
        %6658 = vmatprep.subr.mxu0 0.0
        %6659 = vmatpush2.msra.mxu0 0.0
        %6660 = vmatprep.subr.mxu0 0.0
        %6661 = vmatpush2.msra.mxu0 0.0
        %6662 = vmatprep.subr.mxu0 0.0
        %6663 = vmatpush2.msra.mxu0 0.0
        %6664 = vmatprep.subr.mxu0 0.0
        %6665 = vmatpush2.msra.mxu0 0.0
        %6666 = vmatprep.subr.mxu0 0.0
        %6667 = vmatpush2.msra.mxu0 0.0
        %6668 = vmatprep.subr.mxu0 0.0
        %6669 = vmatpush2.msra.mxu0 0.0
        %6670 = vmatprep.subr.mxu0 0.0
        %6671 = vmatpush2.msra.mxu0 0.0
        %6672 = vmatprep.subr.mxu0 0.0
        %6673 = vmatpush2.msra.mxu0 0.0
        %6674 = vmatprep.subr.mxu0 0.0
        %6675 = vmatpush2.msra.mxu0 0.0
        %6676 = vmatprep.subr.mxu0 0.0
        %6677 = vmatpush2.msra.mxu0 0.0
        %6678 = vmatprep.subr.mxu0 0.0
        %6679 = vmatpush2.msra.mxu0 0.0
        %6680 = vmatprep.subr.mxu0 0.0
        %6681 = vmatpush2.msra.mxu0 0.0
        %6682 = vmatprep.subr.mxu0 0.0
        %6683 = vmatpush2.msra.mxu0 0.0
        %6684 = vmatprep.subr.mxu0 0.0
        %6685 = vmatpush2.msra.mxu0 0.0
        %6686 = vmatprep.mubr.f32.mxu0 0.0
        %v6687 = vand.u32 %v1075, 4294901760
        %v6688 = vsub.f32 %v1075, %v6687
        %6689 = vmatmul.mubr.f32.gmra.mxu0 %v6688
        %v6690 = vpop.f32.mrf.mxu0
        %v6691 = vadd.f32 %v6617, %v6690
        %v6692 = vpop.f32.mrf.mxu0
        %6693 = vdwg.mxu0
        %6694 = vmatprep.subr.mxu0 0.0
        %6695 = vmatpush1.msra.mxu0 0.0
        %6696 = vmatprep.subr.mxu0 0.0
        %6697 = vmatpush1.msra.mxu0 0.0
        %6698 = vmatprep.subr.mxu0 0.0
        %6699 = vmatpush1.msra.mxu0 0.0
        %6700 = vmatprep.subr.mxu0 0.0
        %6701 = vmatpush1.msra.mxu0 0.0
        %6702 = vmatprep.subr.mxu0 0.0
        %6703 = vmatpush1.msra.mxu0 0.0
        %6704 = vmatprep.subr.mxu0 0.0
        %6705 = vmatpush1.msra.mxu0 0.0
        %6706 = vmatprep.subr.mxu0 0.0
        %6707 = vmatpush1.msra.mxu0 0.0
        %6708 = vmatprep.subr.mxu0 0.0
        %6709 = vmatpush1.msra.mxu0 0.0
        %6710 = vmatprep.subr.mxu0 0.0
        %6711 = vmatpush1.msra.mxu0 0.0
        %6712 = vmatprep.subr.mxu0 0.0
        %6713 = vmatpush1.msra.mxu0 0.0
        %6714 = vmatprep.subr.mxu0 0.0
        %6715 = vmatpush1.msra.mxu0 0.0
        %6716 = vmatprep.subr.mxu0 0.0
        %6717 = vmatpush1.msra.mxu0 0.0
        %6718 = vmatprep.subr.mxu0 0.0
        %6719 = vmatpush1.msra.mxu0 0.0
        %6720 = vmatprep.subr.mxu0 0.0
        %6721 = vmatpush1.msra.mxu0 0.0
        %6722 = vmatprep.subr.mxu0 0.0
        %6723 = vmatpush1.msra.mxu0 0.0
        %6724 = vmatprep.subr.mxu0 0.0
        %v6725 = vand.u32 %v6467, 4294901760
        %6726 = vmatpush1.msra.mxu0 %v6725
        %6727 = vmatprep.subr.mxu0 0.0
        %6728 = vmatpush2.msra.mxu0 0.0
        %6729 = vmatprep.subr.mxu0 0.0
        %6730 = vmatpush2.msra.mxu0 0.0
        %6731 = vmatprep.subr.mxu0 0.0
        %6732 = vmatpush2.msra.mxu0 0.0
        %6733 = vmatprep.subr.mxu0 0.0
        %6734 = vmatpush2.msra.mxu0 0.0
        %6735 = vmatprep.subr.mxu0 0.0
        %6736 = vmatpush2.msra.mxu0 0.0
        %6737 = vmatprep.subr.mxu0 0.0
        %6738 = vmatpush2.msra.mxu0 0.0
        %6739 = vmatprep.subr.mxu0 0.0
        %6740 = vmatpush2.msra.mxu0 0.0
        %6741 = vmatprep.subr.mxu0 0.0
        %6742 = vmatpush2.msra.mxu0 0.0
        %6743 = vmatprep.subr.mxu0 0.0
        %6744 = vmatpush2.msra.mxu0 0.0
        %6745 = vmatprep.subr.mxu0 0.0
        %6746 = vmatpush2.msra.mxu0 0.0
        %6747 = vmatprep.subr.mxu0 0.0
        %6748 = vmatpush2.msra.mxu0 0.0
        %6749 = vmatprep.subr.mxu0 0.0
        %6750 = vmatpush2.msra.mxu0 0.0
        %6751 = vmatprep.subr.mxu0 0.0
        %6752 = vmatpush2.msra.mxu0 0.0
        %6753 = vmatprep.subr.mxu0 0.0
        %6754 = vmatpush2.msra.mxu0 0.0
        %6755 = vmatprep.subr.mxu0 0.0
        %6756 = vmatpush2.msra.mxu0 0.0
        %6757 = vmatprep.subr.mxu0 0.0
        %6758 = vmatpush2.msra.mxu0 0.0
        %6759 = vmatprep.mubr.f32.mxu0 0.0
        %v6760 = vand.u32 %v1075, 4294901760
        %v6761 = vsub.f32 %v1075, %v6760
        %v6762 = vand.u32 %v6761, 4294901760
        %6763 = vmatmul.mubr.f32.gmra.mxu0 %v6762
        %v6764 = vpop.f32.mrf.mxu0
        %v6765 = vadd.f32 %v6691, %v6764
        %v6766 = vpop.f32.mrf.mxu0
        %6767 = vdwg.mxu0
        %6768 = vmatprep.subr.mxu0 0.0
        %6769 = vmatpush1.msra.mxu0 0.0
        %6770 = vmatprep.subr.mxu0 0.0
        %6771 = vmatpush1.msra.mxu0 0.0
        %6772 = vmatprep.subr.mxu0 0.0
        %6773 = vmatpush1.msra.mxu0 0.0
        %6774 = vmatprep.subr.mxu0 0.0
        %6775 = vmatpush1.msra.mxu0 0.0
        %6776 = vmatprep.subr.mxu0 0.0
        %6777 = vmatpush1.msra.mxu0 0.0
        %6778 = vmatprep.subr.mxu0 0.0
        %6779 = vmatpush1.msra.mxu0 0.0
        %6780 = vmatprep.subr.mxu0 0.0
        %6781 = vmatpush1.msra.mxu0 0.0
        %6782 = vmatprep.subr.mxu0 0.0
        %6783 = vmatpush1.msra.mxu0 0.0
        %6784 = vmatprep.subr.mxu0 0.0
        %6785 = vmatpush1.msra.mxu0 0.0
        %6786 = vmatprep.subr.mxu0 0.0
        %6787 = vmatpush1.msra.mxu0 0.0
        %6788 = vmatprep.subr.mxu0 0.0
        %6789 = vmatpush1.msra.mxu0 0.0
        %6790 = vmatprep.subr.mxu0 0.0
        %6791 = vmatpush1.msra.mxu0 0.0
        %6792 = vmatprep.subr.mxu0 0.0
        %6793 = vmatpush1.msra.mxu0 0.0
        %6794 = vmatprep.subr.mxu0 0.0
        %6795 = vmatpush1.msra.mxu0 0.0
        %6796 = vmatprep.subr.mxu0 0.0
        %6797 = vmatpush1.msra.mxu0 0.0
        %6798 = vmatprep.subr.mxu0 0.0
        %v6799 = vand.u32 %v6467, 4294901760
        %v6800 = vsub.f32 %v6467, %v6799
        %v6801 = vand.u32 %v6800, 4294901760
        %6802 = vmatpush1.msra.mxu0 %v6801
        %6803 = vmatprep.subr.mxu0 0.0
        %6804 = vmatpush2.msra.mxu0 0.0
        %6805 = vmatprep.subr.mxu0 0.0
        %6806 = vmatpush2.msra.mxu0 0.0
        %6807 = vmatprep.subr.mxu0 0.0
        %6808 = vmatpush2.msra.mxu0 0.0
        %6809 = vmatprep.subr.mxu0 0.0
        %6810 = vmatpush2.msra.mxu0 0.0
        %6811 = vmatprep.subr.mxu0 0.0
        %6812 = vmatpush2.msra.mxu0 0.0
        %6813 = vmatprep.subr.mxu0 0.0
        %6814 = vmatpush2.msra.mxu0 0.0
        %6815 = vmatprep.subr.mxu0 0.0
        %6816 = vmatpush2.msra.mxu0 0.0
        %6817 = vmatprep.subr.mxu0 0.0
        %6818 = vmatpush2.msra.mxu0 0.0
        %6819 = vmatprep.subr.mxu0 0.0
        %6820 = vmatpush2.msra.mxu0 0.0
        %6821 = vmatprep.subr.mxu0 0.0
        %6822 = vmatpush2.msra.mxu0 0.0
        %6823 = vmatprep.subr.mxu0 0.0
        %6824 = vmatpush2.msra.mxu0 0.0
        %6825 = vmatprep.subr.mxu0 0.0
        %6826 = vmatpush2.msra.mxu0 0.0
        %6827 = vmatprep.subr.mxu0 0.0
        %6828 = vmatpush2.msra.mxu0 0.0
        %6829 = vmatprep.subr.mxu0 0.0
        %6830 = vmatpush2.msra.mxu0 0.0
        %6831 = vmatprep.subr.mxu0 0.0
        %6832 = vmatpush2.msra.mxu0 0.0
        %6833 = vmatprep.subr.mxu0 0.0
        %6834 = vmatpush2.msra.mxu0 0.0
        %6835 = vmatprep.mubr.f32.mxu0 0.0
        %v6836 = vand.u32 %v1075, 4294901760
        %6837 = vmatmul.mubr.f32.gmra.mxu0 %v6836
        %v6838 = vpop.f32.mrf.mxu0
        %v6839 = vadd.f32 %v6765, %v6838
        %v6840 = vpop.f32.mrf.mxu0
        %6841 = vdwg.mxu0
        %6842 = vmatprep.subr.mxu0 0.0
        %6843 = vmatpush1.msra.mxu0 0.0
        %6844 = vmatprep.subr.mxu0 0.0
        %6845 = vmatpush1.msra.mxu0 0.0
        %6846 = vmatprep.subr.mxu0 0.0
        %6847 = vmatpush1.msra.mxu0 0.0
        %6848 = vmatprep.subr.mxu0 0.0
        %6849 = vmatpush1.msra.mxu0 0.0
        %6850 = vmatprep.subr.mxu0 0.0
        %6851 = vmatpush1.msra.mxu0 0.0
        %6852 = vmatprep.subr.mxu0 0.0
        %6853 = vmatpush1.msra.mxu0 0.0
        %6854 = vmatprep.subr.mxu0 0.0
        %6855 = vmatpush1.msra.mxu0 0.0
        %6856 = vmatprep.subr.mxu0 0.0
        %6857 = vmatpush1.msra.mxu0 0.0
        %6858 = vmatprep.subr.mxu0 0.0
        %6859 = vmatpush1.msra.mxu0 0.0
        %6860 = vmatprep.subr.mxu0 0.0
        %6861 = vmatpush1.msra.mxu0 0.0
        %6862 = vmatprep.subr.mxu0 0.0
        %6863 = vmatpush1.msra.mxu0 0.0
        %6864 = vmatprep.subr.mxu0 0.0
        %6865 = vmatpush1.msra.mxu0 0.0
        %6866 = vmatprep.subr.mxu0 0.0
        %6867 = vmatpush1.msra.mxu0 0.0
        %6868 = vmatprep.subr.mxu0 0.0
        %6869 = vmatpush1.msra.mxu0 0.0
        %6870 = vmatprep.subr.mxu0 0.0
        %6871 = vmatpush1.msra.mxu0 0.0
        %6872 = vmatprep.subr.mxu0 0.0
        %v6873 = vand.u32 %v6467, 4294901760
        %6874 = vmatpush1.msra.mxu0 %v6873
        %6875 = vmatprep.subr.mxu0 0.0
        %6876 = vmatpush2.msra.mxu0 0.0
        %6877 = vmatprep.subr.mxu0 0.0
        %6878 = vmatpush2.msra.mxu0 0.0
        %6879 = vmatprep.subr.mxu0 0.0
        %6880 = vmatpush2.msra.mxu0 0.0
        %6881 = vmatprep.subr.mxu0 0.0
        %6882 = vmatpush2.msra.mxu0 0.0
        %6883 = vmatprep.subr.mxu0 0.0
        %6884 = vmatpush2.msra.mxu0 0.0
        %6885 = vmatprep.subr.mxu0 0.0
        %6886 = vmatpush2.msra.mxu0 0.0
        %6887 = vmatprep.subr.mxu0 0.0
        %6888 = vmatpush2.msra.mxu0 0.0
        %6889 = vmatprep.subr.mxu0 0.0
        %6890 = vmatpush2.msra.mxu0 0.0
        %6891 = vmatprep.subr.mxu0 0.0
        %6892 = vmatpush2.msra.mxu0 0.0
        %6893 = vmatprep.subr.mxu0 0.0
        %6894 = vmatpush2.msra.mxu0 0.0
        %6895 = vmatprep.subr.mxu0 0.0
        %6896 = vmatpush2.msra.mxu0 0.0
        %6897 = vmatprep.subr.mxu0 0.0
        %6898 = vmatpush2.msra.mxu0 0.0
        %6899 = vmatprep.subr.mxu0 0.0
        %6900 = vmatpush2.msra.mxu0 0.0
        %6901 = vmatprep.subr.mxu0 0.0
        %6902 = vmatpush2.msra.mxu0 0.0
        %6903 = vmatprep.subr.mxu0 0.0
        %6904 = vmatpush2.msra.mxu0 0.0
        %6905 = vmatprep.subr.mxu0 0.0
        %6906 = vmatpush2.msra.mxu0 0.0
        %6907 = vmatprep.mubr.f32.mxu0 0.0
        %v6908 = vand.u32 %v1075, 4294901760
        %6909 = vmatmul.mubr.f32.gmra.mxu0 %v6908
        %v6910 = vpop.f32.mrf.mxu0
        %v6911 = vadd.f32 %v6839, %v6910
        %v6912 = vpop.f32.mrf.mxu0
        %6913 = vdwg.mxu0
        %6914 = vmatprep.subr.mxu0 0.0
        %6915 = vmatpush1.msra.mxu0 0.0
        %6916 = vmatprep.subr.mxu0 0.0
        %6917 = vmatpush1.msra.mxu0 0.0
        %6918 = vmatprep.subr.mxu0 0.0
        %6919 = vmatpush1.msra.mxu0 0.0
        %6920 = vmatprep.subr.mxu0 0.0
        %6921 = vmatpush1.msra.mxu0 0.0
        %6922 = vmatprep.subr.mxu0 0.0
        %6923 = vmatpush1.msra.mxu0 0.0
        %6924 = vmatprep.subr.mxu0 0.0
        %6925 = vmatpush1.msra.mxu0 0.0
        %6926 = vmatprep.subr.mxu0 0.0
        %6927 = vmatpush1.msra.mxu0 0.0
        %6928 = vmatprep.subr.mxu0 0.0
        %6929 = vmatpush1.msra.mxu0 0.0
        %6930 = vmatprep.subr.mxu0 0.0
        %6931 = vmatpush1.msra.mxu0 0.0
        %6932 = vmatprep.subr.mxu0 0.0
        %6933 = vmatpush1.msra.mxu0 0.0
        %6934 = vmatprep.subr.mxu0 0.0
        %6935 = vmatpush1.msra.mxu0 0.0
        %6936 = vmatprep.subr.mxu0 0.0
        %6937 = vmatpush1.msra.mxu0 0.0
        %6938 = vmatprep.subr.mxu0 0.0
        %6939 = vmatpush1.msra.mxu0 0.0
        %6940 = vmatprep.subr.mxu0 0.0
        %6941 = vmatpush1.msra.mxu0 0.0
        %6942 = vmatprep.subr.mxu0 0.0
        %6943 = vmatpush1.msra.mxu0 0.0
        %6944 = vmatprep.subr.mxu0 0.0
        %v6945 = vand.u32 %v6467, 4294901760
        %6946 = vmatpush1.msra.mxu0 %v6945
        %6947 = vmatprep.subr.mxu0 0.0
        %6948 = vmatpush2.msra.mxu0 0.0
        %6949 = vmatprep.subr.mxu0 0.0
        %6950 = vmatpush2.msra.mxu0 0.0
        %6951 = vmatprep.subr.mxu0 0.0
        %6952 = vmatpush2.msra.mxu0 0.0
        %6953 = vmatprep.subr.mxu0 0.0
        %6954 = vmatpush2.msra.mxu0 0.0
        %6955 = vmatprep.subr.mxu0 0.0
        %6956 = vmatpush2.msra.mxu0 0.0
        %6957 = vmatprep.subr.mxu0 0.0
        %6958 = vmatpush2.msra.mxu0 0.0
        %6959 = vmatprep.subr.mxu0 0.0
        %6960 = vmatpush2.msra.mxu0 0.0
        %6961 = vmatprep.subr.mxu0 0.0
        %6962 = vmatpush2.msra.mxu0 0.0
        %6963 = vmatprep.subr.mxu0 0.0
        %6964 = vmatpush2.msra.mxu0 0.0
        %6965 = vmatprep.subr.mxu0 0.0
        %6966 = vmatpush2.msra.mxu0 0.0
        %6967 = vmatprep.subr.mxu0 0.0
        %6968 = vmatpush2.msra.mxu0 0.0
        %6969 = vmatprep.subr.mxu0 0.0
        %6970 = vmatpush2.msra.mxu0 0.0
        %6971 = vmatprep.subr.mxu0 0.0
        %6972 = vmatpush2.msra.mxu0 0.0
        %6973 = vmatprep.subr.mxu0 0.0
        %6974 = vmatpush2.msra.mxu0 0.0
        %6975 = vmatprep.subr.mxu0 0.0
        %6976 = vmatpush2.msra.mxu0 0.0
        %6977 = vmatprep.subr.mxu0 0.0
        %6978 = vmatpush2.msra.mxu0 0.0
        %6979 = vmatprep.mubr.f32.mxu0 0.0
        %v6980 = vand.u32 %v1524, 4294901760
        %v6981 = vsub.f32 %v1524, %v6980
        %v6982 = vand.u32 %v6981, 4294901760
        %v6983 = vsub.f32 %v6981, %v6982
        %v6984 = vand.u32 %v6983, 4294901760
        %6985 = vmatmul.mubr.f32.gmra.mxu0 %v6984
        %v6986 = vpop.f32.mrf.mxu0
        %v6987 = vadd.f32 0.0, %v6986
        %v6988 = vpop.f32.mrf.mxu0
        %6989 = vdwg.mxu0
        %6990 = vmatprep.subr.mxu0 0.0
        %6991 = vmatpush1.msra.mxu0 0.0
        %6992 = vmatprep.subr.mxu0 0.0
        %6993 = vmatpush1.msra.mxu0 0.0
        %6994 = vmatprep.subr.mxu0 0.0
        %6995 = vmatpush1.msra.mxu0 0.0
        %6996 = vmatprep.subr.mxu0 0.0
        %6997 = vmatpush1.msra.mxu0 0.0
        %6998 = vmatprep.subr.mxu0 0.0
        %6999 = vmatpush1.msra.mxu0 0.0
        %7000 = vmatprep.subr.mxu0 0.0
        %7001 = vmatpush1.msra.mxu0 0.0
        %7002 = vmatprep.subr.mxu0 0.0
        %7003 = vmatpush1.msra.mxu0 0.0
        %7004 = vmatprep.subr.mxu0 0.0
        %7005 = vmatpush1.msra.mxu0 0.0
        %7006 = vmatprep.subr.mxu0 0.0
        %7007 = vmatpush1.msra.mxu0 0.0
        %7008 = vmatprep.subr.mxu0 0.0
        %7009 = vmatpush1.msra.mxu0 0.0
        %7010 = vmatprep.subr.mxu0 0.0
        %7011 = vmatpush1.msra.mxu0 0.0
        %7012 = vmatprep.subr.mxu0 0.0
        %7013 = vmatpush1.msra.mxu0 0.0
        %7014 = vmatprep.subr.mxu0 0.0
        %7015 = vmatpush1.msra.mxu0 0.0
        %7016 = vmatprep.subr.mxu0 0.0
        %7017 = vmatpush1.msra.mxu0 0.0
        %7018 = vmatprep.subr.mxu0 0.0
        %7019 = vmatpush1.msra.mxu0 0.0
        %7020 = vmatprep.subr.mxu0 0.0
        %v7021 = vand.u32 %v6467, 4294901760
        %v7022 = vsub.f32 %v6467, %v7021
        %v7023 = vand.u32 %v7022, 4294901760
        %v7024 = vsub.f32 %v7022, %v7023
        %v7025 = vand.u32 %v7024, 4294901760
        %7026 = vmatpush1.msra.mxu0 %v7025
        %7027 = vmatprep.subr.mxu0 0.0
        %7028 = vmatpush2.msra.mxu0 0.0
        %7029 = vmatprep.subr.mxu0 0.0
        %7030 = vmatpush2.msra.mxu0 0.0
        %7031 = vmatprep.subr.mxu0 0.0
        %7032 = vmatpush2.msra.mxu0 0.0
        %7033 = vmatprep.subr.mxu0 0.0
        %7034 = vmatpush2.msra.mxu0 0.0
        %7035 = vmatprep.subr.mxu0 0.0
        %7036 = vmatpush2.msra.mxu0 0.0
        %7037 = vmatprep.subr.mxu0 0.0
        %7038 = vmatpush2.msra.mxu0 0.0
        %7039 = vmatprep.subr.mxu0 0.0
        %7040 = vmatpush2.msra.mxu0 0.0
        %7041 = vmatprep.subr.mxu0 0.0
        %7042 = vmatpush2.msra.mxu0 0.0
        %7043 = vmatprep.subr.mxu0 0.0
        %7044 = vmatpush2.msra.mxu0 0.0
        %7045 = vmatprep.subr.mxu0 0.0
        %7046 = vmatpush2.msra.mxu0 0.0
        %7047 = vmatprep.subr.mxu0 0.0
        %7048 = vmatpush2.msra.mxu0 0.0
        %7049 = vmatprep.subr.mxu0 0.0
        %7050 = vmatpush2.msra.mxu0 0.0
        %7051 = vmatprep.subr.mxu0 0.0
        %7052 = vmatpush2.msra.mxu0 0.0
        %7053 = vmatprep.subr.mxu0 0.0
        %7054 = vmatpush2.msra.mxu0 0.0
        %7055 = vmatprep.subr.mxu0 0.0
        %7056 = vmatpush2.msra.mxu0 0.0
        %7057 = vmatprep.subr.mxu0 0.0
        %7058 = vmatpush2.msra.mxu0 0.0
        %7059 = vmatprep.mubr.f32.mxu0 0.0
        %v7060 = vand.u32 %v1524, 4294901760
        %7061 = vmatmul.mubr.f32.gmra.mxu0 %v7060
        %v7062 = vpop.f32.mrf.mxu0
        %v7063 = vadd.f32 %v6987, %v7062
        %v7064 = vpop.f32.mrf.mxu0
        %7065 = vdwg.mxu0
        %7066 = vmatprep.subr.mxu0 0.0
        %7067 = vmatpush1.msra.mxu0 0.0
        %7068 = vmatprep.subr.mxu0 0.0
        %7069 = vmatpush1.msra.mxu0 0.0
        %7070 = vmatprep.subr.mxu0 0.0
        %7071 = vmatpush1.msra.mxu0 0.0
        %7072 = vmatprep.subr.mxu0 0.0
        %7073 = vmatpush1.msra.mxu0 0.0
        %7074 = vmatprep.subr.mxu0 0.0
        %7075 = vmatpush1.msra.mxu0 0.0
        %7076 = vmatprep.subr.mxu0 0.0
        %7077 = vmatpush1.msra.mxu0 0.0
        %7078 = vmatprep.subr.mxu0 0.0
        %7079 = vmatpush1.msra.mxu0 0.0
        %7080 = vmatprep.subr.mxu0 0.0
        %7081 = vmatpush1.msra.mxu0 0.0
        %7082 = vmatprep.subr.mxu0 0.0
        %7083 = vmatpush1.msra.mxu0 0.0
        %7084 = vmatprep.subr.mxu0 0.0
        %7085 = vmatpush1.msra.mxu0 0.0
        %7086 = vmatprep.subr.mxu0 0.0
        %7087 = vmatpush1.msra.mxu0 0.0
        %7088 = vmatprep.subr.mxu0 0.0
        %7089 = vmatpush1.msra.mxu0 0.0
        %7090 = vmatprep.subr.mxu0 0.0
        %7091 = vmatpush1.msra.mxu0 0.0
        %7092 = vmatprep.subr.mxu0 0.0
        %7093 = vmatpush1.msra.mxu0 0.0
        %7094 = vmatprep.subr.mxu0 0.0
        %7095 = vmatpush1.msra.mxu0 0.0
        %7096 = vmatprep.subr.mxu0 0.0
        %v7097 = vand.u32 %v6467, 4294901760
        %v7098 = vsub.f32 %v6467, %v7097
        %7099 = vmatpush1.msra.mxu0 %v7098
        %7100 = vmatprep.subr.mxu0 0.0
        %7101 = vmatpush2.msra.mxu0 0.0
        %7102 = vmatprep.subr.mxu0 0.0
        %7103 = vmatpush2.msra.mxu0 0.0
        %7104 = vmatprep.subr.mxu0 0.0
        %7105 = vmatpush2.msra.mxu0 0.0
        %7106 = vmatprep.subr.mxu0 0.0
        %7107 = vmatpush2.msra.mxu0 0.0
        %7108 = vmatprep.subr.mxu0 0.0
        %7109 = vmatpush2.msra.mxu0 0.0
        %7110 = vmatprep.subr.mxu0 0.0
        %7111 = vmatpush2.msra.mxu0 0.0
        %7112 = vmatprep.subr.mxu0 0.0
        %7113 = vmatpush2.msra.mxu0 0.0
        %7114 = vmatprep.subr.mxu0 0.0
        %7115 = vmatpush2.msra.mxu0 0.0
        %7116 = vmatprep.subr.mxu0 0.0
        %7117 = vmatpush2.msra.mxu0 0.0
        %7118 = vmatprep.subr.mxu0 0.0
        %7119 = vmatpush2.msra.mxu0 0.0
        %7120 = vmatprep.subr.mxu0 0.0
        %7121 = vmatpush2.msra.mxu0 0.0
        %7122 = vmatprep.subr.mxu0 0.0
        %7123 = vmatpush2.msra.mxu0 0.0
        %7124 = vmatprep.subr.mxu0 0.0
        %7125 = vmatpush2.msra.mxu0 0.0
        %7126 = vmatprep.subr.mxu0 0.0
        %7127 = vmatpush2.msra.mxu0 0.0
        %7128 = vmatprep.subr.mxu0 0.0
        %7129 = vmatpush2.msra.mxu0 0.0
        %7130 = vmatprep.subr.mxu0 0.0
        %7131 = vmatpush2.msra.mxu0 0.0
        %7132 = vmatprep.mubr.f32.mxu0 0.0
        %v7133 = vand.u32 %v1524, 4294901760
        %v7134 = vsub.f32 %v1524, %v7133
        %7135 = vmatmul.mubr.f32.gmra.mxu0 %v7134
        %v7136 = vpop.f32.mrf.mxu0
        %v7137 = vadd.f32 %v7063, %v7136
        %v7138 = vpop.f32.mrf.mxu0
        %7139 = vdwg.mxu0
        %7140 = vmatprep.subr.mxu0 0.0
        %7141 = vmatpush1.msra.mxu0 0.0
        %7142 = vmatprep.subr.mxu0 0.0
        %7143 = vmatpush1.msra.mxu0 0.0
        %7144 = vmatprep.subr.mxu0 0.0
        %7145 = vmatpush1.msra.mxu0 0.0
        %7146 = vmatprep.subr.mxu0 0.0
        %7147 = vmatpush1.msra.mxu0 0.0
        %7148 = vmatprep.subr.mxu0 0.0
        %7149 = vmatpush1.msra.mxu0 0.0
        %7150 = vmatprep.subr.mxu0 0.0
        %7151 = vmatpush1.msra.mxu0 0.0
        %7152 = vmatprep.subr.mxu0 0.0
        %7153 = vmatpush1.msra.mxu0 0.0
        %7154 = vmatprep.subr.mxu0 0.0
        %7155 = vmatpush1.msra.mxu0 0.0
        %7156 = vmatprep.subr.mxu0 0.0
        %7157 = vmatpush1.msra.mxu0 0.0
        %7158 = vmatprep.subr.mxu0 0.0
        %7159 = vmatpush1.msra.mxu0 0.0
        %7160 = vmatprep.subr.mxu0 0.0
        %7161 = vmatpush1.msra.mxu0 0.0
        %7162 = vmatprep.subr.mxu0 0.0
        %7163 = vmatpush1.msra.mxu0 0.0
        %7164 = vmatprep.subr.mxu0 0.0
        %7165 = vmatpush1.msra.mxu0 0.0
        %7166 = vmatprep.subr.mxu0 0.0
        %7167 = vmatpush1.msra.mxu0 0.0
        %7168 = vmatprep.subr.mxu0 0.0
        %7169 = vmatpush1.msra.mxu0 0.0
        %7170 = vmatprep.subr.mxu0 0.0
        %v7171 = vand.u32 %v6467, 4294901760
        %7172 = vmatpush1.msra.mxu0 %v7171
        %7173 = vmatprep.subr.mxu0 0.0
        %7174 = vmatpush2.msra.mxu0 0.0
        %7175 = vmatprep.subr.mxu0 0.0
        %7176 = vmatpush2.msra.mxu0 0.0
        %7177 = vmatprep.subr.mxu0 0.0
        %7178 = vmatpush2.msra.mxu0 0.0
        %7179 = vmatprep.subr.mxu0 0.0
        %7180 = vmatpush2.msra.mxu0 0.0
        %7181 = vmatprep.subr.mxu0 0.0
        %7182 = vmatpush2.msra.mxu0 0.0
        %7183 = vmatprep.subr.mxu0 0.0
        %7184 = vmatpush2.msra.mxu0 0.0
        %7185 = vmatprep.subr.mxu0 0.0
        %7186 = vmatpush2.msra.mxu0 0.0
        %7187 = vmatprep.subr.mxu0 0.0
        %7188 = vmatpush2.msra.mxu0 0.0
        %7189 = vmatprep.subr.mxu0 0.0
        %7190 = vmatpush2.msra.mxu0 0.0
        %7191 = vmatprep.subr.mxu0 0.0
        %7192 = vmatpush2.msra.mxu0 0.0
        %7193 = vmatprep.subr.mxu0 0.0
        %7194 = vmatpush2.msra.mxu0 0.0
        %7195 = vmatprep.subr.mxu0 0.0
        %7196 = vmatpush2.msra.mxu0 0.0
        %7197 = vmatprep.subr.mxu0 0.0
        %7198 = vmatpush2.msra.mxu0 0.0
        %7199 = vmatprep.subr.mxu0 0.0
        %7200 = vmatpush2.msra.mxu0 0.0
        %7201 = vmatprep.subr.mxu0 0.0
        %7202 = vmatpush2.msra.mxu0 0.0
        %7203 = vmatprep.subr.mxu0 0.0
        %7204 = vmatpush2.msra.mxu0 0.0
        %7205 = vmatprep.mubr.f32.mxu0 0.0
        %v7206 = vand.u32 %v1524, 4294901760
        %v7207 = vsub.f32 %v1524, %v7206
        %v7208 = vand.u32 %v7207, 4294901760
        %7209 = vmatmul.mubr.f32.gmra.mxu0 %v7208
        %v7210 = vpop.f32.mrf.mxu0
        %v7211 = vadd.f32 %v7137, %v7210
        %v7212 = vpop.f32.mrf.mxu0
        %7213 = vdwg.mxu0
        %7214 = vmatprep.subr.mxu0 0.0
        %7215 = vmatpush1.msra.mxu0 0.0
        %7216 = vmatprep.subr.mxu0 0.0
        %7217 = vmatpush1.msra.mxu0 0.0
        %7218 = vmatprep.subr.mxu0 0.0
        %7219 = vmatpush1.msra.mxu0 0.0
        %7220 = vmatprep.subr.mxu0 0.0
        %7221 = vmatpush1.msra.mxu0 0.0
        %7222 = vmatprep.subr.mxu0 0.0
        %7223 = vmatpush1.msra.mxu0 0.0
        %7224 = vmatprep.subr.mxu0 0.0
        %7225 = vmatpush1.msra.mxu0 0.0
        %7226 = vmatprep.subr.mxu0 0.0
        %7227 = vmatpush1.msra.mxu0 0.0
        %7228 = vmatprep.subr.mxu0 0.0
        %7229 = vmatpush1.msra.mxu0 0.0
        %7230 = vmatprep.subr.mxu0 0.0
        %7231 = vmatpush1.msra.mxu0 0.0
        %7232 = vmatprep.subr.mxu0 0.0
        %7233 = vmatpush1.msra.mxu0 0.0
        %7234 = vmatprep.subr.mxu0 0.0
        %7235 = vmatpush1.msra.mxu0 0.0
        %7236 = vmatprep.subr.mxu0 0.0
        %7237 = vmatpush1.msra.mxu0 0.0
        %7238 = vmatprep.subr.mxu0 0.0
        %7239 = vmatpush1.msra.mxu0 0.0
        %7240 = vmatprep.subr.mxu0 0.0
        %7241 = vmatpush1.msra.mxu0 0.0
        %7242 = vmatprep.subr.mxu0 0.0
        %7243 = vmatpush1.msra.mxu0 0.0
        %7244 = vmatprep.subr.mxu0 0.0
        %v7245 = vand.u32 %v6467, 4294901760
        %v7246 = vsub.f32 %v6467, %v7245
        %v7247 = vand.u32 %v7246, 4294901760
        %7248 = vmatpush1.msra.mxu0 %v7247
        %7249 = vmatprep.subr.mxu0 0.0
        %7250 = vmatpush2.msra.mxu0 0.0
        %7251 = vmatprep.subr.mxu0 0.0
        %7252 = vmatpush2.msra.mxu0 0.0
        %7253 = vmatprep.subr.mxu0 0.0
        %7254 = vmatpush2.msra.mxu0 0.0
        %7255 = vmatprep.subr.mxu0 0.0
        %7256 = vmatpush2.msra.mxu0 0.0
        %7257 = vmatprep.subr.mxu0 0.0
        %7258 = vmatpush2.msra.mxu0 0.0
        %7259 = vmatprep.subr.mxu0 0.0
        %7260 = vmatpush2.msra.mxu0 0.0
        %7261 = vmatprep.subr.mxu0 0.0
        %7262 = vmatpush2.msra.mxu0 0.0
        %7263 = vmatprep.subr.mxu0 0.0
        %7264 = vmatpush2.msra.mxu0 0.0
        %7265 = vmatprep.subr.mxu0 0.0
        %7266 = vmatpush2.msra.mxu0 0.0
        %7267 = vmatprep.subr.mxu0 0.0
        %7268 = vmatpush2.msra.mxu0 0.0
        %7269 = vmatprep.subr.mxu0 0.0
        %7270 = vmatpush2.msra.mxu0 0.0
        %7271 = vmatprep.subr.mxu0 0.0
        %7272 = vmatpush2.msra.mxu0 0.0
        %7273 = vmatprep.subr.mxu0 0.0
        %7274 = vmatpush2.msra.mxu0 0.0
        %7275 = vmatprep.subr.mxu0 0.0
        %7276 = vmatpush2.msra.mxu0 0.0
        %7277 = vmatprep.subr.mxu0 0.0
        %7278 = vmatpush2.msra.mxu0 0.0
        %7279 = vmatprep.subr.mxu0 0.0
        %7280 = vmatpush2.msra.mxu0 0.0
        %7281 = vmatprep.mubr.f32.mxu0 0.0
        %v7282 = vand.u32 %v1524, 4294901760
        %7283 = vmatmul.mubr.f32.gmra.mxu0 %v7282
        %v7284 = vpop.f32.mrf.mxu0
        %v7285 = vadd.f32 %v7211, %v7284
        %v7286 = vpop.f32.mrf.mxu0
        %7287 = vdwg.mxu0
        %7288 = vmatprep.subr.mxu0 0.0
        %7289 = vmatpush1.msra.mxu0 0.0
        %7290 = vmatprep.subr.mxu0 0.0
        %7291 = vmatpush1.msra.mxu0 0.0
        %7292 = vmatprep.subr.mxu0 0.0
        %7293 = vmatpush1.msra.mxu0 0.0
        %7294 = vmatprep.subr.mxu0 0.0
        %7295 = vmatpush1.msra.mxu0 0.0
        %7296 = vmatprep.subr.mxu0 0.0
        %7297 = vmatpush1.msra.mxu0 0.0
        %7298 = vmatprep.subr.mxu0 0.0
        %7299 = vmatpush1.msra.mxu0 0.0
        %7300 = vmatprep.subr.mxu0 0.0
        %7301 = vmatpush1.msra.mxu0 0.0
        %7302 = vmatprep.subr.mxu0 0.0
        %7303 = vmatpush1.msra.mxu0 0.0
        %7304 = vmatprep.subr.mxu0 0.0
        %7305 = vmatpush1.msra.mxu0 0.0
        %7306 = vmatprep.subr.mxu0 0.0
        %7307 = vmatpush1.msra.mxu0 0.0
        %7308 = vmatprep.subr.mxu0 0.0
        %7309 = vmatpush1.msra.mxu0 0.0
        %7310 = vmatprep.subr.mxu0 0.0
        %7311 = vmatpush1.msra.mxu0 0.0
        %7312 = vmatprep.subr.mxu0 0.0
        %7313 = vmatpush1.msra.mxu0 0.0
        %7314 = vmatprep.subr.mxu0 0.0
        %7315 = vmatpush1.msra.mxu0 0.0
        %7316 = vmatprep.subr.mxu0 0.0
        %7317 = vmatpush1.msra.mxu0 0.0
        %7318 = vmatprep.subr.mxu0 0.0
        %v7319 = vand.u32 %v6467, 4294901760
        %7320 = vmatpush1.msra.mxu0 %v7319
        %7321 = vmatprep.subr.mxu0 0.0
        %7322 = vmatpush2.msra.mxu0 0.0
        %7323 = vmatprep.subr.mxu0 0.0
        %7324 = vmatpush2.msra.mxu0 0.0
        %7325 = vmatprep.subr.mxu0 0.0
        %7326 = vmatpush2.msra.mxu0 0.0
        %7327 = vmatprep.subr.mxu0 0.0
        %7328 = vmatpush2.msra.mxu0 0.0
        %7329 = vmatprep.subr.mxu0 0.0
        %7330 = vmatpush2.msra.mxu0 0.0
        %7331 = vmatprep.subr.mxu0 0.0
        %7332 = vmatpush2.msra.mxu0 0.0
        %7333 = vmatprep.subr.mxu0 0.0
        %7334 = vmatpush2.msra.mxu0 0.0
        %7335 = vmatprep.subr.mxu0 0.0
        %7336 = vmatpush2.msra.mxu0 0.0
        %7337 = vmatprep.subr.mxu0 0.0
        %7338 = vmatpush2.msra.mxu0 0.0
        %7339 = vmatprep.subr.mxu0 0.0
        %7340 = vmatpush2.msra.mxu0 0.0
        %7341 = vmatprep.subr.mxu0 0.0
        %7342 = vmatpush2.msra.mxu0 0.0
        %7343 = vmatprep.subr.mxu0 0.0
        %7344 = vmatpush2.msra.mxu0 0.0
        %7345 = vmatprep.subr.mxu0 0.0
        %7346 = vmatpush2.msra.mxu0 0.0
        %7347 = vmatprep.subr.mxu0 0.0
        %7348 = vmatpush2.msra.mxu0 0.0
        %7349 = vmatprep.subr.mxu0 0.0
        %7350 = vmatpush2.msra.mxu0 0.0
        %7351 = vmatprep.subr.mxu0 0.0
        %7352 = vmatpush2.msra.mxu0 0.0
        %7353 = vmatprep.mubr.f32.mxu0 0.0
        %v7354 = vand.u32 %v1524, 4294901760
        %7355 = vmatmul.mubr.f32.gmra.mxu0 %v7354
        %v7356 = vpop.f32.mrf.mxu0
        %v7357 = vadd.f32 %v7285, %v7356
        %v7358 = vpop.f32.mrf.mxu0
        %7359 = vdwg.mxu0
        %v7360 = vmax.f32 %v6911, %v7357
        %s7361 = scalar_lea.vmem %s152, 12 [#allocation5]
        %7362 = vst.msk [vmem:[%s7361] sm:$0xf] %vm1973, %v7360
        %s7363 = sand.u32 %s68, 1
        %s7364 = scalar_lea.sflag [#allocation4], %s7363
        %s7365 = sand.u32 %s68, 1
        %s7366 = smul.addr %s7365, 16
        %s7367 = scalar_lea.vmem [#allocation5], %s7366
        // Predicated region
        $region29: #{tpu_custom_call.1} parent=23 // pred_check
          %p7368 = pneg %p78
        $region30: #{tpu_custom_call.1} parent=23 // pred_check_branch
          %7370 = sbr.rel (%p7368) target = $region32
        $region31: #{tpu_custom_call.1} parent=23 // pred_region
          %s7372 = ssub.s32 256, 256
          %7373 = vsyncadd %s7364, %s7372
          %s7374 = smul.addr %s23, 4
          %s7375 = smul.addr %s22, 16
          %s7376 = sadd.s32 %s7374, %s7375
          %s7377 = smul.addr %s7376, 64
          %s7378 = scalar_lea.hbm %s1, %s7377
          %s7379 = sshll.u32 %s7367, 4
          %s7380 = int_to_ptr.vmem [resolvable:$true] %s7379
          %7385 = dma.vmem_to_hbm [thread:$0]  %s7380, 256, %s7378, %s7364, 64, 64, 4
        $region32: #{tpu_custom_call.1} parent=23 // pred_fallthru
          _
      $region24: #{tpu_custom_call.1} parent=5 // pred_fallthru
        _
      %p7386 = scmp.le.s32.totalorder 2, %s13
      // Predicated region
      $region33: #{tpu_custom_call.1} parent=5 // pred_check
        %p7387 = pneg %p7386
      $region34: #{tpu_custom_call.1} parent=5 // pred_check_branch
        %7389 = sbr.rel (%p7387) target = $region36
      $region35: #{tpu_custom_call.1} parent=5 // pred_region
        %s7390 = ssub.s32 %s13, 2
        // Predicated region
        $region37: #{tpu_custom_call.1} parent=35 // pred_check
          %p7391 = pneg %p84
        $region38: #{tpu_custom_call.1} parent=35 // pred_check_branch
          %7393 = sbr.rel (%p7391) target = $region40
        $region39: #{tpu_custom_call.1} parent=35 // pred_region
          %s7394 = sand.u32 %s69, 1
          %s7395 = scalar_lea.sflag [#allocation4], %s7394
          %s7396 = sand.u32 %s69, 1
          %s7397 = smul.addr %s7396, 16
          %s7398 = scalar_lea.vmem [#allocation5], %s7397
          %7399 = dma.done %s7395, 256
        $region40: #{tpu_custom_call.1} parent=35 // pred_fallthru
          _
      $region36: #{tpu_custom_call.1} parent=5 // pred_fallthru
        _
    $region6: #{tpu_custom_call.1} parent=1 // loop_footer
      %s17 = sadd.s32 1, %s13
    $region7: #{tpu_custom_call.1} parent=1 // loop_footer_branch
      %12 = sbr.rel target = $region3
    $region8: #{tpu_custom_call.1} parent=1 // loop_exit
      _
    %7400 = vsyncpa [#allocation3], 1
    %s7401 = scalar_lea.sflag [#allocation3], 1
    %7402 = vsyncpa %s7401, 1
    %7403 = vsyncpa [#allocation4], 1
    %s7404 = scalar_lea.sflag [#allocation4], 1
    %7405 = vsyncpa %s7404, 1

</llo_original>
